<compile_context>
chip_gen: v7x
topology: tpu7x:2x2x1
jax: 0.10.0
libtpu: 0.0.40
codegen_flags: <defaults>
</compile_context>

<pallas_src>
import jax
import jax.numpy as jnp
import numpy as np
from jax.experimental import pallas as pl
from jax.experimental.pallas import tpu as pltpu

_KH = 3
_KW = 3


# ----------------------------------------------------------------------------
# Fused kernel: conv1 (+bias, SiLU) -> conv2 (+bias), all in VMEM
# ----------------------------------------------------------------------------
def _encoder_kernel(xe_ref, xo_ref, w1_ref, b1_ref, w2_ref, b2_ref, o_ref,
                    s1_ref, s2_ref):
    # xe_ref: (C_in, H1+1, Wt+4) bf16  even rows of the padded input window
    # xo_ref: (C_in, H1,   Wt+4) bf16  odd rows
    # w1_ref: (C_mid, 9*C_in)    bf16  im2col-flattened conv1 weight
    # b1_ref: (C_mid, 1)         f32
    # w2_ref: (C_out, 9*C_mid)   bf16  im2col-flattened conv2 weight
    # b2_ref: (C_out, 1)         f32
    # o_ref : (C_out, H2*Wt)     f32   lane-dense flattened output tile
    # s1_ref: (9*C_in, H1, Wt+2) bf16  conv1 im2col slab scratch
    # s2_ref: (9*C_mid, H2, Wt)  bf16  conv2 im2col slab scratch
    C_in, H1p1, Win = xe_ref.shape
    H1 = H1p1 - 1
    Wt = Win - 4
    Wc1 = Wt + 2                    # intermediate tile width (incl. halo cols)
    H2 = H1 // 2
    C_mid = w1_ref.shape[0]

    t = pl.program_id(1)
    n_t = pl.num_programs(1)

    # ---- conv1 im2col: write the 9 taps straight into the slab scratch.
    # kh row selection = contiguous sublane slice of a parity plane; the kw
    # lane shift is computed once per (plane, kw) and reused by both kh taps.
    for kw in range(_KW):
        e = xe_ref[:, :, kw:kw + Wc1]                    # (C_in, H1+1, Wc1)
        o = xo_ref[:, :, kw:kw + Wc1]                    # (C_in, H1,   Wc1)
        s1_ref[pl.ds((0 * _KW + kw) * C_in, C_in), :, :] = e[:, 0:H1, :]
        s1_ref[pl.ds((1 * _KW + kw) * C_in, C_in), :, :] = o[:, 0:H1, :]
        s1_ref[pl.ds((2 * _KW + kw) * C_in, C_in), :, :] = e[:, 1:H1 + 1, :]

    # ---- conv1: one deep MXU contraction, f32 bias, SiLU via EUP reciprocal
    z1 = jnp.dot(w1_ref[...],
                 s1_ref[...].reshape(_KH * _KW * C_in, H1 * Wc1),
                 preferred_element_type=jnp.float32)      # (C_mid, H1*Wc1)
    z1 = z1 + b1_ref[...]
    h = (z1 * pl.reciprocal(1.0 + jnp.exp(-z1), approx=True)
         ).astype(jnp.bfloat16)

    # Row-parity split in ONE reshape: lanes [0, Wc1) = even intermediate
    # rows, lanes [Wc1, 2*Wc1) = odd rows.
    h3 = h.reshape(C_mid, H1 // 2, 2 * Wc1)

    # Zero the intermediate's constant W-pad columns (global edges only).
    lane = jax.lax.broadcasted_iota(jnp.int32, (1, 1, 2 * Wc1), 2)
    border = (((t == 0) & ((lane == 0) | (lane == Wc1))) |
              ((t == n_t - 1) & ((lane == Wc1 - 1) | (lane == 2 * Wc1 - 1))))
    h3 = jnp.where(border, 0.0, h3)

    # ---- conv2 im2col into its slab scratch: contiguous sublane slices,
    # hoisted kw shifts, circular-H row handled by a single 1-row store.
    for kw in range(_KW):
        he = h3[:, :, kw:kw + Wt]                        # even rows, shifted
        ho = h3[:, :, Wc1 + kw:Wc1 + kw + Wt]            # odd rows,  shifted
        s2_ref[pl.ds((0 * _KW + kw) * C_mid, C_mid), :, :] = he[:, 0:H2, :]
        s2_ref[pl.ds((1 * _KW + kw) * C_mid, C_mid), :, :] = ho[:, 0:H2, :]
        base2 = (2 * _KW + kw) * C_mid
        if H2 > 1:
            s2_ref[pl.ds(base2, C_mid), 0:H2 - 1, :] = he[:, 1:H2, :]
        s2_ref[pl.ds(base2, C_mid), H2 - 1:H2, :] = he[:, 0:1, :]  # circular

    # ---- conv2: one deep MXU contraction, lane-dense flattened store
    z2 = jnp.dot(w2_ref[...],
                 s2_ref[...].reshape(_KH * _KW * C_mid, H2 * Wt),
                 preferred_element_type=jnp.float32)      # (C_out, H2*Wt)
    o_ref[...] = z2 + b2_ref[...]


# ----------------------------------------------------------------------------
# Wrapper: padding, parity split, W-tile materialization, weight flattening
# ----------------------------------------------------------------------------
def _flatten_conv_weight(w_hwio):
    # (KH, KW, C_in, C_out) -> (C_out, KH*KW*C_in); tap (kh, kw) major,
    # input channel innermost — must match the kernel's slab row ordering.
    kh, kw, c_in, c_out = w_hwio.shape
    return jnp.transpose(w_hwio, (3, 0, 1, 2)).reshape(c_out, kh * kw * c_in)


def _pick_w_tile(w):
    for cand in (512, 256, 128):
        if w > cand and w % cand == 0:
            return cand
    return w


def sparse_range_image_encoder(x_nchw, w1_hwio, b1, w2_hwio, b2):
    """Forward pass. x_nchw: (B, 2, H, W) -> (B, outdim, H//4, W) float32."""
    B, C_in, H, W = x_nchw.shape
    assert H % 4 == 0, "H must be divisible by 4 (two stride-2 convs)"
    C_mid = w1_hwio.shape[3]
    C_out = w2_hwio.shape[3]
    H1, H2 = H // 2, H // 4
    Wt = _pick_w_tile(W)
    n_t = W // Wt

    # Circular pad H (append row 0); zero pad W by (2, 2) so every W tile's
    # (Wt+4)-wide halo window is a plain slice.  Activations in bf16.
    xp = jnp.concatenate([x_nchw, x_nchw[:, :, :1, :]], axis=2)
    xp = jnp.pad(xp, ((0, 0), (0, 0), (0, 0), (2, 2))).astype(jnp.bfloat16)

    # Parity-split rows: each kh tap in-kernel becomes a contiguous sublane
    # slice (no strided sublane reads on packed bf16 refs).
    xe = xp[:, :, 0::2, :]            # (B, C_in, H1+1, W+4)
    xo = xp[:, :, 1::2, :]            # (B, C_in, H1,   W+4)

    # Materialize overlapping W tiles (4 halo cols each) so BlockSpec blocks
    # never overlap; duplicated columns are negligible HBM.
    cols = (jnp.arange(n_t)[:, None] * Wt +
            jnp.arange(Wt + 4)[None, :]).reshape(-1)

    def tile_w(a):                    # (B, C, Hr, W+4) -> (B, n_t, C, Hr, Wt+4)
        g = jnp.take(a, cols, axis=-1).reshape(a.shape[:-1] + (n_t, Wt + 4))
        return jnp.moveaxis(g, -2, 1)

    xe_t = tile_w(xe)
    xo_t = tile_w(xo)

    w1m = _flatten_conv_weight(w1_hwio).astype(jnp.bfloat16)
    w2m = _flatten_conv_weight(w2_hwio).astype(jnp.bfloat16)
    b1c = b1.astype(jnp.float32).reshape(C_mid, 1)
    b2c = b2.astype(jnp.float32).reshape(C_out, 1)

    # VMEM limit from the actual per-step footprint (double-buffered blocks +
    # slab scratches + in-kernel temporaries), with headroom; capped at 96 MiB.
    est = (2 * (C_in * (H1 + 1) * (Wt + 4) * 2 + C_in * H1 * (Wt + 4) * 2
                + C_out * H2 * Wt * 4)
           + (C_mid * 9 * C_in + C_out * 9 * C_mid) * 2 + (C_mid + C_out) * 4
           + 9 * C_in * H1 * (Wt + 2) * 2 + 9 * C_mid * H2 * Wt * 2
           + 2 * (C_mid * H1 * (Wt + 2) * 6 + C_out * H2 * Wt * 4))
    vmem_limit = min(96 * 1024 * 1024, int(est * 1.5) + 8 * 1024 * 1024)

    out = pl.pallas_call(
        _encoder_kernel,
        out_shape=jax.ShapeDtypeStruct((B, n_t, C_out, H2 * Wt), jnp.float32),
        grid=(B, n_t),
        in_specs=[
            pl.BlockSpec((None, None, C_in, H1 + 1, Wt + 4),
                         lambda b, t: (b, t, 0, 0, 0)),
            pl.BlockSpec((None, None, C_in, H1, Wt + 4),
                         lambda b, t: (b, t, 0, 0, 0)),
            pl.BlockSpec((C_mid, _KH * _KW * C_in), lambda b, t: (0, 0)),
            pl.BlockSpec((C_mid, 1), lambda b, t: (0, 0)),
            pl.BlockSpec((C_out, _KH * _KW * C_mid), lambda b, t: (0, 0)),
            pl.BlockSpec((C_out, 1), lambda b, t: (0, 0)),
        ],
        out_specs=pl.BlockSpec((None, None, C_out, H2 * Wt),
                               lambda b, t: (b, t, 0, 0)),
        scratch_shapes=[
            pltpu.VMEM((_KH * _KW * C_in, H1, Wt + 2), jnp.bfloat16),
            pltpu.VMEM((_KH * _KW * C_mid, H2, Wt), jnp.bfloat16),
        ],
        compiler_params=pltpu.CompilerParams(
            dimension_semantics=("parallel", "parallel"),
            vmem_limit_bytes=vmem_limit),
    )(xe_t, xo_t, w1m, b1c, w2m, b2c)

    # Lane-dense kernel output -> NCHW (free layout plumbing in the wrapper).
    out = out.reshape(B, n_t, C_out, H2, Wt)
    return jnp.transpose(out, (0, 2, 3, 1, 4)).reshape(B, C_out, H2, W)


# ----------------------------------------------------------------------------
# Pure-JAX reference mirroring the kernel's bf16-in / f32-accumulate math
# ----------------------------------------------------------------------------
def _reference(x_nchw, w1_hwio, b1, w2_hwio, b2):
    dn = ("NCHW", "HWIO", "NCHW")

    def pad(x):
        x = jnp.concatenate([x, x[:, :, :1, :]], axis=2)      # circular H
        return jnp.pad(x, ((0, 0), (0, 0), (0, 0), (1, 1)))   # zero W

    x = pad(x_nchw).astype(jnp.bfloat16)
    z1 = jax.lax.conv_general_dilated(
        x, w1_hwio.astype(jnp.bfloat16), (2, 1), "VALID",
        dimension_numbers=dn, preferred_element_type=jnp.float32)
    z1 = z1 + b1.reshape(1, -1, 1, 1)
    h = z1 * (1.0 / (1.0 + jnp.exp(-z1)))                      # SiLU
    h = pad(h.astype(jnp.bfloat16))
    z2 = jax.lax.conv_general_dilated(
        h, w2_hwio.astype(jnp.bfloat16), (2, 1), "VALID",
        dimension_numbers=dn, preferred_element_type=jnp.float32)
    return z2 + b2.reshape(1, -1, 1, 1)


# ----------------------------------------------------------------------------
if __name__ == "__main__":
    B, C_in, H, W = 2, 2, 16, 16
    middle, outdim = 32, 4

    key = jax.random.PRNGKey(0)
    k1, k2, k3, k4, k5 = jax.random.split(key, 5)
    x = jax.random.normal(k1, (B, C_in, H, W), jnp.float32)
    # Synthetic parameters, stored in HWIO layout (kh, kw, c_in, c_out).
    w1 = jax.random.normal(k2, (3, 3, C_in, middle), jnp.float32) * 0.1
    b1 = jax.random.normal(k3, (middle,), jnp.float32) * 0.1
    w2 = jax.random.normal(k4, (3, 3, middle, outdim), jnp.float32) * 0.1
    b2 = jax.random.normal(k5, (outdim,), jnp.float32) * 0.1

    y = jax.block_until_ready(sparse_range_image_encoder(x, w1, b1, w2, b2))

    # H=16 -> circ-pad 17 -> conv1 (stride 2) 8 -> pad 9 -> conv2 4 ; W stays 16.
    assert y.shape == (B, outdim, 4, W), y.shape

    y_ref = jax.block_until_ready(_reference(x, w1, b1, w2, b2))
    np.testing.assert_allclose(np.asarray(y), np.asarray(y_ref),
                               rtol=5e-3, atol=5e-3)
    print("KERNEL_OK")
</pallas_src>

<mosaic_0001>
module attributes {stable_mosaic.version = 11 : i64} {
  func.func @_encoder_kernel(%arg0: i32, %arg1: i32, %arg2: memref<1x1x2x9x20xbf16, #tpu.memory_space<vmem>>, %arg3: memref<1x1x2x8x20xbf16, #tpu.memory_space<vmem>>, %arg4: memref<32x18xbf16, #tpu.memory_space<vmem>>, %arg5: memref<32x1xf32, #tpu.memory_space<vmem>>, %arg6: memref<4x288xbf16, #tpu.memory_space<vmem>>, %arg7: memref<4x1xf32, #tpu.memory_space<vmem>>, %arg8: memref<1x1x4x64xf32, #tpu.memory_space<vmem>>, %arg9: memref<18x8x18xbf16, #tpu.memory_space<vmem>>, %arg10: memref<288x4x16xbf16, #tpu.memory_space<vmem>>) attributes {dimension_semantics = [#tpu.dimension_semantics<parallel>, #tpu.dimension_semantics<parallel>], iteration_bounds = array<i64: 2, 1>, scalar_prefetch = 0 : i64, scratch_operands = 2 : i64, tpu.core_type = #tpu.core_type<tc>, window_params = [{transform_indices = @transform_0, window_bounds = array<i64: 1, 1, 2, 9, 20>}, {transform_indices = @transform_1, window_bounds = array<i64: 1, 1, 2, 8, 20>}, {pipeline_mode = #tpu.pipeline_mode<synchronous>, transform_indices = @transform_2, window_bounds = array<i64: 32, 18>}, {pipeline_mode = #tpu.pipeline_mode<synchronous>, transform_indices = @transform_3, window_bounds = array<i64: 32, 1>}, {pipeline_mode = #tpu.pipeline_mode<synchronous>, transform_indices = @transform_4, window_bounds = array<i64: 4, 288>}, {pipeline_mode = #tpu.pipeline_mode<synchronous>, transform_indices = @transform_5, window_bounds = array<i64: 4, 1>}, {transform_indices = @transform_6, window_bounds = array<i64: 1, 1, 4, 64>}]} {
    %c0 = arith.constant 0 : index
    %c0_0 = arith.constant 0 : index
    %c0_1 = arith.constant 0 : index
    %c0_2 = arith.constant 0 : index
    %c0_3 = arith.constant 0 : index
    %0 = vector.load %arg2[%c0, %c0_0, %c0_1, %c0_2, %c0_3] : memref<1x1x2x9x20xbf16, #tpu.memory_space<vmem>>, vector<1x1x2x9x18xbf16>
    %1 = vector.shape_cast %0 : vector<1x1x2x9x18xbf16> to vector<2x9x18xbf16>
    %c0_4 = arith.constant 0 : index
    %c0_5 = arith.constant 0 : index
    %c0_6 = arith.constant 0 : index
    %c0_7 = arith.constant 0 : index
    %c0_8 = arith.constant 0 : index
    %2 = vector.load %arg3[%c0_4, %c0_5, %c0_6, %c0_7, %c0_8] : memref<1x1x2x8x20xbf16, #tpu.memory_space<vmem>>, vector<1x1x2x8x18xbf16>
    %3 = vector.shape_cast %2 : vector<1x1x2x8x18xbf16> to vector<2x8x18xbf16>
    %4 = vector.extract_strided_slice %1 {offsets = [0, 0, 0], sizes = [2, 8, 18], strides = [1, 1, 1]} : vector<2x9x18xbf16> to vector<2x8x18xbf16>
    %c0_9 = arith.constant 0 : index
    %c0_10 = arith.constant 0 : index
    %c0_11 = arith.constant 0 : index
    %5 = vector.load %arg9[%c0_9, %c0_10, %c0_11] : memref<18x8x18xbf16, #tpu.memory_space<vmem>>, vector<2x8x18xbf16>
    tpu.vector_store %arg9[%c0_9, %c0_10, %c0_11], %4 {strides = array<i32>} : memref<18x8x18xbf16, #tpu.memory_space<vmem>>, vector<2x8x18xbf16>,
    %c6 = arith.constant 6 : index
    %c0_12 = arith.constant 0 : index
    %c0_13 = arith.constant 0 : index
    %6 = vector.load %arg9[%c6, %c0_12, %c0_13] : memref<18x8x18xbf16, #tpu.memory_space<vmem>>, vector<2x8x18xbf16>
    tpu.vector_store %arg9[%c6, %c0_12, %c0_13], %3 {strides = array<i32>} : memref<18x8x18xbf16, #tpu.memory_space<vmem>>, vector<2x8x18xbf16>,
    %7 = vector.extract_strided_slice %1 {offsets = [0, 1, 0], sizes = [2, 8, 18], strides = [1, 1, 1]} : vector<2x9x18xbf16> to vector<2x8x18xbf16>
    %c12 = arith.constant 12 : index
    %c0_14 = arith.constant 0 : index
    %c0_15 = arith.constant 0 : index
    %8 = vector.load %arg9[%c12, %c0_14, %c0_15] : memref<18x8x18xbf16, #tpu.memory_space<vmem>>, vector<2x8x18xbf16>
    tpu.vector_store %arg9[%c12, %c0_14, %c0_15], %7 {strides = array<i32>} : memref<18x8x18xbf16, #tpu.memory_space<vmem>>, vector<2x8x18xbf16>,
    %c0_16 = arith.constant 0 : index
    %c0_17 = arith.constant 0 : index
    %c0_18 = arith.constant 0 : index
    %c0_19 = arith.constant 0 : index
    %c1 = arith.constant 1 : index
    %9 = vector.load %arg2[%c0_16, %c0_17, %c0_18, %c0_19, %c1] : memref<1x1x2x9x20xbf16, #tpu.memory_space<vmem>>, vector<1x1x2x9x18xbf16>
    %10 = vector.shape_cast %9 : vector<1x1x2x9x18xbf16> to vector<2x9x18xbf16>
    %c0_20 = arith.constant 0 : index
    %c0_21 = arith.constant 0 : index
    %c0_22 = arith.constant 0 : index
    %c0_23 = arith.constant 0 : index
    %c1_24 = arith.constant 1 : index
    %11 = vector.load %arg3[%c0_20, %c0_21, %c0_22, %c0_23, %c1_24] : memref<1x1x2x8x20xbf16, #tpu.memory_space<vmem>>, vector<1x1x2x8x18xbf16>
    %12 = vector.shape_cast %11 : vector<1x1x2x8x18xbf16> to vector<2x8x18xbf16>
    %13 = vector.extract_strided_slice %10 {offsets = [0, 0, 0], sizes = [2, 8, 18], strides = [1, 1, 1]} : vector<2x9x18xbf16> to vector<2x8x18xbf16>
    %c2 = arith.constant 2 : index
    %c0_25 = arith.constant 0 : index
    %c0_26 = arith.constant 0 : index
    %14 = vector.load %arg9[%c2, %c0_25, %c0_26] : memref<18x8x18xbf16, #tpu.memory_space<vmem>>, vector<2x8x18xbf16>
    tpu.vector_store %arg9[%c2, %c0_25, %c0_26], %13 {strides = array<i32>} : memref<18x8x18xbf16, #tpu.memory_space<vmem>>, vector<2x8x18xbf16>,
    %c8 = arith.constant 8 : index
    %c0_27 = arith.constant 0 : index
    %c0_28 = arith.constant 0 : index
    %15 = vector.load %arg9[%c8, %c0_27, %c0_28] : memref<18x8x18xbf16, #tpu.memory_space<vmem>>, vector<2x8x18xbf16>
    tpu.vector_store %arg9[%c8, %c0_27, %c0_28], %12 {strides = array<i32>} : memref<18x8x18xbf16, #tpu.memory_space<vmem>>, vector<2x8x18xbf16>,
    %16 = vector.extract_strided_slice %10 {offsets = [0, 1, 0], sizes = [2, 8, 18], strides = [1, 1, 1]} : vector<2x9x18xbf16> to vector<2x8x18xbf16>
    %c14 = arith.constant 14 : index
    %c0_29 = arith.constant 0 : index
    %c0_30 = arith.constant 0 : index
    %17 = vector.load %arg9[%c14, %c0_29, %c0_30] : memref<18x8x18xbf16, #tpu.memory_space<vmem>>, vector<2x8x18xbf16>
    tpu.vector_store %arg9[%c14, %c0_29, %c0_30], %16 {strides = array<i32>} : memref<18x8x18xbf16, #tpu.memory_space<vmem>>, vector<2x8x18xbf16>,
    %c0_31 = arith.constant 0 : index
    %c0_32 = arith.constant 0 : index
    %c0_33 = arith.constant 0 : index
    %c0_34 = arith.constant 0 : index
    %c2_35 = arith.constant 2 : index
    %18 = vector.load %arg2[%c0_31, %c0_32, %c0_33, %c0_34, %c2_35] : memref<1x1x2x9x20xbf16, #tpu.memory_space<vmem>>, vector<1x1x2x9x18xbf16>
    %19 = vector.shape_cast %18 : vector<1x1x2x9x18xbf16> to vector<2x9x18xbf16>
    %c0_36 = arith.constant 0 : index
    %c0_37 = arith.constant 0 : index
    %c0_38 = arith.constant 0 : index
    %c0_39 = arith.constant 0 : index
    %c2_40 = arith.constant 2 : index
    %20 = vector.load %arg3[%c0_36, %c0_37, %c0_38, %c0_39, %c2_40] : memref<1x1x2x8x20xbf16, #tpu.memory_space<vmem>>, vector<1x1x2x8x18xbf16>
    %21 = vector.shape_cast %20 : vector<1x1x2x8x18xbf16> to vector<2x8x18xbf16>
    %22 = vector.extract_strided_slice %19 {offsets = [0, 0, 0], sizes = [2, 8, 18], strides = [1, 1, 1]} : vector<2x9x18xbf16> to vector<2x8x18xbf16>
    %c4 = arith.constant 4 : index
    %c0_41 = arith.constant 0 : index
    %c0_42 = arith.constant 0 : index
    %23 = vector.load %arg9[%c4, %c0_41, %c0_42] : memref<18x8x18xbf16, #tpu.memory_space<vmem>>, vector<2x8x18xbf16>
    tpu.vector_store %arg9[%c4, %c0_41, %c0_42], %22 {strides = array<i32>} : memref<18x8x18xbf16, #tpu.memory_space<vmem>>, vector<2x8x18xbf16>,
    %c10 = arith.constant 10 : index
    %c0_43 = arith.constant 0 : index
    %c0_44 = arith.constant 0 : index
    %24 = vector.load %arg9[%c10, %c0_43, %c0_44] : memref<18x8x18xbf16, #tpu.memory_space<vmem>>, vector<2x8x18xbf16>
    tpu.vector_store %arg9[%c10, %c0_43, %c0_44], %21 {strides = array<i32>} : memref<18x8x18xbf16, #tpu.memory_space<vmem>>, vector<2x8x18xbf16>,
    %25 = vector.extract_strided_slice %19 {offsets = [0, 1, 0], sizes = [2, 8, 18], strides = [1, 1, 1]} : vector<2x9x18xbf16> to vector<2x8x18xbf16>
    %c16 = arith.constant 16 : index
    %c0_45 = arith.constant 0 : index
    %c0_46 = arith.constant 0 : index
    %26 = vector.load %arg9[%c16, %c0_45, %c0_46] : memref<18x8x18xbf16, #tpu.memory_space<vmem>>, vector<2x8x18xbf16>
    tpu.vector_store %arg9[%c16, %c0_45, %c0_46], %25 {strides = array<i32>} : memref<18x8x18xbf16, #tpu.memory_space<vmem>>, vector<2x8x18xbf16>,
    %c0_47 = arith.constant 0 : index
    %c0_48 = arith.constant 0 : index
    %27 = vector.load %arg4[%c0_47, %c0_48] : memref<32x18xbf16, #tpu.memory_space<vmem>>, vector<32x18xbf16>
    %c0_49 = arith.constant 0 : index
    %c0_50 = arith.constant 0 : index
    %c0_51 = arith.constant 0 : index
    %28 = vector.load %arg9[%c0_49, %c0_50, %c0_51] : memref<18x8x18xbf16, #tpu.memory_space<vmem>>, vector<18x8x18xbf16>
    %29 = vector.shape_cast %28 : vector<18x8x18xbf16> to vector<18x144xbf16>
    %cst = arith.constant dense<0.000000e+00> : vector<32x144xf32>
    %30 = tpu.matmul %27, %29, %cst {dimension_numbers = #tpu.dot_dimension_numbers<[1], [0], [0], [1], [0, 0, 1, 1], [], []>} : vector<32x18xbf16>, vector<18x144xbf16>, vector<32x144xf32> -> vector<32x144xf32>
    %c0_52 = arith.constant 0 : index
    %c0_53 = arith.constant 0 : index
    %31 = vector.load %arg5[%c0_52, %c0_53] : memref<32x1xf32, #tpu.memory_space<vmem>>, vector<32x1xf32>
    %32 = vector.broadcast %31 : vector<32x1xf32> to vector<32x144xf32>
    %33 = arith.addf %30, %32 : vector<32x144xf32>
    %cst_54 = arith.constant 0.000000e+00 : f32
    %34 = vector.broadcast %cst_54 : f32 to vector<32x144xf32>
    %35 = arith.subf %34, %33 : vector<32x144xf32>
    %36 = math.exp %35 : vector<32x144xf32>
    %cst_55 = arith.constant 1.000000e+00 : f32
    %37 = vector.broadcast %cst_55 : f32 to vector<32x144xf32>
    %38 = arith.addf %37, %36 : vector<32x144xf32>
    %39 = tpu.reciprocal %38 {approx = true} : vector<32x144xf32> -> vector<32x144xf32>
    %40 = arith.mulf %33, %39 : vector<32x144xf32>
    %41 = arith.truncf %40 : vector<32x144xf32> to vector<32x144xbf16>
    %42 = vector.shape_cast %41 : vector<32x144xbf16> to vector<32x4x36xbf16>
    %43 = tpu.iota {dimensions = array<i32: 2>} : vector<1x1x36xi32>
    %c0_i32 = arith.constant 0 : i32
    %44 = arith.cmpi eq, %arg1, %c0_i32 : i32
    %c0_i32_56 = arith.constant 0 : i32
    %45 = vector.broadcast %c0_i32_56 : i32 to vector<1x1x36xi32>
    %46 = arith.cmpi eq, %43, %45 : vector<1x1x36xi32>
    %c18_i32 = arith.constant 18 : i32
    %47 = vector.broadcast %c18_i32 : i32 to vector<1x1x36xi32>
    %48 = arith.cmpi eq, %43, %47 : vector<1x1x36xi32>
    %49 = arith.ori %46, %48 : vector<1x1x36xi1>
    %50 = vector.broadcast %44 : i1 to vector<1x1x36xi1>
    %51 = arith.andi %50, %49 : vector<1x1x36xi1>
    %c0_i32_57 = arith.constant 0 : i32
    %52 = arith.cmpi eq, %arg1, %c0_i32_57 : i32
    %c17_i32 = arith.constant 17 : i32
    %53 = vector.broadcast %c17_i32 : i32 to vector<1x1x36xi32>
    %54 = arith.cmpi eq, %43, %53 : vector<1x1x36xi32>
    %c35_i32 = arith.constant 35 : i32
    %55 = vector.broadcast %c35_i32 : i32 to vector<1x1x36xi32>
    %56 = arith.cmpi eq, %43, %55 : vector<1x1x36xi32>
    %57 = arith.ori %54, %56 : vector<1x1x36xi1>
    %58 = vector.broadcast %52 : i1 to vector<1x1x36xi1>
    %59 = arith.andi %58, %57 : vector<1x1x36xi1>
    %60 = arith.ori %51, %59 : vector<1x1x36xi1>
    %cst_58 = arith.constant 0.000000e+00 : f32
    %61 = arith.truncf %cst_58 : f32 to bf16
    %62 = vector.shape_cast %60 : vector<1x1x36xi1> to vector<1x1x36xi1>
    %63 = vector.broadcast %62 : vector<1x1x36xi1> to vector<32x4x36xi1>
    %64 = vector.broadcast %61 : bf16 to vector<32x4x36xbf16>
    %65 = arith.select %63, %64, %42 : vector<32x4x36xi1>, vector<32x4x36xbf16>
    %66 = vector.extract_strided_slice %65 {offsets = [0, 0, 0], sizes = [32, 4, 16], strides = [1, 1, 1]} : vector<32x4x36xbf16> to vector<32x4x16xbf16>
    %67 = vector.extract_strided_slice %65 {offsets = [0, 0, 18], sizes = [32, 4, 16], strides = [1, 1, 1]} : vector<32x4x36xbf16> to vector<32x4x16xbf16>
    %c0_59 = arith.constant 0 : index
    %c0_60 = arith.constant 0 : index
    %c0_61 = arith.constant 0 : index
    %68 = vector.load %arg10[%c0_59, %c0_60, %c0_61] : memref<288x4x16xbf16, #tpu.memory_space<vmem>>, vector<32x4x16xbf16>
    tpu.vector_store %arg10[%c0_59, %c0_60, %c0_61], %66 {strides = array<i32>} : memref<288x4x16xbf16, #tpu.memory_space<vmem>>, vector<32x4x16xbf16>,
    %c96 = arith.constant 96 : index
    %c0_62 = arith.constant 0 : index
    %c0_63 = arith.constant 0 : index
    %69 = vector.load %arg10[%c96, %c0_62, %c0_63] : memref<288x4x16xbf16, #tpu.memory_space<vmem>>, vector<32x4x16xbf16>
    tpu.vector_store %arg10[%c96, %c0_62, %c0_63], %67 {strides = array<i32>} : memref<288x4x16xbf16, #tpu.memory_space<vmem>>, vector<32x4x16xbf16>,
    %70 = vector.extract_strided_slice %66 {offsets = [0, 1, 0], sizes = [32, 3, 16], strides = [1, 1, 1]} : vector<32x4x16xbf16> to vector<32x3x16xbf16>
    %c192 = arith.constant 192 : index
    %c0_64 = arith.constant 0 : index
    %c0_65 = arith.constant 0 : index
    %71 = vector.load %arg10[%c192, %c0_64, %c0_65] : memref<288x4x16xbf16, #tpu.memory_space<vmem>>, vector<32x3x16xbf16>
    tpu.vector_store %arg10[%c192, %c0_64, %c0_65], %70 {strides = array<i32>} : memref<288x4x16xbf16, #tpu.memory_space<vmem>>, vector<32x3x16xbf16>,
    %72 = vector.extract_strided_slice %66 {offsets = [0, 0, 0], sizes = [32, 1, 16], strides = [1, 1, 1]} : vector<32x4x16xbf16> to vector<32x1x16xbf16>
    %c192_66 = arith.constant 192 : index
    %c3 = arith.constant 3 : index
    %c0_67 = arith.constant 0 : index
    %73 = vector.load %arg10[%c192_66, %c3, %c0_67] : memref<288x4x16xbf16, #tpu.memory_space<vmem>>, vector<32x1x16xbf16>
    tpu.vector_store %arg10[%c192_66, %c3, %c0_67], %72 {strides = array<i32>} : memref<288x4x16xbf16, #tpu.memory_space<vmem>>, vector<32x1x16xbf16>,
    %74 = vector.extract_strided_slice %65 {offsets = [0, 0, 1], sizes = [32, 4, 16], strides = [1, 1, 1]} : vector<32x4x36xbf16> to vector<32x4x16xbf16>
    %75 = vector.extract_strided_slice %65 {offsets = [0, 0, 19], sizes = [32, 4, 16], strides = [1, 1, 1]} : vector<32x4x36xbf16> to vector<32x4x16xbf16>
    %c32 = arith.constant 32 : index
    %c0_68 = arith.constant 0 : index
    %c0_69 = arith.constant 0 : index
    %76 = vector.load %arg10[%c32, %c0_68, %c0_69] : memref<288x4x16xbf16, #tpu.memory_space<vmem>>, vector<32x4x16xbf16>
    tpu.vector_store %arg10[%c32, %c0_68, %c0_69], %74 {strides = array<i32>} : memref<288x4x16xbf16, #tpu.memory_space<vmem>>, vector<32x4x16xbf16>,
    %c128 = arith.constant 128 : index
    %c0_70 = arith.constant 0 : index
    %c0_71 = arith.constant 0 : index
    %77 = vector.load %arg10[%c128, %c0_70, %c0_71] : memref<288x4x16xbf16, #tpu.memory_space<vmem>>, vector<32x4x16xbf16>
    tpu.vector_store %arg10[%c128, %c0_70, %c0_71], %75 {strides = array<i32>} : memref<288x4x16xbf16, #tpu.memory_space<vmem>>, vector<32x4x16xbf16>,
    %78 = vector.extract_strided_slice %74 {offsets = [0, 1, 0], sizes = [32, 3, 16], strides = [1, 1, 1]} : vector<32x4x16xbf16> to vector<32x3x16xbf16>
    %c224 = arith.constant 224 : index
    %c0_72 = arith.constant 0 : index
    %c0_73 = arith.constant 0 : index
    %79 = vector.load %arg10[%c224, %c0_72, %c0_73] : memref<288x4x16xbf16, #tpu.memory_space<vmem>>, vector<32x3x16xbf16>
    tpu.vector_store %arg10[%c224, %c0_72, %c0_73], %78 {strides = array<i32>} : memref<288x4x16xbf16, #tpu.memory_space<vmem>>, vector<32x3x16xbf16>,
    %80 = vector.extract_strided_slice %74 {offsets = [0, 0, 0], sizes = [32, 1, 16], strides = [1, 1, 1]} : vector<32x4x16xbf16> to vector<32x1x16xbf16>
    %c224_74 = arith.constant 224 : index
    %c3_75 = arith.constant 3 : index
    %c0_76 = arith.constant 0 : index
    %81 = vector.load %arg10[%c224_74, %c3_75, %c0_76] : memref<288x4x16xbf16, #tpu.memory_space<vmem>>, vector<32x1x16xbf16>
    tpu.vector_store %arg10[%c224_74, %c3_75, %c0_76], %80 {strides = array<i32>} : memref<288x4x16xbf16, #tpu.memory_space<vmem>>, vector<32x1x16xbf16>,
    %82 = vector.extract_strided_slice %65 {offsets = [0, 0, 2], sizes = [32, 4, 16], strides = [1, 1, 1]} : vector<32x4x36xbf16> to vector<32x4x16xbf16>
    %83 = vector.extract_strided_slice %65 {offsets = [0, 0, 20], sizes = [32, 4, 16], strides = [1, 1, 1]} : vector<32x4x36xbf16> to vector<32x4x16xbf16>
    %c64 = arith.constant 64 : index
    %c0_77 = arith.constant 0 : index
    %c0_78 = arith.constant 0 : index
    %84 = vector.load %arg10[%c64, %c0_77, %c0_78] : memref<288x4x16xbf16, #tpu.memory_space<vmem>>, vector<32x4x16xbf16>
    tpu.vector_store %arg10[%c64, %c0_77, %c0_78], %82 {strides = array<i32>} : memref<288x4x16xbf16, #tpu.memory_space<vmem>>, vector<32x4x16xbf16>,
    %c160 = arith.constant 160 : index
    %c0_79 = arith.constant 0 : index
    %c0_80 = arith.constant 0 : index
    %85 = vector.load %arg10[%c160, %c0_79, %c0_80] : memref<288x4x16xbf16, #tpu.memory_space<vmem>>, vector<32x4x16xbf16>
    tpu.vector_store %arg10[%c160, %c0_79, %c0_80], %83 {strides = array<i32>} : memref<288x4x16xbf16, #tpu.memory_space<vmem>>, vector<32x4x16xbf16>,
    %86 = vector.extract_strided_slice %82 {offsets = [0, 1, 0], sizes = [32, 3, 16], strides = [1, 1, 1]} : vector<32x4x16xbf16> to vector<32x3x16xbf16>
    %c256 = arith.constant 256 : index
    %c0_81 = arith.constant 0 : index
    %c0_82 = arith.constant 0 : index
    %87 = vector.load %arg10[%c256, %c0_81, %c0_82] : memref<288x4x16xbf16, #tpu.memory_space<vmem>>, vector<32x3x16xbf16>
    tpu.vector_store %arg10[%c256, %c0_81, %c0_82], %86 {strides = array<i32>} : memref<288x4x16xbf16, #tpu.memory_space<vmem>>, vector<32x3x16xbf16>,
    %88 = vector.extract_strided_slice %82 {offsets = [0, 0, 0], sizes = [32, 1, 16], strides = [1, 1, 1]} : vector<32x4x16xbf16> to vector<32x1x16xbf16>
    %c256_83 = arith.constant 256 : index
    %c3_84 = arith.constant 3 : index
    %c0_85 = arith.constant 0 : index
    %89 = vector.load %arg10[%c256_83, %c3_84, %c0_85] : memref<288x4x16xbf16, #tpu.memory_space<vmem>>, vector<32x1x16xbf16>
    tpu.vector_store %arg10[%c256_83, %c3_84, %c0_85], %88 {strides = array<i32>} : memref<288x4x16xbf16, #tpu.memory_space<vmem>>, vector<32x1x16xbf16>,
    %c0_86 = arith.constant 0 : index
    %c0_87 = arith.constant 0 : index
    %90 = vector.load %arg6[%c0_86, %c0_87] : memref<4x288xbf16, #tpu.memory_space<vmem>>, vector<4x288xbf16>
    %c0_88 = arith.constant 0 : index
    %c0_89 = arith.constant 0 : index
    %c0_90 = arith.constant 0 : index
    %91 = vector.load %arg10[%c0_88, %c0_89, %c0_90] : memref<288x4x16xbf16, #tpu.memory_space<vmem>>, vector<288x4x16xbf16>
    %92 = vector.shape_cast %91 : vector<288x4x16xbf16> to vector<288x64xbf16>
    %cst_91 = arith.constant dense<0.000000e+00> : vector<4x64xf32>
    %93 = tpu.matmul %90, %92, %cst_91 {dimension_numbers = #tpu.dot_dimension_numbers<[1], [0], [0], [1], [0, 0, 1, 1], [], []>} : vector<4x288xbf16>, vector<288x64xbf16>, vector<4x64xf32> -> vector<4x64xf32>
    %c0_92 = arith.constant 0 : index
    %c0_93 = arith.constant 0 : index
    %94 = vector.load %arg7[%c0_92, %c0_93] : memref<4x1xf32, #tpu.memory_space<vmem>>, vector<4x1xf32>
    %95 = vector.broadcast %94 : vector<4x1xf32> to vector<4x64xf32>
    %96 = arith.addf %93, %95 : vector<4x64xf32>
    %c0_94 = arith.constant 0 : index
    %c0_95 = arith.constant 0 : index
    %c0_96 = arith.constant 0 : index
    %c0_97 = arith.constant 0 : index
    %97 = vector.load %arg8[%c0_94, %c0_95, %c0_96, %c0_97] : memref<1x1x4x64xf32, #tpu.memory_space<vmem>>, vector<1x1x4x64xf32>
    %98 = vector.shape_cast %97 : vector<1x1x4x64xf32> to vector<4x64xf32>
    %99 = vector.shape_cast %96 : vector<4x64xf32> to vector<1x1x4x64xf32>
    tpu.vector_store %arg8[%c0_94, %c0_95, %c0_96, %c0_97], %99 {strides = array<i32>} : memref<1x1x4x64xf32, #tpu.memory_space<vmem>>, vector<1x1x4x64xf32>,
    return
  }
  func.func @transform_0(%arg0: i32, %arg1: i32) -> (i32, i32, i32, i32, i32) {
    %c0_i32 = arith.constant 0 : i32
    %c0_i32_0 = arith.constant 0 : i32
    %c0_i32_1 = arith.constant 0 : i32
    %c0_i32_2 = arith.constant 0 : i32
    return %arg0, %arg1, %c0_i32, %c0_i32_0, %c0_i32_1 : i32, i32, i32, i32, i32
  }
  func.func @transform_1(%arg0: i32, %arg1: i32) -> (i32, i32, i32, i32, i32) {
    %c0_i32 = arith.constant 0 : i32
    %c0_i32_0 = arith.constant 0 : i32
    %c0_i32_1 = arith.constant 0 : i32
    %c0_i32_2 = arith.constant 0 : i32
    return %arg0, %arg1, %c0_i32, %c0_i32_0, %c0_i32_1 : i32, i32, i32, i32, i32
  }
  func.func @transform_2(%arg0: i32, %arg1: i32) -> (i32, i32) {
    %c0_i32 = arith.constant 0 : i32
    %c0_i32_0 = arith.constant 0 : i32
    %c0_i32_1 = arith.constant 0 : i32
    return %c0_i32, %c0_i32_0 : i32, i32
  }
  func.func @transform_3(%arg0: i32, %arg1: i32) -> (i32, i32) {
    %c0_i32 = arith.constant 0 : i32
    %c0_i32_0 = arith.constant 0 : i32
    %c0_i32_1 = arith.constant 0 : i32
    return %c0_i32, %c0_i32_0 : i32, i32
  }
  func.func @transform_4(%arg0: i32, %arg1: i32) -> (i32, i32) {
    %c0_i32 = arith.constant 0 : i32
    %c0_i32_0 = arith.constant 0 : i32
    %c0_i32_1 = arith.constant 0 : i32
    return %c0_i32, %c0_i32_0 : i32, i32
  }
  func.func @transform_5(%arg0: i32, %arg1: i32) -> (i32, i32) {
    %c0_i32 = arith.constant 0 : i32
    %c0_i32_0 = arith.constant 0 : i32
    %c0_i32_1 = arith.constant 0 : i32
    return %c0_i32, %c0_i32_0 : i32, i32
  }
  func.func @transform_6(%arg0: i32, %arg1: i32) -> (i32, i32, i32, i32) {
    %c0_i32 = arith.constant 0 : i32
    %c0_i32_0 = arith.constant 0 : i32
    %c0_i32_1 = arith.constant 0 : i32
    return %arg0, %arg1, %c0_i32, %c0_i32_0 : i32, i32, i32, i32
  }
}

</mosaic_0001>

<llo_original>
// kernel: tpu_custom_call.1
$region0: #{tpu_custom_call.1}
  #allocation0 [shape = 'u32[]', space=smem, size = 0x4, offset = 0x4, fixed_abs, tag = 'smem constant byte address 0x4 - core index']
  #allocation1 [shape = 'u32[144,128]{1,0:T(1,128)}', space=vmem, size = 0x12000, scoped, tag = 'internal scratch']
  #allocation2 [shape = 'bf16[18,8,18]{2,1,0:T(8,128)(2,1)}', space=vmem, size = 0x9000, scoped, tag = 'scratch operand']
  #allocation3 [shape = 'bf16[288,4,16]{2,1,0:T(4,128)(2,1)}', space=vmem, size = 0x48000, scoped, tag = 'scratch operand']
  %s0 = inlined_call_operand.vmem [shape: bf16[2,1,2,9,20], index: 0, kind: input, shape index: {}]
  %s1 = inlined_call_operand.vmem [shape: bf16[2,1,2,8,20], index: 1, kind: input, shape index: {}]
  %s2 = inlined_call_operand.vmem [shape: bf16[32,18], index: 2, kind: input, shape index: {}]
  %s3 = inlined_call_operand.vmem [shape: f32[32,1], index: 3, kind: input, shape index: {}]
  %s4 = inlined_call_operand.vmem [shape: bf16[4,288], index: 4, kind: input, shape index: {}]
  %s5 = inlined_call_operand.vmem [shape: f32[4,1], index: 5, kind: input, shape index: {}]
  %s6 = inlined_call_operand.hbm [shape: f32[2,1,4,64], index: 6, kind: output, shape index: {}]
  %s7 = sld [smem:[#allocation0]]
  $region57: #{tpu_custom_call.1} parent=0
    _
  %s9 = ssub.s32 1, %s7
  %s10 = scalar_select 0, %s9, %s7
  $region1: #{tpu_custom_call.1} parent=0
    #allocation4 [shape = 'u8[4096]{0}', space=vmem, size = 0x1000, scoped, tag = 'output window, operand 0']
    #allocation5 [shape = 's32[2]{0}', space=sflag, size = 0x8, scoped, tag = 'scoped memory for tpu_custom_call.1']
    %11 = vsyncpa [#allocation5], 0
    %s12 = scalar_lea.sflag [#allocation5], 1
    %13 = vsyncpa %s12, 0
    loop: start=0, step=1, limit=4
    $region2: #{tpu_custom_call.1} parent=1 // loop_pre_header
      _
    $region3: #{tpu_custom_call.1} parent=1 // loop_header
      %s15 = sphi 0, %s19
      %p16 = scmp.ge.s32.totalorder %s15, 4
      %s22 = sphi 0, %s34
      %s23 = sphi 0, %s30
      %s24 = sphi 0, %s22
      %s25 = sphi 0, %s23
      %s26 = sphi 0, %s24
      %s27 = sphi 0, %s25
      %s39 = sphi 0, %s41
      %s42 = sphi 0, %s39
      %s43 = sphi 0, %s42
      %s59 = sphi 0, %s43
      %s67 = sphi 0, %s69
      %s70 = sphi 0, %s67
      %s71 = sphi 0, %s70
      %s87 = sphi 0, %s71
      %s91 = sphi 0, %s91
      %s93 = sphi 0, %s91
      %s94 = sphi 0, %s93
      %s108 = sphi 0, %s94
      %s112 = sphi 0, %s112
      %s114 = sphi 0, %s112
      %s115 = sphi 0, %s114
      %s129 = sphi 0, %s115
      %s133 = sphi 0, %s133
      %s135 = sphi 0, %s133
      %s136 = sphi 0, %s135
      %s150 = sphi 0, %s136
      %s154 = sphi 0, %s154
      %s156 = sphi 0, %s154
      %s157 = sphi 0, %s156
      %s171 = sphi 0, %s157
      %s179 = sphi 0, %s181
      %s182 = sphi 0, %s179
      %s183 = sphi 0, %s182
      %s199 = sphi 0, %s183
    $region4: #{tpu_custom_call.1} parent=1 // loop_header_branch
      %18 = sbr.rel (%p16) target = $region8
    $region5: #{tpu_custom_call.1} parent=1 // loop_body
      %s20 = ssub.s32 %s15, 1
      %s21 = ssub.s32 %s15, 2
      %s28 = sadd.s32 1, %s23
      %p29 = scmp.ge.s32.totalorder %s28, 1
      %s30 = scalar_select %p29, 0, %s28
      %s31 = sadd.s32 1, %s22
      %s32 = scalar_select %p29, %s31, %s22
      %p33 = scmp.ge.s32.totalorder %s32, 2
      %s34 = scalar_select %p33, 0, %s32
      %s35 = ssub.s32 %s22, %s34
      %s36 = ssub.s32 %s23, %s30
      %s37 = sor.u32 %s35, %s36
      %p38 = scmp.eq.s32.totalorder %s37, 0
      %s40 = sadd.s32 %s39, 1
      %s41 = scalar_select %p38, %s39, %s40
      %p44 = pneg %p38
      %p45 = scmp.eq.s32.totalorder %s15, 1
      %p46 = por %p44, %p45
      %p47 = scmp.ne.s32.totalorder %s39, %s42
      %p48 = scmp.eq.s32.totalorder %s15, 0
      %p49 = por %p47, %p48
      %p50 = scmp.ne.s32.totalorder %s39, %s42
      %p51 = scmp.eq.s32.totalorder %s20, 1
      %p52 = por %p50, %p51
      %p53 = scmp.ne.s32.totalorder %s42, %s43
      %p54 = scmp.eq.s32.totalorder %s20, 0
      %p55 = por %p53, %p54
      %p56 = scmp.ne.s32.totalorder %s42, %s43
      %p57 = scmp.eq.s32.totalorder %s21, 1
      %p58 = por %p56, %p57
      %p60 = scmp.ne.s32.totalorder %s43, %s59
      %p61 = scmp.eq.s32.totalorder %s21, 0
      %p62 = por %p60, %p61
      %s63 = ssub.s32 %s22, %s34
      %s64 = ssub.s32 %s23, %s30
      %s65 = sor.u32 %s63, %s64
      %p66 = scmp.eq.s32.totalorder %s65, 0
      %s68 = sadd.s32 %s67, 1
      %s69 = scalar_select %p66, %s67, %s68
      %p72 = pneg %p66
      %p73 = scmp.eq.s32.totalorder %s15, 1
      %p74 = por %p72, %p73
      %p75 = scmp.ne.s32.totalorder %s67, %s70
      %p76 = scmp.eq.s32.totalorder %s15, 0
      %p77 = por %p75, %p76
      %p78 = scmp.ne.s32.totalorder %s67, %s70
      %p79 = scmp.eq.s32.totalorder %s20, 1
      %p80 = por %p78, %p79
      %p81 = scmp.ne.s32.totalorder %s70, %s71
      %p82 = scmp.eq.s32.totalorder %s20, 0
      %p83 = por %p81, %p82
      %p84 = scmp.ne.s32.totalorder %s70, %s71
      %p85 = scmp.eq.s32.totalorder %s21, 1
      %p86 = por %p84, %p85
      %p88 = scmp.ne.s32.totalorder %s71, %s87
      %p89 = scmp.eq.s32.totalorder %s21, 0
      %p90 = por %p88, %p89
      %s92 = sadd.s32 %s91, 1
      %p95 = scmp.eq.s32.totalorder %s15, 1
      %p96 = scmp.ne.s32.totalorder %s91, %s93
      %p97 = scmp.eq.s32.totalorder %s15, 0
      %p98 = por %p96, %p97
      %p99 = scmp.ne.s32.totalorder %s91, %s93
      %p100 = scmp.eq.s32.totalorder %s20, 1
      %p101 = por %p99, %p100
      %p102 = scmp.ne.s32.totalorder %s93, %s94
      %p103 = scmp.eq.s32.totalorder %s20, 0
      %p104 = por %p102, %p103
      %p105 = scmp.ne.s32.totalorder %s93, %s94
      %p106 = scmp.eq.s32.totalorder %s21, 1
      %p107 = por %p105, %p106
      %p109 = scmp.ne.s32.totalorder %s94, %s108
      %p110 = scmp.eq.s32.totalorder %s21, 0
      %p111 = por %p109, %p110
      %s113 = sadd.s32 %s112, 1
      %p116 = scmp.eq.s32.totalorder %s15, 1
      %p117 = scmp.ne.s32.totalorder %s112, %s114
      %p118 = scmp.eq.s32.totalorder %s15, 0
      %p119 = por %p117, %p118
      %p120 = scmp.ne.s32.totalorder %s112, %s114
      %p121 = scmp.eq.s32.totalorder %s20, 1
      %p122 = por %p120, %p121
      %p123 = scmp.ne.s32.totalorder %s114, %s115
      %p124 = scmp.eq.s32.totalorder %s20, 0
      %p125 = por %p123, %p124
      %p126 = scmp.ne.s32.totalorder %s114, %s115
      %p127 = scmp.eq.s32.totalorder %s21, 1
      %p128 = por %p126, %p127
      %p130 = scmp.ne.s32.totalorder %s115, %s129
      %p131 = scmp.eq.s32.totalorder %s21, 0
      %p132 = por %p130, %p131
      %s134 = sadd.s32 %s133, 1
      %p137 = scmp.eq.s32.totalorder %s15, 1
      %p138 = scmp.ne.s32.totalorder %s133, %s135
      %p139 = scmp.eq.s32.totalorder %s15, 0
      %p140 = por %p138, %p139
      %p141 = scmp.ne.s32.totalorder %s133, %s135
      %p142 = scmp.eq.s32.totalorder %s20, 1
      %p143 = por %p141, %p142
      %p144 = scmp.ne.s32.totalorder %s135, %s136
      %p145 = scmp.eq.s32.totalorder %s20, 0
      %p146 = por %p144, %p145
      %p147 = scmp.ne.s32.totalorder %s135, %s136
      %p148 = scmp.eq.s32.totalorder %s21, 1
      %p149 = por %p147, %p148
      %p151 = scmp.ne.s32.totalorder %s136, %s150
      %p152 = scmp.eq.s32.totalorder %s21, 0
      %p153 = por %p151, %p152
      %s155 = sadd.s32 %s154, 1
      %p158 = scmp.eq.s32.totalorder %s15, 1
      %p159 = scmp.ne.s32.totalorder %s154, %s156
      %p160 = scmp.eq.s32.totalorder %s15, 0
      %p161 = por %p159, %p160
      %p162 = scmp.ne.s32.totalorder %s154, %s156
      %p163 = scmp.eq.s32.totalorder %s20, 1
      %p164 = por %p162, %p163
      %p165 = scmp.ne.s32.totalorder %s156, %s157
      %p166 = scmp.eq.s32.totalorder %s20, 0
      %p167 = por %p165, %p166
      %p168 = scmp.ne.s32.totalorder %s156, %s157
      %p169 = scmp.eq.s32.totalorder %s21, 1
      %p170 = por %p168, %p169
      %p172 = scmp.ne.s32.totalorder %s157, %s171
      %p173 = scmp.eq.s32.totalorder %s21, 0
      %p174 = por %p172, %p173
      %s175 = ssub.s32 %s22, %s34
      %s176 = ssub.s32 %s23, %s30
      %s177 = sor.u32 %s175, %s176
      %p178 = scmp.eq.s32.totalorder %s177, 0
      %s180 = sadd.s32 %s179, 1
      %s181 = scalar_select %p178, %s179, %s180
      %p184 = pneg %p178
      %p185 = scmp.eq.s32.totalorder %s15, 1
      %p186 = por %p184, %p185
      %p187 = scmp.ne.s32.totalorder %s179, %s182
      %p188 = scmp.eq.s32.totalorder %s15, 0
      %p189 = por %p187, %p188
      %p190 = scmp.ne.s32.totalorder %s179, %s182
      %p191 = scmp.eq.s32.totalorder %s20, 1
      %p192 = por %p190, %p191
      %p193 = scmp.ne.s32.totalorder %s182, %s183
      %p194 = scmp.eq.s32.totalorder %s20, 0
      %p195 = por %p193, %p194
      %p196 = scmp.ne.s32.totalorder %s182, %s183
      %p197 = scmp.eq.s32.totalorder %s21, 1
      %p198 = por %p196, %p197
      %p200 = scmp.ne.s32.totalorder %s183, %s199
      %p201 = scmp.eq.s32.totalorder %s21, 0
      %p202 = por %p200, %p201
      %p203 = scmp.le.s32.totalorder 1, %s15
      %p204 = scmp.lt.s32.totalorder %s15, 3
      %p205 = pnand %p203, %p204
      %p206 = pneg %p205
      // Predicated region
      $region9: #{tpu_custom_call.1} parent=5 // pred_check
        _
      $region10: #{tpu_custom_call.1} parent=5 // pred_check_branch
        %208 = sbr.rel (%p205) target = $region12
      $region11: #{tpu_custom_call.1} parent=5 // pred_region
        %s209 = ssub.s32 %s15, 1
        // Predicated region
        $region13: #{tpu_custom_call.1} parent=11 // pred_check
          %p210 = pneg %p104
        $region14: #{tpu_custom_call.1} parent=11 // pred_check_branch
          %212 = sbr.rel (%p210) target = $region16
        $region15: #{tpu_custom_call.1} parent=11 // pred_region
          _
        $region16: #{tpu_custom_call.1} parent=11 // pred_fallthru
          _
        // Predicated region
        $region17: #{tpu_custom_call.1} parent=11 // pred_check
          %p213 = pneg %p125
        $region18: #{tpu_custom_call.1} parent=11 // pred_check_branch
          %215 = sbr.rel (%p213) target = $region20
        $region19: #{tpu_custom_call.1} parent=11 // pred_region
          _
        $region20: #{tpu_custom_call.1} parent=11 // pred_fallthru
          _
        // Predicated region
        $region21: #{tpu_custom_call.1} parent=11 // pred_check
          %p216 = pneg %p146
        $region22: #{tpu_custom_call.1} parent=11 // pred_check_branch
          %218 = sbr.rel (%p216) target = $region24
        $region23: #{tpu_custom_call.1} parent=11 // pred_region
          _
        $region24: #{tpu_custom_call.1} parent=11 // pred_fallthru
          _
        // Predicated region
        $region25: #{tpu_custom_call.1} parent=11 // pred_check
          %p219 = pneg %p167
        $region26: #{tpu_custom_call.1} parent=11 // pred_check_branch
          %221 = sbr.rel (%p219) target = $region28
        $region27: #{tpu_custom_call.1} parent=11 // pred_region
          _
        $region28: #{tpu_custom_call.1} parent=11 // pred_fallthru
          _
      $region12: #{tpu_custom_call.1} parent=5 // pred_fallthru
        _
      %p222 = scmp.lt.s32.totalorder %s15, 2
      // Predicated region
      $region29: #{tpu_custom_call.1} parent=5 // pred_check
        %p223 = pneg %p222
      $region30: #{tpu_custom_call.1} parent=5 // pred_check_branch
        %225 = sbr.rel (%p223) target = $region32
      $region31: #{tpu_custom_call.1} parent=5 // pred_region
        // Predicated region
        $region33: #{tpu_custom_call.1} parent=31 // pred_check
          %p226 = pneg %p49
        $region34: #{tpu_custom_call.1} parent=31 // pred_check_branch
          %228 = sbr.rel (%p226) target = $region36
        $region35: #{tpu_custom_call.1} parent=31 // pred_region
          %p229 = scmp.lt.s32.totalorder %s22, 1
          %s230 = scalar_select %p229, %s22, 1
          %p231 = scmp.lt.s32.totalorder %s23, 0
          %s232 = scalar_select %p231, %s23, 0
          %s233 = smul.addr %s232, 4
          %s234 = smul.addr %s230, 4
          %s235 = sadd.s32 %s233, %s234
          %s236 = smul.addr %s235, 4
          %s237 = scalar_lea.vmem %s0, %s236
        $region36: #{tpu_custom_call.1} parent=31 // pred_fallthru
          _
        // Predicated region
        $region37: #{tpu_custom_call.1} parent=31 // pred_check
          %p238 = pneg %p77
        $region38: #{tpu_custom_call.1} parent=31 // pred_check_branch
          %240 = sbr.rel (%p238) target = $region40
        $region39: #{tpu_custom_call.1} parent=31 // pred_region
          %p241 = scmp.lt.s32.totalorder %s22, 1
          %s242 = scalar_select %p241, %s22, 1
          %p243 = scmp.lt.s32.totalorder %s23, 0
          %s244 = scalar_select %p243, %s23, 0
          %s245 = smul.addr %s244, 2
          %s246 = smul.addr %s242, 2
          %s247 = sadd.s32 %s245, %s246
          %s248 = smul.addr %s247, 4
          %s249 = scalar_lea.vmem %s1, %s248
        $region40: #{tpu_custom_call.1} parent=31 // pred_fallthru
          _
      $region32: #{tpu_custom_call.1} parent=5 // pred_fallthru
        _
      %p250 = scmp.le.s32.totalorder 1, %s15
      %p251 = scmp.lt.s32.totalorder %s15, 3
      %p252 = pnand %p250, %p251
      %p253 = pneg %p252
      // Predicated region
      $region41: #{tpu_custom_call.1} parent=5 // pred_check
        _
      $region42: #{tpu_custom_call.1} parent=5 // pred_check_branch
        %255 = sbr.rel (%p252) target = $region44
      $region43: #{tpu_custom_call.1} parent=5 // pred_region
        %s256 = ssub.s32 %s15, 1
        %p257 = scmp.lt.s32.totalorder %s24, 1
        %s258 = scalar_select %p257, %s24, 1
        %p259 = scmp.lt.s32.totalorder %s25, 0
        %s260 = scalar_select %p259, %s25, 0
        %s261 = smul.addr %s260, 4
        %s262 = smul.addr %s258, 4
        %s263 = sadd.s32 %s261, %s262
        %s264 = smul.addr %s263, 4
        %s265 = scalar_lea.vmem %s0, %s264
        %p266 = pneg %p55
        %p267 = pneg %p52
        %p268 = scmp.lt.s32.totalorder %s24, 1
        %s269 = scalar_select %p268, %s24, 1
        %p270 = scmp.lt.s32.totalorder %s25, 0
        %s271 = scalar_select %p270, %s25, 0
        %s272 = smul.addr %s271, 2
        %s273 = smul.addr %s269, 2
        %s274 = sadd.s32 %s272, %s273
        %s275 = smul.addr %s274, 4
        %s276 = scalar_lea.vmem %s1, %s275
        %p277 = pneg %p83
        %p278 = pneg %p80
        %p279 = pneg %p104
        %p280 = pneg %p101
        %p281 = pneg %p125
        %p282 = pneg %p122
        %p283 = pneg %p146
        %p284 = pneg %p143
        %p285 = pneg %p167
        %p286 = pneg %p164
        %p287 = pneg %p195
        %p288 = pneg %p192
        %s289 = sand.u32 %s182, 1
        %s290 = scalar_lea.sflag [#allocation5], %s289
        %s291 = sand.u32 %s182, 1
        %s292 = smul.addr %s291, 4
        %s293 = scalar_lea.vmem [#allocation4], %s292
        %p294 = scmp.lt.s32.totalorder %s24, 1
        %s295 = scalar_select %p294, %s24, 1
        %p296 = scmp.lt.s32.totalorder %s25, 0
        %s297 = scalar_select %p296, %s25, 0
        %s298 = smul.addr %s297, 4
        %s299 = smul.addr %s295, 4
        %s300 = sadd.s32 %s298, %s299
        %s301 = smul.addr %s300, 4
        %s302 = scalar_lea.vmem %s0, %s301
        %p303 = scmp.lt.s32.totalorder %s24, 1
        %s304 = scalar_select %p303, %s24, 1
        %p305 = scmp.lt.s32.totalorder %s25, 0
        %s306 = scalar_select %p305, %s25, 0
        %s307 = smul.addr %s306, 2
        %s308 = smul.addr %s304, 2
        %s309 = sadd.s32 %s307, %s308
        %s310 = smul.addr %s309, 4
        %s311 = scalar_lea.vmem %s1, %s310
        %v313 = vld [vmem:[%s302] sm:$0xf]
        %v314 = vld [vmem:[%s302 + $0x4] sm:$0x1]
        %v315 = vld [vmem:[%s302 + $0x8] sm:$0xf]
        %v316 = vld [vmem:[%s302 + $0xc] sm:$0x1]
        %v317 = vld [vmem:[%s311] sm:$0xf]
        %v318 = vld [vmem:[%s311 + $0x4] sm:$0xf]
        %vm319 = vcmask 142336
        %320 = vst.msk [vmem:[#allocation2] sm:$0xf] %vm319, %v313
        %321 = vst.msk [vmem:[#allocation2 + $0x4] sm:$0xf] %vm319, %v315
        %s322 = scalar_lea.vmem [#allocation2], 24
        %323 = vst.msk [vmem:[%s322] sm:$0xf] %vm319, %v317
        %324 = vst.msk [vmem:[%s322 + $0x4] sm:$0xf] %vm319, %v318
        %vm325 = vsmask.f32 3328
        %vm326 = vsmask.f32 7440
        %vm327 = vmor %vm325, %vm326
        %v329 = vshrl.u32 %v313, 16
        %v331 = vrot.slane %v329, 4
        %v332 = vshll.u32 %v313, 16
        %v334 = vrot.slane %v332, 5
        %v335 = vor.u32 %v331, %v334
        %v336 = vrot.slane %v335, 4
        %v338 = vshll.u32 %v314, 16
        %v340 = vrot.slane %v338, 5
        %v341 = vsel %vm327, %v336, %v340
        %v343 = vshrl.u32 %v315, 16
        %v345 = vrot.slane %v343, 4
        %v346 = vshll.u32 %v315, 16
        %v348 = vrot.slane %v346, 5
        %v349 = vor.u32 %v345, %v348
        %v350 = vrot.slane %v349, 4
        %v352 = vshll.u32 %v316, 16
        %v354 = vrot.slane %v352, 5
        %v355 = vsel %vm327, %v350, %v354
        %s358 = scalar_lea.vmem [#allocation2], 48
        %359 = vst.msk [vmem:[%s358] sm:$0xf] %vm319, %v341
        %360 = vst.msk [vmem:[%s358 + $0x4] sm:$0xf] %vm319, %v355
        %v361 = vld [vmem:[%s302] sm:$0xf]
        %v362 = vld [vmem:[%s302 + $0x4] sm:$0x1]
        %v363 = vld [vmem:[%s302 + $0x8] sm:$0xf]
        %v364 = vld [vmem:[%s302 + $0xc] sm:$0x1]
        %v365 = vld [vmem:[%s311] sm:$0xf]
        %v366 = vld [vmem:[%s311 + $0x4] sm:$0xf]
        %369 = vrot.lane.b32.xlu0 %v361, 127
        %v370 = vpop.permute.xlu0 %369
        %371 = vrot.lane.b32.xlu0 %v363, 127
        %v372 = vpop.permute.xlu0 %371
        %s375 = scalar_lea.vmem [#allocation2], 8
        %376 = vst.msk [vmem:[%s375] sm:$0xf] %vm319, %v370
        %377 = vst.msk [vmem:[%s375 + $0x4] sm:$0xf] %vm319, %v372
        %380 = vrot.lane.b32.xlu0 %v365, 127
        %v381 = vpop.permute.xlu0 %380
        %382 = vrot.lane.b32.xlu0 %v366, 127
        %v383 = vpop.permute.xlu0 %382
        %s386 = scalar_lea.vmem [#allocation2], 32
        %387 = vst.msk [vmem:[%s386] sm:$0xf] %vm319, %v381
        %388 = vst.msk [vmem:[%s386 + $0x4] sm:$0xf] %vm319, %v383
        %v390 = vshrl.u32 %v361, 16
        %v392 = vrot.slane %v390, 4
        %v393 = vshll.u32 %v361, 16
        %v395 = vrot.slane %v393, 5
        %v396 = vor.u32 %v392, %v395
        %v397 = vrot.slane %v396, 4
        %v399 = vshll.u32 %v362, 16
        %v401 = vrot.slane %v399, 5
        %v402 = vsel %vm327, %v397, %v401
        %v404 = vshrl.u32 %v363, 16
        %v406 = vrot.slane %v404, 4
        %v407 = vshll.u32 %v363, 16
        %v409 = vrot.slane %v407, 5
        %v410 = vor.u32 %v406, %v409
        %v411 = vrot.slane %v410, 4
        %v413 = vshll.u32 %v364, 16
        %v415 = vrot.slane %v413, 5
        %v416 = vsel %vm327, %v411, %v415
        %417 = vrot.lane.b32.xlu0 %v402, 127
        %v418 = vpop.permute.xlu0 %417
        %419 = vrot.lane.b32.xlu0 %v416, 127
        %v420 = vpop.permute.xlu0 %419
        %s423 = scalar_lea.vmem [#allocation2], 56
        %424 = vst.msk [vmem:[%s423] sm:$0xf] %vm319, %v418
        %425 = vst.msk [vmem:[%s423 + $0x4] sm:$0xf] %vm319, %v420
        %v426 = vld [vmem:[%s302] sm:$0xf]
        %v427 = vld [vmem:[%s302 + $0x4] sm:$0x1]
        %v428 = vld [vmem:[%s302 + $0x8] sm:$0xf]
        %v429 = vld [vmem:[%s302 + $0xc] sm:$0x1]
        %v430 = vld [vmem:[%s311] sm:$0xf]
        %v431 = vld [vmem:[%s311 + $0x4] sm:$0xf]
        %434 = vrot.lane.b32.xlu0 %v426, 126
        %v435 = vpop.permute.xlu0 %434
        %436 = vrot.lane.b32.xlu0 %v428, 126
        %v437 = vpop.permute.xlu0 %436
        %s440 = scalar_lea.vmem [#allocation2], 16
        %441 = vst.msk [vmem:[%s440] sm:$0xf] %vm319, %v435
        %442 = vst.msk [vmem:[%s440 + $0x4] sm:$0xf] %vm319, %v437
        %445 = vrot.lane.b32.xlu0 %v430, 126
        %v446 = vpop.permute.xlu0 %445
        %447 = vrot.lane.b32.xlu0 %v431, 126
        %v448 = vpop.permute.xlu0 %447
        %s451 = scalar_lea.vmem [#allocation2], 40
        %452 = vst.msk [vmem:[%s451] sm:$0xf] %vm319, %v446
        %453 = vst.msk [vmem:[%s451 + $0x4] sm:$0xf] %vm319, %v448
        %v455 = vshrl.u32 %v426, 16
        %v457 = vrot.slane %v455, 4
        %v458 = vshll.u32 %v426, 16
        %v460 = vrot.slane %v458, 5
        %v461 = vor.u32 %v457, %v460
        %v462 = vrot.slane %v461, 4
        %v464 = vshll.u32 %v427, 16
        %v466 = vrot.slane %v464, 5
        %v467 = vsel %vm327, %v462, %v466
        %v469 = vshrl.u32 %v428, 16
        %v471 = vrot.slane %v469, 4
        %v472 = vshll.u32 %v428, 16
        %v474 = vrot.slane %v472, 5
        %v475 = vor.u32 %v471, %v474
        %v476 = vrot.slane %v475, 4
        %v478 = vshll.u32 %v429, 16
        %v480 = vrot.slane %v478, 5
        %v481 = vsel %vm327, %v476, %v480
        %482 = vrot.lane.b32.xlu0 %v467, 126
        %v483 = vpop.permute.xlu0 %482
        %484 = vrot.lane.b32.xlu0 %v481, 126
        %v485 = vpop.permute.xlu0 %484
        %s488 = scalar_lea.vmem [#allocation2], 64
        %489 = vst.msk [vmem:[%s488] sm:$0xf] %vm319, %v483
        %490 = vst.msk [vmem:[%s488 + $0x4] sm:$0xf] %vm319, %v485
        %v491 = vld [vmem:[%s2] sm:$0xf]
        %v492 = vld [vmem:[%s2 + $0x4] sm:$0xf]
        %v493 = vld [vmem:[%s2 + $0x8] sm:$0xf]
        %v494 = vld [vmem:[%s2 + $0xc] sm:$0xf]
        %v495 = vld [vmem:[#allocation2] sm:$0xf]
        %v496 = vld [vmem:[#allocation2 + $0x4] sm:$0xf]
        %v497 = vld [vmem:[#allocation2 + $0x8] sm:$0xf]
        %v498 = vld [vmem:[#allocation2 + $0xc] sm:$0xf]
        %v499 = vld [vmem:[#allocation2 + $0x10] sm:$0xf]
        %v500 = vld [vmem:[#allocation2 + $0x14] sm:$0xf]
        %v501 = vld [vmem:[#allocation2 + $0x18] sm:$0xf]
        %v502 = vld [vmem:[#allocation2 + $0x1c] sm:$0xf]
        %v503 = vld [vmem:[#allocation2 + $0x20] sm:$0xf]
        %v504 = vld [vmem:[#allocation2 + $0x24] sm:$0xf]
        %v505 = vld [vmem:[#allocation2 + $0x28] sm:$0xf]
        %v506 = vld [vmem:[#allocation2 + $0x2c] sm:$0xf]
        %v507 = vld [vmem:[#allocation2 + $0x30] sm:$0xf]
        %v508 = vld [vmem:[#allocation2 + $0x34] sm:$0xf]
        %v509 = vld [vmem:[#allocation2 + $0x38] sm:$0xf]
        %v510 = vld [vmem:[#allocation2 + $0x3c] sm:$0xf]
        %v511 = vld [vmem:[#allocation2 + $0x40] sm:$0xf]
        %v512 = vld [vmem:[#allocation2 + $0x44] sm:$0xf]
        %v515 = vpack.i.b16 %v496, %v495
        %v517 = vshrl.u32 %v495, 16
        %v518 = vshrl.u32 %v496, 16
        %v519 = vpack.i.b16 %v518, %v517
        %v523 = vpack.i.b16 %v498, %v497
        %v525 = vshrl.u32 %v497, 16
        %v526 = vshrl.u32 %v498, 16
        %v527 = vpack.i.b16 %v526, %v525
        %v531 = vpack.i.b16 %v500, %v499
        %v533 = vshrl.u32 %v499, 16
        %v534 = vshrl.u32 %v500, 16
        %v535 = vpack.i.b16 %v534, %v533
        %v539 = vpack.i.b16 %v502, %v501
        %v541 = vshrl.u32 %v501, 16
        %v542 = vshrl.u32 %v502, 16
        %v543 = vpack.i.b16 %v542, %v541
        %v547 = vpack.i.b16 %v504, %v503
        %v549 = vshrl.u32 %v503, 16
        %v550 = vshrl.u32 %v504, 16
        %v551 = vpack.i.b16 %v550, %v549
        %v555 = vpack.i.b16 %v506, %v505
        %v557 = vshrl.u32 %v505, 16
        %v558 = vshrl.u32 %v506, 16
        %v559 = vpack.i.b16 %v558, %v557
        %v563 = vpack.i.b16 %v508, %v507
        %v565 = vshrl.u32 %v507, 16
        %v566 = vshrl.u32 %v508, 16
        %v567 = vpack.i.b16 %v566, %v565
        %v571 = vpack.i.b16 %v510, %v509
        %v573 = vshrl.u32 %v509, 16
        %v574 = vshrl.u32 %v510, 16
        %v575 = vpack.i.b16 %v574, %v573
        %v579 = vpack.i.b16 %v512, %v511
        %v580 = vshrl.u32 %v511, 16
        %v581 = vshrl.u32 %v512, 16
        %v582 = vpack.i.b16 %v581, %v580
        %v583 = vcombine.low %v515, %v531
        %v585 = vunpack.c.l.s4 1983009808
        %v586 = vunpack.c.0.s8 %v585
        %v587 = vlaneseq
        %v588 = vshrl.u32 %v587, 7
        %v589 = vsub.s32 %v586, %v588
        %v590 = vrot.slane %v583, %v589
        %v591 = vcombine.low %v523, %v539
        %v593 = vunpack.c.l.s4 1983009808
        %v594 = vunpack.c.0.s8 %v593
        %v595 = vlaneseq
        %v596 = vshrl.u32 %v595, 7
        %v597 = vsub.s32 %v594, %v596
        %v598 = vrot.slane %v591, %v597
        %v599 = vcombine.low %v590, %v598
        %v600 = vcombine.high %v590, %v598
        %v602 = vunpack.c.l.s4 1934713408
        %v603 = vunpack.c.0.s8 %v602
        %v604 = vlaneseq
        %v605 = vshrl.u32 %v604, 7
        %v606 = vsub.s32 %v603, %v605
        %v607 = vrot.slane %v599, %v606
        %v609 = vunpack.c.l.s4 1934713408
        %v610 = vunpack.c.0.s8 %v609
        %v611 = vlaneseq
        %v612 = vshrl.u32 %v611, 7
        %v613 = vsub.s32 %v610, %v612
        %v614 = vrot.slane %v600, %v613
        %v615 = vcombine.high %v607, 0
        %v616 = vcombine.high %v614, 0
        %v617 = vcombine.low %v519, %v535
        %v619 = vunpack.c.l.s4 1983009808
        %v620 = vunpack.c.0.s8 %v619
        %v621 = vlaneseq
        %v622 = vshrl.u32 %v621, 7
        %v623 = vsub.s32 %v620, %v622
        %v624 = vrot.slane %v617, %v623
        %v625 = vcombine.low %v527, %v543
        %v627 = vunpack.c.l.s4 1983009808
        %v628 = vunpack.c.0.s8 %v627
        %v629 = vlaneseq
        %v630 = vshrl.u32 %v629, 7
        %v631 = vsub.s32 %v628, %v630
        %v632 = vrot.slane %v625, %v631
        %v633 = vcombine.low %v624, %v632
        %v634 = vcombine.high %v624, %v632
        %v636 = vunpack.c.l.s4 1934713408
        %v637 = vunpack.c.0.s8 %v636
        %v638 = vlaneseq
        %v639 = vshrl.u32 %v638, 7
        %v640 = vsub.s32 %v637, %v639
        %v641 = vrot.slane %v633, %v640
        %v643 = vunpack.c.l.s4 1934713408
        %v644 = vunpack.c.0.s8 %v643
        %v645 = vlaneseq
        %v646 = vshrl.u32 %v645, 7
        %v647 = vsub.s32 %v644, %v646
        %v648 = vrot.slane %v634, %v647
        %v649 = vcombine.high %v641, 0
        %v650 = vcombine.high %v648, 0
        %v651 = vcombine.low %v547, %v563
        %v653 = vunpack.c.l.s4 1983009808
        %v654 = vunpack.c.0.s8 %v653
        %v655 = vlaneseq
        %v656 = vshrl.u32 %v655, 7
        %v657 = vsub.s32 %v654, %v656
        %v658 = vrot.slane %v651, %v657
        %v659 = vcombine.low %v555, %v571
        %v661 = vunpack.c.l.s4 1983009808
        %v662 = vunpack.c.0.s8 %v661
        %v663 = vlaneseq
        %v664 = vshrl.u32 %v663, 7
        %v665 = vsub.s32 %v662, %v664
        %v666 = vrot.slane %v659, %v665
        %v667 = vcombine.low %v658, %v666
        %v668 = vcombine.high %v658, %v666
        %v670 = vunpack.c.l.s4 1934713408
        %v671 = vunpack.c.0.s8 %v670
        %v672 = vlaneseq
        %v673 = vshrl.u32 %v672, 7
        %v674 = vsub.s32 %v671, %v673
        %v675 = vrot.slane %v667, %v674
        %v677 = vunpack.c.l.s4 1934713408
        %v678 = vunpack.c.0.s8 %v677
        %v679 = vlaneseq
        %v680 = vshrl.u32 %v679, 7
        %v681 = vsub.s32 %v678, %v680
        %v682 = vrot.slane %v668, %v681
        %v683 = vcombine.high %v675, 0
        %v684 = vcombine.high %v682, 0
        %v685 = vcombine.low %v551, %v567
        %v687 = vunpack.c.l.s4 1983009808
        %v688 = vunpack.c.0.s8 %v687
        %v689 = vlaneseq
        %v690 = vshrl.u32 %v689, 7
        %v691 = vsub.s32 %v688, %v690
        %v692 = vrot.slane %v685, %v691
        %v693 = vcombine.low %v559, %v575
        %v695 = vunpack.c.l.s4 1983009808
        %v696 = vunpack.c.0.s8 %v695
        %v697 = vlaneseq
        %v698 = vshrl.u32 %v697, 7
        %v699 = vsub.s32 %v696, %v698
        %v700 = vrot.slane %v693, %v699
        %v701 = vcombine.low %v692, %v700
        %v702 = vcombine.high %v692, %v700
        %v704 = vunpack.c.l.s4 1934713408
        %v705 = vunpack.c.0.s8 %v704
        %v706 = vlaneseq
        %v707 = vshrl.u32 %v706, 7
        %v708 = vsub.s32 %v705, %v707
        %v709 = vrot.slane %v701, %v708
        %v711 = vunpack.c.l.s4 1934713408
        %v712 = vunpack.c.0.s8 %v711
        %v713 = vlaneseq
        %v714 = vshrl.u32 %v713, 7
        %v715 = vsub.s32 %v712, %v714
        %v716 = vrot.slane %v702, %v715
        %v717 = vcombine.high %v709, 0
        %v718 = vcombine.high %v716, 0
        %v721 = vunpack.c.l.s4 1983009808
        %v722 = vunpack.c.0.s8 %v721
        %v723 = vlaneseq
        %v724 = vshrl.u32 %v723, 7
        %v725 = vsub.s32 %v722, %v724
        %v726 = vrot.slane %v579, %v725
        %v727 = vcombine.high %v726, 0
        %v729 = vunpack.c.l.s4 1934713408
        %v730 = vunpack.c.0.s8 %v729
        %v731 = vlaneseq
        %v732 = vshrl.u32 %v731, 7
        %v733 = vsub.s32 %v730, %v732
        %v734 = vrot.slane %v726, %v733
        %v736 = vunpack.c.l.s4 1934713408
        %v737 = vunpack.c.0.s8 %v736
        %v738 = vlaneseq
        %v739 = vshrl.u32 %v738, 7
        %v740 = vsub.s32 %v737, %v739
        %v741 = vrot.slane %v727, %v740
        %v742 = vcombine.high %v734, 0
        %v743 = vcombine.high %v741, 0
        %v746 = vunpack.c.l.s4 1983009808
        %v747 = vunpack.c.0.s8 %v746
        %v748 = vlaneseq
        %v749 = vshrl.u32 %v748, 7
        %v750 = vsub.s32 %v747, %v749
        %v751 = vrot.slane %v582, %v750
        %v752 = vcombine.high %v751, 0
        %v754 = vunpack.c.l.s4 1934713408
        %v755 = vunpack.c.0.s8 %v754
        %v756 = vlaneseq
        %v757 = vshrl.u32 %v756, 7
        %v758 = vsub.s32 %v755, %v757
        %v759 = vrot.slane %v751, %v758
        %v761 = vunpack.c.l.s4 1934713408
        %v762 = vunpack.c.0.s8 %v761
        %v763 = vlaneseq
        %v764 = vshrl.u32 %v763, 7
        %v765 = vsub.s32 %v762, %v764
        %v766 = vrot.slane %v752, %v765
        %v767 = vcombine.high %v759, 0
        %v768 = vcombine.high %v766, 0
        %v772 = vunpack.c.l.b16 %v607
        %v773 = vunpack.c.l.b16 %v675
        %v774 = vunpack.c.l.b16 %v734
        %v775 = vpack.c.b16 %v773, %v772
        %v776 = vpack.c.b16 %v774, %v774
        %v780 = vunpack.c.l.b16 %v641
        %v781 = vunpack.c.l.b16 %v709
        %v782 = vunpack.c.l.b16 %v759
        %v783 = vpack.c.b16 %v781, %v780
        %v784 = vpack.c.b16 %v782, %v782
        %785 = vrot.lane.b32.xlu0 %v783, 18
        %v786 = vpop.permute.xlu0 %785
        %787 = vrot.lane.b32.xlu0 %v784, 18
        %v788 = vpop.permute.xlu0 %787
        %v792 = vunpack.c.l.b16 %v615
        %v793 = vunpack.c.l.b16 %v683
        %v794 = vunpack.c.l.b16 %v742
        %v795 = vpack.c.b16 %v793, %v792
        %v796 = vpack.c.b16 %v794, %v794
        %797 = vrot.lane.b32.xlu0 %v795, 36
        %v798 = vpop.permute.xlu0 %797
        %799 = vrot.lane.b32.xlu0 %v796, 36
        %v800 = vpop.permute.xlu0 %799
        %v804 = vunpack.c.l.b16 %v649
        %v805 = vunpack.c.l.b16 %v717
        %v806 = vunpack.c.l.b16 %v767
        %v807 = vpack.c.b16 %v805, %v804
        %v808 = vpack.c.b16 %v806, %v806
        %809 = vrot.lane.b32.xlu0 %v807, 54
        %v810 = vpop.permute.xlu0 %809
        %811 = vrot.lane.b32.xlu0 %v808, 54
        %v812 = vpop.permute.xlu0 %811
        %v816 = vunpack.c.l.b16 %v614
        %v817 = vunpack.c.l.b16 %v682
        %v818 = vunpack.c.l.b16 %v741
        %v819 = vpack.c.b16 %v817, %v816
        %v820 = vpack.c.b16 %v818, %v818
        %821 = vrot.lane.b32.xlu0 %v819, 72
        %v822 = vpop.permute.xlu0 %821
        %823 = vrot.lane.b32.xlu0 %v820, 72
        %v824 = vpop.permute.xlu0 %823
        %v828 = vunpack.c.l.b16 %v648
        %v829 = vunpack.c.l.b16 %v716
        %v830 = vunpack.c.l.b16 %v766
        %v831 = vpack.c.b16 %v829, %v828
        %v832 = vpack.c.b16 %v830, %v830
        %833 = vrot.lane.b32.xlu0 %v831, 90
        %v834 = vpop.permute.xlu0 %833
        %835 = vrot.lane.b32.xlu0 %v832, 90
        %v836 = vpop.permute.xlu0 %835
        %v840 = vunpack.c.l.b16 %v616
        %v841 = vunpack.c.l.b16 %v684
        %v842 = vunpack.c.l.b16 %v743
        %v843 = vpack.c.b16 %v841, %v840
        %v844 = vpack.c.b16 %v842, %v842
        %845 = vrot.lane.b32.xlu0 %v843, 108
        %v846 = vpop.permute.xlu0 %845
        %847 = vrot.lane.b32.xlu0 %v844, 108
        %v848 = vpop.permute.xlu0 %847
        %v852 = vunpack.c.l.b16 %v650
        %v853 = vunpack.c.l.b16 %v718
        %v854 = vunpack.c.l.b16 %v768
        %v855 = vpack.c.b16 %v853, %v852
        %v856 = vpack.c.b16 %v854, %v854
        %857 = vrot.lane.b32.xlu0 %v855, 126
        %v858 = vpop.permute.xlu0 %857
        %859 = vrot.lane.b32.xlu0 %v856, 126
        %v860 = vpop.permute.xlu0 %859
        %vm862 = vcmask 146432
        %v865 = vsel %vm862, %v775, %v786
        %v868 = vsel %vm862, %v776, %v788
        %vm869 = vcmask 293888
        %v871 = vsel %vm869, %v865, %v798
        %v873 = vsel %vm869, %v868, %v800
        %vm874 = vcmask 441344
        %v876 = vsel %vm874, %v871, %v810
        %v878 = vsel %vm874, %v873, %v812
        %vm879 = vcmask 588800
        %v881 = vsel %vm879, %v876, %v822
        %v883 = vsel %vm879, %v878, %v824
        %vm884 = vcmask 736256
        %v886 = vsel %vm884, %v881, %v834
        %v888 = vsel %vm884, %v883, %v836
        %vm889 = vcmask 883712
        %v891 = vsel %vm889, %v886, %v846
        %v893 = vsel %vm889, %v888, %v848
        %vm894 = vcmask 1031168
        %v896 = vsel %vm894, %v891, %v858
        %v899 = vsel %vm894, %v893, %v860
        %v900 = vld [vmem:[%s3] sm:$0xff]
        %v901 = vld [vmem:[%s3 + $0x8] sm:$0xff]
        %v902 = vld [vmem:[%s3 + $0x10] sm:$0xff]
        %v903 = vld [vmem:[%s3 + $0x18] sm:$0xff]
        %905 = vset.pattern.permute.xlu0 0
        %906 = vperm.xlu0 %905, %v900
        %v907 = vpop.permute.xlu0 %906
        %910 = vset.pattern.permute.xlu0 0
        %911 = vperm.xlu0 %910, %v901
        %v912 = vpop.permute.xlu0 %911
        %915 = vset.pattern.permute.xlu0 0
        %916 = vperm.xlu0 %915, %v902
        %v917 = vpop.permute.xlu0 %916
        %920 = vset.pattern.permute.xlu0 0
        %921 = vperm.xlu0 %920, %v903
        %v922 = vpop.permute.xlu0 %921
        %v928 = vunpack.c.l.b16 %v491
        %v929 = vunpack.c.l.b16 %v492
        %v930 = vunpack.c.l.b16 %v493
        %v931 = vunpack.c.l.b16 %v494
        %v932 = vpack.c.b16 %v929, %v928
        %v933 = vpack.c.b16 %v931, %v930
        %v935 = vsel %vm862, %v932, 0
        %v938 = vsel %vm862, %v933, 0
        %vm940 = vcmask 1040384
        %v941 = vsel %vm940, %v899, 0
        %v943 = vsel %vm940, %v860, 0
        %945 = vmatprep.subr.bf16.mxu0 %v858
        %946 = vmatpush1.bf16.msra.mxu0 %v896
        %947 = vmatprep.subr.bf16.mxu0 %v943
        %948 = vmatpush1.bf16.msra.mxu0 %v941
        %949 = vmatprep.subr.bf16.mxu0 0
        %950 = vmatpush1.bf16.msra.mxu0 0
        %951 = vmatprep.subr.bf16.mxu0 0
        %952 = vmatpush1.bf16.msra.mxu0 0
        %953 = vmatprep.subr.bf16.mxu0 0
        %954 = vmatpush1.bf16.msra.mxu0 0
        %955 = vmatprep.subr.bf16.mxu0 0
        %956 = vmatpush1.bf16.msra.mxu0 0
        %957 = vmatprep.subr.bf16.mxu0 0
        %958 = vmatpush1.bf16.msra.mxu0 0
        %959 = vmatprep.subr.bf16.mxu0 0
        %960 = vmatpush1.bf16.msra.mxu0 0
        %961 = vmatprep.subr.bf16.mxu0 0
        %962 = vmatpush1.bf16.msra.mxu0 0
        %963 = vmatprep.subr.bf16.mxu0 0
        %964 = vmatpush1.bf16.msra.mxu0 0
        %965 = vmatprep.subr.bf16.mxu0 0
        %966 = vmatpush1.bf16.msra.mxu0 0
        %967 = vmatprep.subr.bf16.mxu0 0
        %968 = vmatpush1.bf16.msra.mxu0 0
        %969 = vmatprep.subr.bf16.mxu0 0
        %970 = vmatpush1.bf16.msra.mxu0 0
        %971 = vmatprep.subr.bf16.mxu0 0
        %972 = vmatpush1.bf16.msra.mxu0 0
        %973 = vmatprep.subr.bf16.mxu0 0
        %974 = vmatpush1.bf16.msra.mxu0 0
        %975 = vmatprep.subr.bf16.mxu0 0
        %976 = vmatpush1.bf16.msra.mxu0 0
        %977 = vmatprep.mubr.bf16.mxu0 0
        %978 = vmatmul.mubr.bf16.gmra.mrb[0].mxu0 %v935
        %v979 = vpop.f32.mrb[0].mxu0
        %v980 = vadd.f32 %v907, %v979
        %v981 = vpop.f32.mrb[0].mxu0
        %v982 = vadd.f32 %v907, %v981
        %v983 = vpop.f32.mrb[0].mxu0
        %v984 = vadd.f32 %v912, %v983
        %v985 = vpop.f32.mrb[0].mxu0
        %v986 = vadd.f32 %v912, %v985
        %987 = vmatprep.mubr.bf16.mxu0 0
        %988 = vmatmul.mubr.bf16.gmra.mrb[0].mxu0 %v938
        %v989 = vpop.f32.mrb[0].mxu0
        %v990 = vadd.f32 %v917, %v989
        %v991 = vpop.f32.mrb[0].mxu0
        %v992 = vadd.f32 %v917, %v991
        %v993 = vpop.f32.mrb[0].mxu0
        %v994 = vadd.f32 %v922, %v993
        %v995 = vpop.f32.mrb[0].mxu0
        %v996 = vadd.f32 %v922, %v995
        %997 = vdwg.mxu0
        %v998 = vsub.f32 0.0, %v980
        %v999 = vsub.f32 0.0, %v982
        %v1000 = vsub.f32 0.0, %v984
        %v1001 = vsub.f32 0.0, %v986
        %v1002 = vsub.f32 0.0, %v990
        %v1003 = vsub.f32 0.0, %v992
        %v1004 = vsub.f32 0.0, %v994
        %v1005 = vsub.f32 0.0, %v996
        %v1006 = vmul.f32 %v998, 1.442695
        %v1007 = vpow.pop %v1006
        %v1008 = vmul.f32 %v999, 1.442695
        %v1009 = vpow.pop %v1008
        %v1010 = vmul.f32 %v1000, 1.442695
        %v1011 = vpow.pop %v1010
        %v1012 = vmul.f32 %v1001, 1.442695
        %v1013 = vpow.pop %v1012
        %v1014 = vmul.f32 %v1002, 1.442695
        %v1015 = vpow.pop %v1014
        %v1016 = vmul.f32 %v1003, 1.442695
        %v1017 = vpow.pop %v1016
        %v1018 = vmul.f32 %v1004, 1.442695
        %v1019 = vpow.pop %v1018
        %v1020 = vmul.f32 %v1005, 1.442695
        %v1021 = vpow.pop %v1020
        %v1022 = vadd.f32 %v1007, 1.0
        %v1023 = vadd.f32 %v1009, 1.0
        %v1024 = vadd.f32 %v1011, 1.0
        %v1025 = vadd.f32 %v1013, 1.0
        %v1026 = vadd.f32 %v1015, 1.0
        %v1027 = vadd.f32 %v1017, 1.0
        %v1028 = vadd.f32 %v1019, 1.0
        %v1029 = vadd.f32 %v1021, 1.0
        %v1030 = vrcp.pop %v1022
        %v1031 = vrcp.pop %v1023
        %v1032 = vrcp.pop %v1024
        %v1033 = vrcp.pop %v1025
        %v1034 = vrcp.pop %v1026
        %v1035 = vrcp.pop %v1027
        %v1036 = vrcp.pop %v1028
        %v1037 = vrcp.pop %v1029
        %v1038 = vmul.f32 %v980, %v1030
        %v1039 = vmul.f32 %v982, %v1031
        %v1040 = vmul.f32 %v984, %v1032
        %v1041 = vmul.f32 %v986, %v1033
        %v1042 = vmul.f32 %v990, %v1034
        %v1043 = vmul.f32 %v992, %v1035
        %v1044 = vmul.f32 %v994, %v1036
        %v1045 = vmul.f32 %v996, %v1037
        %v1046 = vpack.c.bf16 %v1040, %v1038
        %v1047 = vpack.c.bf16 %v1041, %v1039
        %v1048 = vpack.c.bf16 %v1044, %v1042
        %v1049 = vpack.c.bf16 %v1045, %v1043
        %1052 = vrot.lane.b32.xlu0 %v1046, 92
        %v1053 = vpop.permute.xlu0 %1052
        %1054 = vrot.lane.b32.xlu0 %v1048, 92
        %v1055 = vpop.permute.xlu0 %1054
        %1056 = vrot.lane.b32.xlu0 %v1046, 56
        %v1057 = vpop.permute.xlu0 %1056
        %1058 = vrot.lane.b32.xlu0 %v1048, 56
        %v1059 = vpop.permute.xlu0 %1058
        %1062 = vrot.lane.b32.xlu0 %v1046, 20
        %v1063 = vpop.permute.xlu0 %1062
        %1064 = vrot.lane.b32.xlu0 %v1047, 20
        %v1065 = vpop.permute.xlu0 %1064
        %1066 = vrot.lane.b32.xlu0 %v1048, 20
        %v1067 = vpop.permute.xlu0 %1066
        %1068 = vrot.lane.b32.xlu0 %v1049, 20
        %v1069 = vpop.permute.xlu0 %1068
        %vm1070 = vcmask 162816
        %v1071 = vsel %vm1070, %v1063, %v1065
        %v1072 = vsel %vm1070, %v1067, %v1069
        %v1075 = vpack.i.b16 %v1053, %v1046
        %v1077 = vshrl.u32 %v1046, 16
        %v1078 = vshrl.u32 %v1053, 16
        %v1079 = vpack.i.b16 %v1078, %v1077
        %v1083 = vpack.i.b16 %v1071, %v1057
        %v1085 = vshrl.u32 %v1057, 16
        %v1086 = vshrl.u32 %v1071, 16
        %v1087 = vpack.i.b16 %v1086, %v1085
        %v1090 = vpack.i.b16 0, 0
        %v1092 = vshrl.u32 0, 16
        %v1093 = vpack.i.b16 %v1092, %v1092
        %v1097 = vpack.i.b16 %v1055, %v1048
        %v1099 = vshrl.u32 %v1048, 16
        %v1100 = vshrl.u32 %v1055, 16
        %v1101 = vpack.i.b16 %v1100, %v1099
        %v1105 = vpack.i.b16 %v1072, %v1059
        %v1107 = vshrl.u32 %v1059, 16
        %v1108 = vshrl.u32 %v1072, 16
        %v1109 = vpack.i.b16 %v1108, %v1107
        %v1111 = vcombine.high %v1075, %v1090
        %v1113 = vunpack.c.l.s4 1983009808
        %v1114 = vunpack.c.0.s8 %v1113
        %v1115 = vlaneseq
        %v1116 = vshrl.u32 %v1115, 7
        %v1117 = vsub.s32 %v1114, %v1116
        %v1118 = vrot.slane %v1075, %v1117
        %v1120 = vunpack.c.l.s4 1983009808
        %v1121 = vunpack.c.0.s8 %v1120
        %v1122 = vlaneseq
        %v1123 = vshrl.u32 %v1122, 7
        %v1124 = vsub.s32 %v1121, %v1123
        %v1125 = vrot.slane %v1111, %v1124
        %v1126 = vcombine.high %v1083, %v1090
        %v1128 = vunpack.c.l.s4 1983009808
        %v1129 = vunpack.c.0.s8 %v1128
        %v1130 = vlaneseq
        %v1131 = vshrl.u32 %v1130, 7
        %v1132 = vsub.s32 %v1129, %v1131
        %v1133 = vrot.slane %v1083, %v1132
        %v1135 = vunpack.c.l.s4 1983009808
        %v1136 = vunpack.c.0.s8 %v1135
        %v1137 = vlaneseq
        %v1138 = vshrl.u32 %v1137, 7
        %v1139 = vsub.s32 %v1136, %v1138
        %v1140 = vrot.slane %v1126, %v1139
        %v1141 = vcombine.low %v1118, %v1133
        %v1142 = vcombine.high %v1118, %v1133
        %v1144 = vunpack.c.l.s4 1934713408
        %v1145 = vunpack.c.0.s8 %v1144
        %v1146 = vlaneseq
        %v1147 = vshrl.u32 %v1146, 7
        %v1148 = vsub.s32 %v1145, %v1147
        %v1149 = vrot.slane %v1141, %v1148
        %v1151 = vunpack.c.l.s4 1934713408
        %v1152 = vunpack.c.0.s8 %v1151
        %v1153 = vlaneseq
        %v1154 = vshrl.u32 %v1153, 7
        %v1155 = vsub.s32 %v1152, %v1154
        %v1156 = vrot.slane %v1142, %v1155
        %v1157 = vcombine.low %v1125, %v1140
        %v1158 = vcombine.high %v1125, %v1140
        %v1160 = vunpack.c.l.s4 1934713408
        %v1161 = vunpack.c.0.s8 %v1160
        %v1162 = vlaneseq
        %v1163 = vshrl.u32 %v1162, 7
        %v1164 = vsub.s32 %v1161, %v1163
        %v1165 = vrot.slane %v1157, %v1164
        %v1167 = vunpack.c.l.s4 1934713408
        %v1168 = vunpack.c.0.s8 %v1167
        %v1169 = vlaneseq
        %v1170 = vshrl.u32 %v1169, 7
        %v1171 = vsub.s32 %v1168, %v1170
        %v1172 = vrot.slane %v1158, %v1171
        %v1173 = vcombine.high %v1149, 0
        %v1174 = vcombine.high %v1156, 0
        %v1175 = vcombine.high %v1165, 0
        %v1176 = vcombine.high %v1172, 0
        %v1177 = vcombine.high %v1079, %v1093
        %v1179 = vunpack.c.l.s4 1983009808
        %v1180 = vunpack.c.0.s8 %v1179
        %v1181 = vlaneseq
        %v1182 = vshrl.u32 %v1181, 7
        %v1183 = vsub.s32 %v1180, %v1182
        %v1184 = vrot.slane %v1079, %v1183
        %v1186 = vunpack.c.l.s4 1983009808
        %v1187 = vunpack.c.0.s8 %v1186
        %v1188 = vlaneseq
        %v1189 = vshrl.u32 %v1188, 7
        %v1190 = vsub.s32 %v1187, %v1189
        %v1191 = vrot.slane %v1177, %v1190
        %v1192 = vcombine.high %v1087, %v1093
        %v1194 = vunpack.c.l.s4 1983009808
        %v1195 = vunpack.c.0.s8 %v1194
        %v1196 = vlaneseq
        %v1197 = vshrl.u32 %v1196, 7
        %v1198 = vsub.s32 %v1195, %v1197
        %v1199 = vrot.slane %v1087, %v1198
        %v1201 = vunpack.c.l.s4 1983009808
        %v1202 = vunpack.c.0.s8 %v1201
        %v1203 = vlaneseq
        %v1204 = vshrl.u32 %v1203, 7
        %v1205 = vsub.s32 %v1202, %v1204
        %v1206 = vrot.slane %v1192, %v1205
        %v1207 = vcombine.low %v1184, %v1199
        %v1208 = vcombine.high %v1184, %v1199
        %v1210 = vunpack.c.l.s4 1934713408
        %v1211 = vunpack.c.0.s8 %v1210
        %v1212 = vlaneseq
        %v1213 = vshrl.u32 %v1212, 7
        %v1214 = vsub.s32 %v1211, %v1213
        %v1215 = vrot.slane %v1207, %v1214
        %v1217 = vunpack.c.l.s4 1934713408
        %v1218 = vunpack.c.0.s8 %v1217
        %v1219 = vlaneseq
        %v1220 = vshrl.u32 %v1219, 7
        %v1221 = vsub.s32 %v1218, %v1220
        %v1222 = vrot.slane %v1208, %v1221
        %v1223 = vcombine.low %v1191, %v1206
        %v1224 = vcombine.high %v1191, %v1206
        %v1226 = vunpack.c.l.s4 1934713408
        %v1227 = vunpack.c.0.s8 %v1226
        %v1228 = vlaneseq
        %v1229 = vshrl.u32 %v1228, 7
        %v1230 = vsub.s32 %v1227, %v1229
        %v1231 = vrot.slane %v1223, %v1230
        %v1233 = vunpack.c.l.s4 1934713408
        %v1234 = vunpack.c.0.s8 %v1233
        %v1235 = vlaneseq
        %v1236 = vshrl.u32 %v1235, 7
        %v1237 = vsub.s32 %v1234, %v1236
        %v1238 = vrot.slane %v1224, %v1237
        %v1239 = vcombine.high %v1215, 0
        %v1240 = vcombine.high %v1222, 0
        %v1241 = vcombine.high %v1231, 0
        %v1242 = vcombine.high %v1238, 0
        %v1243 = vcombine.high %v1097, %v1090
        %v1245 = vunpack.c.l.s4 1983009808
        %v1246 = vunpack.c.0.s8 %v1245
        %v1247 = vlaneseq
        %v1248 = vshrl.u32 %v1247, 7
        %v1249 = vsub.s32 %v1246, %v1248
        %v1250 = vrot.slane %v1097, %v1249
        %v1252 = vunpack.c.l.s4 1983009808
        %v1253 = vunpack.c.0.s8 %v1252
        %v1254 = vlaneseq
        %v1255 = vshrl.u32 %v1254, 7
        %v1256 = vsub.s32 %v1253, %v1255
        %v1257 = vrot.slane %v1243, %v1256
        %v1258 = vcombine.high %v1105, %v1090
        %v1260 = vunpack.c.l.s4 1983009808
        %v1261 = vunpack.c.0.s8 %v1260
        %v1262 = vlaneseq
        %v1263 = vshrl.u32 %v1262, 7
        %v1264 = vsub.s32 %v1261, %v1263
        %v1265 = vrot.slane %v1105, %v1264
        %v1267 = vunpack.c.l.s4 1983009808
        %v1268 = vunpack.c.0.s8 %v1267
        %v1269 = vlaneseq
        %v1270 = vshrl.u32 %v1269, 7
        %v1271 = vsub.s32 %v1268, %v1270
        %v1272 = vrot.slane %v1258, %v1271
        %v1273 = vcombine.low %v1250, %v1265
        %v1274 = vcombine.high %v1250, %v1265
        %v1276 = vunpack.c.l.s4 1934713408
        %v1277 = vunpack.c.0.s8 %v1276
        %v1278 = vlaneseq
        %v1279 = vshrl.u32 %v1278, 7
        %v1280 = vsub.s32 %v1277, %v1279
        %v1281 = vrot.slane %v1273, %v1280
        %v1283 = vunpack.c.l.s4 1934713408
        %v1284 = vunpack.c.0.s8 %v1283
        %v1285 = vlaneseq
        %v1286 = vshrl.u32 %v1285, 7
        %v1287 = vsub.s32 %v1284, %v1286
        %v1288 = vrot.slane %v1274, %v1287
        %v1289 = vcombine.low %v1257, %v1272
        %v1290 = vcombine.high %v1257, %v1272
        %v1292 = vunpack.c.l.s4 1934713408
        %v1293 = vunpack.c.0.s8 %v1292
        %v1294 = vlaneseq
        %v1295 = vshrl.u32 %v1294, 7
        %v1296 = vsub.s32 %v1293, %v1295
        %v1297 = vrot.slane %v1289, %v1296
        %v1299 = vunpack.c.l.s4 1934713408
        %v1300 = vunpack.c.0.s8 %v1299
        %v1301 = vlaneseq
        %v1302 = vshrl.u32 %v1301, 7
        %v1303 = vsub.s32 %v1300, %v1302
        %v1304 = vrot.slane %v1290, %v1303
        %v1305 = vcombine.high %v1281, 0
        %v1306 = vcombine.high %v1288, 0
        %v1307 = vcombine.high %v1297, 0
        %v1308 = vcombine.high %v1304, 0
        %v1309 = vcombine.high %v1101, %v1093
        %v1311 = vunpack.c.l.s4 1983009808
        %v1312 = vunpack.c.0.s8 %v1311
        %v1313 = vlaneseq
        %v1314 = vshrl.u32 %v1313, 7
        %v1315 = vsub.s32 %v1312, %v1314
        %v1316 = vrot.slane %v1101, %v1315
        %v1318 = vunpack.c.l.s4 1983009808
        %v1319 = vunpack.c.0.s8 %v1318
        %v1320 = vlaneseq
        %v1321 = vshrl.u32 %v1320, 7
        %v1322 = vsub.s32 %v1319, %v1321
        %v1323 = vrot.slane %v1309, %v1322
        %v1324 = vcombine.high %v1109, %v1093
        %v1326 = vunpack.c.l.s4 1983009808
        %v1327 = vunpack.c.0.s8 %v1326
        %v1328 = vlaneseq
        %v1329 = vshrl.u32 %v1328, 7
        %v1330 = vsub.s32 %v1327, %v1329
        %v1331 = vrot.slane %v1109, %v1330
        %v1333 = vunpack.c.l.s4 1983009808
        %v1334 = vunpack.c.0.s8 %v1333
        %v1335 = vlaneseq
        %v1336 = vshrl.u32 %v1335, 7
        %v1337 = vsub.s32 %v1334, %v1336
        %v1338 = vrot.slane %v1324, %v1337
        %v1339 = vcombine.low %v1316, %v1331
        %v1340 = vcombine.high %v1316, %v1331
        %v1342 = vunpack.c.l.s4 1934713408
        %v1343 = vunpack.c.0.s8 %v1342
        %v1344 = vlaneseq
        %v1345 = vshrl.u32 %v1344, 7
        %v1346 = vsub.s32 %v1343, %v1345
        %v1347 = vrot.slane %v1339, %v1346
        %v1349 = vunpack.c.l.s4 1934713408
        %v1350 = vunpack.c.0.s8 %v1349
        %v1351 = vlaneseq
        %v1352 = vshrl.u32 %v1351, 7
        %v1353 = vsub.s32 %v1350, %v1352
        %v1354 = vrot.slane %v1340, %v1353
        %v1355 = vcombine.low %v1323, %v1338
        %v1356 = vcombine.high %v1323, %v1338
        %v1358 = vunpack.c.l.s4 1934713408
        %v1359 = vunpack.c.0.s8 %v1358
        %v1360 = vlaneseq
        %v1361 = vshrl.u32 %v1360, 7
        %v1362 = vsub.s32 %v1359, %v1361
        %v1363 = vrot.slane %v1355, %v1362
        %v1365 = vunpack.c.l.s4 1934713408
        %v1366 = vunpack.c.0.s8 %v1365
        %v1367 = vlaneseq
        %v1368 = vshrl.u32 %v1367, 7
        %v1369 = vsub.s32 %v1366, %v1368
        %v1370 = vrot.slane %v1356, %v1369
        %v1371 = vcombine.high %v1347, 0
        %v1372 = vcombine.high %v1354, 0
        %v1373 = vcombine.high %v1363, 0
        %v1374 = vcombine.high %v1370, 0
        %v1375 = vlaneseq
        %v1376 = vand.u32 %v1375, 127
        %p1377 = scmp.eq.s32.totalorder %s25, 0
        %vm1378 = vcmp.eq.s32.totalorder %v1376, 0
        %vm1379 = vcmp.eq.s32.totalorder %v1376, 18
        %vm1380 = vmor %vm1378, %vm1379
        %s1381 = scalar_select %p1377, 1, 0
        %v1382 = vstv %s1381
        %vm1383 = vcmp.eq.s32.totalorder %v1382, 1
        %vm1384 = vmand %vm1383, %vm1380
        %vm1385 = vcmp.eq.s32.totalorder %v1376, 17
        %vm1386 = vcmp.eq.s32.totalorder %v1376, 35
        %vm1387 = vmor %vm1385, %vm1386
        %vm1388 = vmand %vm1383, %vm1387
        %vm1389 = vmor %vm1384, %vm1388
        %v1390 = vsel %vm1389, 1, 0
        %vm1391 = vcmp.eq.s32.totalorder %v1390, 1
        %vm1392 = vmpackc.low %vm1391, %vm1391
        %v1393 = vsel %vm1392, 0, %v1149
        %v1394 = vsel %vm1392, 0, %v1215
        %v1395 = vsel %vm1392, 0, %v1173
        %v1396 = vsel %vm1392, 0, %v1239
        %v1397 = vsel %vm1392, 0, %v1156
        %v1398 = vsel %vm1392, 0, %v1222
        %v1399 = vsel %vm1392, 0, %v1174
        %v1400 = vsel %vm1392, 0, %v1240
        %v1401 = vsel %vm1392, 0, %v1165
        %v1402 = vsel %vm1392, 0, %v1231
        %v1403 = vsel %vm1392, 0, %v1175
        %v1404 = vsel %vm1392, 0, %v1241
        %v1405 = vsel %vm1392, 0, %v1172
        %v1406 = vsel %vm1392, 0, %v1238
        %v1407 = vsel %vm1392, 0, %v1176
        %v1408 = vsel %vm1392, 0, %v1242
        %v1409 = vsel %vm1392, 0, %v1281
        %v1410 = vsel %vm1392, 0, %v1347
        %v1411 = vsel %vm1392, 0, %v1305
        %v1412 = vsel %vm1392, 0, %v1371
        %v1413 = vsel %vm1392, 0, %v1288
        %v1414 = vsel %vm1392, 0, %v1354
        %v1415 = vsel %vm1392, 0, %v1306
        %v1416 = vsel %vm1392, 0, %v1372
        %v1417 = vsel %vm1392, 0, %v1297
        %v1418 = vsel %vm1392, 0, %v1363
        %v1419 = vsel %vm1392, 0, %v1307
        %v1420 = vsel %vm1392, 0, %v1373
        %v1421 = vsel %vm1392, 0, %v1304
        %v1422 = vsel %vm1392, 0, %v1370
        %v1423 = vsel %vm1392, 0, %v1308
        %v1424 = vsel %vm1392, 0, %v1374
        %vm1425 = vcmask 123904
        %1426 = vst.msk [vmem:[#allocation3] sm:$0x3] %vm1425, %v1393
        %1427 = vst.msk [vmem:[#allocation3 + $0x2] sm:$0x3] %vm1425, %v1394
        %1428 = vst.msk [vmem:[#allocation3 + $0x4] sm:$0x3] %vm1425, %v1395
        %1429 = vst.msk [vmem:[#allocation3 + $0x6] sm:$0x3] %vm1425, %v1396
        %1430 = vst.msk [vmem:[#allocation3 + $0x8] sm:$0x3] %vm1425, %v1397
        %1431 = vst.msk [vmem:[#allocation3 + $0xa] sm:$0x3] %vm1425, %v1398
        %1432 = vst.msk [vmem:[#allocation3 + $0xc] sm:$0x3] %vm1425, %v1399
        %1433 = vst.msk [vmem:[#allocation3 + $0xe] sm:$0x3] %vm1425, %v1400
        %1434 = vst.msk [vmem:[#allocation3 + $0x10] sm:$0x3] %vm1425, %v1401
        %1435 = vst.msk [vmem:[#allocation3 + $0x12] sm:$0x3] %vm1425, %v1402
        %1436 = vst.msk [vmem:[#allocation3 + $0x14] sm:$0x3] %vm1425, %v1403
        %1437 = vst.msk [vmem:[#allocation3 + $0x16] sm:$0x3] %vm1425, %v1404
        %1438 = vst.msk [vmem:[#allocation3 + $0x18] sm:$0x3] %vm1425, %v1405
        %1439 = vst.msk [vmem:[#allocation3 + $0x1a] sm:$0x3] %vm1425, %v1406
        %1440 = vst.msk [vmem:[#allocation3 + $0x1c] sm:$0x3] %vm1425, %v1407
        %1441 = vst.msk [vmem:[#allocation3 + $0x1e] sm:$0x3] %vm1425, %v1408
        %1442 = vst.msk [vmem:[#allocation3 + $0x20] sm:$0x3] %vm1425, %v1409
        %1443 = vst.msk [vmem:[#allocation3 + $0x22] sm:$0x3] %vm1425, %v1410
        %1444 = vst.msk [vmem:[#allocation3 + $0x24] sm:$0x3] %vm1425, %v1411
        %1445 = vst.msk [vmem:[#allocation3 + $0x26] sm:$0x3] %vm1425, %v1412
        %1446 = vst.msk [vmem:[#allocation3 + $0x28] sm:$0x3] %vm1425, %v1413
        %1447 = vst.msk [vmem:[#allocation3 + $0x2a] sm:$0x3] %vm1425, %v1414
        %1448 = vst.msk [vmem:[#allocation3 + $0x2c] sm:$0x3] %vm1425, %v1415
        %1449 = vst.msk [vmem:[#allocation3 + $0x2e] sm:$0x3] %vm1425, %v1416
        %1450 = vst.msk [vmem:[#allocation3 + $0x30] sm:$0x3] %vm1425, %v1417
        %1451 = vst.msk [vmem:[#allocation3 + $0x32] sm:$0x3] %vm1425, %v1418
        %1452 = vst.msk [vmem:[#allocation3 + $0x34] sm:$0x3] %vm1425, %v1419
        %1453 = vst.msk [vmem:[#allocation3 + $0x36] sm:$0x3] %vm1425, %v1420
        %1454 = vst.msk [vmem:[#allocation3 + $0x38] sm:$0x3] %vm1425, %v1421
        %1455 = vst.msk [vmem:[#allocation3 + $0x3a] sm:$0x3] %vm1425, %v1422
        %1456 = vst.msk [vmem:[#allocation3 + $0x3c] sm:$0x3] %vm1425, %v1423
        %1457 = vst.msk [vmem:[#allocation3 + $0x3e] sm:$0x3] %vm1425, %v1424
        %v1491 = vunpack.c.l.s4 1983009808
        %v1492 = vunpack.c.0.s8 %v1491
        %v1493 = vlaneseq
        %v1494 = vshrl.u32 %v1493, 7
        %v1495 = vsub.s32 %v1492, %v1494
        %v1496 = vrot.slane %v1393, %v1495
        %v1498 = vunpack.c.l.s4 1983009808
        %v1499 = vunpack.c.0.s8 %v1498
        %v1500 = vlaneseq
        %v1501 = vshrl.u32 %v1500, 7
        %v1502 = vsub.s32 %v1499, %v1501
        %v1503 = vrot.slane %v1394, %v1502
        %v1505 = vunpack.c.l.s4 1983009808
        %v1506 = vunpack.c.0.s8 %v1505
        %v1507 = vlaneseq
        %v1508 = vshrl.u32 %v1507, 7
        %v1509 = vsub.s32 %v1506, %v1508
        %v1510 = vrot.slane %v1395, %v1509
        %v1512 = vunpack.c.l.s4 1983009808
        %v1513 = vunpack.c.0.s8 %v1512
        %v1514 = vlaneseq
        %v1515 = vshrl.u32 %v1514, 7
        %v1516 = vsub.s32 %v1513, %v1515
        %v1517 = vrot.slane %v1396, %v1516
        %v1519 = vunpack.c.l.s4 1983009808
        %v1520 = vunpack.c.0.s8 %v1519
        %v1521 = vlaneseq
        %v1522 = vshrl.u32 %v1521, 7
        %v1523 = vsub.s32 %v1520, %v1522
        %v1524 = vrot.slane %v1397, %v1523
        %v1526 = vunpack.c.l.s4 1983009808
        %v1527 = vunpack.c.0.s8 %v1526
        %v1528 = vlaneseq
        %v1529 = vshrl.u32 %v1528, 7
        %v1530 = vsub.s32 %v1527, %v1529
        %v1531 = vrot.slane %v1398, %v1530
        %v1533 = vunpack.c.l.s4 1983009808
        %v1534 = vunpack.c.0.s8 %v1533
        %v1535 = vlaneseq
        %v1536 = vshrl.u32 %v1535, 7
        %v1537 = vsub.s32 %v1534, %v1536
        %v1538 = vrot.slane %v1399, %v1537
        %v1540 = vunpack.c.l.s4 1983009808
        %v1541 = vunpack.c.0.s8 %v1540
        %v1542 = vlaneseq
        %v1543 = vshrl.u32 %v1542, 7
        %v1544 = vsub.s32 %v1541, %v1543
        %v1545 = vrot.slane %v1400, %v1544
        %v1547 = vunpack.c.l.s4 1983009808
        %v1548 = vunpack.c.0.s8 %v1547
        %v1549 = vlaneseq
        %v1550 = vshrl.u32 %v1549, 7
        %v1551 = vsub.s32 %v1548, %v1550
        %v1552 = vrot.slane %v1401, %v1551
        %v1554 = vunpack.c.l.s4 1983009808
        %v1555 = vunpack.c.0.s8 %v1554
        %v1556 = vlaneseq
        %v1557 = vshrl.u32 %v1556, 7
        %v1558 = vsub.s32 %v1555, %v1557
        %v1559 = vrot.slane %v1402, %v1558
        %v1561 = vunpack.c.l.s4 1983009808
        %v1562 = vunpack.c.0.s8 %v1561
        %v1563 = vlaneseq
        %v1564 = vshrl.u32 %v1563, 7
        %v1565 = vsub.s32 %v1562, %v1564
        %v1566 = vrot.slane %v1403, %v1565
        %v1568 = vunpack.c.l.s4 1983009808
        %v1569 = vunpack.c.0.s8 %v1568
        %v1570 = vlaneseq
        %v1571 = vshrl.u32 %v1570, 7
        %v1572 = vsub.s32 %v1569, %v1571
        %v1573 = vrot.slane %v1404, %v1572
        %v1575 = vunpack.c.l.s4 1983009808
        %v1576 = vunpack.c.0.s8 %v1575
        %v1577 = vlaneseq
        %v1578 = vshrl.u32 %v1577, 7
        %v1579 = vsub.s32 %v1576, %v1578
        %v1580 = vrot.slane %v1405, %v1579
        %v1582 = vunpack.c.l.s4 1983009808
        %v1583 = vunpack.c.0.s8 %v1582
        %v1584 = vlaneseq
        %v1585 = vshrl.u32 %v1584, 7
        %v1586 = vsub.s32 %v1583, %v1585
        %v1587 = vrot.slane %v1406, %v1586
        %v1589 = vunpack.c.l.s4 1983009808
        %v1590 = vunpack.c.0.s8 %v1589
        %v1591 = vlaneseq
        %v1592 = vshrl.u32 %v1591, 7
        %v1593 = vsub.s32 %v1590, %v1592
        %v1594 = vrot.slane %v1407, %v1593
        %v1596 = vunpack.c.l.s4 1983009808
        %v1597 = vunpack.c.0.s8 %v1596
        %v1598 = vlaneseq
        %v1599 = vshrl.u32 %v1598, 7
        %v1600 = vsub.s32 %v1597, %v1599
        %v1601 = vrot.slane %v1408, %v1600
        %v1603 = vunpack.c.l.s4 1983009808
        %v1604 = vunpack.c.0.s8 %v1603
        %v1605 = vlaneseq
        %v1606 = vshrl.u32 %v1605, 7
        %v1607 = vsub.s32 %v1604, %v1606
        %v1608 = vrot.slane %v1409, %v1607
        %v1610 = vunpack.c.l.s4 1983009808
        %v1611 = vunpack.c.0.s8 %v1610
        %v1612 = vlaneseq
        %v1613 = vshrl.u32 %v1612, 7
        %v1614 = vsub.s32 %v1611, %v1613
        %v1615 = vrot.slane %v1410, %v1614
        %v1617 = vunpack.c.l.s4 1983009808
        %v1618 = vunpack.c.0.s8 %v1617
        %v1619 = vlaneseq
        %v1620 = vshrl.u32 %v1619, 7
        %v1621 = vsub.s32 %v1618, %v1620
        %v1622 = vrot.slane %v1411, %v1621
        %v1624 = vunpack.c.l.s4 1983009808
        %v1625 = vunpack.c.0.s8 %v1624
        %v1626 = vlaneseq
        %v1627 = vshrl.u32 %v1626, 7
        %v1628 = vsub.s32 %v1625, %v1627
        %v1629 = vrot.slane %v1412, %v1628
        %v1631 = vunpack.c.l.s4 1983009808
        %v1632 = vunpack.c.0.s8 %v1631
        %v1633 = vlaneseq
        %v1634 = vshrl.u32 %v1633, 7
        %v1635 = vsub.s32 %v1632, %v1634
        %v1636 = vrot.slane %v1413, %v1635
        %v1638 = vunpack.c.l.s4 1983009808
        %v1639 = vunpack.c.0.s8 %v1638
        %v1640 = vlaneseq
        %v1641 = vshrl.u32 %v1640, 7
        %v1642 = vsub.s32 %v1639, %v1641
        %v1643 = vrot.slane %v1414, %v1642
        %v1645 = vunpack.c.l.s4 1983009808
        %v1646 = vunpack.c.0.s8 %v1645
        %v1647 = vlaneseq
        %v1648 = vshrl.u32 %v1647, 7
        %v1649 = vsub.s32 %v1646, %v1648
        %v1650 = vrot.slane %v1415, %v1649
        %v1652 = vunpack.c.l.s4 1983009808
        %v1653 = vunpack.c.0.s8 %v1652
        %v1654 = vlaneseq
        %v1655 = vshrl.u32 %v1654, 7
        %v1656 = vsub.s32 %v1653, %v1655
        %v1657 = vrot.slane %v1416, %v1656
        %v1659 = vunpack.c.l.s4 1983009808
        %v1660 = vunpack.c.0.s8 %v1659
        %v1661 = vlaneseq
        %v1662 = vshrl.u32 %v1661, 7
        %v1663 = vsub.s32 %v1660, %v1662
        %v1664 = vrot.slane %v1417, %v1663
        %v1666 = vunpack.c.l.s4 1983009808
        %v1667 = vunpack.c.0.s8 %v1666
        %v1668 = vlaneseq
        %v1669 = vshrl.u32 %v1668, 7
        %v1670 = vsub.s32 %v1667, %v1669
        %v1671 = vrot.slane %v1418, %v1670
        %v1673 = vunpack.c.l.s4 1983009808
        %v1674 = vunpack.c.0.s8 %v1673
        %v1675 = vlaneseq
        %v1676 = vshrl.u32 %v1675, 7
        %v1677 = vsub.s32 %v1674, %v1676
        %v1678 = vrot.slane %v1419, %v1677
        %v1680 = vunpack.c.l.s4 1983009808
        %v1681 = vunpack.c.0.s8 %v1680
        %v1682 = vlaneseq
        %v1683 = vshrl.u32 %v1682, 7
        %v1684 = vsub.s32 %v1681, %v1683
        %v1685 = vrot.slane %v1420, %v1684
        %v1687 = vunpack.c.l.s4 1983009808
        %v1688 = vunpack.c.0.s8 %v1687
        %v1689 = vlaneseq
        %v1690 = vshrl.u32 %v1689, 7
        %v1691 = vsub.s32 %v1688, %v1690
        %v1692 = vrot.slane %v1421, %v1691
        %v1694 = vunpack.c.l.s4 1983009808
        %v1695 = vunpack.c.0.s8 %v1694
        %v1696 = vlaneseq
        %v1697 = vshrl.u32 %v1696, 7
        %v1698 = vsub.s32 %v1695, %v1697
        %v1699 = vrot.slane %v1422, %v1698
        %v1701 = vunpack.c.l.s4 1983009808
        %v1702 = vunpack.c.0.s8 %v1701
        %v1703 = vlaneseq
        %v1704 = vshrl.u32 %v1703, 7
        %v1705 = vsub.s32 %v1702, %v1704
        %v1706 = vrot.slane %v1423, %v1705
        %v1708 = vunpack.c.l.s4 1983009808
        %v1709 = vunpack.c.0.s8 %v1708
        %v1710 = vlaneseq
        %v1711 = vshrl.u32 %v1710, 7
        %v1712 = vsub.s32 %v1709, %v1711
        %v1713 = vrot.slane %v1424, %v1712
        %1714 = vrot.lane.b32.xlu0 %v1496, 110
        %v1715 = vpop.permute.xlu0 %1714
        %1716 = vrot.lane.b32.xlu0 %v1503, 110
        %v1717 = vpop.permute.xlu0 %1716
        %1718 = vrot.lane.b32.xlu0 %v1510, 110
        %v1719 = vpop.permute.xlu0 %1718
        %1720 = vrot.lane.b32.xlu0 %v1517, 110
        %v1721 = vpop.permute.xlu0 %1720
        %1722 = vrot.lane.b32.xlu0 %v1524, 110
        %v1723 = vpop.permute.xlu0 %1722
        %1724 = vrot.lane.b32.xlu0 %v1531, 110
        %v1725 = vpop.permute.xlu0 %1724
        %1726 = vrot.lane.b32.xlu0 %v1538, 110
        %v1727 = vpop.permute.xlu0 %1726
        %1728 = vrot.lane.b32.xlu0 %v1545, 110
        %v1729 = vpop.permute.xlu0 %1728
        %1730 = vrot.lane.b32.xlu0 %v1552, 110
        %v1731 = vpop.permute.xlu0 %1730
        %1732 = vrot.lane.b32.xlu0 %v1559, 110
        %v1733 = vpop.permute.xlu0 %1732
        %1734 = vrot.lane.b32.xlu0 %v1566, 110
        %v1735 = vpop.permute.xlu0 %1734
        %1736 = vrot.lane.b32.xlu0 %v1573, 110
        %v1737 = vpop.permute.xlu0 %1736
        %1738 = vrot.lane.b32.xlu0 %v1580, 110
        %v1739 = vpop.permute.xlu0 %1738
        %1740 = vrot.lane.b32.xlu0 %v1587, 110
        %v1741 = vpop.permute.xlu0 %1740
        %1742 = vrot.lane.b32.xlu0 %v1594, 110
        %v1743 = vpop.permute.xlu0 %1742
        %1744 = vrot.lane.b32.xlu0 %v1601, 110
        %v1745 = vpop.permute.xlu0 %1744
        %1746 = vrot.lane.b32.xlu0 %v1608, 110
        %v1747 = vpop.permute.xlu0 %1746
        %1748 = vrot.lane.b32.xlu0 %v1615, 110
        %v1749 = vpop.permute.xlu0 %1748
        %1750 = vrot.lane.b32.xlu0 %v1622, 110
        %v1751 = vpop.permute.xlu0 %1750
        %1752 = vrot.lane.b32.xlu0 %v1629, 110
        %v1753 = vpop.permute.xlu0 %1752
        %1754 = vrot.lane.b32.xlu0 %v1636, 110
        %v1755 = vpop.permute.xlu0 %1754
        %1756 = vrot.lane.b32.xlu0 %v1643, 110
        %v1757 = vpop.permute.xlu0 %1756
        %1758 = vrot.lane.b32.xlu0 %v1650, 110
        %v1759 = vpop.permute.xlu0 %1758
        %1760 = vrot.lane.b32.xlu0 %v1657, 110
        %v1761 = vpop.permute.xlu0 %1760
        %1762 = vrot.lane.b32.xlu0 %v1664, 110
        %v1763 = vpop.permute.xlu0 %1762
        %1764 = vrot.lane.b32.xlu0 %v1671, 110
        %v1765 = vpop.permute.xlu0 %1764
        %1766 = vrot.lane.b32.xlu0 %v1678, 110
        %v1767 = vpop.permute.xlu0 %1766
        %1768 = vrot.lane.b32.xlu0 %v1685, 110
        %v1769 = vpop.permute.xlu0 %1768
        %1770 = vrot.lane.b32.xlu0 %v1692, 110
        %v1771 = vpop.permute.xlu0 %1770
        %1772 = vrot.lane.b32.xlu0 %v1699, 110
        %v1773 = vpop.permute.xlu0 %1772
        %1774 = vrot.lane.b32.xlu0 %v1706, 110
        %v1775 = vpop.permute.xlu0 %1774
        %1776 = vrot.lane.b32.xlu0 %v1713, 110
        %v1777 = vpop.permute.xlu0 %1776
        %s1810 = scalar_lea.vmem [#allocation3], 192
        %1811 = vst.msk [vmem:[%s1810] sm:$0x3] %vm1425, %v1715
        %1812 = vst.msk [vmem:[%s1810 + $0x2] sm:$0x3] %vm1425, %v1717
        %1813 = vst.msk [vmem:[%s1810 + $0x4] sm:$0x3] %vm1425, %v1719
        %1814 = vst.msk [vmem:[%s1810 + $0x6] sm:$0x3] %vm1425, %v1721
        %1815 = vst.msk [vmem:[%s1810 + $0x8] sm:$0x3] %vm1425, %v1723
        %1816 = vst.msk [vmem:[%s1810 + $0xa] sm:$0x3] %vm1425, %v1725
        %1817 = vst.msk [vmem:[%s1810 + $0xc] sm:$0x3] %vm1425, %v1727
        %1818 = vst.msk [vmem:[%s1810 + $0xe] sm:$0x3] %vm1425, %v1729
        %1819 = vst.msk [vmem:[%s1810 + $0x10] sm:$0x3] %vm1425, %v1731
        %1820 = vst.msk [vmem:[%s1810 + $0x12] sm:$0x3] %vm1425, %v1733
        %1821 = vst.msk [vmem:[%s1810 + $0x14] sm:$0x3] %vm1425, %v1735
        %1822 = vst.msk [vmem:[%s1810 + $0x16] sm:$0x3] %vm1425, %v1737
        %1823 = vst.msk [vmem:[%s1810 + $0x18] sm:$0x3] %vm1425, %v1739
        %1824 = vst.msk [vmem:[%s1810 + $0x1a] sm:$0x3] %vm1425, %v1741
        %1825 = vst.msk [vmem:[%s1810 + $0x1c] sm:$0x3] %vm1425, %v1743
        %1826 = vst.msk [vmem:[%s1810 + $0x1e] sm:$0x3] %vm1425, %v1745
        %1827 = vst.msk [vmem:[%s1810 + $0x20] sm:$0x3] %vm1425, %v1747
        %1828 = vst.msk [vmem:[%s1810 + $0x22] sm:$0x3] %vm1425, %v1749
        %1829 = vst.msk [vmem:[%s1810 + $0x24] sm:$0x3] %vm1425, %v1751
        %1830 = vst.msk [vmem:[%s1810 + $0x26] sm:$0x3] %vm1425, %v1753
        %1831 = vst.msk [vmem:[%s1810 + $0x28] sm:$0x3] %vm1425, %v1755
        %1832 = vst.msk [vmem:[%s1810 + $0x2a] sm:$0x3] %vm1425, %v1757
        %1833 = vst.msk [vmem:[%s1810 + $0x2c] sm:$0x3] %vm1425, %v1759
        %1834 = vst.msk [vmem:[%s1810 + $0x2e] sm:$0x3] %vm1425, %v1761
        %1835 = vst.msk [vmem:[%s1810 + $0x30] sm:$0x3] %vm1425, %v1763
        %1836 = vst.msk [vmem:[%s1810 + $0x32] sm:$0x3] %vm1425, %v1765
        %1837 = vst.msk [vmem:[%s1810 + $0x34] sm:$0x3] %vm1425, %v1767
        %1838 = vst.msk [vmem:[%s1810 + $0x36] sm:$0x3] %vm1425, %v1769
        %1839 = vst.msk [vmem:[%s1810 + $0x38] sm:$0x3] %vm1425, %v1771
        %1840 = vst.msk [vmem:[%s1810 + $0x3a] sm:$0x3] %vm1425, %v1773
        %1841 = vst.msk [vmem:[%s1810 + $0x3c] sm:$0x3] %vm1425, %v1775
        %1842 = vst.msk [vmem:[%s1810 + $0x3e] sm:$0x3] %vm1425, %v1777
        %v1844 = vshrl.u32 %v1496, 16
        %v1846 = vrot.slane %v1844, 6
        %v1847 = vshll.u32 %v1496, 16
        %v1849 = vrot.slane %v1847, 7
        %v1850 = vor.u32 %v1846, %v1849
        %v1851 = vrot.slane %v1850, 2
        %v1853 = vshrl.u32 %v1503, 16
        %v1855 = vrot.slane %v1853, 6
        %v1856 = vshll.u32 %v1503, 16
        %v1858 = vrot.slane %v1856, 7
        %v1859 = vor.u32 %v1855, %v1858
        %v1860 = vrot.slane %v1859, 2
        %v1862 = vshrl.u32 %v1510, 16
        %v1864 = vrot.slane %v1862, 6
        %v1865 = vshll.u32 %v1510, 16
        %v1867 = vrot.slane %v1865, 7
        %v1868 = vor.u32 %v1864, %v1867
        %v1869 = vrot.slane %v1868, 2
        %v1871 = vshrl.u32 %v1517, 16
        %v1873 = vrot.slane %v1871, 6
        %v1874 = vshll.u32 %v1517, 16
        %v1876 = vrot.slane %v1874, 7
        %v1877 = vor.u32 %v1873, %v1876
        %v1878 = vrot.slane %v1877, 2
        %v1880 = vshrl.u32 %v1524, 16
        %v1882 = vrot.slane %v1880, 6
        %v1883 = vshll.u32 %v1524, 16
        %v1885 = vrot.slane %v1883, 7
        %v1886 = vor.u32 %v1882, %v1885
        %v1887 = vrot.slane %v1886, 2
        %v1889 = vshrl.u32 %v1531, 16
        %v1891 = vrot.slane %v1889, 6
        %v1892 = vshll.u32 %v1531, 16
        %v1894 = vrot.slane %v1892, 7
        %v1895 = vor.u32 %v1891, %v1894
        %v1896 = vrot.slane %v1895, 2
        %v1898 = vshrl.u32 %v1538, 16
        %v1900 = vrot.slane %v1898, 6
        %v1901 = vshll.u32 %v1538, 16
        %v1903 = vrot.slane %v1901, 7
        %v1904 = vor.u32 %v1900, %v1903
        %v1905 = vrot.slane %v1904, 2
        %v1907 = vshrl.u32 %v1545, 16
        %v1909 = vrot.slane %v1907, 6
        %v1910 = vshll.u32 %v1545, 16
        %v1912 = vrot.slane %v1910, 7
        %v1913 = vor.u32 %v1909, %v1912
        %v1914 = vrot.slane %v1913, 2
        %v1916 = vshrl.u32 %v1552, 16
        %v1918 = vrot.slane %v1916, 6
        %v1919 = vshll.u32 %v1552, 16
        %v1921 = vrot.slane %v1919, 7
        %v1922 = vor.u32 %v1918, %v1921
        %v1923 = vrot.slane %v1922, 2
        %v1925 = vshrl.u32 %v1559, 16
        %v1927 = vrot.slane %v1925, 6
        %v1928 = vshll.u32 %v1559, 16
        %v1930 = vrot.slane %v1928, 7
        %v1931 = vor.u32 %v1927, %v1930
        %v1932 = vrot.slane %v1931, 2
        %v1934 = vshrl.u32 %v1566, 16
        %v1936 = vrot.slane %v1934, 6
        %v1937 = vshll.u32 %v1566, 16
        %v1939 = vrot.slane %v1937, 7
        %v1940 = vor.u32 %v1936, %v1939
        %v1941 = vrot.slane %v1940, 2
        %v1943 = vshrl.u32 %v1573, 16
        %v1945 = vrot.slane %v1943, 6
        %v1946 = vshll.u32 %v1573, 16
        %v1948 = vrot.slane %v1946, 7
        %v1949 = vor.u32 %v1945, %v1948
        %v1950 = vrot.slane %v1949, 2
        %v1952 = vshrl.u32 %v1580, 16
        %v1954 = vrot.slane %v1952, 6
        %v1955 = vshll.u32 %v1580, 16
        %v1957 = vrot.slane %v1955, 7
        %v1958 = vor.u32 %v1954, %v1957
        %v1959 = vrot.slane %v1958, 2
        %v1961 = vshrl.u32 %v1587, 16
        %v1963 = vrot.slane %v1961, 6
        %v1964 = vshll.u32 %v1587, 16
        %v1966 = vrot.slane %v1964, 7
        %v1967 = vor.u32 %v1963, %v1966
        %v1968 = vrot.slane %v1967, 2
        %v1970 = vshrl.u32 %v1594, 16
        %v1972 = vrot.slane %v1970, 6
        %v1973 = vshll.u32 %v1594, 16
        %v1975 = vrot.slane %v1973, 7
        %v1976 = vor.u32 %v1972, %v1975
        %v1977 = vrot.slane %v1976, 2
        %v1979 = vshrl.u32 %v1601, 16
        %v1981 = vrot.slane %v1979, 6
        %v1982 = vshll.u32 %v1601, 16
        %v1984 = vrot.slane %v1982, 7
        %v1985 = vor.u32 %v1981, %v1984
        %v1986 = vrot.slane %v1985, 2
        %v1988 = vshrl.u32 %v1608, 16
        %v1990 = vrot.slane %v1988, 6
        %v1991 = vshll.u32 %v1608, 16
        %v1993 = vrot.slane %v1991, 7
        %v1994 = vor.u32 %v1990, %v1993
        %v1995 = vrot.slane %v1994, 2
        %v1997 = vshrl.u32 %v1615, 16
        %v1999 = vrot.slane %v1997, 6
        %v2000 = vshll.u32 %v1615, 16
        %v2002 = vrot.slane %v2000, 7
        %v2003 = vor.u32 %v1999, %v2002
        %v2004 = vrot.slane %v2003, 2
        %v2006 = vshrl.u32 %v1622, 16
        %v2008 = vrot.slane %v2006, 6
        %v2009 = vshll.u32 %v1622, 16
        %v2011 = vrot.slane %v2009, 7
        %v2012 = vor.u32 %v2008, %v2011
        %v2013 = vrot.slane %v2012, 2
        %v2015 = vshrl.u32 %v1629, 16
        %v2017 = vrot.slane %v2015, 6
        %v2018 = vshll.u32 %v1629, 16
        %v2020 = vrot.slane %v2018, 7
        %v2021 = vor.u32 %v2017, %v2020
        %v2022 = vrot.slane %v2021, 2
        %v2024 = vshrl.u32 %v1636, 16
        %v2026 = vrot.slane %v2024, 6
        %v2027 = vshll.u32 %v1636, 16
        %v2029 = vrot.slane %v2027, 7
        %v2030 = vor.u32 %v2026, %v2029
        %v2031 = vrot.slane %v2030, 2
        %v2033 = vshrl.u32 %v1643, 16
        %v2035 = vrot.slane %v2033, 6
        %v2036 = vshll.u32 %v1643, 16
        %v2038 = vrot.slane %v2036, 7
        %v2039 = vor.u32 %v2035, %v2038
        %v2040 = vrot.slane %v2039, 2
        %v2042 = vshrl.u32 %v1650, 16
        %v2044 = vrot.slane %v2042, 6
        %v2045 = vshll.u32 %v1650, 16
        %v2047 = vrot.slane %v2045, 7
        %v2048 = vor.u32 %v2044, %v2047
        %v2049 = vrot.slane %v2048, 2
        %v2051 = vshrl.u32 %v1657, 16
        %v2053 = vrot.slane %v2051, 6
        %v2054 = vshll.u32 %v1657, 16
        %v2056 = vrot.slane %v2054, 7
        %v2057 = vor.u32 %v2053, %v2056
        %v2058 = vrot.slane %v2057, 2
        %v2060 = vshrl.u32 %v1664, 16
        %v2062 = vrot.slane %v2060, 6
        %v2063 = vshll.u32 %v1664, 16
        %v2065 = vrot.slane %v2063, 7
        %v2066 = vor.u32 %v2062, %v2065
        %v2067 = vrot.slane %v2066, 2
        %v2069 = vshrl.u32 %v1671, 16
        %v2071 = vrot.slane %v2069, 6
        %v2072 = vshll.u32 %v1671, 16
        %v2074 = vrot.slane %v2072, 7
        %v2075 = vor.u32 %v2071, %v2074
        %v2076 = vrot.slane %v2075, 2
        %v2078 = vshrl.u32 %v1678, 16
        %v2080 = vrot.slane %v2078, 6
        %v2081 = vshll.u32 %v1678, 16
        %v2083 = vrot.slane %v2081, 7
        %v2084 = vor.u32 %v2080, %v2083
        %v2085 = vrot.slane %v2084, 2
        %v2087 = vshrl.u32 %v1685, 16
        %v2089 = vrot.slane %v2087, 6
        %v2090 = vshll.u32 %v1685, 16
        %v2092 = vrot.slane %v2090, 7
        %v2093 = vor.u32 %v2089, %v2092
        %v2094 = vrot.slane %v2093, 2
        %v2096 = vshrl.u32 %v1692, 16
        %v2098 = vrot.slane %v2096, 6
        %v2099 = vshll.u32 %v1692, 16
        %v2101 = vrot.slane %v2099, 7
        %v2102 = vor.u32 %v2098, %v2101
        %v2103 = vrot.slane %v2102, 2
        %v2105 = vshrl.u32 %v1699, 16
        %v2107 = vrot.slane %v2105, 6
        %v2108 = vshll.u32 %v1699, 16
        %v2110 = vrot.slane %v2108, 7
        %v2111 = vor.u32 %v2107, %v2110
        %v2112 = vrot.slane %v2111, 2
        %v2114 = vshrl.u32 %v1706, 16
        %v2116 = vrot.slane %v2114, 6
        %v2117 = vshll.u32 %v1706, 16
        %v2119 = vrot.slane %v2117, 7
        %v2120 = vor.u32 %v2116, %v2119
        %v2121 = vrot.slane %v2120, 2
        %v2123 = vshrl.u32 %v1713, 16
        %v2125 = vrot.slane %v2123, 6
        %v2126 = vshll.u32 %v1713, 16
        %v2128 = vrot.slane %v2126, 7
        %v2129 = vor.u32 %v2125, %v2128
        %v2130 = vrot.slane %v2129, 2
        %s2163 = scalar_lea.vmem [#allocation3], 384
        %vm2164 = vcmask 123904
        %vm2165 = vsmask.f32 1280
        %vm2166 = vmand %vm2164, %vm2165
        %v2167 = vld [vmem:[%s2163] sm:$0x3]
        %v2168 = vsel %vm2166, %v1851, %v2167
        %2169 = vst [vmem:[%s2163] sm:$0x3] %v2168
        %v2170 = vld [vmem:[%s2163 + $0x2] sm:$0x3]
        %v2171 = vsel %vm2166, %v1860, %v2170
        %2172 = vst [vmem:[%s2163 + $0x2] sm:$0x3] %v2171
        %v2173 = vld [vmem:[%s2163 + $0x4] sm:$0x3]
        %v2174 = vsel %vm2166, %v1869, %v2173
        %2175 = vst [vmem:[%s2163 + $0x4] sm:$0x3] %v2174
        %v2176 = vld [vmem:[%s2163 + $0x6] sm:$0x3]
        %v2177 = vsel %vm2166, %v1878, %v2176
        %2178 = vst [vmem:[%s2163 + $0x6] sm:$0x3] %v2177
        %v2179 = vld [vmem:[%s2163 + $0x8] sm:$0x3]
        %v2180 = vsel %vm2166, %v1887, %v2179
        %2181 = vst [vmem:[%s2163 + $0x8] sm:$0x3] %v2180
        %v2182 = vld [vmem:[%s2163 + $0xa] sm:$0x3]
        %v2183 = vsel %vm2166, %v1896, %v2182
        %2184 = vst [vmem:[%s2163 + $0xa] sm:$0x3] %v2183
        %v2185 = vld [vmem:[%s2163 + $0xc] sm:$0x3]
        %v2186 = vsel %vm2166, %v1905, %v2185
        %2187 = vst [vmem:[%s2163 + $0xc] sm:$0x3] %v2186
        %v2188 = vld [vmem:[%s2163 + $0xe] sm:$0x3]
        %v2189 = vsel %vm2166, %v1914, %v2188
        %2190 = vst [vmem:[%s2163 + $0xe] sm:$0x3] %v2189
        %v2191 = vld [vmem:[%s2163 + $0x10] sm:$0x3]
        %v2192 = vsel %vm2166, %v1923, %v2191
        %2193 = vst [vmem:[%s2163 + $0x10] sm:$0x3] %v2192
        %v2194 = vld [vmem:[%s2163 + $0x12] sm:$0x3]
        %v2195 = vsel %vm2166, %v1932, %v2194
        %2196 = vst [vmem:[%s2163 + $0x12] sm:$0x3] %v2195
        %v2197 = vld [vmem:[%s2163 + $0x14] sm:$0x3]
        %v2198 = vsel %vm2166, %v1941, %v2197
        %2199 = vst [vmem:[%s2163 + $0x14] sm:$0x3] %v2198
        %v2200 = vld [vmem:[%s2163 + $0x16] sm:$0x3]
        %v2201 = vsel %vm2166, %v1950, %v2200
        %2202 = vst [vmem:[%s2163 + $0x16] sm:$0x3] %v2201
        %v2203 = vld [vmem:[%s2163 + $0x18] sm:$0x3]
        %v2204 = vsel %vm2166, %v1959, %v2203
        %2205 = vst [vmem:[%s2163 + $0x18] sm:$0x3] %v2204
        %v2206 = vld [vmem:[%s2163 + $0x1a] sm:$0x3]
        %v2207 = vsel %vm2166, %v1968, %v2206
        %2208 = vst [vmem:[%s2163 + $0x1a] sm:$0x3] %v2207
        %v2209 = vld [vmem:[%s2163 + $0x1c] sm:$0x3]
        %v2210 = vsel %vm2166, %v1977, %v2209
        %2211 = vst [vmem:[%s2163 + $0x1c] sm:$0x3] %v2210
        %v2212 = vld [vmem:[%s2163 + $0x1e] sm:$0x3]
        %v2213 = vsel %vm2166, %v1986, %v2212
        %2214 = vst [vmem:[%s2163 + $0x1e] sm:$0x3] %v2213
        %v2215 = vld [vmem:[%s2163 + $0x20] sm:$0x3]
        %v2216 = vsel %vm2166, %v1995, %v2215
        %2217 = vst [vmem:[%s2163 + $0x20] sm:$0x3] %v2216
        %v2218 = vld [vmem:[%s2163 + $0x22] sm:$0x3]
        %v2219 = vsel %vm2166, %v2004, %v2218
        %2220 = vst [vmem:[%s2163 + $0x22] sm:$0x3] %v2219
        %v2221 = vld [vmem:[%s2163 + $0x24] sm:$0x3]
        %v2222 = vsel %vm2166, %v2013, %v2221
        %2223 = vst [vmem:[%s2163 + $0x24] sm:$0x3] %v2222
        %v2224 = vld [vmem:[%s2163 + $0x26] sm:$0x3]
        %v2225 = vsel %vm2166, %v2022, %v2224
        %2226 = vst [vmem:[%s2163 + $0x26] sm:$0x3] %v2225
        %v2227 = vld [vmem:[%s2163 + $0x28] sm:$0x3]
        %v2228 = vsel %vm2166, %v2031, %v2227
        %2229 = vst [vmem:[%s2163 + $0x28] sm:$0x3] %v2228
        %v2230 = vld [vmem:[%s2163 + $0x2a] sm:$0x3]
        %v2231 = vsel %vm2166, %v2040, %v2230
        %2232 = vst [vmem:[%s2163 + $0x2a] sm:$0x3] %v2231
        %v2233 = vld [vmem:[%s2163 + $0x2c] sm:$0x3]
        %v2234 = vsel %vm2166, %v2049, %v2233
        %2235 = vst [vmem:[%s2163 + $0x2c] sm:$0x3] %v2234
        %v2236 = vld [vmem:[%s2163 + $0x2e] sm:$0x3]
        %v2237 = vsel %vm2166, %v2058, %v2236
        %2238 = vst [vmem:[%s2163 + $0x2e] sm:$0x3] %v2237
        %v2239 = vld [vmem:[%s2163 + $0x30] sm:$0x3]
        %v2240 = vsel %vm2166, %v2067, %v2239
        %2241 = vst [vmem:[%s2163 + $0x30] sm:$0x3] %v2240
        %v2242 = vld [vmem:[%s2163 + $0x32] sm:$0x3]
        %v2243 = vsel %vm2166, %v2076, %v2242
        %2244 = vst [vmem:[%s2163 + $0x32] sm:$0x3] %v2243
        %v2245 = vld [vmem:[%s2163 + $0x34] sm:$0x3]
        %v2246 = vsel %vm2166, %v2085, %v2245
        %2247 = vst [vmem:[%s2163 + $0x34] sm:$0x3] %v2246
        %v2248 = vld [vmem:[%s2163 + $0x36] sm:$0x3]
        %v2249 = vsel %vm2166, %v2094, %v2248
        %2250 = vst [vmem:[%s2163 + $0x36] sm:$0x3] %v2249
        %v2251 = vld [vmem:[%s2163 + $0x38] sm:$0x3]
        %v2252 = vsel %vm2166, %v2103, %v2251
        %2253 = vst [vmem:[%s2163 + $0x38] sm:$0x3] %v2252
        %v2254 = vld [vmem:[%s2163 + $0x3a] sm:$0x3]
        %v2255 = vsel %vm2166, %v2112, %v2254
        %2256 = vst [vmem:[%s2163 + $0x3a] sm:$0x3] %v2255
        %v2257 = vld [vmem:[%s2163 + $0x3c] sm:$0x3]
        %v2258 = vsel %vm2166, %v2121, %v2257
        %2259 = vst [vmem:[%s2163 + $0x3c] sm:$0x3] %v2258
        %v2260 = vld [vmem:[%s2163 + $0x3e] sm:$0x3]
        %v2261 = vsel %vm2166, %v2130, %v2260
        %2262 = vst [vmem:[%s2163 + $0x3e] sm:$0x3] %v2261
        %vm2295 = vcmask 123905
        %vm2296 = vsmask.f32 7942
        %vm2297 = vmand %vm2295, %vm2296
        %v2298 = vld [vmem:[%s2163] sm:$0x2]
        %v2299 = vsel %vm2297, %v1849, %v2298
        %2300 = vst [vmem:[%s2163] sm:$0x2] %v2299
        %v2301 = vld [vmem:[%s2163 + $0x2] sm:$0x2]
        %v2302 = vsel %vm2297, %v1858, %v2301
        %2303 = vst [vmem:[%s2163 + $0x2] sm:$0x2] %v2302
        %v2304 = vld [vmem:[%s2163 + $0x4] sm:$0x2]
        %v2305 = vsel %vm2297, %v1867, %v2304
        %2306 = vst [vmem:[%s2163 + $0x4] sm:$0x2] %v2305
        %v2307 = vld [vmem:[%s2163 + $0x6] sm:$0x2]
        %v2308 = vsel %vm2297, %v1876, %v2307
        %2309 = vst [vmem:[%s2163 + $0x6] sm:$0x2] %v2308
        %v2310 = vld [vmem:[%s2163 + $0x8] sm:$0x2]
        %v2311 = vsel %vm2297, %v1885, %v2310
        %2312 = vst [vmem:[%s2163 + $0x8] sm:$0x2] %v2311
        %v2313 = vld [vmem:[%s2163 + $0xa] sm:$0x2]
        %v2314 = vsel %vm2297, %v1894, %v2313
        %2315 = vst [vmem:[%s2163 + $0xa] sm:$0x2] %v2314
        %v2316 = vld [vmem:[%s2163 + $0xc] sm:$0x2]
        %v2317 = vsel %vm2297, %v1903, %v2316
        %2318 = vst [vmem:[%s2163 + $0xc] sm:$0x2] %v2317
        %v2319 = vld [vmem:[%s2163 + $0xe] sm:$0x2]
        %v2320 = vsel %vm2297, %v1912, %v2319
        %2321 = vst [vmem:[%s2163 + $0xe] sm:$0x2] %v2320
        %v2322 = vld [vmem:[%s2163 + $0x10] sm:$0x2]
        %v2323 = vsel %vm2297, %v1921, %v2322
        %2324 = vst [vmem:[%s2163 + $0x10] sm:$0x2] %v2323
        %v2325 = vld [vmem:[%s2163 + $0x12] sm:$0x2]
        %v2326 = vsel %vm2297, %v1930, %v2325
        %2327 = vst [vmem:[%s2163 + $0x12] sm:$0x2] %v2326
        %v2328 = vld [vmem:[%s2163 + $0x14] sm:$0x2]
        %v2329 = vsel %vm2297, %v1939, %v2328
        %2330 = vst [vmem:[%s2163 + $0x14] sm:$0x2] %v2329
        %v2331 = vld [vmem:[%s2163 + $0x16] sm:$0x2]
        %v2332 = vsel %vm2297, %v1948, %v2331
        %2333 = vst [vmem:[%s2163 + $0x16] sm:$0x2] %v2332
        %v2334 = vld [vmem:[%s2163 + $0x18] sm:$0x2]
        %v2335 = vsel %vm2297, %v1957, %v2334
        %2336 = vst [vmem:[%s2163 + $0x18] sm:$0x2] %v2335
        %v2337 = vld [vmem:[%s2163 + $0x1a] sm:$0x2]
        %v2338 = vsel %vm2297, %v1966, %v2337
        %2339 = vst [vmem:[%s2163 + $0x1a] sm:$0x2] %v2338
        %v2340 = vld [vmem:[%s2163 + $0x1c] sm:$0x2]
        %v2341 = vsel %vm2297, %v1975, %v2340
        %2342 = vst [vmem:[%s2163 + $0x1c] sm:$0x2] %v2341
        %v2343 = vld [vmem:[%s2163 + $0x1e] sm:$0x2]
        %v2344 = vsel %vm2297, %v1984, %v2343
        %2345 = vst [vmem:[%s2163 + $0x1e] sm:$0x2] %v2344
        %v2346 = vld [vmem:[%s2163 + $0x20] sm:$0x2]
        %v2347 = vsel %vm2297, %v1993, %v2346
        %2348 = vst [vmem:[%s2163 + $0x20] sm:$0x2] %v2347
        %v2349 = vld [vmem:[%s2163 + $0x22] sm:$0x2]
        %v2350 = vsel %vm2297, %v2002, %v2349
        %2351 = vst [vmem:[%s2163 + $0x22] sm:$0x2] %v2350
        %v2352 = vld [vmem:[%s2163 + $0x24] sm:$0x2]
        %v2353 = vsel %vm2297, %v2011, %v2352
        %2354 = vst [vmem:[%s2163 + $0x24] sm:$0x2] %v2353
        %v2355 = vld [vmem:[%s2163 + $0x26] sm:$0x2]
        %v2356 = vsel %vm2297, %v2020, %v2355
        %2357 = vst [vmem:[%s2163 + $0x26] sm:$0x2] %v2356
        %v2358 = vld [vmem:[%s2163 + $0x28] sm:$0x2]
        %v2359 = vsel %vm2297, %v2029, %v2358
        %2360 = vst [vmem:[%s2163 + $0x28] sm:$0x2] %v2359
        %v2361 = vld [vmem:[%s2163 + $0x2a] sm:$0x2]
        %v2362 = vsel %vm2297, %v2038, %v2361
        %2363 = vst [vmem:[%s2163 + $0x2a] sm:$0x2] %v2362
        %v2364 = vld [vmem:[%s2163 + $0x2c] sm:$0x2]
        %v2365 = vsel %vm2297, %v2047, %v2364
        %2366 = vst [vmem:[%s2163 + $0x2c] sm:$0x2] %v2365
        %v2367 = vld [vmem:[%s2163 + $0x2e] sm:$0x2]
        %v2368 = vsel %vm2297, %v2056, %v2367
        %2369 = vst [vmem:[%s2163 + $0x2e] sm:$0x2] %v2368
        %v2370 = vld [vmem:[%s2163 + $0x30] sm:$0x2]
        %v2371 = vsel %vm2297, %v2065, %v2370
        %2372 = vst [vmem:[%s2163 + $0x30] sm:$0x2] %v2371
        %v2373 = vld [vmem:[%s2163 + $0x32] sm:$0x2]
        %v2374 = vsel %vm2297, %v2074, %v2373
        %2375 = vst [vmem:[%s2163 + $0x32] sm:$0x2] %v2374
        %v2376 = vld [vmem:[%s2163 + $0x34] sm:$0x2]
        %v2377 = vsel %vm2297, %v2083, %v2376
        %2378 = vst [vmem:[%s2163 + $0x34] sm:$0x2] %v2377
        %v2379 = vld [vmem:[%s2163 + $0x36] sm:$0x2]
        %v2380 = vsel %vm2297, %v2092, %v2379
        %2381 = vst [vmem:[%s2163 + $0x36] sm:$0x2] %v2380
        %v2382 = vld [vmem:[%s2163 + $0x38] sm:$0x2]
        %v2383 = vsel %vm2297, %v2101, %v2382
        %2384 = vst [vmem:[%s2163 + $0x38] sm:$0x2] %v2383
        %v2385 = vld [vmem:[%s2163 + $0x3a] sm:$0x2]
        %v2386 = vsel %vm2297, %v2110, %v2385
        %2387 = vst [vmem:[%s2163 + $0x3a] sm:$0x2] %v2386
        %v2388 = vld [vmem:[%s2163 + $0x3c] sm:$0x2]
        %v2389 = vsel %vm2297, %v2119, %v2388
        %2390 = vst [vmem:[%s2163 + $0x3c] sm:$0x2] %v2389
        %v2391 = vld [vmem:[%s2163 + $0x3e] sm:$0x2]
        %v2392 = vsel %vm2297, %v2128, %v2391
        %2393 = vst [vmem:[%s2163 + $0x3e] sm:$0x2] %v2392
        %2394 = vrot.lane.b32.xlu0 %v1496, 127
        %v2395 = vpop.permute.xlu0 %2394
        %2396 = vrot.lane.b32.xlu0 %v1503, 127
        %v2397 = vpop.permute.xlu0 %2396
        %2398 = vrot.lane.b32.xlu0 %v1510, 127
        %v2399 = vpop.permute.xlu0 %2398
        %2400 = vrot.lane.b32.xlu0 %v1517, 127
        %v2401 = vpop.permute.xlu0 %2400
        %2402 = vrot.lane.b32.xlu0 %v1524, 127
        %v2403 = vpop.permute.xlu0 %2402
        %2404 = vrot.lane.b32.xlu0 %v1531, 127
        %v2405 = vpop.permute.xlu0 %2404
        %2406 = vrot.lane.b32.xlu0 %v1538, 127
        %v2407 = vpop.permute.xlu0 %2406
        %2408 = vrot.lane.b32.xlu0 %v1545, 127
        %v2409 = vpop.permute.xlu0 %2408
        %2410 = vrot.lane.b32.xlu0 %v1552, 127
        %v2411 = vpop.permute.xlu0 %2410
        %2412 = vrot.lane.b32.xlu0 %v1559, 127
        %v2413 = vpop.permute.xlu0 %2412
        %2414 = vrot.lane.b32.xlu0 %v1566, 127
        %v2415 = vpop.permute.xlu0 %2414
        %2416 = vrot.lane.b32.xlu0 %v1573, 127
        %v2417 = vpop.permute.xlu0 %2416
        %2418 = vrot.lane.b32.xlu0 %v1580, 127
        %v2419 = vpop.permute.xlu0 %2418
        %2420 = vrot.lane.b32.xlu0 %v1587, 127
        %v2421 = vpop.permute.xlu0 %2420
        %2422 = vrot.lane.b32.xlu0 %v1594, 127
        %v2423 = vpop.permute.xlu0 %2422
        %2424 = vrot.lane.b32.xlu0 %v1601, 127
        %v2425 = vpop.permute.xlu0 %2424
        %2426 = vrot.lane.b32.xlu0 %v1608, 127
        %v2427 = vpop.permute.xlu0 %2426
        %2428 = vrot.lane.b32.xlu0 %v1615, 127
        %v2429 = vpop.permute.xlu0 %2428
        %2430 = vrot.lane.b32.xlu0 %v1622, 127
        %v2431 = vpop.permute.xlu0 %2430
        %2432 = vrot.lane.b32.xlu0 %v1629, 127
        %v2433 = vpop.permute.xlu0 %2432
        %2434 = vrot.lane.b32.xlu0 %v1636, 127
        %v2435 = vpop.permute.xlu0 %2434
        %2436 = vrot.lane.b32.xlu0 %v1643, 127
        %v2437 = vpop.permute.xlu0 %2436
        %2438 = vrot.lane.b32.xlu0 %v1650, 127
        %v2439 = vpop.permute.xlu0 %2438
        %2440 = vrot.lane.b32.xlu0 %v1657, 127
        %v2441 = vpop.permute.xlu0 %2440
        %2442 = vrot.lane.b32.xlu0 %v1664, 127
        %v2443 = vpop.permute.xlu0 %2442
        %2444 = vrot.lane.b32.xlu0 %v1671, 127
        %v2445 = vpop.permute.xlu0 %2444
        %2446 = vrot.lane.b32.xlu0 %v1678, 127
        %v2447 = vpop.permute.xlu0 %2446
        %2448 = vrot.lane.b32.xlu0 %v1685, 127
        %v2449 = vpop.permute.xlu0 %2448
        %2450 = vrot.lane.b32.xlu0 %v1692, 127
        %v2451 = vpop.permute.xlu0 %2450
        %2452 = vrot.lane.b32.xlu0 %v1699, 127
        %v2453 = vpop.permute.xlu0 %2452
        %2454 = vrot.lane.b32.xlu0 %v1706, 127
        %v2455 = vpop.permute.xlu0 %2454
        %2456 = vrot.lane.b32.xlu0 %v1713, 127
        %v2457 = vpop.permute.xlu0 %2456
        %s2490 = scalar_lea.vmem [#allocation3], 64
        %2491 = vst.msk [vmem:[%s2490] sm:$0x3] %vm1425, %v2395
        %2492 = vst.msk [vmem:[%s2490 + $0x2] sm:$0x3] %vm1425, %v2397
        %2493 = vst.msk [vmem:[%s2490 + $0x4] sm:$0x3] %vm1425, %v2399
        %2494 = vst.msk [vmem:[%s2490 + $0x6] sm:$0x3] %vm1425, %v2401
        %2495 = vst.msk [vmem:[%s2490 + $0x8] sm:$0x3] %vm1425, %v2403
        %2496 = vst.msk [vmem:[%s2490 + $0xa] sm:$0x3] %vm1425, %v2405
        %2497 = vst.msk [vmem:[%s2490 + $0xc] sm:$0x3] %vm1425, %v2407
        %2498 = vst.msk [vmem:[%s2490 + $0xe] sm:$0x3] %vm1425, %v2409
        %2499 = vst.msk [vmem:[%s2490 + $0x10] sm:$0x3] %vm1425, %v2411
        %2500 = vst.msk [vmem:[%s2490 + $0x12] sm:$0x3] %vm1425, %v2413
        %2501 = vst.msk [vmem:[%s2490 + $0x14] sm:$0x3] %vm1425, %v2415
        %2502 = vst.msk [vmem:[%s2490 + $0x16] sm:$0x3] %vm1425, %v2417
        %2503 = vst.msk [vmem:[%s2490 + $0x18] sm:$0x3] %vm1425, %v2419
        %2504 = vst.msk [vmem:[%s2490 + $0x1a] sm:$0x3] %vm1425, %v2421
        %2505 = vst.msk [vmem:[%s2490 + $0x1c] sm:$0x3] %vm1425, %v2423
        %2506 = vst.msk [vmem:[%s2490 + $0x1e] sm:$0x3] %vm1425, %v2425
        %2507 = vst.msk [vmem:[%s2490 + $0x20] sm:$0x3] %vm1425, %v2427
        %2508 = vst.msk [vmem:[%s2490 + $0x22] sm:$0x3] %vm1425, %v2429
        %2509 = vst.msk [vmem:[%s2490 + $0x24] sm:$0x3] %vm1425, %v2431
        %2510 = vst.msk [vmem:[%s2490 + $0x26] sm:$0x3] %vm1425, %v2433
        %2511 = vst.msk [vmem:[%s2490 + $0x28] sm:$0x3] %vm1425, %v2435
        %2512 = vst.msk [vmem:[%s2490 + $0x2a] sm:$0x3] %vm1425, %v2437
        %2513 = vst.msk [vmem:[%s2490 + $0x2c] sm:$0x3] %vm1425, %v2439
        %2514 = vst.msk [vmem:[%s2490 + $0x2e] sm:$0x3] %vm1425, %v2441
        %2515 = vst.msk [vmem:[%s2490 + $0x30] sm:$0x3] %vm1425, %v2443
        %2516 = vst.msk [vmem:[%s2490 + $0x32] sm:$0x3] %vm1425, %v2445
        %2517 = vst.msk [vmem:[%s2490 + $0x34] sm:$0x3] %vm1425, %v2447
        %2518 = vst.msk [vmem:[%s2490 + $0x36] sm:$0x3] %vm1425, %v2449
        %2519 = vst.msk [vmem:[%s2490 + $0x38] sm:$0x3] %vm1425, %v2451
        %2520 = vst.msk [vmem:[%s2490 + $0x3a] sm:$0x3] %vm1425, %v2453
        %2521 = vst.msk [vmem:[%s2490 + $0x3c] sm:$0x3] %vm1425, %v2455
        %2522 = vst.msk [vmem:[%s2490 + $0x3e] sm:$0x3] %vm1425, %v2457
        %2523 = vrot.lane.b32.xlu0 %v1496, 109
        %v2524 = vpop.permute.xlu0 %2523
        %2525 = vrot.lane.b32.xlu0 %v1503, 109
        %v2526 = vpop.permute.xlu0 %2525
        %2527 = vrot.lane.b32.xlu0 %v1510, 109
        %v2528 = vpop.permute.xlu0 %2527
        %2529 = vrot.lane.b32.xlu0 %v1517, 109
        %v2530 = vpop.permute.xlu0 %2529
        %2531 = vrot.lane.b32.xlu0 %v1524, 109
        %v2532 = vpop.permute.xlu0 %2531
        %2533 = vrot.lane.b32.xlu0 %v1531, 109
        %v2534 = vpop.permute.xlu0 %2533
        %2535 = vrot.lane.b32.xlu0 %v1538, 109
        %v2536 = vpop.permute.xlu0 %2535
        %2537 = vrot.lane.b32.xlu0 %v1545, 109
        %v2538 = vpop.permute.xlu0 %2537
        %2539 = vrot.lane.b32.xlu0 %v1552, 109
        %v2540 = vpop.permute.xlu0 %2539
        %2541 = vrot.lane.b32.xlu0 %v1559, 109
        %v2542 = vpop.permute.xlu0 %2541
        %2543 = vrot.lane.b32.xlu0 %v1566, 109
        %v2544 = vpop.permute.xlu0 %2543
        %2545 = vrot.lane.b32.xlu0 %v1573, 109
        %v2546 = vpop.permute.xlu0 %2545
        %2547 = vrot.lane.b32.xlu0 %v1580, 109
        %v2548 = vpop.permute.xlu0 %2547
        %2549 = vrot.lane.b32.xlu0 %v1587, 109
        %v2550 = vpop.permute.xlu0 %2549
        %2551 = vrot.lane.b32.xlu0 %v1594, 109
        %v2552 = vpop.permute.xlu0 %2551
        %2553 = vrot.lane.b32.xlu0 %v1601, 109
        %v2554 = vpop.permute.xlu0 %2553
        %2555 = vrot.lane.b32.xlu0 %v1608, 109
        %v2556 = vpop.permute.xlu0 %2555
        %2557 = vrot.lane.b32.xlu0 %v1615, 109
        %v2558 = vpop.permute.xlu0 %2557
        %2559 = vrot.lane.b32.xlu0 %v1622, 109
        %v2560 = vpop.permute.xlu0 %2559
        %2561 = vrot.lane.b32.xlu0 %v1629, 109
        %v2562 = vpop.permute.xlu0 %2561
        %2563 = vrot.lane.b32.xlu0 %v1636, 109
        %v2564 = vpop.permute.xlu0 %2563
        %2565 = vrot.lane.b32.xlu0 %v1643, 109
        %v2566 = vpop.permute.xlu0 %2565
        %2567 = vrot.lane.b32.xlu0 %v1650, 109
        %v2568 = vpop.permute.xlu0 %2567
        %2569 = vrot.lane.b32.xlu0 %v1657, 109
        %v2570 = vpop.permute.xlu0 %2569
        %2571 = vrot.lane.b32.xlu0 %v1664, 109
        %v2572 = vpop.permute.xlu0 %2571
        %2573 = vrot.lane.b32.xlu0 %v1671, 109
        %v2574 = vpop.permute.xlu0 %2573
        %2575 = vrot.lane.b32.xlu0 %v1678, 109
        %v2576 = vpop.permute.xlu0 %2575
        %2577 = vrot.lane.b32.xlu0 %v1685, 109
        %v2578 = vpop.permute.xlu0 %2577
        %2579 = vrot.lane.b32.xlu0 %v1692, 109
        %v2580 = vpop.permute.xlu0 %2579
        %2581 = vrot.lane.b32.xlu0 %v1699, 109
        %v2582 = vpop.permute.xlu0 %2581
        %2583 = vrot.lane.b32.xlu0 %v1706, 109
        %v2584 = vpop.permute.xlu0 %2583
        %2585 = vrot.lane.b32.xlu0 %v1713, 109
        %v2586 = vpop.permute.xlu0 %2585
        %s2619 = scalar_lea.vmem [#allocation3], 256
        %2620 = vst.msk [vmem:[%s2619] sm:$0x3] %vm1425, %v2524
        %2621 = vst.msk [vmem:[%s2619 + $0x2] sm:$0x3] %vm1425, %v2526
        %2622 = vst.msk [vmem:[%s2619 + $0x4] sm:$0x3] %vm1425, %v2528
        %2623 = vst.msk [vmem:[%s2619 + $0x6] sm:$0x3] %vm1425, %v2530
        %2624 = vst.msk [vmem:[%s2619 + $0x8] sm:$0x3] %vm1425, %v2532
        %2625 = vst.msk [vmem:[%s2619 + $0xa] sm:$0x3] %vm1425, %v2534
        %2626 = vst.msk [vmem:[%s2619 + $0xc] sm:$0x3] %vm1425, %v2536
        %2627 = vst.msk [vmem:[%s2619 + $0xe] sm:$0x3] %vm1425, %v2538
        %2628 = vst.msk [vmem:[%s2619 + $0x10] sm:$0x3] %vm1425, %v2540
        %2629 = vst.msk [vmem:[%s2619 + $0x12] sm:$0x3] %vm1425, %v2542
        %2630 = vst.msk [vmem:[%s2619 + $0x14] sm:$0x3] %vm1425, %v2544
        %2631 = vst.msk [vmem:[%s2619 + $0x16] sm:$0x3] %vm1425, %v2546
        %2632 = vst.msk [vmem:[%s2619 + $0x18] sm:$0x3] %vm1425, %v2548
        %2633 = vst.msk [vmem:[%s2619 + $0x1a] sm:$0x3] %vm1425, %v2550
        %2634 = vst.msk [vmem:[%s2619 + $0x1c] sm:$0x3] %vm1425, %v2552
        %2635 = vst.msk [vmem:[%s2619 + $0x1e] sm:$0x3] %vm1425, %v2554
        %2636 = vst.msk [vmem:[%s2619 + $0x20] sm:$0x3] %vm1425, %v2556
        %2637 = vst.msk [vmem:[%s2619 + $0x22] sm:$0x3] %vm1425, %v2558
        %2638 = vst.msk [vmem:[%s2619 + $0x24] sm:$0x3] %vm1425, %v2560
        %2639 = vst.msk [vmem:[%s2619 + $0x26] sm:$0x3] %vm1425, %v2562
        %2640 = vst.msk [vmem:[%s2619 + $0x28] sm:$0x3] %vm1425, %v2564
        %2641 = vst.msk [vmem:[%s2619 + $0x2a] sm:$0x3] %vm1425, %v2566
        %2642 = vst.msk [vmem:[%s2619 + $0x2c] sm:$0x3] %vm1425, %v2568
        %2643 = vst.msk [vmem:[%s2619 + $0x2e] sm:$0x3] %vm1425, %v2570
        %2644 = vst.msk [vmem:[%s2619 + $0x30] sm:$0x3] %vm1425, %v2572
        %2645 = vst.msk [vmem:[%s2619 + $0x32] sm:$0x3] %vm1425, %v2574
        %2646 = vst.msk [vmem:[%s2619 + $0x34] sm:$0x3] %vm1425, %v2576
        %2647 = vst.msk [vmem:[%s2619 + $0x36] sm:$0x3] %vm1425, %v2578
        %2648 = vst.msk [vmem:[%s2619 + $0x38] sm:$0x3] %vm1425, %v2580
        %2649 = vst.msk [vmem:[%s2619 + $0x3a] sm:$0x3] %vm1425, %v2582
        %2650 = vst.msk [vmem:[%s2619 + $0x3c] sm:$0x3] %vm1425, %v2584
        %2651 = vst.msk [vmem:[%s2619 + $0x3e] sm:$0x3] %vm1425, %v2586
        %2652 = vrot.lane.b32.xlu0 %v1851, 127
        %v2653 = vpop.permute.xlu0 %2652
        %2654 = vrot.lane.b32.xlu0 %v1860, 127
        %v2655 = vpop.permute.xlu0 %2654
        %2656 = vrot.lane.b32.xlu0 %v1869, 127
        %v2657 = vpop.permute.xlu0 %2656
        %2658 = vrot.lane.b32.xlu0 %v1878, 127
        %v2659 = vpop.permute.xlu0 %2658
        %2660 = vrot.lane.b32.xlu0 %v1887, 127
        %v2661 = vpop.permute.xlu0 %2660
        %2662 = vrot.lane.b32.xlu0 %v1896, 127
        %v2663 = vpop.permute.xlu0 %2662
        %2664 = vrot.lane.b32.xlu0 %v1905, 127
        %v2665 = vpop.permute.xlu0 %2664
        %2666 = vrot.lane.b32.xlu0 %v1914, 127
        %v2667 = vpop.permute.xlu0 %2666
        %2668 = vrot.lane.b32.xlu0 %v1923, 127
        %v2669 = vpop.permute.xlu0 %2668
        %2670 = vrot.lane.b32.xlu0 %v1932, 127
        %v2671 = vpop.permute.xlu0 %2670
        %2672 = vrot.lane.b32.xlu0 %v1941, 127
        %v2673 = vpop.permute.xlu0 %2672
        %2674 = vrot.lane.b32.xlu0 %v1950, 127
        %v2675 = vpop.permute.xlu0 %2674
        %2676 = vrot.lane.b32.xlu0 %v1959, 127
        %v2677 = vpop.permute.xlu0 %2676
        %2678 = vrot.lane.b32.xlu0 %v1968, 127
        %v2679 = vpop.permute.xlu0 %2678
        %2680 = vrot.lane.b32.xlu0 %v1977, 127
        %v2681 = vpop.permute.xlu0 %2680
        %2682 = vrot.lane.b32.xlu0 %v1986, 127
        %v2683 = vpop.permute.xlu0 %2682
        %2684 = vrot.lane.b32.xlu0 %v1995, 127
        %v2685 = vpop.permute.xlu0 %2684
        %2686 = vrot.lane.b32.xlu0 %v2004, 127
        %v2687 = vpop.permute.xlu0 %2686
        %2688 = vrot.lane.b32.xlu0 %v2013, 127
        %v2689 = vpop.permute.xlu0 %2688
        %2690 = vrot.lane.b32.xlu0 %v2022, 127
        %v2691 = vpop.permute.xlu0 %2690
        %2692 = vrot.lane.b32.xlu0 %v2031, 127
        %v2693 = vpop.permute.xlu0 %2692
        %2694 = vrot.lane.b32.xlu0 %v2040, 127
        %v2695 = vpop.permute.xlu0 %2694
        %2696 = vrot.lane.b32.xlu0 %v2049, 127
        %v2697 = vpop.permute.xlu0 %2696
        %2698 = vrot.lane.b32.xlu0 %v2058, 127
        %v2699 = vpop.permute.xlu0 %2698
        %2700 = vrot.lane.b32.xlu0 %v2067, 127
        %v2701 = vpop.permute.xlu0 %2700
        %2702 = vrot.lane.b32.xlu0 %v2076, 127
        %v2703 = vpop.permute.xlu0 %2702
        %2704 = vrot.lane.b32.xlu0 %v2085, 127
        %v2705 = vpop.permute.xlu0 %2704
        %2706 = vrot.lane.b32.xlu0 %v2094, 127
        %v2707 = vpop.permute.xlu0 %2706
        %2708 = vrot.lane.b32.xlu0 %v2103, 127
        %v2709 = vpop.permute.xlu0 %2708
        %2710 = vrot.lane.b32.xlu0 %v2112, 127
        %v2711 = vpop.permute.xlu0 %2710
        %2712 = vrot.lane.b32.xlu0 %v2121, 127
        %v2713 = vpop.permute.xlu0 %2712
        %2714 = vrot.lane.b32.xlu0 %v2130, 127
        %v2715 = vpop.permute.xlu0 %2714
        %s2748 = scalar_lea.vmem [#allocation3], 448
        %v2749 = vld [vmem:[%s2748] sm:$0x3]
        %v2750 = vsel %vm2166, %v2653, %v2749
        %2751 = vst [vmem:[%s2748] sm:$0x3] %v2750
        %v2752 = vld [vmem:[%s2748 + $0x2] sm:$0x3]
        %v2753 = vsel %vm2166, %v2655, %v2752
        %2754 = vst [vmem:[%s2748 + $0x2] sm:$0x3] %v2753
        %v2755 = vld [vmem:[%s2748 + $0x4] sm:$0x3]
        %v2756 = vsel %vm2166, %v2657, %v2755
        %2757 = vst [vmem:[%s2748 + $0x4] sm:$0x3] %v2756
        %v2758 = vld [vmem:[%s2748 + $0x6] sm:$0x3]
        %v2759 = vsel %vm2166, %v2659, %v2758
        %2760 = vst [vmem:[%s2748 + $0x6] sm:$0x3] %v2759
        %v2761 = vld [vmem:[%s2748 + $0x8] sm:$0x3]
        %v2762 = vsel %vm2166, %v2661, %v2761
        %2763 = vst [vmem:[%s2748 + $0x8] sm:$0x3] %v2762
        %v2764 = vld [vmem:[%s2748 + $0xa] sm:$0x3]
        %v2765 = vsel %vm2166, %v2663, %v2764
        %2766 = vst [vmem:[%s2748 + $0xa] sm:$0x3] %v2765
        %v2767 = vld [vmem:[%s2748 + $0xc] sm:$0x3]
        %v2768 = vsel %vm2166, %v2665, %v2767
        %2769 = vst [vmem:[%s2748 + $0xc] sm:$0x3] %v2768
        %v2770 = vld [vmem:[%s2748 + $0xe] sm:$0x3]
        %v2771 = vsel %vm2166, %v2667, %v2770
        %2772 = vst [vmem:[%s2748 + $0xe] sm:$0x3] %v2771
        %v2773 = vld [vmem:[%s2748 + $0x10] sm:$0x3]
        %v2774 = vsel %vm2166, %v2669, %v2773
        %2775 = vst [vmem:[%s2748 + $0x10] sm:$0x3] %v2774
        %v2776 = vld [vmem:[%s2748 + $0x12] sm:$0x3]
        %v2777 = vsel %vm2166, %v2671, %v2776
        %2778 = vst [vmem:[%s2748 + $0x12] sm:$0x3] %v2777
        %v2779 = vld [vmem:[%s2748 + $0x14] sm:$0x3]
        %v2780 = vsel %vm2166, %v2673, %v2779
        %2781 = vst [vmem:[%s2748 + $0x14] sm:$0x3] %v2780
        %v2782 = vld [vmem:[%s2748 + $0x16] sm:$0x3]
        %v2783 = vsel %vm2166, %v2675, %v2782
        %2784 = vst [vmem:[%s2748 + $0x16] sm:$0x3] %v2783
        %v2785 = vld [vmem:[%s2748 + $0x18] sm:$0x3]
        %v2786 = vsel %vm2166, %v2677, %v2785
        %2787 = vst [vmem:[%s2748 + $0x18] sm:$0x3] %v2786
        %v2788 = vld [vmem:[%s2748 + $0x1a] sm:$0x3]
        %v2789 = vsel %vm2166, %v2679, %v2788
        %2790 = vst [vmem:[%s2748 + $0x1a] sm:$0x3] %v2789
        %v2791 = vld [vmem:[%s2748 + $0x1c] sm:$0x3]
        %v2792 = vsel %vm2166, %v2681, %v2791
        %2793 = vst [vmem:[%s2748 + $0x1c] sm:$0x3] %v2792
        %v2794 = vld [vmem:[%s2748 + $0x1e] sm:$0x3]
        %v2795 = vsel %vm2166, %v2683, %v2794
        %2796 = vst [vmem:[%s2748 + $0x1e] sm:$0x3] %v2795
        %v2797 = vld [vmem:[%s2748 + $0x20] sm:$0x3]
        %v2798 = vsel %vm2166, %v2685, %v2797
        %2799 = vst [vmem:[%s2748 + $0x20] sm:$0x3] %v2798
        %v2800 = vld [vmem:[%s2748 + $0x22] sm:$0x3]
        %v2801 = vsel %vm2166, %v2687, %v2800
        %2802 = vst [vmem:[%s2748 + $0x22] sm:$0x3] %v2801
        %v2803 = vld [vmem:[%s2748 + $0x24] sm:$0x3]
        %v2804 = vsel %vm2166, %v2689, %v2803
        %2805 = vst [vmem:[%s2748 + $0x24] sm:$0x3] %v2804
        %v2806 = vld [vmem:[%s2748 + $0x26] sm:$0x3]
        %v2807 = vsel %vm2166, %v2691, %v2806
        %2808 = vst [vmem:[%s2748 + $0x26] sm:$0x3] %v2807
        %v2809 = vld [vmem:[%s2748 + $0x28] sm:$0x3]
        %v2810 = vsel %vm2166, %v2693, %v2809
        %2811 = vst [vmem:[%s2748 + $0x28] sm:$0x3] %v2810
        %v2812 = vld [vmem:[%s2748 + $0x2a] sm:$0x3]
        %v2813 = vsel %vm2166, %v2695, %v2812
        %2814 = vst [vmem:[%s2748 + $0x2a] sm:$0x3] %v2813
        %v2815 = vld [vmem:[%s2748 + $0x2c] sm:$0x3]
        %v2816 = vsel %vm2166, %v2697, %v2815
        %2817 = vst [vmem:[%s2748 + $0x2c] sm:$0x3] %v2816
        %v2818 = vld [vmem:[%s2748 + $0x2e] sm:$0x3]
        %v2819 = vsel %vm2166, %v2699, %v2818
        %2820 = vst [vmem:[%s2748 + $0x2e] sm:$0x3] %v2819
        %v2821 = vld [vmem:[%s2748 + $0x30] sm:$0x3]
        %v2822 = vsel %vm2166, %v2701, %v2821
        %2823 = vst [vmem:[%s2748 + $0x30] sm:$0x3] %v2822
        %v2824 = vld [vmem:[%s2748 + $0x32] sm:$0x3]
        %v2825 = vsel %vm2166, %v2703, %v2824
        %2826 = vst [vmem:[%s2748 + $0x32] sm:$0x3] %v2825
        %v2827 = vld [vmem:[%s2748 + $0x34] sm:$0x3]
        %v2828 = vsel %vm2166, %v2705, %v2827
        %2829 = vst [vmem:[%s2748 + $0x34] sm:$0x3] %v2828
        %v2830 = vld [vmem:[%s2748 + $0x36] sm:$0x3]
        %v2831 = vsel %vm2166, %v2707, %v2830
        %2832 = vst [vmem:[%s2748 + $0x36] sm:$0x3] %v2831
        %v2833 = vld [vmem:[%s2748 + $0x38] sm:$0x3]
        %v2834 = vsel %vm2166, %v2709, %v2833
        %2835 = vst [vmem:[%s2748 + $0x38] sm:$0x3] %v2834
        %v2836 = vld [vmem:[%s2748 + $0x3a] sm:$0x3]
        %v2837 = vsel %vm2166, %v2711, %v2836
        %2838 = vst [vmem:[%s2748 + $0x3a] sm:$0x3] %v2837
        %v2839 = vld [vmem:[%s2748 + $0x3c] sm:$0x3]
        %v2840 = vsel %vm2166, %v2713, %v2839
        %2841 = vst [vmem:[%s2748 + $0x3c] sm:$0x3] %v2840
        %v2842 = vld [vmem:[%s2748 + $0x3e] sm:$0x3]
        %v2843 = vsel %vm2166, %v2715, %v2842
        %2844 = vst [vmem:[%s2748 + $0x3e] sm:$0x3] %v2843
        %2845 = vrot.lane.b32.xlu0 %v1849, 127
        %v2846 = vpop.permute.xlu0 %2845
        %2847 = vrot.lane.b32.xlu0 %v1858, 127
        %v2848 = vpop.permute.xlu0 %2847
        %2849 = vrot.lane.b32.xlu0 %v1867, 127
        %v2850 = vpop.permute.xlu0 %2849
        %2851 = vrot.lane.b32.xlu0 %v1876, 127
        %v2852 = vpop.permute.xlu0 %2851
        %2853 = vrot.lane.b32.xlu0 %v1885, 127
        %v2854 = vpop.permute.xlu0 %2853
        %2855 = vrot.lane.b32.xlu0 %v1894, 127
        %v2856 = vpop.permute.xlu0 %2855
        %2857 = vrot.lane.b32.xlu0 %v1903, 127
        %v2858 = vpop.permute.xlu0 %2857
        %2859 = vrot.lane.b32.xlu0 %v1912, 127
        %v2860 = vpop.permute.xlu0 %2859
        %2861 = vrot.lane.b32.xlu0 %v1921, 127
        %v2862 = vpop.permute.xlu0 %2861
        %2863 = vrot.lane.b32.xlu0 %v1930, 127
        %v2864 = vpop.permute.xlu0 %2863
        %2865 = vrot.lane.b32.xlu0 %v1939, 127
        %v2866 = vpop.permute.xlu0 %2865
        %2867 = vrot.lane.b32.xlu0 %v1948, 127
        %v2868 = vpop.permute.xlu0 %2867
        %2869 = vrot.lane.b32.xlu0 %v1957, 127
        %v2870 = vpop.permute.xlu0 %2869
        %2871 = vrot.lane.b32.xlu0 %v1966, 127
        %v2872 = vpop.permute.xlu0 %2871
        %2873 = vrot.lane.b32.xlu0 %v1975, 127
        %v2874 = vpop.permute.xlu0 %2873
        %2875 = vrot.lane.b32.xlu0 %v1984, 127
        %v2876 = vpop.permute.xlu0 %2875
        %2877 = vrot.lane.b32.xlu0 %v1993, 127
        %v2878 = vpop.permute.xlu0 %2877
        %2879 = vrot.lane.b32.xlu0 %v2002, 127
        %v2880 = vpop.permute.xlu0 %2879
        %2881 = vrot.lane.b32.xlu0 %v2011, 127
        %v2882 = vpop.permute.xlu0 %2881
        %2883 = vrot.lane.b32.xlu0 %v2020, 127
        %v2884 = vpop.permute.xlu0 %2883
        %2885 = vrot.lane.b32.xlu0 %v2029, 127
        %v2886 = vpop.permute.xlu0 %2885
        %2887 = vrot.lane.b32.xlu0 %v2038, 127
        %v2888 = vpop.permute.xlu0 %2887
        %2889 = vrot.lane.b32.xlu0 %v2047, 127
        %v2890 = vpop.permute.xlu0 %2889
        %2891 = vrot.lane.b32.xlu0 %v2056, 127
        %v2892 = vpop.permute.xlu0 %2891
        %2893 = vrot.lane.b32.xlu0 %v2065, 127
        %v2894 = vpop.permute.xlu0 %2893
        %2895 = vrot.lane.b32.xlu0 %v2074, 127
        %v2896 = vpop.permute.xlu0 %2895
        %2897 = vrot.lane.b32.xlu0 %v2083, 127
        %v2898 = vpop.permute.xlu0 %2897
        %2899 = vrot.lane.b32.xlu0 %v2092, 127
        %v2900 = vpop.permute.xlu0 %2899
        %2901 = vrot.lane.b32.xlu0 %v2101, 127
        %v2902 = vpop.permute.xlu0 %2901
        %2903 = vrot.lane.b32.xlu0 %v2110, 127
        %v2904 = vpop.permute.xlu0 %2903
        %2905 = vrot.lane.b32.xlu0 %v2119, 127
        %v2906 = vpop.permute.xlu0 %2905
        %2907 = vrot.lane.b32.xlu0 %v2128, 127
        %v2908 = vpop.permute.xlu0 %2907
        %v2941 = vld [vmem:[%s2748] sm:$0x2]
        %v2942 = vsel %vm2297, %v2846, %v2941
        %2943 = vst [vmem:[%s2748] sm:$0x2] %v2942
        %v2944 = vld [vmem:[%s2748 + $0x2] sm:$0x2]
        %v2945 = vsel %vm2297, %v2848, %v2944
        %2946 = vst [vmem:[%s2748 + $0x2] sm:$0x2] %v2945
        %v2947 = vld [vmem:[%s2748 + $0x4] sm:$0x2]
        %v2948 = vsel %vm2297, %v2850, %v2947
        %2949 = vst [vmem:[%s2748 + $0x4] sm:$0x2] %v2948
        %v2950 = vld [vmem:[%s2748 + $0x6] sm:$0x2]
        %v2951 = vsel %vm2297, %v2852, %v2950
        %2952 = vst [vmem:[%s2748 + $0x6] sm:$0x2] %v2951
        %v2953 = vld [vmem:[%s2748 + $0x8] sm:$0x2]
        %v2954 = vsel %vm2297, %v2854, %v2953
        %2955 = vst [vmem:[%s2748 + $0x8] sm:$0x2] %v2954
        %v2956 = vld [vmem:[%s2748 + $0xa] sm:$0x2]
        %v2957 = vsel %vm2297, %v2856, %v2956
        %2958 = vst [vmem:[%s2748 + $0xa] sm:$0x2] %v2957
        %v2959 = vld [vmem:[%s2748 + $0xc] sm:$0x2]
        %v2960 = vsel %vm2297, %v2858, %v2959
        %2961 = vst [vmem:[%s2748 + $0xc] sm:$0x2] %v2960
        %v2962 = vld [vmem:[%s2748 + $0xe] sm:$0x2]
        %v2963 = vsel %vm2297, %v2860, %v2962
        %2964 = vst [vmem:[%s2748 + $0xe] sm:$0x2] %v2963
        %v2965 = vld [vmem:[%s2748 + $0x10] sm:$0x2]
        %v2966 = vsel %vm2297, %v2862, %v2965
        %2967 = vst [vmem:[%s2748 + $0x10] sm:$0x2] %v2966
        %v2968 = vld [vmem:[%s2748 + $0x12] sm:$0x2]
        %v2969 = vsel %vm2297, %v2864, %v2968
        %2970 = vst [vmem:[%s2748 + $0x12] sm:$0x2] %v2969
        %v2971 = vld [vmem:[%s2748 + $0x14] sm:$0x2]
        %v2972 = vsel %vm2297, %v2866, %v2971
        %2973 = vst [vmem:[%s2748 + $0x14] sm:$0x2] %v2972
        %v2974 = vld [vmem:[%s2748 + $0x16] sm:$0x2]
        %v2975 = vsel %vm2297, %v2868, %v2974
        %2976 = vst [vmem:[%s2748 + $0x16] sm:$0x2] %v2975
        %v2977 = vld [vmem:[%s2748 + $0x18] sm:$0x2]
        %v2978 = vsel %vm2297, %v2870, %v2977
        %2979 = vst [vmem:[%s2748 + $0x18] sm:$0x2] %v2978
        %v2980 = vld [vmem:[%s2748 + $0x1a] sm:$0x2]
        %v2981 = vsel %vm2297, %v2872, %v2980
        %2982 = vst [vmem:[%s2748 + $0x1a] sm:$0x2] %v2981
        %v2983 = vld [vmem:[%s2748 + $0x1c] sm:$0x2]
        %v2984 = vsel %vm2297, %v2874, %v2983
        %2985 = vst [vmem:[%s2748 + $0x1c] sm:$0x2] %v2984
        %v2986 = vld [vmem:[%s2748 + $0x1e] sm:$0x2]
        %v2987 = vsel %vm2297, %v2876, %v2986
        %2988 = vst [vmem:[%s2748 + $0x1e] sm:$0x2] %v2987
        %v2989 = vld [vmem:[%s2748 + $0x20] sm:$0x2]
        %v2990 = vsel %vm2297, %v2878, %v2989
        %2991 = vst [vmem:[%s2748 + $0x20] sm:$0x2] %v2990
        %v2992 = vld [vmem:[%s2748 + $0x22] sm:$0x2]
        %v2993 = vsel %vm2297, %v2880, %v2992
        %2994 = vst [vmem:[%s2748 + $0x22] sm:$0x2] %v2993
        %v2995 = vld [vmem:[%s2748 + $0x24] sm:$0x2]
        %v2996 = vsel %vm2297, %v2882, %v2995
        %2997 = vst [vmem:[%s2748 + $0x24] sm:$0x2] %v2996
        %v2998 = vld [vmem:[%s2748 + $0x26] sm:$0x2]
        %v2999 = vsel %vm2297, %v2884, %v2998
        %3000 = vst [vmem:[%s2748 + $0x26] sm:$0x2] %v2999
        %v3001 = vld [vmem:[%s2748 + $0x28] sm:$0x2]
        %v3002 = vsel %vm2297, %v2886, %v3001
        %3003 = vst [vmem:[%s2748 + $0x28] sm:$0x2] %v3002
        %v3004 = vld [vmem:[%s2748 + $0x2a] sm:$0x2]
        %v3005 = vsel %vm2297, %v2888, %v3004
        %3006 = vst [vmem:[%s2748 + $0x2a] sm:$0x2] %v3005
        %v3007 = vld [vmem:[%s2748 + $0x2c] sm:$0x2]
        %v3008 = vsel %vm2297, %v2890, %v3007
        %3009 = vst [vmem:[%s2748 + $0x2c] sm:$0x2] %v3008
        %v3010 = vld [vmem:[%s2748 + $0x2e] sm:$0x2]
        %v3011 = vsel %vm2297, %v2892, %v3010
        %3012 = vst [vmem:[%s2748 + $0x2e] sm:$0x2] %v3011
        %v3013 = vld [vmem:[%s2748 + $0x30] sm:$0x2]
        %v3014 = vsel %vm2297, %v2894, %v3013
        %3015 = vst [vmem:[%s2748 + $0x30] sm:$0x2] %v3014
        %v3016 = vld [vmem:[%s2748 + $0x32] sm:$0x2]
        %v3017 = vsel %vm2297, %v2896, %v3016
        %3018 = vst [vmem:[%s2748 + $0x32] sm:$0x2] %v3017
        %v3019 = vld [vmem:[%s2748 + $0x34] sm:$0x2]
        %v3020 = vsel %vm2297, %v2898, %v3019
        %3021 = vst [vmem:[%s2748 + $0x34] sm:$0x2] %v3020
        %v3022 = vld [vmem:[%s2748 + $0x36] sm:$0x2]
        %v3023 = vsel %vm2297, %v2900, %v3022
        %3024 = vst [vmem:[%s2748 + $0x36] sm:$0x2] %v3023
        %v3025 = vld [vmem:[%s2748 + $0x38] sm:$0x2]
        %v3026 = vsel %vm2297, %v2902, %v3025
        %3027 = vst [vmem:[%s2748 + $0x38] sm:$0x2] %v3026
        %v3028 = vld [vmem:[%s2748 + $0x3a] sm:$0x2]
        %v3029 = vsel %vm2297, %v2904, %v3028
        %3030 = vst [vmem:[%s2748 + $0x3a] sm:$0x2] %v3029
        %v3031 = vld [vmem:[%s2748 + $0x3c] sm:$0x2]
        %v3032 = vsel %vm2297, %v2906, %v3031
        %3033 = vst [vmem:[%s2748 + $0x3c] sm:$0x2] %v3032
        %v3034 = vld [vmem:[%s2748 + $0x3e] sm:$0x2]
        %v3035 = vsel %vm2297, %v2908, %v3034
        %3036 = vst [vmem:[%s2748 + $0x3e] sm:$0x2] %v3035
        %3037 = vrot.lane.b32.xlu0 %v1496, 126
        %v3038 = vpop.permute.xlu0 %3037
        %3039 = vrot.lane.b32.xlu0 %v1503, 126
        %v3040 = vpop.permute.xlu0 %3039
        %3041 = vrot.lane.b32.xlu0 %v1510, 126
        %v3042 = vpop.permute.xlu0 %3041
        %3043 = vrot.lane.b32.xlu0 %v1517, 126
        %v3044 = vpop.permute.xlu0 %3043
        %3045 = vrot.lane.b32.xlu0 %v1524, 126
        %v3046 = vpop.permute.xlu0 %3045
        %3047 = vrot.lane.b32.xlu0 %v1531, 126
        %v3048 = vpop.permute.xlu0 %3047
        %3049 = vrot.lane.b32.xlu0 %v1538, 126
        %v3050 = vpop.permute.xlu0 %3049
        %3051 = vrot.lane.b32.xlu0 %v1545, 126
        %v3052 = vpop.permute.xlu0 %3051
        %3053 = vrot.lane.b32.xlu0 %v1552, 126
        %v3054 = vpop.permute.xlu0 %3053
        %3055 = vrot.lane.b32.xlu0 %v1559, 126
        %v3056 = vpop.permute.xlu0 %3055
        %3057 = vrot.lane.b32.xlu0 %v1566, 126
        %v3058 = vpop.permute.xlu0 %3057
        %3059 = vrot.lane.b32.xlu0 %v1573, 126
        %v3060 = vpop.permute.xlu0 %3059
        %3061 = vrot.lane.b32.xlu0 %v1580, 126
        %v3062 = vpop.permute.xlu0 %3061
        %3063 = vrot.lane.b32.xlu0 %v1587, 126
        %v3064 = vpop.permute.xlu0 %3063
        %3065 = vrot.lane.b32.xlu0 %v1594, 126
        %v3066 = vpop.permute.xlu0 %3065
        %3067 = vrot.lane.b32.xlu0 %v1601, 126
        %v3068 = vpop.permute.xlu0 %3067
        %3069 = vrot.lane.b32.xlu0 %v1608, 126
        %v3070 = vpop.permute.xlu0 %3069
        %3071 = vrot.lane.b32.xlu0 %v1615, 126
        %v3072 = vpop.permute.xlu0 %3071
        %3073 = vrot.lane.b32.xlu0 %v1622, 126
        %v3074 = vpop.permute.xlu0 %3073
        %3075 = vrot.lane.b32.xlu0 %v1629, 126
        %v3076 = vpop.permute.xlu0 %3075
        %3077 = vrot.lane.b32.xlu0 %v1636, 126
        %v3078 = vpop.permute.xlu0 %3077
        %3079 = vrot.lane.b32.xlu0 %v1643, 126
        %v3080 = vpop.permute.xlu0 %3079
        %3081 = vrot.lane.b32.xlu0 %v1650, 126
        %v3082 = vpop.permute.xlu0 %3081
        %3083 = vrot.lane.b32.xlu0 %v1657, 126
        %v3084 = vpop.permute.xlu0 %3083
        %3085 = vrot.lane.b32.xlu0 %v1664, 126
        %v3086 = vpop.permute.xlu0 %3085
        %3087 = vrot.lane.b32.xlu0 %v1671, 126
        %v3088 = vpop.permute.xlu0 %3087
        %3089 = vrot.lane.b32.xlu0 %v1678, 126
        %v3090 = vpop.permute.xlu0 %3089
        %3091 = vrot.lane.b32.xlu0 %v1685, 126
        %v3092 = vpop.permute.xlu0 %3091
        %3093 = vrot.lane.b32.xlu0 %v1692, 126
        %v3094 = vpop.permute.xlu0 %3093
        %3095 = vrot.lane.b32.xlu0 %v1699, 126
        %v3096 = vpop.permute.xlu0 %3095
        %3097 = vrot.lane.b32.xlu0 %v1706, 126
        %v3098 = vpop.permute.xlu0 %3097
        %3099 = vrot.lane.b32.xlu0 %v1713, 126
        %v3100 = vpop.permute.xlu0 %3099
        %s3133 = scalar_lea.vmem [#allocation3], 128
        %3134 = vst.msk [vmem:[%s3133] sm:$0x3] %vm1425, %v3038
        %3135 = vst.msk [vmem:[%s3133 + $0x2] sm:$0x3] %vm1425, %v3040
        %3136 = vst.msk [vmem:[%s3133 + $0x4] sm:$0x3] %vm1425, %v3042
        %3137 = vst.msk [vmem:[%s3133 + $0x6] sm:$0x3] %vm1425, %v3044
        %3138 = vst.msk [vmem:[%s3133 + $0x8] sm:$0x3] %vm1425, %v3046
        %3139 = vst.msk [vmem:[%s3133 + $0xa] sm:$0x3] %vm1425, %v3048
        %3140 = vst.msk [vmem:[%s3133 + $0xc] sm:$0x3] %vm1425, %v3050
        %3141 = vst.msk [vmem:[%s3133 + $0xe] sm:$0x3] %vm1425, %v3052
        %3142 = vst.msk [vmem:[%s3133 + $0x10] sm:$0x3] %vm1425, %v3054
        %3143 = vst.msk [vmem:[%s3133 + $0x12] sm:$0x3] %vm1425, %v3056
        %3144 = vst.msk [vmem:[%s3133 + $0x14] sm:$0x3] %vm1425, %v3058
        %3145 = vst.msk [vmem:[%s3133 + $0x16] sm:$0x3] %vm1425, %v3060
        %3146 = vst.msk [vmem:[%s3133 + $0x18] sm:$0x3] %vm1425, %v3062
        %3147 = vst.msk [vmem:[%s3133 + $0x1a] sm:$0x3] %vm1425, %v3064
        %3148 = vst.msk [vmem:[%s3133 + $0x1c] sm:$0x3] %vm1425, %v3066
        %3149 = vst.msk [vmem:[%s3133 + $0x1e] sm:$0x3] %vm1425, %v3068
        %3150 = vst.msk [vmem:[%s3133 + $0x20] sm:$0x3] %vm1425, %v3070
        %3151 = vst.msk [vmem:[%s3133 + $0x22] sm:$0x3] %vm1425, %v3072
        %3152 = vst.msk [vmem:[%s3133 + $0x24] sm:$0x3] %vm1425, %v3074
        %3153 = vst.msk [vmem:[%s3133 + $0x26] sm:$0x3] %vm1425, %v3076
        %3154 = vst.msk [vmem:[%s3133 + $0x28] sm:$0x3] %vm1425, %v3078
        %3155 = vst.msk [vmem:[%s3133 + $0x2a] sm:$0x3] %vm1425, %v3080
        %3156 = vst.msk [vmem:[%s3133 + $0x2c] sm:$0x3] %vm1425, %v3082
        %3157 = vst.msk [vmem:[%s3133 + $0x2e] sm:$0x3] %vm1425, %v3084
        %3158 = vst.msk [vmem:[%s3133 + $0x30] sm:$0x3] %vm1425, %v3086
        %3159 = vst.msk [vmem:[%s3133 + $0x32] sm:$0x3] %vm1425, %v3088
        %3160 = vst.msk [vmem:[%s3133 + $0x34] sm:$0x3] %vm1425, %v3090
        %3161 = vst.msk [vmem:[%s3133 + $0x36] sm:$0x3] %vm1425, %v3092
        %3162 = vst.msk [vmem:[%s3133 + $0x38] sm:$0x3] %vm1425, %v3094
        %3163 = vst.msk [vmem:[%s3133 + $0x3a] sm:$0x3] %vm1425, %v3096
        %3164 = vst.msk [vmem:[%s3133 + $0x3c] sm:$0x3] %vm1425, %v3098
        %3165 = vst.msk [vmem:[%s3133 + $0x3e] sm:$0x3] %vm1425, %v3100
        %3166 = vrot.lane.b32.xlu0 %v1496, 108
        %v3167 = vpop.permute.xlu0 %3166
        %3168 = vrot.lane.b32.xlu0 %v1503, 108
        %v3169 = vpop.permute.xlu0 %3168
        %3170 = vrot.lane.b32.xlu0 %v1510, 108
        %v3171 = vpop.permute.xlu0 %3170
        %3172 = vrot.lane.b32.xlu0 %v1517, 108
        %v3173 = vpop.permute.xlu0 %3172
        %3174 = vrot.lane.b32.xlu0 %v1524, 108
        %v3175 = vpop.permute.xlu0 %3174
        %3176 = vrot.lane.b32.xlu0 %v1531, 108
        %v3177 = vpop.permute.xlu0 %3176
        %3178 = vrot.lane.b32.xlu0 %v1538, 108
        %v3179 = vpop.permute.xlu0 %3178
        %3180 = vrot.lane.b32.xlu0 %v1545, 108
        %v3181 = vpop.permute.xlu0 %3180
        %3182 = vrot.lane.b32.xlu0 %v1552, 108
        %v3183 = vpop.permute.xlu0 %3182
        %3184 = vrot.lane.b32.xlu0 %v1559, 108
        %v3185 = vpop.permute.xlu0 %3184
        %3186 = vrot.lane.b32.xlu0 %v1566, 108
        %v3187 = vpop.permute.xlu0 %3186
        %3188 = vrot.lane.b32.xlu0 %v1573, 108
        %v3189 = vpop.permute.xlu0 %3188
        %3190 = vrot.lane.b32.xlu0 %v1580, 108
        %v3191 = vpop.permute.xlu0 %3190
        %3192 = vrot.lane.b32.xlu0 %v1587, 108
        %v3193 = vpop.permute.xlu0 %3192
        %3194 = vrot.lane.b32.xlu0 %v1594, 108
        %v3195 = vpop.permute.xlu0 %3194
        %3196 = vrot.lane.b32.xlu0 %v1601, 108
        %v3197 = vpop.permute.xlu0 %3196
        %3198 = vrot.lane.b32.xlu0 %v1608, 108
        %v3199 = vpop.permute.xlu0 %3198
        %3200 = vrot.lane.b32.xlu0 %v1615, 108
        %v3201 = vpop.permute.xlu0 %3200
        %3202 = vrot.lane.b32.xlu0 %v1622, 108
        %v3203 = vpop.permute.xlu0 %3202
        %3204 = vrot.lane.b32.xlu0 %v1629, 108
        %v3205 = vpop.permute.xlu0 %3204
        %3206 = vrot.lane.b32.xlu0 %v1636, 108
        %v3207 = vpop.permute.xlu0 %3206
        %3208 = vrot.lane.b32.xlu0 %v1643, 108
        %v3209 = vpop.permute.xlu0 %3208
        %3210 = vrot.lane.b32.xlu0 %v1650, 108
        %v3211 = vpop.permute.xlu0 %3210
        %3212 = vrot.lane.b32.xlu0 %v1657, 108
        %v3213 = vpop.permute.xlu0 %3212
        %3214 = vrot.lane.b32.xlu0 %v1664, 108
        %v3215 = vpop.permute.xlu0 %3214
        %3216 = vrot.lane.b32.xlu0 %v1671, 108
        %v3217 = vpop.permute.xlu0 %3216
        %3218 = vrot.lane.b32.xlu0 %v1678, 108
        %v3219 = vpop.permute.xlu0 %3218
        %3220 = vrot.lane.b32.xlu0 %v1685, 108
        %v3221 = vpop.permute.xlu0 %3220
        %3222 = vrot.lane.b32.xlu0 %v1692, 108
        %v3223 = vpop.permute.xlu0 %3222
        %3224 = vrot.lane.b32.xlu0 %v1699, 108
        %v3225 = vpop.permute.xlu0 %3224
        %3226 = vrot.lane.b32.xlu0 %v1706, 108
        %v3227 = vpop.permute.xlu0 %3226
        %3228 = vrot.lane.b32.xlu0 %v1713, 108
        %v3229 = vpop.permute.xlu0 %3228
        %s3262 = scalar_lea.vmem [#allocation3], 320
        %3263 = vst.msk [vmem:[%s3262] sm:$0x3] %vm1425, %v3167
        %3264 = vst.msk [vmem:[%s3262 + $0x2] sm:$0x3] %vm1425, %v3169
        %3265 = vst.msk [vmem:[%s3262 + $0x4] sm:$0x3] %vm1425, %v3171
        %3266 = vst.msk [vmem:[%s3262 + $0x6] sm:$0x3] %vm1425, %v3173
        %3267 = vst.msk [vmem:[%s3262 + $0x8] sm:$0x3] %vm1425, %v3175
        %3268 = vst.msk [vmem:[%s3262 + $0xa] sm:$0x3] %vm1425, %v3177
        %3269 = vst.msk [vmem:[%s3262 + $0xc] sm:$0x3] %vm1425, %v3179
        %3270 = vst.msk [vmem:[%s3262 + $0xe] sm:$0x3] %vm1425, %v3181
        %3271 = vst.msk [vmem:[%s3262 + $0x10] sm:$0x3] %vm1425, %v3183
        %3272 = vst.msk [vmem:[%s3262 + $0x12] sm:$0x3] %vm1425, %v3185
        %3273 = vst.msk [vmem:[%s3262 + $0x14] sm:$0x3] %vm1425, %v3187
        %3274 = vst.msk [vmem:[%s3262 + $0x16] sm:$0x3] %vm1425, %v3189
        %3275 = vst.msk [vmem:[%s3262 + $0x18] sm:$0x3] %vm1425, %v3191
        %3276 = vst.msk [vmem:[%s3262 + $0x1a] sm:$0x3] %vm1425, %v3193
        %3277 = vst.msk [vmem:[%s3262 + $0x1c] sm:$0x3] %vm1425, %v3195
        %3278 = vst.msk [vmem:[%s3262 + $0x1e] sm:$0x3] %vm1425, %v3197
        %3279 = vst.msk [vmem:[%s3262 + $0x20] sm:$0x3] %vm1425, %v3199
        %3280 = vst.msk [vmem:[%s3262 + $0x22] sm:$0x3] %vm1425, %v3201
        %3281 = vst.msk [vmem:[%s3262 + $0x24] sm:$0x3] %vm1425, %v3203
        %3282 = vst.msk [vmem:[%s3262 + $0x26] sm:$0x3] %vm1425, %v3205
        %3283 = vst.msk [vmem:[%s3262 + $0x28] sm:$0x3] %vm1425, %v3207
        %3284 = vst.msk [vmem:[%s3262 + $0x2a] sm:$0x3] %vm1425, %v3209
        %3285 = vst.msk [vmem:[%s3262 + $0x2c] sm:$0x3] %vm1425, %v3211
        %3286 = vst.msk [vmem:[%s3262 + $0x2e] sm:$0x3] %vm1425, %v3213
        %3287 = vst.msk [vmem:[%s3262 + $0x30] sm:$0x3] %vm1425, %v3215
        %3288 = vst.msk [vmem:[%s3262 + $0x32] sm:$0x3] %vm1425, %v3217
        %3289 = vst.msk [vmem:[%s3262 + $0x34] sm:$0x3] %vm1425, %v3219
        %3290 = vst.msk [vmem:[%s3262 + $0x36] sm:$0x3] %vm1425, %v3221
        %3291 = vst.msk [vmem:[%s3262 + $0x38] sm:$0x3] %vm1425, %v3223
        %3292 = vst.msk [vmem:[%s3262 + $0x3a] sm:$0x3] %vm1425, %v3225
        %3293 = vst.msk [vmem:[%s3262 + $0x3c] sm:$0x3] %vm1425, %v3227
        %3294 = vst.msk [vmem:[%s3262 + $0x3e] sm:$0x3] %vm1425, %v3229
        %3295 = vrot.lane.b32.xlu0 %v1851, 126
        %v3296 = vpop.permute.xlu0 %3295
        %3297 = vrot.lane.b32.xlu0 %v1860, 126
        %v3298 = vpop.permute.xlu0 %3297
        %3299 = vrot.lane.b32.xlu0 %v1869, 126
        %v3300 = vpop.permute.xlu0 %3299
        %3301 = vrot.lane.b32.xlu0 %v1878, 126
        %v3302 = vpop.permute.xlu0 %3301
        %3303 = vrot.lane.b32.xlu0 %v1887, 126
        %v3304 = vpop.permute.xlu0 %3303
        %3305 = vrot.lane.b32.xlu0 %v1896, 126
        %v3306 = vpop.permute.xlu0 %3305
        %3307 = vrot.lane.b32.xlu0 %v1905, 126
        %v3308 = vpop.permute.xlu0 %3307
        %3309 = vrot.lane.b32.xlu0 %v1914, 126
        %v3310 = vpop.permute.xlu0 %3309
        %3311 = vrot.lane.b32.xlu0 %v1923, 126
        %v3312 = vpop.permute.xlu0 %3311
        %3313 = vrot.lane.b32.xlu0 %v1932, 126
        %v3314 = vpop.permute.xlu0 %3313
        %3315 = vrot.lane.b32.xlu0 %v1941, 126
        %v3316 = vpop.permute.xlu0 %3315
        %3317 = vrot.lane.b32.xlu0 %v1950, 126
        %v3318 = vpop.permute.xlu0 %3317
        %3319 = vrot.lane.b32.xlu0 %v1959, 126
        %v3320 = vpop.permute.xlu0 %3319
        %3321 = vrot.lane.b32.xlu0 %v1968, 126
        %v3322 = vpop.permute.xlu0 %3321
        %3323 = vrot.lane.b32.xlu0 %v1977, 126
        %v3324 = vpop.permute.xlu0 %3323
        %3325 = vrot.lane.b32.xlu0 %v1986, 126
        %v3326 = vpop.permute.xlu0 %3325
        %3327 = vrot.lane.b32.xlu0 %v1995, 126
        %v3328 = vpop.permute.xlu0 %3327
        %3329 = vrot.lane.b32.xlu0 %v2004, 126
        %v3330 = vpop.permute.xlu0 %3329
        %3331 = vrot.lane.b32.xlu0 %v2013, 126
        %v3332 = vpop.permute.xlu0 %3331
        %3333 = vrot.lane.b32.xlu0 %v2022, 126
        %v3334 = vpop.permute.xlu0 %3333
        %3335 = vrot.lane.b32.xlu0 %v2031, 126
        %v3336 = vpop.permute.xlu0 %3335
        %3337 = vrot.lane.b32.xlu0 %v2040, 126
        %v3338 = vpop.permute.xlu0 %3337
        %3339 = vrot.lane.b32.xlu0 %v2049, 126
        %v3340 = vpop.permute.xlu0 %3339
        %3341 = vrot.lane.b32.xlu0 %v2058, 126
        %v3342 = vpop.permute.xlu0 %3341
        %3343 = vrot.lane.b32.xlu0 %v2067, 126
        %v3344 = vpop.permute.xlu0 %3343
        %3345 = vrot.lane.b32.xlu0 %v2076, 126
        %v3346 = vpop.permute.xlu0 %3345
        %3347 = vrot.lane.b32.xlu0 %v2085, 126
        %v3348 = vpop.permute.xlu0 %3347
        %3349 = vrot.lane.b32.xlu0 %v2094, 126
        %v3350 = vpop.permute.xlu0 %3349
        %3351 = vrot.lane.b32.xlu0 %v2103, 126
        %v3352 = vpop.permute.xlu0 %3351
        %3353 = vrot.lane.b32.xlu0 %v2112, 126
        %v3354 = vpop.permute.xlu0 %3353
        %3355 = vrot.lane.b32.xlu0 %v2121, 126
        %v3356 = vpop.permute.xlu0 %3355
        %3357 = vrot.lane.b32.xlu0 %v2130, 126
        %v3358 = vpop.permute.xlu0 %3357
        %s3391 = scalar_lea.vmem [#allocation3], 512
        %v3392 = vld [vmem:[%s3391] sm:$0x3]
        %v3393 = vsel %vm2166, %v3296, %v3392
        %3394 = vst [vmem:[%s3391] sm:$0x3] %v3393
        %v3395 = vld [vmem:[%s3391 + $0x2] sm:$0x3]
        %v3396 = vsel %vm2166, %v3298, %v3395
        %3397 = vst [vmem:[%s3391 + $0x2] sm:$0x3] %v3396
        %v3398 = vld [vmem:[%s3391 + $0x4] sm:$0x3]
        %v3399 = vsel %vm2166, %v3300, %v3398
        %3400 = vst [vmem:[%s3391 + $0x4] sm:$0x3] %v3399
        %v3401 = vld [vmem:[%s3391 + $0x6] sm:$0x3]
        %v3402 = vsel %vm2166, %v3302, %v3401
        %3403 = vst [vmem:[%s3391 + $0x6] sm:$0x3] %v3402
        %v3404 = vld [vmem:[%s3391 + $0x8] sm:$0x3]
        %v3405 = vsel %vm2166, %v3304, %v3404
        %3406 = vst [vmem:[%s3391 + $0x8] sm:$0x3] %v3405
        %v3407 = vld [vmem:[%s3391 + $0xa] sm:$0x3]
        %v3408 = vsel %vm2166, %v3306, %v3407
        %3409 = vst [vmem:[%s3391 + $0xa] sm:$0x3] %v3408
        %v3410 = vld [vmem:[%s3391 + $0xc] sm:$0x3]
        %v3411 = vsel %vm2166, %v3308, %v3410
        %3412 = vst [vmem:[%s3391 + $0xc] sm:$0x3] %v3411
        %v3413 = vld [vmem:[%s3391 + $0xe] sm:$0x3]
        %v3414 = vsel %vm2166, %v3310, %v3413
        %3415 = vst [vmem:[%s3391 + $0xe] sm:$0x3] %v3414
        %v3416 = vld [vmem:[%s3391 + $0x10] sm:$0x3]
        %v3417 = vsel %vm2166, %v3312, %v3416
        %3418 = vst [vmem:[%s3391 + $0x10] sm:$0x3] %v3417
        %v3419 = vld [vmem:[%s3391 + $0x12] sm:$0x3]
        %v3420 = vsel %vm2166, %v3314, %v3419
        %3421 = vst [vmem:[%s3391 + $0x12] sm:$0x3] %v3420
        %v3422 = vld [vmem:[%s3391 + $0x14] sm:$0x3]
        %v3423 = vsel %vm2166, %v3316, %v3422
        %3424 = vst [vmem:[%s3391 + $0x14] sm:$0x3] %v3423
        %v3425 = vld [vmem:[%s3391 + $0x16] sm:$0x3]
        %v3426 = vsel %vm2166, %v3318, %v3425
        %3427 = vst [vmem:[%s3391 + $0x16] sm:$0x3] %v3426
        %v3428 = vld [vmem:[%s3391 + $0x18] sm:$0x3]
        %v3429 = vsel %vm2166, %v3320, %v3428
        %3430 = vst [vmem:[%s3391 + $0x18] sm:$0x3] %v3429
        %v3431 = vld [vmem:[%s3391 + $0x1a] sm:$0x3]
        %v3432 = vsel %vm2166, %v3322, %v3431
        %3433 = vst [vmem:[%s3391 + $0x1a] sm:$0x3] %v3432
        %v3434 = vld [vmem:[%s3391 + $0x1c] sm:$0x3]
        %v3435 = vsel %vm2166, %v3324, %v3434
        %3436 = vst [vmem:[%s3391 + $0x1c] sm:$0x3] %v3435
        %v3437 = vld [vmem:[%s3391 + $0x1e] sm:$0x3]
        %v3438 = vsel %vm2166, %v3326, %v3437
        %3439 = vst [vmem:[%s3391 + $0x1e] sm:$0x3] %v3438
        %v3440 = vld [vmem:[%s3391 + $0x20] sm:$0x3]
        %v3441 = vsel %vm2166, %v3328, %v3440
        %3442 = vst [vmem:[%s3391 + $0x20] sm:$0x3] %v3441
        %v3443 = vld [vmem:[%s3391 + $0x22] sm:$0x3]
        %v3444 = vsel %vm2166, %v3330, %v3443
        %3445 = vst [vmem:[%s3391 + $0x22] sm:$0x3] %v3444
        %v3446 = vld [vmem:[%s3391 + $0x24] sm:$0x3]
        %v3447 = vsel %vm2166, %v3332, %v3446
        %3448 = vst [vmem:[%s3391 + $0x24] sm:$0x3] %v3447
        %v3449 = vld [vmem:[%s3391 + $0x26] sm:$0x3]
        %v3450 = vsel %vm2166, %v3334, %v3449
        %3451 = vst [vmem:[%s3391 + $0x26] sm:$0x3] %v3450
        %v3452 = vld [vmem:[%s3391 + $0x28] sm:$0x3]
        %v3453 = vsel %vm2166, %v3336, %v3452
        %3454 = vst [vmem:[%s3391 + $0x28] sm:$0x3] %v3453
        %v3455 = vld [vmem:[%s3391 + $0x2a] sm:$0x3]
        %v3456 = vsel %vm2166, %v3338, %v3455
        %3457 = vst [vmem:[%s3391 + $0x2a] sm:$0x3] %v3456
        %v3458 = vld [vmem:[%s3391 + $0x2c] sm:$0x3]
        %v3459 = vsel %vm2166, %v3340, %v3458
        %3460 = vst [vmem:[%s3391 + $0x2c] sm:$0x3] %v3459
        %v3461 = vld [vmem:[%s3391 + $0x2e] sm:$0x3]
        %v3462 = vsel %vm2166, %v3342, %v3461
        %3463 = vst [vmem:[%s3391 + $0x2e] sm:$0x3] %v3462
        %v3464 = vld [vmem:[%s3391 + $0x30] sm:$0x3]
        %v3465 = vsel %vm2166, %v3344, %v3464
        %3466 = vst [vmem:[%s3391 + $0x30] sm:$0x3] %v3465
        %v3467 = vld [vmem:[%s3391 + $0x32] sm:$0x3]
        %v3468 = vsel %vm2166, %v3346, %v3467
        %3469 = vst [vmem:[%s3391 + $0x32] sm:$0x3] %v3468
        %v3470 = vld [vmem:[%s3391 + $0x34] sm:$0x3]
        %v3471 = vsel %vm2166, %v3348, %v3470
        %3472 = vst [vmem:[%s3391 + $0x34] sm:$0x3] %v3471
        %v3473 = vld [vmem:[%s3391 + $0x36] sm:$0x3]
        %v3474 = vsel %vm2166, %v3350, %v3473
        %3475 = vst [vmem:[%s3391 + $0x36] sm:$0x3] %v3474
        %v3476 = vld [vmem:[%s3391 + $0x38] sm:$0x3]
        %v3477 = vsel %vm2166, %v3352, %v3476
        %3478 = vst [vmem:[%s3391 + $0x38] sm:$0x3] %v3477
        %v3479 = vld [vmem:[%s3391 + $0x3a] sm:$0x3]
        %v3480 = vsel %vm2166, %v3354, %v3479
        %3481 = vst [vmem:[%s3391 + $0x3a] sm:$0x3] %v3480
        %v3482 = vld [vmem:[%s3391 + $0x3c] sm:$0x3]
        %v3483 = vsel %vm2166, %v3356, %v3482
        %3484 = vst [vmem:[%s3391 + $0x3c] sm:$0x3] %v3483
        %v3485 = vld [vmem:[%s3391 + $0x3e] sm:$0x3]
        %v3486 = vsel %vm2166, %v3358, %v3485
        %3487 = vst [vmem:[%s3391 + $0x3e] sm:$0x3] %v3486
        %3488 = vrot.lane.b32.xlu0 %v1849, 126
        %v3489 = vpop.permute.xlu0 %3488
        %3490 = vrot.lane.b32.xlu0 %v1858, 126
        %v3491 = vpop.permute.xlu0 %3490
        %3492 = vrot.lane.b32.xlu0 %v1867, 126
        %v3493 = vpop.permute.xlu0 %3492
        %3494 = vrot.lane.b32.xlu0 %v1876, 126
        %v3495 = vpop.permute.xlu0 %3494
        %3496 = vrot.lane.b32.xlu0 %v1885, 126
        %v3497 = vpop.permute.xlu0 %3496
        %3498 = vrot.lane.b32.xlu0 %v1894, 126
        %v3499 = vpop.permute.xlu0 %3498
        %3500 = vrot.lane.b32.xlu0 %v1903, 126
        %v3501 = vpop.permute.xlu0 %3500
        %3502 = vrot.lane.b32.xlu0 %v1912, 126
        %v3503 = vpop.permute.xlu0 %3502
        %3504 = vrot.lane.b32.xlu0 %v1921, 126
        %v3505 = vpop.permute.xlu0 %3504
        %3506 = vrot.lane.b32.xlu0 %v1930, 126
        %v3507 = vpop.permute.xlu0 %3506
        %3508 = vrot.lane.b32.xlu0 %v1939, 126
        %v3509 = vpop.permute.xlu0 %3508
        %3510 = vrot.lane.b32.xlu0 %v1948, 126
        %v3511 = vpop.permute.xlu0 %3510
        %3512 = vrot.lane.b32.xlu0 %v1957, 126
        %v3513 = vpop.permute.xlu0 %3512
        %3514 = vrot.lane.b32.xlu0 %v1966, 126
        %v3515 = vpop.permute.xlu0 %3514
        %3516 = vrot.lane.b32.xlu0 %v1975, 126
        %v3517 = vpop.permute.xlu0 %3516
        %3518 = vrot.lane.b32.xlu0 %v1984, 126
        %v3519 = vpop.permute.xlu0 %3518
        %3520 = vrot.lane.b32.xlu0 %v1993, 126
        %v3521 = vpop.permute.xlu0 %3520
        %3522 = vrot.lane.b32.xlu0 %v2002, 126
        %v3523 = vpop.permute.xlu0 %3522
        %3524 = vrot.lane.b32.xlu0 %v2011, 126
        %v3525 = vpop.permute.xlu0 %3524
        %3526 = vrot.lane.b32.xlu0 %v2020, 126
        %v3527 = vpop.permute.xlu0 %3526
        %3528 = vrot.lane.b32.xlu0 %v2029, 126
        %v3529 = vpop.permute.xlu0 %3528
        %3530 = vrot.lane.b32.xlu0 %v2038, 126
        %v3531 = vpop.permute.xlu0 %3530
        %3532 = vrot.lane.b32.xlu0 %v2047, 126
        %v3533 = vpop.permute.xlu0 %3532
        %3534 = vrot.lane.b32.xlu0 %v2056, 126
        %v3535 = vpop.permute.xlu0 %3534
        %3536 = vrot.lane.b32.xlu0 %v2065, 126
        %v3537 = vpop.permute.xlu0 %3536
        %3538 = vrot.lane.b32.xlu0 %v2074, 126
        %v3539 = vpop.permute.xlu0 %3538
        %3540 = vrot.lane.b32.xlu0 %v2083, 126
        %v3541 = vpop.permute.xlu0 %3540
        %3542 = vrot.lane.b32.xlu0 %v2092, 126
        %v3543 = vpop.permute.xlu0 %3542
        %3544 = vrot.lane.b32.xlu0 %v2101, 126
        %v3545 = vpop.permute.xlu0 %3544
        %3546 = vrot.lane.b32.xlu0 %v2110, 126
        %v3547 = vpop.permute.xlu0 %3546
        %3548 = vrot.lane.b32.xlu0 %v2119, 126
        %v3549 = vpop.permute.xlu0 %3548
        %3550 = vrot.lane.b32.xlu0 %v2128, 126
        %v3551 = vpop.permute.xlu0 %3550
        %v3584 = vld [vmem:[%s3391] sm:$0x2]
        %v3585 = vsel %vm2297, %v3489, %v3584
        %3586 = vst [vmem:[%s3391] sm:$0x2] %v3585
        %v3587 = vld [vmem:[%s3391 + $0x2] sm:$0x2]
        %v3588 = vsel %vm2297, %v3491, %v3587
        %3589 = vst [vmem:[%s3391 + $0x2] sm:$0x2] %v3588
        %v3590 = vld [vmem:[%s3391 + $0x4] sm:$0x2]
        %v3591 = vsel %vm2297, %v3493, %v3590
        %3592 = vst [vmem:[%s3391 + $0x4] sm:$0x2] %v3591
        %v3593 = vld [vmem:[%s3391 + $0x6] sm:$0x2]
        %v3594 = vsel %vm2297, %v3495, %v3593
        %3595 = vst [vmem:[%s3391 + $0x6] sm:$0x2] %v3594
        %v3596 = vld [vmem:[%s3391 + $0x8] sm:$0x2]
        %v3597 = vsel %vm2297, %v3497, %v3596
        %3598 = vst [vmem:[%s3391 + $0x8] sm:$0x2] %v3597
        %v3599 = vld [vmem:[%s3391 + $0xa] sm:$0x2]
        %v3600 = vsel %vm2297, %v3499, %v3599
        %3601 = vst [vmem:[%s3391 + $0xa] sm:$0x2] %v3600
        %v3602 = vld [vmem:[%s3391 + $0xc] sm:$0x2]
        %v3603 = vsel %vm2297, %v3501, %v3602
        %3604 = vst [vmem:[%s3391 + $0xc] sm:$0x2] %v3603
        %v3605 = vld [vmem:[%s3391 + $0xe] sm:$0x2]
        %v3606 = vsel %vm2297, %v3503, %v3605
        %3607 = vst [vmem:[%s3391 + $0xe] sm:$0x2] %v3606
        %v3608 = vld [vmem:[%s3391 + $0x10] sm:$0x2]
        %v3609 = vsel %vm2297, %v3505, %v3608
        %3610 = vst [vmem:[%s3391 + $0x10] sm:$0x2] %v3609
        %v3611 = vld [vmem:[%s3391 + $0x12] sm:$0x2]
        %v3612 = vsel %vm2297, %v3507, %v3611
        %3613 = vst [vmem:[%s3391 + $0x12] sm:$0x2] %v3612
        %v3614 = vld [vmem:[%s3391 + $0x14] sm:$0x2]
        %v3615 = vsel %vm2297, %v3509, %v3614
        %3616 = vst [vmem:[%s3391 + $0x14] sm:$0x2] %v3615
        %v3617 = vld [vmem:[%s3391 + $0x16] sm:$0x2]
        %v3618 = vsel %vm2297, %v3511, %v3617
        %3619 = vst [vmem:[%s3391 + $0x16] sm:$0x2] %v3618
        %v3620 = vld [vmem:[%s3391 + $0x18] sm:$0x2]
        %v3621 = vsel %vm2297, %v3513, %v3620
        %3622 = vst [vmem:[%s3391 + $0x18] sm:$0x2] %v3621
        %v3623 = vld [vmem:[%s3391 + $0x1a] sm:$0x2]
        %v3624 = vsel %vm2297, %v3515, %v3623
        %3625 = vst [vmem:[%s3391 + $0x1a] sm:$0x2] %v3624
        %v3626 = vld [vmem:[%s3391 + $0x1c] sm:$0x2]
        %v3627 = vsel %vm2297, %v3517, %v3626
        %3628 = vst [vmem:[%s3391 + $0x1c] sm:$0x2] %v3627
        %v3629 = vld [vmem:[%s3391 + $0x1e] sm:$0x2]
        %v3630 = vsel %vm2297, %v3519, %v3629
        %3631 = vst [vmem:[%s3391 + $0x1e] sm:$0x2] %v3630
        %v3632 = vld [vmem:[%s3391 + $0x20] sm:$0x2]
        %v3633 = vsel %vm2297, %v3521, %v3632
        %3634 = vst [vmem:[%s3391 + $0x20] sm:$0x2] %v3633
        %v3635 = vld [vmem:[%s3391 + $0x22] sm:$0x2]
        %v3636 = vsel %vm2297, %v3523, %v3635
        %3637 = vst [vmem:[%s3391 + $0x22] sm:$0x2] %v3636
        %v3638 = vld [vmem:[%s3391 + $0x24] sm:$0x2]
        %v3639 = vsel %vm2297, %v3525, %v3638
        %3640 = vst [vmem:[%s3391 + $0x24] sm:$0x2] %v3639
        %v3641 = vld [vmem:[%s3391 + $0x26] sm:$0x2]
        %v3642 = vsel %vm2297, %v3527, %v3641
        %3643 = vst [vmem:[%s3391 + $0x26] sm:$0x2] %v3642
        %v3644 = vld [vmem:[%s3391 + $0x28] sm:$0x2]
        %v3645 = vsel %vm2297, %v3529, %v3644
        %3646 = vst [vmem:[%s3391 + $0x28] sm:$0x2] %v3645
        %v3647 = vld [vmem:[%s3391 + $0x2a] sm:$0x2]
        %v3648 = vsel %vm2297, %v3531, %v3647
        %3649 = vst [vmem:[%s3391 + $0x2a] sm:$0x2] %v3648
        %v3650 = vld [vmem:[%s3391 + $0x2c] sm:$0x2]
        %v3651 = vsel %vm2297, %v3533, %v3650
        %3652 = vst [vmem:[%s3391 + $0x2c] sm:$0x2] %v3651
        %v3653 = vld [vmem:[%s3391 + $0x2e] sm:$0x2]
        %v3654 = vsel %vm2297, %v3535, %v3653
        %3655 = vst [vmem:[%s3391 + $0x2e] sm:$0x2] %v3654
        %v3656 = vld [vmem:[%s3391 + $0x30] sm:$0x2]
        %v3657 = vsel %vm2297, %v3537, %v3656
        %3658 = vst [vmem:[%s3391 + $0x30] sm:$0x2] %v3657
        %v3659 = vld [vmem:[%s3391 + $0x32] sm:$0x2]
        %v3660 = vsel %vm2297, %v3539, %v3659
        %3661 = vst [vmem:[%s3391 + $0x32] sm:$0x2] %v3660
        %v3662 = vld [vmem:[%s3391 + $0x34] sm:$0x2]
        %v3663 = vsel %vm2297, %v3541, %v3662
        %3664 = vst [vmem:[%s3391 + $0x34] sm:$0x2] %v3663
        %v3665 = vld [vmem:[%s3391 + $0x36] sm:$0x2]
        %v3666 = vsel %vm2297, %v3543, %v3665
        %3667 = vst [vmem:[%s3391 + $0x36] sm:$0x2] %v3666
        %v3668 = vld [vmem:[%s3391 + $0x38] sm:$0x2]
        %v3669 = vsel %vm2297, %v3545, %v3668
        %3670 = vst [vmem:[%s3391 + $0x38] sm:$0x2] %v3669
        %v3671 = vld [vmem:[%s3391 + $0x3a] sm:$0x2]
        %v3672 = vsel %vm2297, %v3547, %v3671
        %3673 = vst [vmem:[%s3391 + $0x3a] sm:$0x2] %v3672
        %v3674 = vld [vmem:[%s3391 + $0x3c] sm:$0x2]
        %v3675 = vsel %vm2297, %v3549, %v3674
        %3676 = vst [vmem:[%s3391 + $0x3c] sm:$0x2] %v3675
        %v3677 = vld [vmem:[%s3391 + $0x3e] sm:$0x2]
        %v3678 = vsel %vm2297, %v3551, %v3677
        %3679 = vst [vmem:[%s3391 + $0x3e] sm:$0x2] %v3678
        %v3680 = vld [vmem:[%s4] sm:$0x3f]
        %v3681 = vld [vmem:[#allocation3] sm:$0x3]
        %v3682 = vld [vmem:[#allocation3 + $0x2] sm:$0x3]
        %v3683 = vld [vmem:[#allocation3 + $0x4] sm:$0x3]
        %v3684 = vld [vmem:[#allocation3 + $0x6] sm:$0x3]
        %v3685 = vld [vmem:[#allocation3 + $0x8] sm:$0x3]
        %v3686 = vld [vmem:[#allocation3 + $0xa] sm:$0x3]
        %v3687 = vld [vmem:[#allocation3 + $0xc] sm:$0x3]
        %v3688 = vld [vmem:[#allocation3 + $0xe] sm:$0x3]
        %v3689 = vld [vmem:[#allocation3 + $0x10] sm:$0x3]
        %v3690 = vld [vmem:[#allocation3 + $0x12] sm:$0x3]
        %v3691 = vld [vmem:[#allocation3 + $0x14] sm:$0x3]
        %v3692 = vld [vmem:[#allocation3 + $0x16] sm:$0x3]
        %v3693 = vld [vmem:[#allocation3 + $0x18] sm:$0x3]
        %v3694 = vld [vmem:[#allocation3 + $0x1a] sm:$0x3]
        %v3695 = vld [vmem:[#allocation3 + $0x1c] sm:$0x3]
        %v3696 = vld [vmem:[#allocation3 + $0x1e] sm:$0x3]
        %v3697 = vld [vmem:[#allocation3 + $0x20] sm:$0x3]
        %v3698 = vld [vmem:[#allocation3 + $0x22] sm:$0x3]
        %v3699 = vld [vmem:[#allocation3 + $0x24] sm:$0x3]
        %v3700 = vld [vmem:[#allocation3 + $0x26] sm:$0x3]
        %v3701 = vld [vmem:[#allocation3 + $0x28] sm:$0x3]
        %v3702 = vld [vmem:[#allocation3 + $0x2a] sm:$0x3]
        %v3703 = vld [vmem:[#allocation3 + $0x2c] sm:$0x3]
        %v3704 = vld [vmem:[#allocation3 + $0x2e] sm:$0x3]
        %v3705 = vld [vmem:[#allocation3 + $0x30] sm:$0x3]
        %v3706 = vld [vmem:[#allocation3 + $0x32] sm:$0x3]
        %v3707 = vld [vmem:[#allocation3 + $0x34] sm:$0x3]
        %v3708 = vld [vmem:[#allocation3 + $0x36] sm:$0x3]
        %v3709 = vld [vmem:[#allocation3 + $0x38] sm:$0x3]
        %v3710 = vld [vmem:[#allocation3 + $0x3a] sm:$0x3]
        %v3711 = vld [vmem:[#allocation3 + $0x3c] sm:$0x3]
        %v3712 = vld [vmem:[#allocation3 + $0x3e] sm:$0x3]
        %v3713 = vld [vmem:[#allocation3 + $0x40] sm:$0x3]
        %v3714 = vld [vmem:[#allocation3 + $0x42] sm:$0x3]
        %v3715 = vld [vmem:[#allocation3 + $0x44] sm:$0x3]
        %v3716 = vld [vmem:[#allocation3 + $0x46] sm:$0x3]
        %v3717 = vld [vmem:[#allocation3 + $0x48] sm:$0x3]
        %v3718 = vld [vmem:[#allocation3 + $0x4a] sm:$0x3]
        %v3719 = vld [vmem:[#allocation3 + $0x4c] sm:$0x3]
        %v3720 = vld [vmem:[#allocation3 + $0x4e] sm:$0x3]
        %v3721 = vld [vmem:[#allocation3 + $0x50] sm:$0x3]
        %v3722 = vld [vmem:[#allocation3 + $0x52] sm:$0x3]
        %v3723 = vld [vmem:[#allocation3 + $0x54] sm:$0x3]
        %v3724 = vld [vmem:[#allocation3 + $0x56] sm:$0x3]
        %v3725 = vld [vmem:[#allocation3 + $0x58] sm:$0x3]
        %v3726 = vld [vmem:[#allocation3 + $0x5a] sm:$0x3]
        %v3727 = vld [vmem:[#allocation3 + $0x5c] sm:$0x3]
        %v3728 = vld [vmem:[#allocation3 + $0x5e] sm:$0x3]
        %v3729 = vld [vmem:[#allocation3 + $0x60] sm:$0x3]
        %v3730 = vld [vmem:[#allocation3 + $0x62] sm:$0x3]
        %v3731 = vld [vmem:[#allocation3 + $0x64] sm:$0x3]
        %v3732 = vld [vmem:[#allocation3 + $0x66] sm:$0x3]
        %v3733 = vld [vmem:[#allocation3 + $0x68] sm:$0x3]
        %v3734 = vld [vmem:[#allocation3 + $0x6a] sm:$0x3]
        %v3735 = vld [vmem:[#allocation3 + $0x6c] sm:$0x3]
        %v3736 = vld [vmem:[#allocation3 + $0x6e] sm:$0x3]
        %v3737 = vld [vmem:[#allocation3 + $0x70] sm:$0x3]
        %v3738 = vld [vmem:[#allocation3 + $0x72] sm:$0x3]
        %v3739 = vld [vmem:[#allocation3 + $0x74] sm:$0x3]
        %v3740 = vld [vmem:[#allocation3 + $0x76] sm:$0x3]
        %v3741 = vld [vmem:[#allocation3 + $0x78] sm:$0x3]
        %v3742 = vld [vmem:[#allocation3 + $0x7a] sm:$0x3]
        %v3743 = vld [vmem:[#allocation3 + $0x7c] sm:$0x3]
        %v3744 = vld [vmem:[#allocation3 + $0x7e] sm:$0x3]
        %v3745 = vld [vmem:[#allocation3 + $0x80] sm:$0x3]
        %v3746 = vld [vmem:[#allocation3 + $0x82] sm:$0x3]
        %v3747 = vld [vmem:[#allocation3 + $0x84] sm:$0x3]
        %v3748 = vld [vmem:[#allocation3 + $0x86] sm:$0x3]
        %v3749 = vld [vmem:[#allocation3 + $0x88] sm:$0x3]
        %v3750 = vld [vmem:[#allocation3 + $0x8a] sm:$0x3]
        %v3751 = vld [vmem:[#allocation3 + $0x8c] sm:$0x3]
        %v3752 = vld [vmem:[#allocation3 + $0x8e] sm:$0x3]
        %v3753 = vld [vmem:[#allocation3 + $0x90] sm:$0x3]
        %v3754 = vld [vmem:[#allocation3 + $0x92] sm:$0x3]
        %v3755 = vld [vmem:[#allocation3 + $0x94] sm:$0x3]
        %v3756 = vld [vmem:[#allocation3 + $0x96] sm:$0x3]
        %v3757 = vld [vmem:[#allocation3 + $0x98] sm:$0x3]
        %v3758 = vld [vmem:[#allocation3 + $0x9a] sm:$0x3]
        %v3759 = vld [vmem:[#allocation3 + $0x9c] sm:$0x3]
        %v3760 = vld [vmem:[#allocation3 + $0x9e] sm:$0x3]
        %v3761 = vld [vmem:[#allocation3 + $0xa0] sm:$0x3]
        %v3762 = vld [vmem:[#allocation3 + $0xa2] sm:$0x3]
        %v3763 = vld [vmem:[#allocation3 + $0xa4] sm:$0x3]
        %v3764 = vld [vmem:[#allocation3 + $0xa6] sm:$0x3]
        %v3765 = vld [vmem:[#allocation3 + $0xa8] sm:$0x3]
        %v3766 = vld [vmem:[#allocation3 + $0xaa] sm:$0x3]
        %v3767 = vld [vmem:[#allocation3 + $0xac] sm:$0x3]
        %v3768 = vld [vmem:[#allocation3 + $0xae] sm:$0x3]
        %v3769 = vld [vmem:[#allocation3 + $0xb0] sm:$0x3]
        %v3770 = vld [vmem:[#allocation3 + $0xb2] sm:$0x3]
        %v3771 = vld [vmem:[#allocation3 + $0xb4] sm:$0x3]
        %v3772 = vld [vmem:[#allocation3 + $0xb6] sm:$0x3]
        %v3773 = vld [vmem:[#allocation3 + $0xb8] sm:$0x3]
        %v3774 = vld [vmem:[#allocation3 + $0xba] sm:$0x3]
        %v3775 = vld [vmem:[#allocation3 + $0xbc] sm:$0x3]
        %v3776 = vld [vmem:[#allocation3 + $0xbe] sm:$0x3]
        %v3777 = vld [vmem:[#allocation3 + $0xc0] sm:$0x3]
        %v3778 = vld [vmem:[#allocation3 + $0xc2] sm:$0x3]
        %v3779 = vld [vmem:[#allocation3 + $0xc4] sm:$0x3]
        %v3780 = vld [vmem:[#allocation3 + $0xc6] sm:$0x3]
        %v3781 = vld [vmem:[#allocation3 + $0xc8] sm:$0x3]
        %v3782 = vld [vmem:[#allocation3 + $0xca] sm:$0x3]
        %v3783 = vld [vmem:[#allocation3 + $0xcc] sm:$0x3]
        %v3784 = vld [vmem:[#allocation3 + $0xce] sm:$0x3]
        %v3785 = vld [vmem:[#allocation3 + $0xd0] sm:$0x3]
        %v3786 = vld [vmem:[#allocation3 + $0xd2] sm:$0x3]
        %v3787 = vld [vmem:[#allocation3 + $0xd4] sm:$0x3]
        %v3788 = vld [vmem:[#allocation3 + $0xd6] sm:$0x3]
        %v3789 = vld [vmem:[#allocation3 + $0xd8] sm:$0x3]
        %v3790 = vld [vmem:[#allocation3 + $0xda] sm:$0x3]
        %v3791 = vld [vmem:[#allocation3 + $0xdc] sm:$0x3]
        %v3792 = vld [vmem:[#allocation3 + $0xde] sm:$0x3]
        %v3793 = vld [vmem:[#allocation3 + $0xe0] sm:$0x3]
        %v3794 = vld [vmem:[#allocation3 + $0xe2] sm:$0x3]
        %v3795 = vld [vmem:[#allocation3 + $0xe4] sm:$0x3]
        %v3796 = vld [vmem:[#allocation3 + $0xe6] sm:$0x3]
        %v3797 = vld [vmem:[#allocation3 + $0xe8] sm:$0x3]
        %v3798 = vld [vmem:[#allocation3 + $0xea] sm:$0x3]
        %v3799 = vld [vmem:[#allocation3 + $0xec] sm:$0x3]
        %v3800 = vld [vmem:[#allocation3 + $0xee] sm:$0x3]
        %v3801 = vld [vmem:[#allocation3 + $0xf0] sm:$0x3]
        %v3802 = vld [vmem:[#allocation3 + $0xf2] sm:$0x3]
        %v3803 = vld [vmem:[#allocation3 + $0xf4] sm:$0x3]
        %v3804 = vld [vmem:[#allocation3 + $0xf6] sm:$0x3]
        %v3805 = vld [vmem:[#allocation3 + $0xf8] sm:$0x3]
        %v3806 = vld [vmem:[#allocation3 + $0xfa] sm:$0x3]
        %v3807 = vld [vmem:[#allocation3 + $0xfc] sm:$0x3]
        %v3808 = vld [vmem:[#allocation3 + $0xfe] sm:$0x3]
        %v3809 = vld [vmem:[#allocation3 + $0x100] sm:$0x3]
        %v3810 = vld [vmem:[#allocation3 + $0x102] sm:$0x3]
        %v3811 = vld [vmem:[#allocation3 + $0x104] sm:$0x3]
        %v3812 = vld [vmem:[#allocation3 + $0x106] sm:$0x3]
        %v3813 = vld [vmem:[#allocation3 + $0x108] sm:$0x3]
        %v3814 = vld [vmem:[#allocation3 + $0x10a] sm:$0x3]
        %v3815 = vld [vmem:[#allocation3 + $0x10c] sm:$0x3]
        %v3816 = vld [vmem:[#allocation3 + $0x10e] sm:$0x3]
        %v3817 = vld [vmem:[#allocation3 + $0x110] sm:$0x3]
        %v3818 = vld [vmem:[#allocation3 + $0x112] sm:$0x3]
        %v3819 = vld [vmem:[#allocation3 + $0x114] sm:$0x3]
        %v3820 = vld [vmem:[#allocation3 + $0x116] sm:$0x3]
        %v3821 = vld [vmem:[#allocation3 + $0x118] sm:$0x3]
        %v3822 = vld [vmem:[#allocation3 + $0x11a] sm:$0x3]
        %v3823 = vld [vmem:[#allocation3 + $0x11c] sm:$0x3]
        %v3824 = vld [vmem:[#allocation3 + $0x11e] sm:$0x3]
        %v3825 = vld [vmem:[#allocation3 + $0x120] sm:$0x3]
        %v3826 = vld [vmem:[#allocation3 + $0x122] sm:$0x3]
        %v3827 = vld [vmem:[#allocation3 + $0x124] sm:$0x3]
        %v3828 = vld [vmem:[#allocation3 + $0x126] sm:$0x3]
        %v3829 = vld [vmem:[#allocation3 + $0x128] sm:$0x3]
        %v3830 = vld [vmem:[#allocation3 + $0x12a] sm:$0x3]
        %v3831 = vld [vmem:[#allocation3 + $0x12c] sm:$0x3]
        %v3832 = vld [vmem:[#allocation3 + $0x12e] sm:$0x3]
        %v3833 = vld [vmem:[#allocation3 + $0x130] sm:$0x3]
        %v3834 = vld [vmem:[#allocation3 + $0x132] sm:$0x3]
        %v3835 = vld [vmem:[#allocation3 + $0x134] sm:$0x3]
        %v3836 = vld [vmem:[#allocation3 + $0x136] sm:$0x3]
        %v3837 = vld [vmem:[#allocation3 + $0x138] sm:$0x3]
        %v3838 = vld [vmem:[#allocation3 + $0x13a] sm:$0x3]
        %v3839 = vld [vmem:[#allocation3 + $0x13c] sm:$0x3]
        %v3840 = vld [vmem:[#allocation3 + $0x13e] sm:$0x3]
        %v3841 = vld [vmem:[#allocation3 + $0x140] sm:$0x3]
        %v3842 = vld [vmem:[#allocation3 + $0x142] sm:$0x3]
        %v3843 = vld [vmem:[#allocation3 + $0x144] sm:$0x3]
        %v3844 = vld [vmem:[#allocation3 + $0x146] sm:$0x3]
        %v3845 = vld [vmem:[#allocation3 + $0x148] sm:$0x3]
        %v3846 = vld [vmem:[#allocation3 + $0x14a] sm:$0x3]
        %v3847 = vld [vmem:[#allocation3 + $0x14c] sm:$0x3]
        %v3848 = vld [vmem:[#allocation3 + $0x14e] sm:$0x3]
        %v3849 = vld [vmem:[#allocation3 + $0x150] sm:$0x3]
        %v3850 = vld [vmem:[#allocation3 + $0x152] sm:$0x3]
        %v3851 = vld [vmem:[#allocation3 + $0x154] sm:$0x3]
        %v3852 = vld [vmem:[#allocation3 + $0x156] sm:$0x3]
        %v3853 = vld [vmem:[#allocation3 + $0x158] sm:$0x3]
        %v3854 = vld [vmem:[#allocation3 + $0x15a] sm:$0x3]
        %v3855 = vld [vmem:[#allocation3 + $0x15c] sm:$0x3]
        %v3856 = vld [vmem:[#allocation3 + $0x15e] sm:$0x3]
        %v3857 = vld [vmem:[#allocation3 + $0x160] sm:$0x3]
        %v3858 = vld [vmem:[#allocation3 + $0x162] sm:$0x3]
        %v3859 = vld [vmem:[#allocation3 + $0x164] sm:$0x3]
        %v3860 = vld [vmem:[#allocation3 + $0x166] sm:$0x3]
        %v3861 = vld [vmem:[#allocation3 + $0x168] sm:$0x3]
        %v3862 = vld [vmem:[#allocation3 + $0x16a] sm:$0x3]
        %v3863 = vld [vmem:[#allocation3 + $0x16c] sm:$0x3]
        %v3864 = vld [vmem:[#allocation3 + $0x16e] sm:$0x3]
        %v3865 = vld [vmem:[#allocation3 + $0x170] sm:$0x3]
        %v3866 = vld [vmem:[#allocation3 + $0x172] sm:$0x3]
        %v3867 = vld [vmem:[#allocation3 + $0x174] sm:$0x3]
        %v3868 = vld [vmem:[#allocation3 + $0x176] sm:$0x3]
        %v3869 = vld [vmem:[#allocation3 + $0x178] sm:$0x3]
        %v3870 = vld [vmem:[#allocation3 + $0x17a] sm:$0x3]
        %v3871 = vld [vmem:[#allocation3 + $0x17c] sm:$0x3]
        %v3872 = vld [vmem:[#allocation3 + $0x17e] sm:$0x3]
        %v3873 = vld [vmem:[#allocation3 + $0x180] sm:$0x3]
        %v3874 = vld [vmem:[#allocation3 + $0x182] sm:$0x3]
        %v3875 = vld [vmem:[#allocation3 + $0x184] sm:$0x3]
        %v3876 = vld [vmem:[#allocation3 + $0x186] sm:$0x3]
        %v3877 = vld [vmem:[#allocation3 + $0x188] sm:$0x3]
        %v3878 = vld [vmem:[#allocation3 + $0x18a] sm:$0x3]
        %v3879 = vld [vmem:[#allocation3 + $0x18c] sm:$0x3]
        %v3880 = vld [vmem:[#allocation3 + $0x18e] sm:$0x3]
        %v3881 = vld [vmem:[#allocation3 + $0x190] sm:$0x3]
        %v3882 = vld [vmem:[#allocation3 + $0x192] sm:$0x3]
        %v3883 = vld [vmem:[#allocation3 + $0x194] sm:$0x3]
        %v3884 = vld [vmem:[#allocation3 + $0x196] sm:$0x3]
        %v3885 = vld [vmem:[#allocation3 + $0x198] sm:$0x3]
        %v3886 = vld [vmem:[#allocation3 + $0x19a] sm:$0x3]
        %v3887 = vld [vmem:[#allocation3 + $0x19c] sm:$0x3]
        %v3888 = vld [vmem:[#allocation3 + $0x19e] sm:$0x3]
        %v3889 = vld [vmem:[#allocation3 + $0x1a0] sm:$0x3]
        %v3890 = vld [vmem:[#allocation3 + $0x1a2] sm:$0x3]
        %v3891 = vld [vmem:[#allocation3 + $0x1a4] sm:$0x3]
        %v3892 = vld [vmem:[#allocation3 + $0x1a6] sm:$0x3]
        %v3893 = vld [vmem:[#allocation3 + $0x1a8] sm:$0x3]
        %v3894 = vld [vmem:[#allocation3 + $0x1aa] sm:$0x3]
        %v3895 = vld [vmem:[#allocation3 + $0x1ac] sm:$0x3]
        %v3896 = vld [vmem:[#allocation3 + $0x1ae] sm:$0x3]
        %v3897 = vld [vmem:[#allocation3 + $0x1b0] sm:$0x3]
        %v3898 = vld [vmem:[#allocation3 + $0x1b2] sm:$0x3]
        %v3899 = vld [vmem:[#allocation3 + $0x1b4] sm:$0x3]
        %v3900 = vld [vmem:[#allocation3 + $0x1b6] sm:$0x3]
        %v3901 = vld [vmem:[#allocation3 + $0x1b8] sm:$0x3]
        %v3902 = vld [vmem:[#allocation3 + $0x1ba] sm:$0x3]
        %v3903 = vld [vmem:[#allocation3 + $0x1bc] sm:$0x3]
        %v3904 = vld [vmem:[#allocation3 + $0x1be] sm:$0x3]
        %v3905 = vld [vmem:[#allocation3 + $0x1c0] sm:$0x3]
        %v3906 = vld [vmem:[#allocation3 + $0x1c2] sm:$0x3]
        %v3907 = vld [vmem:[#allocation3 + $0x1c4] sm:$0x3]
        %v3908 = vld [vmem:[#allocation3 + $0x1c6] sm:$0x3]
        %v3909 = vld [vmem:[#allocation3 + $0x1c8] sm:$0x3]
        %v3910 = vld [vmem:[#allocation3 + $0x1ca] sm:$0x3]
        %v3911 = vld [vmem:[#allocation3 + $0x1cc] sm:$0x3]
        %v3912 = vld [vmem:[#allocation3 + $0x1ce] sm:$0x3]
        %v3913 = vld [vmem:[#allocation3 + $0x1d0] sm:$0x3]
        %v3914 = vld [vmem:[#allocation3 + $0x1d2] sm:$0x3]
        %v3915 = vld [vmem:[#allocation3 + $0x1d4] sm:$0x3]
        %v3916 = vld [vmem:[#allocation3 + $0x1d6] sm:$0x3]
        %v3917 = vld [vmem:[#allocation3 + $0x1d8] sm:$0x3]
        %v3918 = vld [vmem:[#allocation3 + $0x1da] sm:$0x3]
        %v3919 = vld [vmem:[#allocation3 + $0x1dc] sm:$0x3]
        %v3920 = vld [vmem:[#allocation3 + $0x1de] sm:$0x3]
        %v3921 = vld [vmem:[#allocation3 + $0x1e0] sm:$0x3]
        %v3922 = vld [vmem:[#allocation3 + $0x1e2] sm:$0x3]
        %v3923 = vld [vmem:[#allocation3 + $0x1e4] sm:$0x3]
        %v3924 = vld [vmem:[#allocation3 + $0x1e6] sm:$0x3]
        %v3925 = vld [vmem:[#allocation3 + $0x1e8] sm:$0x3]
        %v3926 = vld [vmem:[#allocation3 + $0x1ea] sm:$0x3]
        %v3927 = vld [vmem:[#allocation3 + $0x1ec] sm:$0x3]
        %v3928 = vld [vmem:[#allocation3 + $0x1ee] sm:$0x3]
        %v3929 = vld [vmem:[#allocation3 + $0x1f0] sm:$0x3]
        %v3930 = vld [vmem:[#allocation3 + $0x1f2] sm:$0x3]
        %v3931 = vld [vmem:[#allocation3 + $0x1f4] sm:$0x3]
        %v3932 = vld [vmem:[#allocation3 + $0x1f6] sm:$0x3]
        %v3933 = vld [vmem:[#allocation3 + $0x1f8] sm:$0x3]
        %v3934 = vld [vmem:[#allocation3 + $0x1fa] sm:$0x3]
        %v3935 = vld [vmem:[#allocation3 + $0x1fc] sm:$0x3]
        %v3936 = vld [vmem:[#allocation3 + $0x1fe] sm:$0x3]
        %v3937 = vld [vmem:[#allocation3 + $0x200] sm:$0x3]
        %v3938 = vld [vmem:[#allocation3 + $0x202] sm:$0x3]
        %v3939 = vld [vmem:[#allocation3 + $0x204] sm:$0x3]
        %v3940 = vld [vmem:[#allocation3 + $0x206] sm:$0x3]
        %v3941 = vld [vmem:[#allocation3 + $0x208] sm:$0x3]
        %v3942 = vld [vmem:[#allocation3 + $0x20a] sm:$0x3]
        %v3943 = vld [vmem:[#allocation3 + $0x20c] sm:$0x3]
        %v3944 = vld [vmem:[#allocation3 + $0x20e] sm:$0x3]
        %v3945 = vld [vmem:[#allocation3 + $0x210] sm:$0x3]
        %v3946 = vld [vmem:[#allocation3 + $0x212] sm:$0x3]
        %v3947 = vld [vmem:[#allocation3 + $0x214] sm:$0x3]
        %v3948 = vld [vmem:[#allocation3 + $0x216] sm:$0x3]
        %v3949 = vld [vmem:[#allocation3 + $0x218] sm:$0x3]
        %v3950 = vld [vmem:[#allocation3 + $0x21a] sm:$0x3]
        %v3951 = vld [vmem:[#allocation3 + $0x21c] sm:$0x3]
        %v3952 = vld [vmem:[#allocation3 + $0x21e] sm:$0x3]
        %v3953 = vld [vmem:[#allocation3 + $0x220] sm:$0x3]
        %v3954 = vld [vmem:[#allocation3 + $0x222] sm:$0x3]
        %v3955 = vld [vmem:[#allocation3 + $0x224] sm:$0x3]
        %v3956 = vld [vmem:[#allocation3 + $0x226] sm:$0x3]
        %v3957 = vld [vmem:[#allocation3 + $0x228] sm:$0x3]
        %v3958 = vld [vmem:[#allocation3 + $0x22a] sm:$0x3]
        %v3959 = vld [vmem:[#allocation3 + $0x22c] sm:$0x3]
        %v3960 = vld [vmem:[#allocation3 + $0x22e] sm:$0x3]
        %v3961 = vld [vmem:[#allocation3 + $0x230] sm:$0x3]
        %v3962 = vld [vmem:[#allocation3 + $0x232] sm:$0x3]
        %v3963 = vld [vmem:[#allocation3 + $0x234] sm:$0x3]
        %v3964 = vld [vmem:[#allocation3 + $0x236] sm:$0x3]
        %v3965 = vld [vmem:[#allocation3 + $0x238] sm:$0x3]
        %v3966 = vld [vmem:[#allocation3 + $0x23a] sm:$0x3]
        %v3967 = vld [vmem:[#allocation3 + $0x23c] sm:$0x3]
        %v3968 = vld [vmem:[#allocation3 + $0x23e] sm:$0x3]
        %v3969 = vcombine.low %v3681, %v3683
        %v3971 = vunpack.c.l.s4 1934713408
        %v3972 = vunpack.c.0.s8 %v3971
        %v3973 = vlaneseq
        %v3974 = vshrl.u32 %v3973, 7
        %v3975 = vsub.s32 %v3972, %v3974
        %v3976 = vrot.slane %v3969, %v3975
        %v3977 = vcombine.high %v3976, 0
        %v3978 = vcombine.low %v3682, %v3684
        %v3980 = vunpack.c.l.s4 1934713408
        %v3981 = vunpack.c.0.s8 %v3980
        %v3982 = vlaneseq
        %v3983 = vshrl.u32 %v3982, 7
        %v3984 = vsub.s32 %v3981, %v3983
        %v3985 = vrot.slane %v3978, %v3984
        %v3986 = vcombine.high %v3985, 0
        %v3987 = vcombine.low %v3685, %v3687
        %v3989 = vunpack.c.l.s4 1934713408
        %v3990 = vunpack.c.0.s8 %v3989
        %v3991 = vlaneseq
        %v3992 = vshrl.u32 %v3991, 7
        %v3993 = vsub.s32 %v3990, %v3992
        %v3994 = vrot.slane %v3987, %v3993
        %v3995 = vcombine.high %v3994, 0
        %v3996 = vcombine.low %v3686, %v3688
        %v3998 = vunpack.c.l.s4 1934713408
        %v3999 = vunpack.c.0.s8 %v3998
        %v4000 = vlaneseq
        %v4001 = vshrl.u32 %v4000, 7
        %v4002 = vsub.s32 %v3999, %v4001
        %v4003 = vrot.slane %v3996, %v4002
        %v4004 = vcombine.high %v4003, 0
        %v4005 = vcombine.low %v3689, %v3691
        %v4007 = vunpack.c.l.s4 1934713408
        %v4008 = vunpack.c.0.s8 %v4007
        %v4009 = vlaneseq
        %v4010 = vshrl.u32 %v4009, 7
        %v4011 = vsub.s32 %v4008, %v4010
        %v4012 = vrot.slane %v4005, %v4011
        %v4013 = vcombine.high %v4012, 0
        %v4014 = vcombine.low %v3690, %v3692
        %v4016 = vunpack.c.l.s4 1934713408
        %v4017 = vunpack.c.0.s8 %v4016
        %v4018 = vlaneseq
        %v4019 = vshrl.u32 %v4018, 7
        %v4020 = vsub.s32 %v4017, %v4019
        %v4021 = vrot.slane %v4014, %v4020
        %v4022 = vcombine.high %v4021, 0
        %v4023 = vcombine.low %v3693, %v3695
        %v4025 = vunpack.c.l.s4 1934713408
        %v4026 = vunpack.c.0.s8 %v4025
        %v4027 = vlaneseq
        %v4028 = vshrl.u32 %v4027, 7
        %v4029 = vsub.s32 %v4026, %v4028
        %v4030 = vrot.slane %v4023, %v4029
        %v4031 = vcombine.high %v4030, 0
        %v4032 = vcombine.low %v3694, %v3696
        %v4034 = vunpack.c.l.s4 1934713408
        %v4035 = vunpack.c.0.s8 %v4034
        %v4036 = vlaneseq
        %v4037 = vshrl.u32 %v4036, 7
        %v4038 = vsub.s32 %v4035, %v4037
        %v4039 = vrot.slane %v4032, %v4038
        %v4040 = vcombine.high %v4039, 0
        %v4041 = vcombine.low %v3697, %v3699
        %v4043 = vunpack.c.l.s4 1934713408
        %v4044 = vunpack.c.0.s8 %v4043
        %v4045 = vlaneseq
        %v4046 = vshrl.u32 %v4045, 7
        %v4047 = vsub.s32 %v4044, %v4046
        %v4048 = vrot.slane %v4041, %v4047
        %v4049 = vcombine.high %v4048, 0
        %v4050 = vcombine.low %v3698, %v3700
        %v4052 = vunpack.c.l.s4 1934713408
        %v4053 = vunpack.c.0.s8 %v4052
        %v4054 = vlaneseq
        %v4055 = vshrl.u32 %v4054, 7
        %v4056 = vsub.s32 %v4053, %v4055
        %v4057 = vrot.slane %v4050, %v4056
        %v4058 = vcombine.high %v4057, 0
        %v4059 = vcombine.low %v3701, %v3703
        %v4061 = vunpack.c.l.s4 1934713408
        %v4062 = vunpack.c.0.s8 %v4061
        %v4063 = vlaneseq
        %v4064 = vshrl.u32 %v4063, 7
        %v4065 = vsub.s32 %v4062, %v4064
        %v4066 = vrot.slane %v4059, %v4065
        %v4067 = vcombine.high %v4066, 0
        %v4068 = vcombine.low %v3702, %v3704
        %v4070 = vunpack.c.l.s4 1934713408
        %v4071 = vunpack.c.0.s8 %v4070
        %v4072 = vlaneseq
        %v4073 = vshrl.u32 %v4072, 7
        %v4074 = vsub.s32 %v4071, %v4073
        %v4075 = vrot.slane %v4068, %v4074
        %v4076 = vcombine.high %v4075, 0
        %v4077 = vcombine.low %v3705, %v3707
        %v4079 = vunpack.c.l.s4 1934713408
        %v4080 = vunpack.c.0.s8 %v4079
        %v4081 = vlaneseq
        %v4082 = vshrl.u32 %v4081, 7
        %v4083 = vsub.s32 %v4080, %v4082
        %v4084 = vrot.slane %v4077, %v4083
        %v4085 = vcombine.high %v4084, 0
        %v4086 = vcombine.low %v3706, %v3708
        %v4088 = vunpack.c.l.s4 1934713408
        %v4089 = vunpack.c.0.s8 %v4088
        %v4090 = vlaneseq
        %v4091 = vshrl.u32 %v4090, 7
        %v4092 = vsub.s32 %v4089, %v4091
        %v4093 = vrot.slane %v4086, %v4092
        %v4094 = vcombine.high %v4093, 0
        %v4095 = vcombine.low %v3709, %v3711
        %v4097 = vunpack.c.l.s4 1934713408
        %v4098 = vunpack.c.0.s8 %v4097
        %v4099 = vlaneseq
        %v4100 = vshrl.u32 %v4099, 7
        %v4101 = vsub.s32 %v4098, %v4100
        %v4102 = vrot.slane %v4095, %v4101
        %v4103 = vcombine.high %v4102, 0
        %v4104 = vcombine.low %v3710, %v3712
        %v4106 = vunpack.c.l.s4 1934713408
        %v4107 = vunpack.c.0.s8 %v4106
        %v4108 = vlaneseq
        %v4109 = vshrl.u32 %v4108, 7
        %v4110 = vsub.s32 %v4107, %v4109
        %v4111 = vrot.slane %v4104, %v4110
        %v4112 = vcombine.high %v4111, 0
        %v4113 = vcombine.low %v3713, %v3715
        %v4115 = vunpack.c.l.s4 1934713408
        %v4116 = vunpack.c.0.s8 %v4115
        %v4117 = vlaneseq
        %v4118 = vshrl.u32 %v4117, 7
        %v4119 = vsub.s32 %v4116, %v4118
        %v4120 = vrot.slane %v4113, %v4119
        %v4121 = vcombine.high %v4120, 0
        %v4122 = vcombine.low %v3714, %v3716
        %v4124 = vunpack.c.l.s4 1934713408
        %v4125 = vunpack.c.0.s8 %v4124
        %v4126 = vlaneseq
        %v4127 = vshrl.u32 %v4126, 7
        %v4128 = vsub.s32 %v4125, %v4127
        %v4129 = vrot.slane %v4122, %v4128
        %v4130 = vcombine.high %v4129, 0
        %v4131 = vcombine.low %v3717, %v3719
        %v4133 = vunpack.c.l.s4 1934713408
        %v4134 = vunpack.c.0.s8 %v4133
        %v4135 = vlaneseq
        %v4136 = vshrl.u32 %v4135, 7
        %v4137 = vsub.s32 %v4134, %v4136
        %v4138 = vrot.slane %v4131, %v4137
        %v4139 = vcombine.high %v4138, 0
        %v4140 = vcombine.low %v3718, %v3720
        %v4142 = vunpack.c.l.s4 1934713408
        %v4143 = vunpack.c.0.s8 %v4142
        %v4144 = vlaneseq
        %v4145 = vshrl.u32 %v4144, 7
        %v4146 = vsub.s32 %v4143, %v4145
        %v4147 = vrot.slane %v4140, %v4146
        %v4148 = vcombine.high %v4147, 0
        %v4149 = vcombine.low %v3721, %v3723
        %v4151 = vunpack.c.l.s4 1934713408
        %v4152 = vunpack.c.0.s8 %v4151
        %v4153 = vlaneseq
        %v4154 = vshrl.u32 %v4153, 7
        %v4155 = vsub.s32 %v4152, %v4154
        %v4156 = vrot.slane %v4149, %v4155
        %v4157 = vcombine.high %v4156, 0
        %v4158 = vcombine.low %v3722, %v3724
        %v4160 = vunpack.c.l.s4 1934713408
        %v4161 = vunpack.c.0.s8 %v4160
        %v4162 = vlaneseq
        %v4163 = vshrl.u32 %v4162, 7
        %v4164 = vsub.s32 %v4161, %v4163
        %v4165 = vrot.slane %v4158, %v4164
        %v4166 = vcombine.high %v4165, 0
        %v4167 = vcombine.low %v3725, %v3727
        %v4169 = vunpack.c.l.s4 1934713408
        %v4170 = vunpack.c.0.s8 %v4169
        %v4171 = vlaneseq
        %v4172 = vshrl.u32 %v4171, 7
        %v4173 = vsub.s32 %v4170, %v4172
        %v4174 = vrot.slane %v4167, %v4173
        %v4175 = vcombine.high %v4174, 0
        %v4176 = vcombine.low %v3726, %v3728
        %v4178 = vunpack.c.l.s4 1934713408
        %v4179 = vunpack.c.0.s8 %v4178
        %v4180 = vlaneseq
        %v4181 = vshrl.u32 %v4180, 7
        %v4182 = vsub.s32 %v4179, %v4181
        %v4183 = vrot.slane %v4176, %v4182
        %v4184 = vcombine.high %v4183, 0
        %v4185 = vcombine.low %v3729, %v3731
        %v4187 = vunpack.c.l.s4 1934713408
        %v4188 = vunpack.c.0.s8 %v4187
        %v4189 = vlaneseq
        %v4190 = vshrl.u32 %v4189, 7
        %v4191 = vsub.s32 %v4188, %v4190
        %v4192 = vrot.slane %v4185, %v4191
        %v4193 = vcombine.high %v4192, 0
        %v4194 = vcombine.low %v3730, %v3732
        %v4196 = vunpack.c.l.s4 1934713408
        %v4197 = vunpack.c.0.s8 %v4196
        %v4198 = vlaneseq
        %v4199 = vshrl.u32 %v4198, 7
        %v4200 = vsub.s32 %v4197, %v4199
        %v4201 = vrot.slane %v4194, %v4200
        %v4202 = vcombine.high %v4201, 0
        %v4203 = vcombine.low %v3733, %v3735
        %v4205 = vunpack.c.l.s4 1934713408
        %v4206 = vunpack.c.0.s8 %v4205
        %v4207 = vlaneseq
        %v4208 = vshrl.u32 %v4207, 7
        %v4209 = vsub.s32 %v4206, %v4208
        %v4210 = vrot.slane %v4203, %v4209
        %v4211 = vcombine.high %v4210, 0
        %v4212 = vcombine.low %v3734, %v3736
        %v4214 = vunpack.c.l.s4 1934713408
        %v4215 = vunpack.c.0.s8 %v4214
        %v4216 = vlaneseq
        %v4217 = vshrl.u32 %v4216, 7
        %v4218 = vsub.s32 %v4215, %v4217
        %v4219 = vrot.slane %v4212, %v4218
        %v4220 = vcombine.high %v4219, 0
        %v4221 = vcombine.low %v3737, %v3739
        %v4223 = vunpack.c.l.s4 1934713408
        %v4224 = vunpack.c.0.s8 %v4223
        %v4225 = vlaneseq
        %v4226 = vshrl.u32 %v4225, 7
        %v4227 = vsub.s32 %v4224, %v4226
        %v4228 = vrot.slane %v4221, %v4227
        %v4229 = vcombine.high %v4228, 0
        %v4230 = vcombine.low %v3738, %v3740
        %v4232 = vunpack.c.l.s4 1934713408
        %v4233 = vunpack.c.0.s8 %v4232
        %v4234 = vlaneseq
        %v4235 = vshrl.u32 %v4234, 7
        %v4236 = vsub.s32 %v4233, %v4235
        %v4237 = vrot.slane %v4230, %v4236
        %v4238 = vcombine.high %v4237, 0
        %v4239 = vcombine.low %v3741, %v3743
        %v4241 = vunpack.c.l.s4 1934713408
        %v4242 = vunpack.c.0.s8 %v4241
        %v4243 = vlaneseq
        %v4244 = vshrl.u32 %v4243, 7
        %v4245 = vsub.s32 %v4242, %v4244
        %v4246 = vrot.slane %v4239, %v4245
        %v4247 = vcombine.high %v4246, 0
        %v4248 = vcombine.low %v3742, %v3744
        %v4250 = vunpack.c.l.s4 1934713408
        %v4251 = vunpack.c.0.s8 %v4250
        %v4252 = vlaneseq
        %v4253 = vshrl.u32 %v4252, 7
        %v4254 = vsub.s32 %v4251, %v4253
        %v4255 = vrot.slane %v4248, %v4254
        %v4256 = vcombine.high %v4255, 0
        %v4257 = vcombine.low %v3745, %v3747
        %v4259 = vunpack.c.l.s4 1934713408
        %v4260 = vunpack.c.0.s8 %v4259
        %v4261 = vlaneseq
        %v4262 = vshrl.u32 %v4261, 7
        %v4263 = vsub.s32 %v4260, %v4262
        %v4264 = vrot.slane %v4257, %v4263
        %v4265 = vcombine.high %v4264, 0
        %v4266 = vcombine.low %v3746, %v3748
        %v4268 = vunpack.c.l.s4 1934713408
        %v4269 = vunpack.c.0.s8 %v4268
        %v4270 = vlaneseq
        %v4271 = vshrl.u32 %v4270, 7
        %v4272 = vsub.s32 %v4269, %v4271
        %v4273 = vrot.slane %v4266, %v4272
        %v4274 = vcombine.high %v4273, 0
        %v4275 = vcombine.low %v3749, %v3751
        %v4277 = vunpack.c.l.s4 1934713408
        %v4278 = vunpack.c.0.s8 %v4277
        %v4279 = vlaneseq
        %v4280 = vshrl.u32 %v4279, 7
        %v4281 = vsub.s32 %v4278, %v4280
        %v4282 = vrot.slane %v4275, %v4281
        %v4283 = vcombine.high %v4282, 0
        %v4284 = vcombine.low %v3750, %v3752
        %v4286 = vunpack.c.l.s4 1934713408
        %v4287 = vunpack.c.0.s8 %v4286
        %v4288 = vlaneseq
        %v4289 = vshrl.u32 %v4288, 7
        %v4290 = vsub.s32 %v4287, %v4289
        %v4291 = vrot.slane %v4284, %v4290
        %v4292 = vcombine.high %v4291, 0
        %v4293 = vcombine.low %v3753, %v3755
        %v4295 = vunpack.c.l.s4 1934713408
        %v4296 = vunpack.c.0.s8 %v4295
        %v4297 = vlaneseq
        %v4298 = vshrl.u32 %v4297, 7
        %v4299 = vsub.s32 %v4296, %v4298
        %v4300 = vrot.slane %v4293, %v4299
        %v4301 = vcombine.high %v4300, 0
        %v4302 = vcombine.low %v3754, %v3756
        %v4304 = vunpack.c.l.s4 1934713408
        %v4305 = vunpack.c.0.s8 %v4304
        %v4306 = vlaneseq
        %v4307 = vshrl.u32 %v4306, 7
        %v4308 = vsub.s32 %v4305, %v4307
        %v4309 = vrot.slane %v4302, %v4308
        %v4310 = vcombine.high %v4309, 0
        %v4311 = vcombine.low %v3757, %v3759
        %v4313 = vunpack.c.l.s4 1934713408
        %v4314 = vunpack.c.0.s8 %v4313
        %v4315 = vlaneseq
        %v4316 = vshrl.u32 %v4315, 7
        %v4317 = vsub.s32 %v4314, %v4316
        %v4318 = vrot.slane %v4311, %v4317
        %v4319 = vcombine.high %v4318, 0
        %v4320 = vcombine.low %v3758, %v3760
        %v4322 = vunpack.c.l.s4 1934713408
        %v4323 = vunpack.c.0.s8 %v4322
        %v4324 = vlaneseq
        %v4325 = vshrl.u32 %v4324, 7
        %v4326 = vsub.s32 %v4323, %v4325
        %v4327 = vrot.slane %v4320, %v4326
        %v4328 = vcombine.high %v4327, 0
        %v4329 = vcombine.low %v3761, %v3763
        %v4331 = vunpack.c.l.s4 1934713408
        %v4332 = vunpack.c.0.s8 %v4331
        %v4333 = vlaneseq
        %v4334 = vshrl.u32 %v4333, 7
        %v4335 = vsub.s32 %v4332, %v4334
        %v4336 = vrot.slane %v4329, %v4335
        %v4337 = vcombine.high %v4336, 0
        %v4338 = vcombine.low %v3762, %v3764
        %v4340 = vunpack.c.l.s4 1934713408
        %v4341 = vunpack.c.0.s8 %v4340
        %v4342 = vlaneseq
        %v4343 = vshrl.u32 %v4342, 7
        %v4344 = vsub.s32 %v4341, %v4343
        %v4345 = vrot.slane %v4338, %v4344
        %v4346 = vcombine.high %v4345, 0
        %v4347 = vcombine.low %v3765, %v3767
        %v4349 = vunpack.c.l.s4 1934713408
        %v4350 = vunpack.c.0.s8 %v4349
        %v4351 = vlaneseq
        %v4352 = vshrl.u32 %v4351, 7
        %v4353 = vsub.s32 %v4350, %v4352
        %v4354 = vrot.slane %v4347, %v4353
        %v4355 = vcombine.high %v4354, 0
        %v4356 = vcombine.low %v3766, %v3768
        %v4358 = vunpack.c.l.s4 1934713408
        %v4359 = vunpack.c.0.s8 %v4358
        %v4360 = vlaneseq
        %v4361 = vshrl.u32 %v4360, 7
        %v4362 = vsub.s32 %v4359, %v4361
        %v4363 = vrot.slane %v4356, %v4362
        %v4364 = vcombine.high %v4363, 0
        %v4365 = vcombine.low %v3769, %v3771
        %v4367 = vunpack.c.l.s4 1934713408
        %v4368 = vunpack.c.0.s8 %v4367
        %v4369 = vlaneseq
        %v4370 = vshrl.u32 %v4369, 7
        %v4371 = vsub.s32 %v4368, %v4370
        %v4372 = vrot.slane %v4365, %v4371
        %v4373 = vcombine.high %v4372, 0
        %v4374 = vcombine.low %v3770, %v3772
        %v4376 = vunpack.c.l.s4 1934713408
        %v4377 = vunpack.c.0.s8 %v4376
        %v4378 = vlaneseq
        %v4379 = vshrl.u32 %v4378, 7
        %v4380 = vsub.s32 %v4377, %v4379
        %v4381 = vrot.slane %v4374, %v4380
        %v4382 = vcombine.high %v4381, 0
        %v4383 = vcombine.low %v3773, %v3775
        %v4385 = vunpack.c.l.s4 1934713408
        %v4386 = vunpack.c.0.s8 %v4385
        %v4387 = vlaneseq
        %v4388 = vshrl.u32 %v4387, 7
        %v4389 = vsub.s32 %v4386, %v4388
        %v4390 = vrot.slane %v4383, %v4389
        %v4391 = vcombine.high %v4390, 0
        %v4392 = vcombine.low %v3774, %v3776
        %v4394 = vunpack.c.l.s4 1934713408
        %v4395 = vunpack.c.0.s8 %v4394
        %v4396 = vlaneseq
        %v4397 = vshrl.u32 %v4396, 7
        %v4398 = vsub.s32 %v4395, %v4397
        %v4399 = vrot.slane %v4392, %v4398
        %v4400 = vcombine.high %v4399, 0
        %v4401 = vcombine.low %v3777, %v3779
        %v4403 = vunpack.c.l.s4 1934713408
        %v4404 = vunpack.c.0.s8 %v4403
        %v4405 = vlaneseq
        %v4406 = vshrl.u32 %v4405, 7
        %v4407 = vsub.s32 %v4404, %v4406
        %v4408 = vrot.slane %v4401, %v4407
        %v4409 = vcombine.high %v4408, 0
        %v4410 = vcombine.low %v3778, %v3780
        %v4412 = vunpack.c.l.s4 1934713408
        %v4413 = vunpack.c.0.s8 %v4412
        %v4414 = vlaneseq
        %v4415 = vshrl.u32 %v4414, 7
        %v4416 = vsub.s32 %v4413, %v4415
        %v4417 = vrot.slane %v4410, %v4416
        %v4418 = vcombine.high %v4417, 0
        %v4419 = vcombine.low %v3781, %v3783
        %v4421 = vunpack.c.l.s4 1934713408
        %v4422 = vunpack.c.0.s8 %v4421
        %v4423 = vlaneseq
        %v4424 = vshrl.u32 %v4423, 7
        %v4425 = vsub.s32 %v4422, %v4424
        %v4426 = vrot.slane %v4419, %v4425
        %v4427 = vcombine.high %v4426, 0
        %v4428 = vcombine.low %v3782, %v3784
        %v4430 = vunpack.c.l.s4 1934713408
        %v4431 = vunpack.c.0.s8 %v4430
        %v4432 = vlaneseq
        %v4433 = vshrl.u32 %v4432, 7
        %v4434 = vsub.s32 %v4431, %v4433
        %v4435 = vrot.slane %v4428, %v4434
        %v4436 = vcombine.high %v4435, 0
        %v4437 = vcombine.low %v3785, %v3787
        %v4439 = vunpack.c.l.s4 1934713408
        %v4440 = vunpack.c.0.s8 %v4439
        %v4441 = vlaneseq
        %v4442 = vshrl.u32 %v4441, 7
        %v4443 = vsub.s32 %v4440, %v4442
        %v4444 = vrot.slane %v4437, %v4443
        %v4445 = vcombine.high %v4444, 0
        %v4446 = vcombine.low %v3786, %v3788
        %v4448 = vunpack.c.l.s4 1934713408
        %v4449 = vunpack.c.0.s8 %v4448
        %v4450 = vlaneseq
        %v4451 = vshrl.u32 %v4450, 7
        %v4452 = vsub.s32 %v4449, %v4451
        %v4453 = vrot.slane %v4446, %v4452
        %v4454 = vcombine.high %v4453, 0
        %v4455 = vcombine.low %v3789, %v3791
        %v4457 = vunpack.c.l.s4 1934713408
        %v4458 = vunpack.c.0.s8 %v4457
        %v4459 = vlaneseq
        %v4460 = vshrl.u32 %v4459, 7
        %v4461 = vsub.s32 %v4458, %v4460
        %v4462 = vrot.slane %v4455, %v4461
        %v4463 = vcombine.high %v4462, 0
        %v4464 = vcombine.low %v3790, %v3792
        %v4466 = vunpack.c.l.s4 1934713408
        %v4467 = vunpack.c.0.s8 %v4466
        %v4468 = vlaneseq
        %v4469 = vshrl.u32 %v4468, 7
        %v4470 = vsub.s32 %v4467, %v4469
        %v4471 = vrot.slane %v4464, %v4470
        %v4472 = vcombine.high %v4471, 0
        %v4473 = vcombine.low %v3793, %v3795
        %v4475 = vunpack.c.l.s4 1934713408
        %v4476 = vunpack.c.0.s8 %v4475
        %v4477 = vlaneseq
        %v4478 = vshrl.u32 %v4477, 7
        %v4479 = vsub.s32 %v4476, %v4478
        %v4480 = vrot.slane %v4473, %v4479
        %v4481 = vcombine.high %v4480, 0
        %v4482 = vcombine.low %v3794, %v3796
        %v4484 = vunpack.c.l.s4 1934713408
        %v4485 = vunpack.c.0.s8 %v4484
        %v4486 = vlaneseq
        %v4487 = vshrl.u32 %v4486, 7
        %v4488 = vsub.s32 %v4485, %v4487
        %v4489 = vrot.slane %v4482, %v4488
        %v4490 = vcombine.high %v4489, 0
        %v4491 = vcombine.low %v3797, %v3799
        %v4493 = vunpack.c.l.s4 1934713408
        %v4494 = vunpack.c.0.s8 %v4493
        %v4495 = vlaneseq
        %v4496 = vshrl.u32 %v4495, 7
        %v4497 = vsub.s32 %v4494, %v4496
        %v4498 = vrot.slane %v4491, %v4497
        %v4499 = vcombine.high %v4498, 0
        %v4500 = vcombine.low %v3798, %v3800
        %v4502 = vunpack.c.l.s4 1934713408
        %v4503 = vunpack.c.0.s8 %v4502
        %v4504 = vlaneseq
        %v4505 = vshrl.u32 %v4504, 7
        %v4506 = vsub.s32 %v4503, %v4505
        %v4507 = vrot.slane %v4500, %v4506
        %v4508 = vcombine.high %v4507, 0
        %v4509 = vcombine.low %v3801, %v3803
        %v4511 = vunpack.c.l.s4 1934713408
        %v4512 = vunpack.c.0.s8 %v4511
        %v4513 = vlaneseq
        %v4514 = vshrl.u32 %v4513, 7
        %v4515 = vsub.s32 %v4512, %v4514
        %v4516 = vrot.slane %v4509, %v4515
        %v4517 = vcombine.high %v4516, 0
        %v4518 = vcombine.low %v3802, %v3804
        %v4520 = vunpack.c.l.s4 1934713408
        %v4521 = vunpack.c.0.s8 %v4520
        %v4522 = vlaneseq
        %v4523 = vshrl.u32 %v4522, 7
        %v4524 = vsub.s32 %v4521, %v4523
        %v4525 = vrot.slane %v4518, %v4524
        %v4526 = vcombine.high %v4525, 0
        %v4527 = vcombine.low %v3805, %v3807
        %v4529 = vunpack.c.l.s4 1934713408
        %v4530 = vunpack.c.0.s8 %v4529
        %v4531 = vlaneseq
        %v4532 = vshrl.u32 %v4531, 7
        %v4533 = vsub.s32 %v4530, %v4532
        %v4534 = vrot.slane %v4527, %v4533
        %v4535 = vcombine.high %v4534, 0
        %v4536 = vcombine.low %v3806, %v3808
        %v4538 = vunpack.c.l.s4 1934713408
        %v4539 = vunpack.c.0.s8 %v4538
        %v4540 = vlaneseq
        %v4541 = vshrl.u32 %v4540, 7
        %v4542 = vsub.s32 %v4539, %v4541
        %v4543 = vrot.slane %v4536, %v4542
        %v4544 = vcombine.high %v4543, 0
        %v4545 = vcombine.low %v3809, %v3811
        %v4547 = vunpack.c.l.s4 1934713408
        %v4548 = vunpack.c.0.s8 %v4547
        %v4549 = vlaneseq
        %v4550 = vshrl.u32 %v4549, 7
        %v4551 = vsub.s32 %v4548, %v4550
        %v4552 = vrot.slane %v4545, %v4551
        %v4553 = vcombine.high %v4552, 0
        %v4554 = vcombine.low %v3810, %v3812
        %v4556 = vunpack.c.l.s4 1934713408
        %v4557 = vunpack.c.0.s8 %v4556
        %v4558 = vlaneseq
        %v4559 = vshrl.u32 %v4558, 7
        %v4560 = vsub.s32 %v4557, %v4559
        %v4561 = vrot.slane %v4554, %v4560
        %v4562 = vcombine.high %v4561, 0
        %v4563 = vcombine.low %v3813, %v3815
        %v4565 = vunpack.c.l.s4 1934713408
        %v4566 = vunpack.c.0.s8 %v4565
        %v4567 = vlaneseq
        %v4568 = vshrl.u32 %v4567, 7
        %v4569 = vsub.s32 %v4566, %v4568
        %v4570 = vrot.slane %v4563, %v4569
        %v4571 = vcombine.high %v4570, 0
        %v4572 = vcombine.low %v3814, %v3816
        %v4574 = vunpack.c.l.s4 1934713408
        %v4575 = vunpack.c.0.s8 %v4574
        %v4576 = vlaneseq
        %v4577 = vshrl.u32 %v4576, 7
        %v4578 = vsub.s32 %v4575, %v4577
        %v4579 = vrot.slane %v4572, %v4578
        %v4580 = vcombine.high %v4579, 0
        %v4581 = vcombine.low %v3817, %v3819
        %v4583 = vunpack.c.l.s4 1934713408
        %v4584 = vunpack.c.0.s8 %v4583
        %v4585 = vlaneseq
        %v4586 = vshrl.u32 %v4585, 7
        %v4587 = vsub.s32 %v4584, %v4586
        %v4588 = vrot.slane %v4581, %v4587
        %v4589 = vcombine.high %v4588, 0
        %v4590 = vcombine.low %v3818, %v3820
        %v4592 = vunpack.c.l.s4 1934713408
        %v4593 = vunpack.c.0.s8 %v4592
        %v4594 = vlaneseq
        %v4595 = vshrl.u32 %v4594, 7
        %v4596 = vsub.s32 %v4593, %v4595
        %v4597 = vrot.slane %v4590, %v4596
        %v4598 = vcombine.high %v4597, 0
        %v4599 = vcombine.low %v3821, %v3823
        %v4601 = vunpack.c.l.s4 1934713408
        %v4602 = vunpack.c.0.s8 %v4601
        %v4603 = vlaneseq
        %v4604 = vshrl.u32 %v4603, 7
        %v4605 = vsub.s32 %v4602, %v4604
        %v4606 = vrot.slane %v4599, %v4605
        %v4607 = vcombine.high %v4606, 0
        %v4608 = vcombine.low %v3822, %v3824
        %v4610 = vunpack.c.l.s4 1934713408
        %v4611 = vunpack.c.0.s8 %v4610
        %v4612 = vlaneseq
        %v4613 = vshrl.u32 %v4612, 7
        %v4614 = vsub.s32 %v4611, %v4613
        %v4615 = vrot.slane %v4608, %v4614
        %v4616 = vcombine.high %v4615, 0
        %v4617 = vcombine.low %v3825, %v3827
        %v4619 = vunpack.c.l.s4 1934713408
        %v4620 = vunpack.c.0.s8 %v4619
        %v4621 = vlaneseq
        %v4622 = vshrl.u32 %v4621, 7
        %v4623 = vsub.s32 %v4620, %v4622
        %v4624 = vrot.slane %v4617, %v4623
        %v4625 = vcombine.high %v4624, 0
        %v4626 = vcombine.low %v3826, %v3828
        %v4628 = vunpack.c.l.s4 1934713408
        %v4629 = vunpack.c.0.s8 %v4628
        %v4630 = vlaneseq
        %v4631 = vshrl.u32 %v4630, 7
        %v4632 = vsub.s32 %v4629, %v4631
        %v4633 = vrot.slane %v4626, %v4632
        %v4634 = vcombine.high %v4633, 0
        %v4635 = vcombine.low %v3829, %v3831
        %v4637 = vunpack.c.l.s4 1934713408
        %v4638 = vunpack.c.0.s8 %v4637
        %v4639 = vlaneseq
        %v4640 = vshrl.u32 %v4639, 7
        %v4641 = vsub.s32 %v4638, %v4640
        %v4642 = vrot.slane %v4635, %v4641
        %v4643 = vcombine.high %v4642, 0
        %v4644 = vcombine.low %v3830, %v3832
        %v4646 = vunpack.c.l.s4 1934713408
        %v4647 = vunpack.c.0.s8 %v4646
        %v4648 = vlaneseq
        %v4649 = vshrl.u32 %v4648, 7
        %v4650 = vsub.s32 %v4647, %v4649
        %v4651 = vrot.slane %v4644, %v4650
        %v4652 = vcombine.high %v4651, 0
        %v4653 = vcombine.low %v3833, %v3835
        %v4655 = vunpack.c.l.s4 1934713408
        %v4656 = vunpack.c.0.s8 %v4655
        %v4657 = vlaneseq
        %v4658 = vshrl.u32 %v4657, 7
        %v4659 = vsub.s32 %v4656, %v4658
        %v4660 = vrot.slane %v4653, %v4659
        %v4661 = vcombine.high %v4660, 0
        %v4662 = vcombine.low %v3834, %v3836
        %v4664 = vunpack.c.l.s4 1934713408
        %v4665 = vunpack.c.0.s8 %v4664
        %v4666 = vlaneseq
        %v4667 = vshrl.u32 %v4666, 7
        %v4668 = vsub.s32 %v4665, %v4667
        %v4669 = vrot.slane %v4662, %v4668
        %v4670 = vcombine.high %v4669, 0
        %v4671 = vcombine.low %v3837, %v3839
        %v4673 = vunpack.c.l.s4 1934713408
        %v4674 = vunpack.c.0.s8 %v4673
        %v4675 = vlaneseq
        %v4676 = vshrl.u32 %v4675, 7
        %v4677 = vsub.s32 %v4674, %v4676
        %v4678 = vrot.slane %v4671, %v4677
        %v4679 = vcombine.high %v4678, 0
        %v4680 = vcombine.low %v3838, %v3840
        %v4682 = vunpack.c.l.s4 1934713408
        %v4683 = vunpack.c.0.s8 %v4682
        %v4684 = vlaneseq
        %v4685 = vshrl.u32 %v4684, 7
        %v4686 = vsub.s32 %v4683, %v4685
        %v4687 = vrot.slane %v4680, %v4686
        %v4688 = vcombine.high %v4687, 0
        %v4689 = vcombine.low %v3841, %v3843
        %v4691 = vunpack.c.l.s4 1934713408
        %v4692 = vunpack.c.0.s8 %v4691
        %v4693 = vlaneseq
        %v4694 = vshrl.u32 %v4693, 7
        %v4695 = vsub.s32 %v4692, %v4694
        %v4696 = vrot.slane %v4689, %v4695
        %v4697 = vcombine.high %v4696, 0
        %v4698 = vcombine.low %v3842, %v3844
        %v4700 = vunpack.c.l.s4 1934713408
        %v4701 = vunpack.c.0.s8 %v4700
        %v4702 = vlaneseq
        %v4703 = vshrl.u32 %v4702, 7
        %v4704 = vsub.s32 %v4701, %v4703
        %v4705 = vrot.slane %v4698, %v4704
        %v4706 = vcombine.high %v4705, 0
        %v4707 = vcombine.low %v3845, %v3847
        %v4709 = vunpack.c.l.s4 1934713408
        %v4710 = vunpack.c.0.s8 %v4709
        %v4711 = vlaneseq
        %v4712 = vshrl.u32 %v4711, 7
        %v4713 = vsub.s32 %v4710, %v4712
        %v4714 = vrot.slane %v4707, %v4713
        %v4715 = vcombine.high %v4714, 0
        %v4716 = vcombine.low %v3846, %v3848
        %v4718 = vunpack.c.l.s4 1934713408
        %v4719 = vunpack.c.0.s8 %v4718
        %v4720 = vlaneseq
        %v4721 = vshrl.u32 %v4720, 7
        %v4722 = vsub.s32 %v4719, %v4721
        %v4723 = vrot.slane %v4716, %v4722
        %v4724 = vcombine.high %v4723, 0
        %v4725 = vcombine.low %v3849, %v3851
        %v4727 = vunpack.c.l.s4 1934713408
        %v4728 = vunpack.c.0.s8 %v4727
        %v4729 = vlaneseq
        %v4730 = vshrl.u32 %v4729, 7
        %v4731 = vsub.s32 %v4728, %v4730
        %v4732 = vrot.slane %v4725, %v4731
        %v4733 = vcombine.high %v4732, 0
        %v4734 = vcombine.low %v3850, %v3852
        %v4736 = vunpack.c.l.s4 1934713408
        %v4737 = vunpack.c.0.s8 %v4736
        %v4738 = vlaneseq
        %v4739 = vshrl.u32 %v4738, 7
        %v4740 = vsub.s32 %v4737, %v4739
        %v4741 = vrot.slane %v4734, %v4740
        %v4742 = vcombine.high %v4741, 0
        %v4743 = vcombine.low %v3853, %v3855
        %v4745 = vunpack.c.l.s4 1934713408
        %v4746 = vunpack.c.0.s8 %v4745
        %v4747 = vlaneseq
        %v4748 = vshrl.u32 %v4747, 7
        %v4749 = vsub.s32 %v4746, %v4748
        %v4750 = vrot.slane %v4743, %v4749
        %v4751 = vcombine.high %v4750, 0
        %v4752 = vcombine.low %v3854, %v3856
        %v4754 = vunpack.c.l.s4 1934713408
        %v4755 = vunpack.c.0.s8 %v4754
        %v4756 = vlaneseq
        %v4757 = vshrl.u32 %v4756, 7
        %v4758 = vsub.s32 %v4755, %v4757
        %v4759 = vrot.slane %v4752, %v4758
        %v4760 = vcombine.high %v4759, 0
        %v4761 = vcombine.low %v3857, %v3859
        %v4763 = vunpack.c.l.s4 1934713408
        %v4764 = vunpack.c.0.s8 %v4763
        %v4765 = vlaneseq
        %v4766 = vshrl.u32 %v4765, 7
        %v4767 = vsub.s32 %v4764, %v4766
        %v4768 = vrot.slane %v4761, %v4767
        %v4769 = vcombine.high %v4768, 0
        %v4770 = vcombine.low %v3858, %v3860
        %v4772 = vunpack.c.l.s4 1934713408
        %v4773 = vunpack.c.0.s8 %v4772
        %v4774 = vlaneseq
        %v4775 = vshrl.u32 %v4774, 7
        %v4776 = vsub.s32 %v4773, %v4775
        %v4777 = vrot.slane %v4770, %v4776
        %v4778 = vcombine.high %v4777, 0
        %v4779 = vcombine.low %v3861, %v3863
        %v4781 = vunpack.c.l.s4 1934713408
        %v4782 = vunpack.c.0.s8 %v4781
        %v4783 = vlaneseq
        %v4784 = vshrl.u32 %v4783, 7
        %v4785 = vsub.s32 %v4782, %v4784
        %v4786 = vrot.slane %v4779, %v4785
        %v4787 = vcombine.high %v4786, 0
        %v4788 = vcombine.low %v3862, %v3864
        %v4790 = vunpack.c.l.s4 1934713408
        %v4791 = vunpack.c.0.s8 %v4790
        %v4792 = vlaneseq
        %v4793 = vshrl.u32 %v4792, 7
        %v4794 = vsub.s32 %v4791, %v4793
        %v4795 = vrot.slane %v4788, %v4794
        %v4796 = vcombine.high %v4795, 0
        %v4797 = vcombine.low %v3865, %v3867
        %v4799 = vunpack.c.l.s4 1934713408
        %v4800 = vunpack.c.0.s8 %v4799
        %v4801 = vlaneseq
        %v4802 = vshrl.u32 %v4801, 7
        %v4803 = vsub.s32 %v4800, %v4802
        %v4804 = vrot.slane %v4797, %v4803
        %v4805 = vcombine.high %v4804, 0
        %v4806 = vcombine.low %v3866, %v3868
        %v4808 = vunpack.c.l.s4 1934713408
        %v4809 = vunpack.c.0.s8 %v4808
        %v4810 = vlaneseq
        %v4811 = vshrl.u32 %v4810, 7
        %v4812 = vsub.s32 %v4809, %v4811
        %v4813 = vrot.slane %v4806, %v4812
        %v4814 = vcombine.high %v4813, 0
        %v4815 = vcombine.low %v3869, %v3871
        %v4817 = vunpack.c.l.s4 1934713408
        %v4818 = vunpack.c.0.s8 %v4817
        %v4819 = vlaneseq
        %v4820 = vshrl.u32 %v4819, 7
        %v4821 = vsub.s32 %v4818, %v4820
        %v4822 = vrot.slane %v4815, %v4821
        %v4823 = vcombine.high %v4822, 0
        %v4824 = vcombine.low %v3870, %v3872
        %v4826 = vunpack.c.l.s4 1934713408
        %v4827 = vunpack.c.0.s8 %v4826
        %v4828 = vlaneseq
        %v4829 = vshrl.u32 %v4828, 7
        %v4830 = vsub.s32 %v4827, %v4829
        %v4831 = vrot.slane %v4824, %v4830
        %v4832 = vcombine.high %v4831, 0
        %v4833 = vcombine.low %v3873, %v3875
        %v4835 = vunpack.c.l.s4 1934713408
        %v4836 = vunpack.c.0.s8 %v4835
        %v4837 = vlaneseq
        %v4838 = vshrl.u32 %v4837, 7
        %v4839 = vsub.s32 %v4836, %v4838
        %v4840 = vrot.slane %v4833, %v4839
        %v4841 = vcombine.high %v4840, 0
        %v4842 = vcombine.low %v3874, %v3876
        %v4844 = vunpack.c.l.s4 1934713408
        %v4845 = vunpack.c.0.s8 %v4844
        %v4846 = vlaneseq
        %v4847 = vshrl.u32 %v4846, 7
        %v4848 = vsub.s32 %v4845, %v4847
        %v4849 = vrot.slane %v4842, %v4848
        %v4850 = vcombine.high %v4849, 0
        %v4851 = vcombine.low %v3877, %v3879
        %v4853 = vunpack.c.l.s4 1934713408
        %v4854 = vunpack.c.0.s8 %v4853
        %v4855 = vlaneseq
        %v4856 = vshrl.u32 %v4855, 7
        %v4857 = vsub.s32 %v4854, %v4856
        %v4858 = vrot.slane %v4851, %v4857
        %v4859 = vcombine.high %v4858, 0
        %v4860 = vcombine.low %v3878, %v3880
        %v4862 = vunpack.c.l.s4 1934713408
        %v4863 = vunpack.c.0.s8 %v4862
        %v4864 = vlaneseq
        %v4865 = vshrl.u32 %v4864, 7
        %v4866 = vsub.s32 %v4863, %v4865
        %v4867 = vrot.slane %v4860, %v4866
        %v4868 = vcombine.high %v4867, 0
        %v4869 = vcombine.low %v3881, %v3883
        %v4871 = vunpack.c.l.s4 1934713408
        %v4872 = vunpack.c.0.s8 %v4871
        %v4873 = vlaneseq
        %v4874 = vshrl.u32 %v4873, 7
        %v4875 = vsub.s32 %v4872, %v4874
        %v4876 = vrot.slane %v4869, %v4875
        %v4877 = vcombine.high %v4876, 0
        %v4878 = vcombine.low %v3882, %v3884
        %v4880 = vunpack.c.l.s4 1934713408
        %v4881 = vunpack.c.0.s8 %v4880
        %v4882 = vlaneseq
        %v4883 = vshrl.u32 %v4882, 7
        %v4884 = vsub.s32 %v4881, %v4883
        %v4885 = vrot.slane %v4878, %v4884
        %v4886 = vcombine.high %v4885, 0
        %v4887 = vcombine.low %v3885, %v3887
        %v4889 = vunpack.c.l.s4 1934713408
        %v4890 = vunpack.c.0.s8 %v4889
        %v4891 = vlaneseq
        %v4892 = vshrl.u32 %v4891, 7
        %v4893 = vsub.s32 %v4890, %v4892
        %v4894 = vrot.slane %v4887, %v4893
        %v4895 = vcombine.high %v4894, 0
        %v4896 = vcombine.low %v3886, %v3888
        %v4898 = vunpack.c.l.s4 1934713408
        %v4899 = vunpack.c.0.s8 %v4898
        %v4900 = vlaneseq
        %v4901 = vshrl.u32 %v4900, 7
        %v4902 = vsub.s32 %v4899, %v4901
        %v4903 = vrot.slane %v4896, %v4902
        %v4904 = vcombine.high %v4903, 0
        %v4905 = vcombine.low %v3889, %v3891
        %v4907 = vunpack.c.l.s4 1934713408
        %v4908 = vunpack.c.0.s8 %v4907
        %v4909 = vlaneseq
        %v4910 = vshrl.u32 %v4909, 7
        %v4911 = vsub.s32 %v4908, %v4910
        %v4912 = vrot.slane %v4905, %v4911
        %v4913 = vcombine.high %v4912, 0
        %v4914 = vcombine.low %v3890, %v3892
        %v4916 = vunpack.c.l.s4 1934713408
        %v4917 = vunpack.c.0.s8 %v4916
        %v4918 = vlaneseq
        %v4919 = vshrl.u32 %v4918, 7
        %v4920 = vsub.s32 %v4917, %v4919
        %v4921 = vrot.slane %v4914, %v4920
        %v4922 = vcombine.high %v4921, 0
        %v4923 = vcombine.low %v3893, %v3895
        %v4925 = vunpack.c.l.s4 1934713408
        %v4926 = vunpack.c.0.s8 %v4925
        %v4927 = vlaneseq
        %v4928 = vshrl.u32 %v4927, 7
        %v4929 = vsub.s32 %v4926, %v4928
        %v4930 = vrot.slane %v4923, %v4929
        %v4931 = vcombine.high %v4930, 0
        %v4932 = vcombine.low %v3894, %v3896
        %v4934 = vunpack.c.l.s4 1934713408
        %v4935 = vunpack.c.0.s8 %v4934
        %v4936 = vlaneseq
        %v4937 = vshrl.u32 %v4936, 7
        %v4938 = vsub.s32 %v4935, %v4937
        %v4939 = vrot.slane %v4932, %v4938
        %v4940 = vcombine.high %v4939, 0
        %v4941 = vcombine.low %v3897, %v3899
        %v4943 = vunpack.c.l.s4 1934713408
        %v4944 = vunpack.c.0.s8 %v4943
        %v4945 = vlaneseq
        %v4946 = vshrl.u32 %v4945, 7
        %v4947 = vsub.s32 %v4944, %v4946
        %v4948 = vrot.slane %v4941, %v4947
        %v4949 = vcombine.high %v4948, 0
        %v4950 = vcombine.low %v3898, %v3900
        %v4952 = vunpack.c.l.s4 1934713408
        %v4953 = vunpack.c.0.s8 %v4952
        %v4954 = vlaneseq
        %v4955 = vshrl.u32 %v4954, 7
        %v4956 = vsub.s32 %v4953, %v4955
        %v4957 = vrot.slane %v4950, %v4956
        %v4958 = vcombine.high %v4957, 0
        %v4959 = vcombine.low %v3901, %v3903
        %v4961 = vunpack.c.l.s4 1934713408
        %v4962 = vunpack.c.0.s8 %v4961
        %v4963 = vlaneseq
        %v4964 = vshrl.u32 %v4963, 7
        %v4965 = vsub.s32 %v4962, %v4964
        %v4966 = vrot.slane %v4959, %v4965
        %v4967 = vcombine.high %v4966, 0
        %v4968 = vcombine.low %v3902, %v3904
        %v4970 = vunpack.c.l.s4 1934713408
        %v4971 = vunpack.c.0.s8 %v4970
        %v4972 = vlaneseq
        %v4973 = vshrl.u32 %v4972, 7
        %v4974 = vsub.s32 %v4971, %v4973
        %v4975 = vrot.slane %v4968, %v4974
        %v4976 = vcombine.high %v4975, 0
        %v4977 = vcombine.low %v3905, %v3907
        %v4979 = vunpack.c.l.s4 1934713408
        %v4980 = vunpack.c.0.s8 %v4979
        %v4981 = vlaneseq
        %v4982 = vshrl.u32 %v4981, 7
        %v4983 = vsub.s32 %v4980, %v4982
        %v4984 = vrot.slane %v4977, %v4983
        %v4985 = vcombine.high %v4984, 0
        %v4986 = vcombine.low %v3906, %v3908
        %v4988 = vunpack.c.l.s4 1934713408
        %v4989 = vunpack.c.0.s8 %v4988
        %v4990 = vlaneseq
        %v4991 = vshrl.u32 %v4990, 7
        %v4992 = vsub.s32 %v4989, %v4991
        %v4993 = vrot.slane %v4986, %v4992
        %v4994 = vcombine.high %v4993, 0
        %v4995 = vcombine.low %v3909, %v3911
        %v4997 = vunpack.c.l.s4 1934713408
        %v4998 = vunpack.c.0.s8 %v4997
        %v4999 = vlaneseq
        %v5000 = vshrl.u32 %v4999, 7
        %v5001 = vsub.s32 %v4998, %v5000
        %v5002 = vrot.slane %v4995, %v5001
        %v5003 = vcombine.high %v5002, 0
        %v5004 = vcombine.low %v3910, %v3912
        %v5006 = vunpack.c.l.s4 1934713408
        %v5007 = vunpack.c.0.s8 %v5006
        %v5008 = vlaneseq
        %v5009 = vshrl.u32 %v5008, 7
        %v5010 = vsub.s32 %v5007, %v5009
        %v5011 = vrot.slane %v5004, %v5010
        %v5012 = vcombine.high %v5011, 0
        %v5013 = vcombine.low %v3913, %v3915
        %v5015 = vunpack.c.l.s4 1934713408
        %v5016 = vunpack.c.0.s8 %v5015
        %v5017 = vlaneseq
        %v5018 = vshrl.u32 %v5017, 7
        %v5019 = vsub.s32 %v5016, %v5018
        %v5020 = vrot.slane %v5013, %v5019
        %v5021 = vcombine.high %v5020, 0
        %v5022 = vcombine.low %v3914, %v3916
        %v5024 = vunpack.c.l.s4 1934713408
        %v5025 = vunpack.c.0.s8 %v5024
        %v5026 = vlaneseq
        %v5027 = vshrl.u32 %v5026, 7
        %v5028 = vsub.s32 %v5025, %v5027
        %v5029 = vrot.slane %v5022, %v5028
        %v5030 = vcombine.high %v5029, 0
        %v5031 = vcombine.low %v3917, %v3919
        %v5033 = vunpack.c.l.s4 1934713408
        %v5034 = vunpack.c.0.s8 %v5033
        %v5035 = vlaneseq
        %v5036 = vshrl.u32 %v5035, 7
        %v5037 = vsub.s32 %v5034, %v5036
        %v5038 = vrot.slane %v5031, %v5037
        %v5039 = vcombine.high %v5038, 0
        %v5040 = vcombine.low %v3918, %v3920
        %v5042 = vunpack.c.l.s4 1934713408
        %v5043 = vunpack.c.0.s8 %v5042
        %v5044 = vlaneseq
        %v5045 = vshrl.u32 %v5044, 7
        %v5046 = vsub.s32 %v5043, %v5045
        %v5047 = vrot.slane %v5040, %v5046
        %v5048 = vcombine.high %v5047, 0
        %v5049 = vcombine.low %v3921, %v3923
        %v5051 = vunpack.c.l.s4 1934713408
        %v5052 = vunpack.c.0.s8 %v5051
        %v5053 = vlaneseq
        %v5054 = vshrl.u32 %v5053, 7
        %v5055 = vsub.s32 %v5052, %v5054
        %v5056 = vrot.slane %v5049, %v5055
        %v5057 = vcombine.high %v5056, 0
        %v5058 = vcombine.low %v3922, %v3924
        %v5060 = vunpack.c.l.s4 1934713408
        %v5061 = vunpack.c.0.s8 %v5060
        %v5062 = vlaneseq
        %v5063 = vshrl.u32 %v5062, 7
        %v5064 = vsub.s32 %v5061, %v5063
        %v5065 = vrot.slane %v5058, %v5064
        %v5066 = vcombine.high %v5065, 0
        %v5067 = vcombine.low %v3925, %v3927
        %v5069 = vunpack.c.l.s4 1934713408
        %v5070 = vunpack.c.0.s8 %v5069
        %v5071 = vlaneseq
        %v5072 = vshrl.u32 %v5071, 7
        %v5073 = vsub.s32 %v5070, %v5072
        %v5074 = vrot.slane %v5067, %v5073
        %v5075 = vcombine.high %v5074, 0
        %v5076 = vcombine.low %v3926, %v3928
        %v5078 = vunpack.c.l.s4 1934713408
        %v5079 = vunpack.c.0.s8 %v5078
        %v5080 = vlaneseq
        %v5081 = vshrl.u32 %v5080, 7
        %v5082 = vsub.s32 %v5079, %v5081
        %v5083 = vrot.slane %v5076, %v5082
        %v5084 = vcombine.high %v5083, 0
        %v5085 = vcombine.low %v3929, %v3931
        %v5087 = vunpack.c.l.s4 1934713408
        %v5088 = vunpack.c.0.s8 %v5087
        %v5089 = vlaneseq
        %v5090 = vshrl.u32 %v5089, 7
        %v5091 = vsub.s32 %v5088, %v5090
        %v5092 = vrot.slane %v5085, %v5091
        %v5093 = vcombine.high %v5092, 0
        %v5094 = vcombine.low %v3930, %v3932
        %v5096 = vunpack.c.l.s4 1934713408
        %v5097 = vunpack.c.0.s8 %v5096
        %v5098 = vlaneseq
        %v5099 = vshrl.u32 %v5098, 7
        %v5100 = vsub.s32 %v5097, %v5099
        %v5101 = vrot.slane %v5094, %v5100
        %v5102 = vcombine.high %v5101, 0
        %v5103 = vcombine.low %v3933, %v3935
        %v5105 = vunpack.c.l.s4 1934713408
        %v5106 = vunpack.c.0.s8 %v5105
        %v5107 = vlaneseq
        %v5108 = vshrl.u32 %v5107, 7
        %v5109 = vsub.s32 %v5106, %v5108
        %v5110 = vrot.slane %v5103, %v5109
        %v5111 = vcombine.high %v5110, 0
        %v5112 = vcombine.low %v3934, %v3936
        %v5114 = vunpack.c.l.s4 1934713408
        %v5115 = vunpack.c.0.s8 %v5114
        %v5116 = vlaneseq
        %v5117 = vshrl.u32 %v5116, 7
        %v5118 = vsub.s32 %v5115, %v5117
        %v5119 = vrot.slane %v5112, %v5118
        %v5120 = vcombine.high %v5119, 0
        %v5121 = vcombine.low %v3937, %v3939
        %v5123 = vunpack.c.l.s4 1934713408
        %v5124 = vunpack.c.0.s8 %v5123
        %v5125 = vlaneseq
        %v5126 = vshrl.u32 %v5125, 7
        %v5127 = vsub.s32 %v5124, %v5126
        %v5128 = vrot.slane %v5121, %v5127
        %v5129 = vcombine.high %v5128, 0
        %v5130 = vcombine.low %v3938, %v3940
        %v5132 = vunpack.c.l.s4 1934713408
        %v5133 = vunpack.c.0.s8 %v5132
        %v5134 = vlaneseq
        %v5135 = vshrl.u32 %v5134, 7
        %v5136 = vsub.s32 %v5133, %v5135
        %v5137 = vrot.slane %v5130, %v5136
        %v5138 = vcombine.high %v5137, 0
        %v5139 = vcombine.low %v3941, %v3943
        %v5141 = vunpack.c.l.s4 1934713408
        %v5142 = vunpack.c.0.s8 %v5141
        %v5143 = vlaneseq
        %v5144 = vshrl.u32 %v5143, 7
        %v5145 = vsub.s32 %v5142, %v5144
        %v5146 = vrot.slane %v5139, %v5145
        %v5147 = vcombine.high %v5146, 0
        %v5148 = vcombine.low %v3942, %v3944
        %v5150 = vunpack.c.l.s4 1934713408
        %v5151 = vunpack.c.0.s8 %v5150
        %v5152 = vlaneseq
        %v5153 = vshrl.u32 %v5152, 7
        %v5154 = vsub.s32 %v5151, %v5153
        %v5155 = vrot.slane %v5148, %v5154
        %v5156 = vcombine.high %v5155, 0
        %v5157 = vcombine.low %v3945, %v3947
        %v5159 = vunpack.c.l.s4 1934713408
        %v5160 = vunpack.c.0.s8 %v5159
        %v5161 = vlaneseq
        %v5162 = vshrl.u32 %v5161, 7
        %v5163 = vsub.s32 %v5160, %v5162
        %v5164 = vrot.slane %v5157, %v5163
        %v5165 = vcombine.high %v5164, 0
        %v5166 = vcombine.low %v3946, %v3948
        %v5168 = vunpack.c.l.s4 1934713408
        %v5169 = vunpack.c.0.s8 %v5168
        %v5170 = vlaneseq
        %v5171 = vshrl.u32 %v5170, 7
        %v5172 = vsub.s32 %v5169, %v5171
        %v5173 = vrot.slane %v5166, %v5172
        %v5174 = vcombine.high %v5173, 0
        %v5175 = vcombine.low %v3949, %v3951
        %v5177 = vunpack.c.l.s4 1934713408
        %v5178 = vunpack.c.0.s8 %v5177
        %v5179 = vlaneseq
        %v5180 = vshrl.u32 %v5179, 7
        %v5181 = vsub.s32 %v5178, %v5180
        %v5182 = vrot.slane %v5175, %v5181
        %v5183 = vcombine.high %v5182, 0
        %v5184 = vcombine.low %v3950, %v3952
        %v5186 = vunpack.c.l.s4 1934713408
        %v5187 = vunpack.c.0.s8 %v5186
        %v5188 = vlaneseq
        %v5189 = vshrl.u32 %v5188, 7
        %v5190 = vsub.s32 %v5187, %v5189
        %v5191 = vrot.slane %v5184, %v5190
        %v5192 = vcombine.high %v5191, 0
        %v5193 = vcombine.low %v3953, %v3955
        %v5195 = vunpack.c.l.s4 1934713408
        %v5196 = vunpack.c.0.s8 %v5195
        %v5197 = vlaneseq
        %v5198 = vshrl.u32 %v5197, 7
        %v5199 = vsub.s32 %v5196, %v5198
        %v5200 = vrot.slane %v5193, %v5199
        %v5201 = vcombine.high %v5200, 0
        %v5202 = vcombine.low %v3954, %v3956
        %v5204 = vunpack.c.l.s4 1934713408
        %v5205 = vunpack.c.0.s8 %v5204
        %v5206 = vlaneseq
        %v5207 = vshrl.u32 %v5206, 7
        %v5208 = vsub.s32 %v5205, %v5207
        %v5209 = vrot.slane %v5202, %v5208
        %v5210 = vcombine.high %v5209, 0
        %v5211 = vcombine.low %v3957, %v3959
        %v5213 = vunpack.c.l.s4 1934713408
        %v5214 = vunpack.c.0.s8 %v5213
        %v5215 = vlaneseq
        %v5216 = vshrl.u32 %v5215, 7
        %v5217 = vsub.s32 %v5214, %v5216
        %v5218 = vrot.slane %v5211, %v5217
        %v5219 = vcombine.high %v5218, 0
        %v5220 = vcombine.low %v3958, %v3960
        %v5222 = vunpack.c.l.s4 1934713408
        %v5223 = vunpack.c.0.s8 %v5222
        %v5224 = vlaneseq
        %v5225 = vshrl.u32 %v5224, 7
        %v5226 = vsub.s32 %v5223, %v5225
        %v5227 = vrot.slane %v5220, %v5226
        %v5228 = vcombine.high %v5227, 0
        %v5229 = vcombine.low %v3961, %v3963
        %v5231 = vunpack.c.l.s4 1934713408
        %v5232 = vunpack.c.0.s8 %v5231
        %v5233 = vlaneseq
        %v5234 = vshrl.u32 %v5233, 7
        %v5235 = vsub.s32 %v5232, %v5234
        %v5236 = vrot.slane %v5229, %v5235
        %v5237 = vcombine.high %v5236, 0
        %v5238 = vcombine.low %v3962, %v3964
        %v5240 = vunpack.c.l.s4 1934713408
        %v5241 = vunpack.c.0.s8 %v5240
        %v5242 = vlaneseq
        %v5243 = vshrl.u32 %v5242, 7
        %v5244 = vsub.s32 %v5241, %v5243
        %v5245 = vrot.slane %v5238, %v5244
        %v5246 = vcombine.high %v5245, 0
        %v5247 = vcombine.low %v3965, %v3967
        %v5249 = vunpack.c.l.s4 1934713408
        %v5250 = vunpack.c.0.s8 %v5249
        %v5251 = vlaneseq
        %v5252 = vshrl.u32 %v5251, 7
        %v5253 = vsub.s32 %v5250, %v5252
        %v5254 = vrot.slane %v5247, %v5253
        %v5255 = vcombine.high %v5254, 0
        %v5256 = vcombine.low %v3966, %v3968
        %v5258 = vunpack.c.l.s4 1934713408
        %v5259 = vunpack.c.0.s8 %v5258
        %v5260 = vlaneseq
        %v5261 = vshrl.u32 %v5260, 7
        %v5262 = vsub.s32 %v5259, %v5261
        %v5263 = vrot.slane %v5256, %v5262
        %v5264 = vcombine.high %v5263, 0
        %v5267 = vpack.i.b16 %v3985, %v3976
        %v5268 = vshrl.u32 %v3976, 16
        %v5269 = vshrl.u32 %v3985, 16
        %v5270 = vpack.i.b16 %v5269, %v5268
        %v5273 = vpack.i.b16 %v3986, %v3977
        %v5274 = vshrl.u32 %v3977, 16
        %v5275 = vshrl.u32 %v3986, 16
        %v5276 = vpack.i.b16 %v5275, %v5274
        %v5279 = vpack.i.b16 %v4003, %v3994
        %v5280 = vshrl.u32 %v3994, 16
        %v5281 = vshrl.u32 %v4003, 16
        %v5282 = vpack.i.b16 %v5281, %v5280
        %v5285 = vpack.i.b16 %v4004, %v3995
        %v5286 = vshrl.u32 %v3995, 16
        %v5287 = vshrl.u32 %v4004, 16
        %v5288 = vpack.i.b16 %v5287, %v5286
        %v5291 = vpack.i.b16 %v4021, %v4012
        %v5292 = vshrl.u32 %v4012, 16
        %v5293 = vshrl.u32 %v4021, 16
        %v5294 = vpack.i.b16 %v5293, %v5292
        %v5297 = vpack.i.b16 %v4022, %v4013
        %v5298 = vshrl.u32 %v4013, 16
        %v5299 = vshrl.u32 %v4022, 16
        %v5300 = vpack.i.b16 %v5299, %v5298
        %v5303 = vpack.i.b16 %v4039, %v4030
        %v5304 = vshrl.u32 %v4030, 16
        %v5305 = vshrl.u32 %v4039, 16
        %v5306 = vpack.i.b16 %v5305, %v5304
        %v5309 = vpack.i.b16 %v4040, %v4031
        %v5310 = vshrl.u32 %v4031, 16
        %v5311 = vshrl.u32 %v4040, 16
        %v5312 = vpack.i.b16 %v5311, %v5310
        %v5315 = vpack.i.b16 %v4057, %v4048
        %v5316 = vshrl.u32 %v4048, 16
        %v5317 = vshrl.u32 %v4057, 16
        %v5318 = vpack.i.b16 %v5317, %v5316
        %v5321 = vpack.i.b16 %v4058, %v4049
        %v5322 = vshrl.u32 %v4049, 16
        %v5323 = vshrl.u32 %v4058, 16
        %v5324 = vpack.i.b16 %v5323, %v5322
        %v5327 = vpack.i.b16 %v4075, %v4066
        %v5328 = vshrl.u32 %v4066, 16
        %v5329 = vshrl.u32 %v4075, 16
        %v5330 = vpack.i.b16 %v5329, %v5328
        %v5333 = vpack.i.b16 %v4076, %v4067
        %v5334 = vshrl.u32 %v4067, 16
        %v5335 = vshrl.u32 %v4076, 16
        %v5336 = vpack.i.b16 %v5335, %v5334
        %v5339 = vpack.i.b16 %v4093, %v4084
        %v5340 = vshrl.u32 %v4084, 16
        %v5341 = vshrl.u32 %v4093, 16
        %v5342 = vpack.i.b16 %v5341, %v5340
        %v5345 = vpack.i.b16 %v4094, %v4085
        %v5346 = vshrl.u32 %v4085, 16
        %v5347 = vshrl.u32 %v4094, 16
        %v5348 = vpack.i.b16 %v5347, %v5346
        %v5351 = vpack.i.b16 %v4111, %v4102
        %v5352 = vshrl.u32 %v4102, 16
        %v5353 = vshrl.u32 %v4111, 16
        %v5354 = vpack.i.b16 %v5353, %v5352
        %v5357 = vpack.i.b16 %v4112, %v4103
        %v5358 = vshrl.u32 %v4103, 16
        %v5359 = vshrl.u32 %v4112, 16
        %v5360 = vpack.i.b16 %v5359, %v5358
        %v5363 = vpack.i.b16 %v4129, %v4120
        %v5364 = vshrl.u32 %v4120, 16
        %v5365 = vshrl.u32 %v4129, 16
        %v5366 = vpack.i.b16 %v5365, %v5364
        %v5369 = vpack.i.b16 %v4130, %v4121
        %v5370 = vshrl.u32 %v4121, 16
        %v5371 = vshrl.u32 %v4130, 16
        %v5372 = vpack.i.b16 %v5371, %v5370
        %v5375 = vpack.i.b16 %v4147, %v4138
        %v5376 = vshrl.u32 %v4138, 16
        %v5377 = vshrl.u32 %v4147, 16
        %v5378 = vpack.i.b16 %v5377, %v5376
        %v5381 = vpack.i.b16 %v4148, %v4139
        %v5382 = vshrl.u32 %v4139, 16
        %v5383 = vshrl.u32 %v4148, 16
        %v5384 = vpack.i.b16 %v5383, %v5382
        %v5387 = vpack.i.b16 %v4165, %v4156
        %v5388 = vshrl.u32 %v4156, 16
        %v5389 = vshrl.u32 %v4165, 16
        %v5390 = vpack.i.b16 %v5389, %v5388
        %v5393 = vpack.i.b16 %v4166, %v4157
        %v5394 = vshrl.u32 %v4157, 16
        %v5395 = vshrl.u32 %v4166, 16
        %v5396 = vpack.i.b16 %v5395, %v5394
        %v5399 = vpack.i.b16 %v4183, %v4174
        %v5400 = vshrl.u32 %v4174, 16
        %v5401 = vshrl.u32 %v4183, 16
        %v5402 = vpack.i.b16 %v5401, %v5400
        %v5405 = vpack.i.b16 %v4184, %v4175
        %v5406 = vshrl.u32 %v4175, 16
        %v5407 = vshrl.u32 %v4184, 16
        %v5408 = vpack.i.b16 %v5407, %v5406
        %v5411 = vpack.i.b16 %v4201, %v4192
        %v5412 = vshrl.u32 %v4192, 16
        %v5413 = vshrl.u32 %v4201, 16
        %v5414 = vpack.i.b16 %v5413, %v5412
        %v5417 = vpack.i.b16 %v4202, %v4193
        %v5418 = vshrl.u32 %v4193, 16
        %v5419 = vshrl.u32 %v4202, 16
        %v5420 = vpack.i.b16 %v5419, %v5418
        %v5423 = vpack.i.b16 %v4219, %v4210
        %v5424 = vshrl.u32 %v4210, 16
        %v5425 = vshrl.u32 %v4219, 16
        %v5426 = vpack.i.b16 %v5425, %v5424
        %v5429 = vpack.i.b16 %v4220, %v4211
        %v5430 = vshrl.u32 %v4211, 16
        %v5431 = vshrl.u32 %v4220, 16
        %v5432 = vpack.i.b16 %v5431, %v5430
        %v5435 = vpack.i.b16 %v4237, %v4228
        %v5436 = vshrl.u32 %v4228, 16
        %v5437 = vshrl.u32 %v4237, 16
        %v5438 = vpack.i.b16 %v5437, %v5436
        %v5441 = vpack.i.b16 %v4238, %v4229
        %v5442 = vshrl.u32 %v4229, 16
        %v5443 = vshrl.u32 %v4238, 16
        %v5444 = vpack.i.b16 %v5443, %v5442
        %v5447 = vpack.i.b16 %v4255, %v4246
        %v5448 = vshrl.u32 %v4246, 16
        %v5449 = vshrl.u32 %v4255, 16
        %v5450 = vpack.i.b16 %v5449, %v5448
        %v5453 = vpack.i.b16 %v4256, %v4247
        %v5454 = vshrl.u32 %v4247, 16
        %v5455 = vshrl.u32 %v4256, 16
        %v5456 = vpack.i.b16 %v5455, %v5454
        %v5459 = vpack.i.b16 %v4273, %v4264
        %v5460 = vshrl.u32 %v4264, 16
        %v5461 = vshrl.u32 %v4273, 16
        %v5462 = vpack.i.b16 %v5461, %v5460
        %v5465 = vpack.i.b16 %v4274, %v4265
        %v5466 = vshrl.u32 %v4265, 16
        %v5467 = vshrl.u32 %v4274, 16
        %v5468 = vpack.i.b16 %v5467, %v5466
        %v5471 = vpack.i.b16 %v4291, %v4282
        %v5472 = vshrl.u32 %v4282, 16
        %v5473 = vshrl.u32 %v4291, 16
        %v5474 = vpack.i.b16 %v5473, %v5472
        %v5477 = vpack.i.b16 %v4292, %v4283
        %v5478 = vshrl.u32 %v4283, 16
        %v5479 = vshrl.u32 %v4292, 16
        %v5480 = vpack.i.b16 %v5479, %v5478
        %v5483 = vpack.i.b16 %v4309, %v4300
        %v5484 = vshrl.u32 %v4300, 16
        %v5485 = vshrl.u32 %v4309, 16
        %v5486 = vpack.i.b16 %v5485, %v5484
        %v5489 = vpack.i.b16 %v4310, %v4301
        %v5490 = vshrl.u32 %v4301, 16
        %v5491 = vshrl.u32 %v4310, 16
        %v5492 = vpack.i.b16 %v5491, %v5490
        %v5495 = vpack.i.b16 %v4327, %v4318
        %v5496 = vshrl.u32 %v4318, 16
        %v5497 = vshrl.u32 %v4327, 16
        %v5498 = vpack.i.b16 %v5497, %v5496
        %v5501 = vpack.i.b16 %v4328, %v4319
        %v5502 = vshrl.u32 %v4319, 16
        %v5503 = vshrl.u32 %v4328, 16
        %v5504 = vpack.i.b16 %v5503, %v5502
        %v5507 = vpack.i.b16 %v4345, %v4336
        %v5508 = vshrl.u32 %v4336, 16
        %v5509 = vshrl.u32 %v4345, 16
        %v5510 = vpack.i.b16 %v5509, %v5508
        %v5513 = vpack.i.b16 %v4346, %v4337
        %v5514 = vshrl.u32 %v4337, 16
        %v5515 = vshrl.u32 %v4346, 16
        %v5516 = vpack.i.b16 %v5515, %v5514
        %v5519 = vpack.i.b16 %v4363, %v4354
        %v5520 = vshrl.u32 %v4354, 16
        %v5521 = vshrl.u32 %v4363, 16
        %v5522 = vpack.i.b16 %v5521, %v5520
        %v5525 = vpack.i.b16 %v4364, %v4355
        %v5526 = vshrl.u32 %v4355, 16
        %v5527 = vshrl.u32 %v4364, 16
        %v5528 = vpack.i.b16 %v5527, %v5526
        %v5531 = vpack.i.b16 %v4381, %v4372
        %v5532 = vshrl.u32 %v4372, 16
        %v5533 = vshrl.u32 %v4381, 16
        %v5534 = vpack.i.b16 %v5533, %v5532
        %v5537 = vpack.i.b16 %v4382, %v4373
        %v5538 = vshrl.u32 %v4373, 16
        %v5539 = vshrl.u32 %v4382, 16
        %v5540 = vpack.i.b16 %v5539, %v5538
        %v5543 = vpack.i.b16 %v4399, %v4390
        %v5544 = vshrl.u32 %v4390, 16
        %v5545 = vshrl.u32 %v4399, 16
        %v5546 = vpack.i.b16 %v5545, %v5544
        %v5549 = vpack.i.b16 %v4400, %v4391
        %v5550 = vshrl.u32 %v4391, 16
        %v5551 = vshrl.u32 %v4400, 16
        %v5552 = vpack.i.b16 %v5551, %v5550
        %v5555 = vpack.i.b16 %v4417, %v4408
        %v5556 = vshrl.u32 %v4408, 16
        %v5557 = vshrl.u32 %v4417, 16
        %v5558 = vpack.i.b16 %v5557, %v5556
        %v5561 = vpack.i.b16 %v4418, %v4409
        %v5562 = vshrl.u32 %v4409, 16
        %v5563 = vshrl.u32 %v4418, 16
        %v5564 = vpack.i.b16 %v5563, %v5562
        %v5567 = vpack.i.b16 %v4435, %v4426
        %v5568 = vshrl.u32 %v4426, 16
        %v5569 = vshrl.u32 %v4435, 16
        %v5570 = vpack.i.b16 %v5569, %v5568
        %v5573 = vpack.i.b16 %v4436, %v4427
        %v5574 = vshrl.u32 %v4427, 16
        %v5575 = vshrl.u32 %v4436, 16
        %v5576 = vpack.i.b16 %v5575, %v5574
        %v5579 = vpack.i.b16 %v4453, %v4444
        %v5580 = vshrl.u32 %v4444, 16
        %v5581 = vshrl.u32 %v4453, 16
        %v5582 = vpack.i.b16 %v5581, %v5580
        %v5585 = vpack.i.b16 %v4454, %v4445
        %v5586 = vshrl.u32 %v4445, 16
        %v5587 = vshrl.u32 %v4454, 16
        %v5588 = vpack.i.b16 %v5587, %v5586
        %v5591 = vpack.i.b16 %v4471, %v4462
        %v5592 = vshrl.u32 %v4462, 16
        %v5593 = vshrl.u32 %v4471, 16
        %v5594 = vpack.i.b16 %v5593, %v5592
        %v5597 = vpack.i.b16 %v4472, %v4463
        %v5598 = vshrl.u32 %v4463, 16
        %v5599 = vshrl.u32 %v4472, 16
        %v5600 = vpack.i.b16 %v5599, %v5598
        %v5603 = vpack.i.b16 %v4489, %v4480
        %v5604 = vshrl.u32 %v4480, 16
        %v5605 = vshrl.u32 %v4489, 16
        %v5606 = vpack.i.b16 %v5605, %v5604
        %v5609 = vpack.i.b16 %v4490, %v4481
        %v5610 = vshrl.u32 %v4481, 16
        %v5611 = vshrl.u32 %v4490, 16
        %v5612 = vpack.i.b16 %v5611, %v5610
        %v5615 = vpack.i.b16 %v4507, %v4498
        %v5616 = vshrl.u32 %v4498, 16
        %v5617 = vshrl.u32 %v4507, 16
        %v5618 = vpack.i.b16 %v5617, %v5616
        %v5621 = vpack.i.b16 %v4508, %v4499
        %v5622 = vshrl.u32 %v4499, 16
        %v5623 = vshrl.u32 %v4508, 16
        %v5624 = vpack.i.b16 %v5623, %v5622
        %v5627 = vpack.i.b16 %v4525, %v4516
        %v5628 = vshrl.u32 %v4516, 16
        %v5629 = vshrl.u32 %v4525, 16
        %v5630 = vpack.i.b16 %v5629, %v5628
        %v5633 = vpack.i.b16 %v4526, %v4517
        %v5634 = vshrl.u32 %v4517, 16
        %v5635 = vshrl.u32 %v4526, 16
        %v5636 = vpack.i.b16 %v5635, %v5634
        %v5639 = vpack.i.b16 %v4543, %v4534
        %v5640 = vshrl.u32 %v4534, 16
        %v5641 = vshrl.u32 %v4543, 16
        %v5642 = vpack.i.b16 %v5641, %v5640
        %v5645 = vpack.i.b16 %v4544, %v4535
        %v5646 = vshrl.u32 %v4535, 16
        %v5647 = vshrl.u32 %v4544, 16
        %v5648 = vpack.i.b16 %v5647, %v5646
        %v5651 = vpack.i.b16 %v4561, %v4552
        %v5652 = vshrl.u32 %v4552, 16
        %v5653 = vshrl.u32 %v4561, 16
        %v5654 = vpack.i.b16 %v5653, %v5652
        %v5657 = vpack.i.b16 %v4562, %v4553
        %v5658 = vshrl.u32 %v4553, 16
        %v5659 = vshrl.u32 %v4562, 16
        %v5660 = vpack.i.b16 %v5659, %v5658
        %v5663 = vpack.i.b16 %v4579, %v4570
        %v5664 = vshrl.u32 %v4570, 16
        %v5665 = vshrl.u32 %v4579, 16
        %v5666 = vpack.i.b16 %v5665, %v5664
        %v5669 = vpack.i.b16 %v4580, %v4571
        %v5670 = vshrl.u32 %v4571, 16
        %v5671 = vshrl.u32 %v4580, 16
        %v5672 = vpack.i.b16 %v5671, %v5670
        %v5675 = vpack.i.b16 %v4597, %v4588
        %v5676 = vshrl.u32 %v4588, 16
        %v5677 = vshrl.u32 %v4597, 16
        %v5678 = vpack.i.b16 %v5677, %v5676
        %v5681 = vpack.i.b16 %v4598, %v4589
        %v5682 = vshrl.u32 %v4589, 16
        %v5683 = vshrl.u32 %v4598, 16
        %v5684 = vpack.i.b16 %v5683, %v5682
        %v5687 = vpack.i.b16 %v4615, %v4606
        %v5688 = vshrl.u32 %v4606, 16
        %v5689 = vshrl.u32 %v4615, 16
        %v5690 = vpack.i.b16 %v5689, %v5688
        %v5693 = vpack.i.b16 %v4616, %v4607
        %v5694 = vshrl.u32 %v4607, 16
        %v5695 = vshrl.u32 %v4616, 16
        %v5696 = vpack.i.b16 %v5695, %v5694
        %v5699 = vpack.i.b16 %v4633, %v4624
        %v5700 = vshrl.u32 %v4624, 16
        %v5701 = vshrl.u32 %v4633, 16
        %v5702 = vpack.i.b16 %v5701, %v5700
        %v5705 = vpack.i.b16 %v4634, %v4625
        %v5706 = vshrl.u32 %v4625, 16
        %v5707 = vshrl.u32 %v4634, 16
        %v5708 = vpack.i.b16 %v5707, %v5706
        %v5711 = vpack.i.b16 %v4651, %v4642
        %v5712 = vshrl.u32 %v4642, 16
        %v5713 = vshrl.u32 %v4651, 16
        %v5714 = vpack.i.b16 %v5713, %v5712
        %v5717 = vpack.i.b16 %v4652, %v4643
        %v5718 = vshrl.u32 %v4643, 16
        %v5719 = vshrl.u32 %v4652, 16
        %v5720 = vpack.i.b16 %v5719, %v5718
        %v5723 = vpack.i.b16 %v4669, %v4660
        %v5724 = vshrl.u32 %v4660, 16
        %v5725 = vshrl.u32 %v4669, 16
        %v5726 = vpack.i.b16 %v5725, %v5724
        %v5729 = vpack.i.b16 %v4670, %v4661
        %v5730 = vshrl.u32 %v4661, 16
        %v5731 = vshrl.u32 %v4670, 16
        %v5732 = vpack.i.b16 %v5731, %v5730
        %v5735 = vpack.i.b16 %v4687, %v4678
        %v5736 = vshrl.u32 %v4678, 16
        %v5737 = vshrl.u32 %v4687, 16
        %v5738 = vpack.i.b16 %v5737, %v5736
        %v5741 = vpack.i.b16 %v4688, %v4679
        %v5742 = vshrl.u32 %v4679, 16
        %v5743 = vshrl.u32 %v4688, 16
        %v5744 = vpack.i.b16 %v5743, %v5742
        %v5747 = vpack.i.b16 %v4705, %v4696
        %v5748 = vshrl.u32 %v4696, 16
        %v5749 = vshrl.u32 %v4705, 16
        %v5750 = vpack.i.b16 %v5749, %v5748
        %v5753 = vpack.i.b16 %v4706, %v4697
        %v5754 = vshrl.u32 %v4697, 16
        %v5755 = vshrl.u32 %v4706, 16
        %v5756 = vpack.i.b16 %v5755, %v5754
        %v5759 = vpack.i.b16 %v4723, %v4714
        %v5760 = vshrl.u32 %v4714, 16
        %v5761 = vshrl.u32 %v4723, 16
        %v5762 = vpack.i.b16 %v5761, %v5760
        %v5765 = vpack.i.b16 %v4724, %v4715
        %v5766 = vshrl.u32 %v4715, 16
        %v5767 = vshrl.u32 %v4724, 16
        %v5768 = vpack.i.b16 %v5767, %v5766
        %v5771 = vpack.i.b16 %v4741, %v4732
        %v5772 = vshrl.u32 %v4732, 16
        %v5773 = vshrl.u32 %v4741, 16
        %v5774 = vpack.i.b16 %v5773, %v5772
        %v5777 = vpack.i.b16 %v4742, %v4733
        %v5778 = vshrl.u32 %v4733, 16
        %v5779 = vshrl.u32 %v4742, 16
        %v5780 = vpack.i.b16 %v5779, %v5778
        %v5783 = vpack.i.b16 %v4759, %v4750
        %v5784 = vshrl.u32 %v4750, 16
        %v5785 = vshrl.u32 %v4759, 16
        %v5786 = vpack.i.b16 %v5785, %v5784
        %v5789 = vpack.i.b16 %v4760, %v4751
        %v5790 = vshrl.u32 %v4751, 16
        %v5791 = vshrl.u32 %v4760, 16
        %v5792 = vpack.i.b16 %v5791, %v5790
        %v5795 = vpack.i.b16 %v4777, %v4768
        %v5796 = vshrl.u32 %v4768, 16
        %v5797 = vshrl.u32 %v4777, 16
        %v5798 = vpack.i.b16 %v5797, %v5796
        %v5801 = vpack.i.b16 %v4778, %v4769
        %v5802 = vshrl.u32 %v4769, 16
        %v5803 = vshrl.u32 %v4778, 16
        %v5804 = vpack.i.b16 %v5803, %v5802
        %v5807 = vpack.i.b16 %v4795, %v4786
        %v5808 = vshrl.u32 %v4786, 16
        %v5809 = vshrl.u32 %v4795, 16
        %v5810 = vpack.i.b16 %v5809, %v5808
        %v5813 = vpack.i.b16 %v4796, %v4787
        %v5814 = vshrl.u32 %v4787, 16
        %v5815 = vshrl.u32 %v4796, 16
        %v5816 = vpack.i.b16 %v5815, %v5814
        %v5819 = vpack.i.b16 %v4813, %v4804
        %v5820 = vshrl.u32 %v4804, 16
        %v5821 = vshrl.u32 %v4813, 16
        %v5822 = vpack.i.b16 %v5821, %v5820
        %v5825 = vpack.i.b16 %v4814, %v4805
        %v5826 = vshrl.u32 %v4805, 16
        %v5827 = vshrl.u32 %v4814, 16
        %v5828 = vpack.i.b16 %v5827, %v5826
        %v5831 = vpack.i.b16 %v4831, %v4822
        %v5832 = vshrl.u32 %v4822, 16
        %v5833 = vshrl.u32 %v4831, 16
        %v5834 = vpack.i.b16 %v5833, %v5832
        %v5837 = vpack.i.b16 %v4832, %v4823
        %v5838 = vshrl.u32 %v4823, 16
        %v5839 = vshrl.u32 %v4832, 16
        %v5840 = vpack.i.b16 %v5839, %v5838
        %v5843 = vpack.i.b16 %v4849, %v4840
        %v5844 = vshrl.u32 %v4840, 16
        %v5845 = vshrl.u32 %v4849, 16
        %v5846 = vpack.i.b16 %v5845, %v5844
        %v5849 = vpack.i.b16 %v4850, %v4841
        %v5850 = vshrl.u32 %v4841, 16
        %v5851 = vshrl.u32 %v4850, 16
        %v5852 = vpack.i.b16 %v5851, %v5850
        %v5855 = vpack.i.b16 %v4867, %v4858
        %v5856 = vshrl.u32 %v4858, 16
        %v5857 = vshrl.u32 %v4867, 16
        %v5858 = vpack.i.b16 %v5857, %v5856
        %v5861 = vpack.i.b16 %v4868, %v4859
        %v5862 = vshrl.u32 %v4859, 16
        %v5863 = vshrl.u32 %v4868, 16
        %v5864 = vpack.i.b16 %v5863, %v5862
        %v5867 = vpack.i.b16 %v4885, %v4876
        %v5868 = vshrl.u32 %v4876, 16
        %v5869 = vshrl.u32 %v4885, 16
        %v5870 = vpack.i.b16 %v5869, %v5868
        %v5873 = vpack.i.b16 %v4886, %v4877
        %v5874 = vshrl.u32 %v4877, 16
        %v5875 = vshrl.u32 %v4886, 16
        %v5876 = vpack.i.b16 %v5875, %v5874
        %v5879 = vpack.i.b16 %v4903, %v4894
        %v5880 = vshrl.u32 %v4894, 16
        %v5881 = vshrl.u32 %v4903, 16
        %v5882 = vpack.i.b16 %v5881, %v5880
        %v5885 = vpack.i.b16 %v4904, %v4895
        %v5886 = vshrl.u32 %v4895, 16
        %v5887 = vshrl.u32 %v4904, 16
        %v5888 = vpack.i.b16 %v5887, %v5886
        %v5891 = vpack.i.b16 %v4921, %v4912
        %v5892 = vshrl.u32 %v4912, 16
        %v5893 = vshrl.u32 %v4921, 16
        %v5894 = vpack.i.b16 %v5893, %v5892
        %v5897 = vpack.i.b16 %v4922, %v4913
        %v5898 = vshrl.u32 %v4913, 16
        %v5899 = vshrl.u32 %v4922, 16
        %v5900 = vpack.i.b16 %v5899, %v5898
        %v5903 = vpack.i.b16 %v4939, %v4930
        %v5904 = vshrl.u32 %v4930, 16
        %v5905 = vshrl.u32 %v4939, 16
        %v5906 = vpack.i.b16 %v5905, %v5904
        %v5909 = vpack.i.b16 %v4940, %v4931
        %v5910 = vshrl.u32 %v4931, 16
        %v5911 = vshrl.u32 %v4940, 16
        %v5912 = vpack.i.b16 %v5911, %v5910
        %v5915 = vpack.i.b16 %v4957, %v4948
        %v5916 = vshrl.u32 %v4948, 16
        %v5917 = vshrl.u32 %v4957, 16
        %v5918 = vpack.i.b16 %v5917, %v5916
        %v5921 = vpack.i.b16 %v4958, %v4949
        %v5922 = vshrl.u32 %v4949, 16
        %v5923 = vshrl.u32 %v4958, 16
        %v5924 = vpack.i.b16 %v5923, %v5922
        %v5927 = vpack.i.b16 %v4975, %v4966
        %v5928 = vshrl.u32 %v4966, 16
        %v5929 = vshrl.u32 %v4975, 16
        %v5930 = vpack.i.b16 %v5929, %v5928
        %v5933 = vpack.i.b16 %v4976, %v4967
        %v5934 = vshrl.u32 %v4967, 16
        %v5935 = vshrl.u32 %v4976, 16
        %v5936 = vpack.i.b16 %v5935, %v5934
        %v5939 = vpack.i.b16 %v4993, %v4984
        %v5940 = vshrl.u32 %v4984, 16
        %v5941 = vshrl.u32 %v4993, 16
        %v5942 = vpack.i.b16 %v5941, %v5940
        %v5945 = vpack.i.b16 %v4994, %v4985
        %v5946 = vshrl.u32 %v4985, 16
        %v5947 = vshrl.u32 %v4994, 16
        %v5948 = vpack.i.b16 %v5947, %v5946
        %v5951 = vpack.i.b16 %v5011, %v5002
        %v5952 = vshrl.u32 %v5002, 16
        %v5953 = vshrl.u32 %v5011, 16
        %v5954 = vpack.i.b16 %v5953, %v5952
        %v5957 = vpack.i.b16 %v5012, %v5003
        %v5958 = vshrl.u32 %v5003, 16
        %v5959 = vshrl.u32 %v5012, 16
        %v5960 = vpack.i.b16 %v5959, %v5958
        %v5963 = vpack.i.b16 %v5029, %v5020
        %v5964 = vshrl.u32 %v5020, 16
        %v5965 = vshrl.u32 %v5029, 16
        %v5966 = vpack.i.b16 %v5965, %v5964
        %v5969 = vpack.i.b16 %v5030, %v5021
        %v5970 = vshrl.u32 %v5021, 16
        %v5971 = vshrl.u32 %v5030, 16
        %v5972 = vpack.i.b16 %v5971, %v5970
        %v5975 = vpack.i.b16 %v5047, %v5038
        %v5976 = vshrl.u32 %v5038, 16
        %v5977 = vshrl.u32 %v5047, 16
        %v5978 = vpack.i.b16 %v5977, %v5976
        %v5981 = vpack.i.b16 %v5048, %v5039
        %v5982 = vshrl.u32 %v5039, 16
        %v5983 = vshrl.u32 %v5048, 16
        %v5984 = vpack.i.b16 %v5983, %v5982
        %v5987 = vpack.i.b16 %v5065, %v5056
        %v5988 = vshrl.u32 %v5056, 16
        %v5989 = vshrl.u32 %v5065, 16
        %v5990 = vpack.i.b16 %v5989, %v5988
        %v5993 = vpack.i.b16 %v5066, %v5057
        %v5994 = vshrl.u32 %v5057, 16
        %v5995 = vshrl.u32 %v5066, 16
        %v5996 = vpack.i.b16 %v5995, %v5994
        %v5999 = vpack.i.b16 %v5083, %v5074
        %v6000 = vshrl.u32 %v5074, 16
        %v6001 = vshrl.u32 %v5083, 16
        %v6002 = vpack.i.b16 %v6001, %v6000
        %v6005 = vpack.i.b16 %v5084, %v5075
        %v6006 = vshrl.u32 %v5075, 16
        %v6007 = vshrl.u32 %v5084, 16
        %v6008 = vpack.i.b16 %v6007, %v6006
        %v6011 = vpack.i.b16 %v5101, %v5092
        %v6012 = vshrl.u32 %v5092, 16
        %v6013 = vshrl.u32 %v5101, 16
        %v6014 = vpack.i.b16 %v6013, %v6012
        %v6017 = vpack.i.b16 %v5102, %v5093
        %v6018 = vshrl.u32 %v5093, 16
        %v6019 = vshrl.u32 %v5102, 16
        %v6020 = vpack.i.b16 %v6019, %v6018
        %v6023 = vpack.i.b16 %v5119, %v5110
        %v6024 = vshrl.u32 %v5110, 16
        %v6025 = vshrl.u32 %v5119, 16
        %v6026 = vpack.i.b16 %v6025, %v6024
        %v6029 = vpack.i.b16 %v5120, %v5111
        %v6030 = vshrl.u32 %v5111, 16
        %v6031 = vshrl.u32 %v5120, 16
        %v6032 = vpack.i.b16 %v6031, %v6030
        %v6035 = vpack.i.b16 %v5137, %v5128
        %v6036 = vshrl.u32 %v5128, 16
        %v6037 = vshrl.u32 %v5137, 16
        %v6038 = vpack.i.b16 %v6037, %v6036
        %v6041 = vpack.i.b16 %v5138, %v5129
        %v6042 = vshrl.u32 %v5129, 16
        %v6043 = vshrl.u32 %v5138, 16
        %v6044 = vpack.i.b16 %v6043, %v6042
        %v6047 = vpack.i.b16 %v5155, %v5146
        %v6048 = vshrl.u32 %v5146, 16
        %v6049 = vshrl.u32 %v5155, 16
        %v6050 = vpack.i.b16 %v6049, %v6048
        %v6053 = vpack.i.b16 %v5156, %v5147
        %v6054 = vshrl.u32 %v5147, 16
        %v6055 = vshrl.u32 %v5156, 16
        %v6056 = vpack.i.b16 %v6055, %v6054
        %v6059 = vpack.i.b16 %v5173, %v5164
        %v6060 = vshrl.u32 %v5164, 16
        %v6061 = vshrl.u32 %v5173, 16
        %v6062 = vpack.i.b16 %v6061, %v6060
        %v6065 = vpack.i.b16 %v5174, %v5165
        %v6066 = vshrl.u32 %v5165, 16
        %v6067 = vshrl.u32 %v5174, 16
        %v6068 = vpack.i.b16 %v6067, %v6066
        %v6071 = vpack.i.b16 %v5191, %v5182
        %v6072 = vshrl.u32 %v5182, 16
        %v6073 = vshrl.u32 %v5191, 16
        %v6074 = vpack.i.b16 %v6073, %v6072
        %v6077 = vpack.i.b16 %v5192, %v5183
        %v6078 = vshrl.u32 %v5183, 16
        %v6079 = vshrl.u32 %v5192, 16
        %v6080 = vpack.i.b16 %v6079, %v6078
        %v6083 = vpack.i.b16 %v5209, %v5200
        %v6084 = vshrl.u32 %v5200, 16
        %v6085 = vshrl.u32 %v5209, 16
        %v6086 = vpack.i.b16 %v6085, %v6084
        %v6089 = vpack.i.b16 %v5210, %v5201
        %v6090 = vshrl.u32 %v5201, 16
        %v6091 = vshrl.u32 %v5210, 16
        %v6092 = vpack.i.b16 %v6091, %v6090
        %v6095 = vpack.i.b16 %v5227, %v5218
        %v6096 = vshrl.u32 %v5218, 16
        %v6097 = vshrl.u32 %v5227, 16
        %v6098 = vpack.i.b16 %v6097, %v6096
        %v6101 = vpack.i.b16 %v5228, %v5219
        %v6102 = vshrl.u32 %v5219, 16
        %v6103 = vshrl.u32 %v5228, 16
        %v6104 = vpack.i.b16 %v6103, %v6102
        %v6107 = vpack.i.b16 %v5245, %v5236
        %v6108 = vshrl.u32 %v5236, 16
        %v6109 = vshrl.u32 %v5245, 16
        %v6110 = vpack.i.b16 %v6109, %v6108
        %v6113 = vpack.i.b16 %v5246, %v5237
        %v6114 = vshrl.u32 %v5237, 16
        %v6115 = vshrl.u32 %v5246, 16
        %v6116 = vpack.i.b16 %v6115, %v6114
        %v6119 = vpack.i.b16 %v5263, %v5254
        %v6120 = vshrl.u32 %v5254, 16
        %v6121 = vshrl.u32 %v5263, 16
        %v6122 = vpack.i.b16 %v6121, %v6120
        %v6125 = vpack.i.b16 %v5264, %v5255
        %v6126 = vshrl.u32 %v5255, 16
        %v6127 = vshrl.u32 %v5264, 16
        %v6128 = vpack.i.b16 %v6127, %v6126
        %v6129 = vcombine.low %v5267, %v5279
        %v6130 = vcombine.low %v5291, %v5303
        %v6132 = vunpack.c.l.s4 1983009808
        %v6133 = vunpack.c.0.s8 %v6132
        %v6134 = vlaneseq
        %v6135 = vshrl.u32 %v6134, 7
        %v6136 = vsub.s32 %v6133, %v6135
        %v6137 = vrot.slane %v6129, %v6136
        %v6139 = vunpack.c.l.s4 1983009808
        %v6140 = vunpack.c.0.s8 %v6139
        %v6141 = vlaneseq
        %v6142 = vshrl.u32 %v6141, 7
        %v6143 = vsub.s32 %v6140, %v6142
        %v6144 = vrot.slane %v6130, %v6143
        %v6145 = vcombine.low %v6137, %v6144
        %v6146 = vcombine.low %v5315, %v5327
        %v6147 = vcombine.low %v5339, %v5351
        %v6149 = vunpack.c.l.s4 1983009808
        %v6150 = vunpack.c.0.s8 %v6149
        %v6151 = vlaneseq
        %v6152 = vshrl.u32 %v6151, 7
        %v6153 = vsub.s32 %v6150, %v6152
        %v6154 = vrot.slane %v6146, %v6153
        %v6156 = vunpack.c.l.s4 1983009808
        %v6157 = vunpack.c.0.s8 %v6156
        %v6158 = vlaneseq
        %v6159 = vshrl.u32 %v6158, 7
        %v6160 = vsub.s32 %v6157, %v6159
        %v6161 = vrot.slane %v6147, %v6160
        %v6162 = vcombine.low %v6154, %v6161
        %v6163 = vcombine.low %v5363, %v5375
        %v6164 = vcombine.low %v5387, %v5399
        %v6166 = vunpack.c.l.s4 1983009808
        %v6167 = vunpack.c.0.s8 %v6166
        %v6168 = vlaneseq
        %v6169 = vshrl.u32 %v6168, 7
        %v6170 = vsub.s32 %v6167, %v6169
        %v6171 = vrot.slane %v6163, %v6170
        %v6173 = vunpack.c.l.s4 1983009808
        %v6174 = vunpack.c.0.s8 %v6173
        %v6175 = vlaneseq
        %v6176 = vshrl.u32 %v6175, 7
        %v6177 = vsub.s32 %v6174, %v6176
        %v6178 = vrot.slane %v6164, %v6177
        %v6179 = vcombine.low %v6171, %v6178
        %v6180 = vcombine.low %v5411, %v5423
        %v6181 = vcombine.low %v5435, %v5447
        %v6183 = vunpack.c.l.s4 1983009808
        %v6184 = vunpack.c.0.s8 %v6183
        %v6185 = vlaneseq
        %v6186 = vshrl.u32 %v6185, 7
        %v6187 = vsub.s32 %v6184, %v6186
        %v6188 = vrot.slane %v6180, %v6187
        %v6190 = vunpack.c.l.s4 1983009808
        %v6191 = vunpack.c.0.s8 %v6190
        %v6192 = vlaneseq
        %v6193 = vshrl.u32 %v6192, 7
        %v6194 = vsub.s32 %v6191, %v6193
        %v6195 = vrot.slane %v6181, %v6194
        %v6196 = vcombine.low %v6188, %v6195
        %v6197 = vcombine.low %v5459, %v5471
        %v6198 = vcombine.low %v5483, %v5495
        %v6200 = vunpack.c.l.s4 1983009808
        %v6201 = vunpack.c.0.s8 %v6200
        %v6202 = vlaneseq
        %v6203 = vshrl.u32 %v6202, 7
        %v6204 = vsub.s32 %v6201, %v6203
        %v6205 = vrot.slane %v6197, %v6204
        %v6207 = vunpack.c.l.s4 1983009808
        %v6208 = vunpack.c.0.s8 %v6207
        %v6209 = vlaneseq
        %v6210 = vshrl.u32 %v6209, 7
        %v6211 = vsub.s32 %v6208, %v6210
        %v6212 = vrot.slane %v6198, %v6211
        %v6213 = vcombine.low %v6205, %v6212
        %v6214 = vcombine.low %v5507, %v5519
        %v6215 = vcombine.low %v5531, %v5543
        %v6217 = vunpack.c.l.s4 1983009808
        %v6218 = vunpack.c.0.s8 %v6217
        %v6219 = vlaneseq
        %v6220 = vshrl.u32 %v6219, 7
        %v6221 = vsub.s32 %v6218, %v6220
        %v6222 = vrot.slane %v6214, %v6221
        %v6224 = vunpack.c.l.s4 1983009808
        %v6225 = vunpack.c.0.s8 %v6224
        %v6226 = vlaneseq
        %v6227 = vshrl.u32 %v6226, 7
        %v6228 = vsub.s32 %v6225, %v6227
        %v6229 = vrot.slane %v6215, %v6228
        %v6230 = vcombine.low %v6222, %v6229
        %v6231 = vcombine.low %v5555, %v5567
        %v6232 = vcombine.low %v5579, %v5591
        %v6234 = vunpack.c.l.s4 1983009808
        %v6235 = vunpack.c.0.s8 %v6234
        %v6236 = vlaneseq
        %v6237 = vshrl.u32 %v6236, 7
        %v6238 = vsub.s32 %v6235, %v6237
        %v6239 = vrot.slane %v6231, %v6238
        %v6241 = vunpack.c.l.s4 1983009808
        %v6242 = vunpack.c.0.s8 %v6241
        %v6243 = vlaneseq
        %v6244 = vshrl.u32 %v6243, 7
        %v6245 = vsub.s32 %v6242, %v6244
        %v6246 = vrot.slane %v6232, %v6245
        %v6247 = vcombine.low %v6239, %v6246
        %v6248 = vcombine.low %v5603, %v5615
        %v6249 = vcombine.low %v5627, %v5639
        %v6251 = vunpack.c.l.s4 1983009808
        %v6252 = vunpack.c.0.s8 %v6251
        %v6253 = vlaneseq
        %v6254 = vshrl.u32 %v6253, 7
        %v6255 = vsub.s32 %v6252, %v6254
        %v6256 = vrot.slane %v6248, %v6255
        %v6258 = vunpack.c.l.s4 1983009808
        %v6259 = vunpack.c.0.s8 %v6258
        %v6260 = vlaneseq
        %v6261 = vshrl.u32 %v6260, 7
        %v6262 = vsub.s32 %v6259, %v6261
        %v6263 = vrot.slane %v6249, %v6262
        %v6264 = vcombine.low %v6256, %v6263
        %v6265 = vcombine.low %v5651, %v5663
        %v6266 = vcombine.low %v5675, %v5687
        %v6268 = vunpack.c.l.s4 1983009808
        %v6269 = vunpack.c.0.s8 %v6268
        %v6270 = vlaneseq
        %v6271 = vshrl.u32 %v6270, 7
        %v6272 = vsub.s32 %v6269, %v6271
        %v6273 = vrot.slane %v6265, %v6272
        %v6275 = vunpack.c.l.s4 1983009808
        %v6276 = vunpack.c.0.s8 %v6275
        %v6277 = vlaneseq
        %v6278 = vshrl.u32 %v6277, 7
        %v6279 = vsub.s32 %v6276, %v6278
        %v6280 = vrot.slane %v6266, %v6279
        %v6281 = vcombine.low %v6273, %v6280
        %v6282 = vcombine.low %v5699, %v5711
        %v6283 = vcombine.low %v5723, %v5735
        %v6285 = vunpack.c.l.s4 1983009808
        %v6286 = vunpack.c.0.s8 %v6285
        %v6287 = vlaneseq
        %v6288 = vshrl.u32 %v6287, 7
        %v6289 = vsub.s32 %v6286, %v6288
        %v6290 = vrot.slane %v6282, %v6289
        %v6292 = vunpack.c.l.s4 1983009808
        %v6293 = vunpack.c.0.s8 %v6292
        %v6294 = vlaneseq
        %v6295 = vshrl.u32 %v6294, 7
        %v6296 = vsub.s32 %v6293, %v6295
        %v6297 = vrot.slane %v6283, %v6296
        %v6298 = vcombine.low %v6290, %v6297
        %v6299 = vcombine.low %v5747, %v5759
        %v6300 = vcombine.low %v5771, %v5783
        %v6302 = vunpack.c.l.s4 1983009808
        %v6303 = vunpack.c.0.s8 %v6302
        %v6304 = vlaneseq
        %v6305 = vshrl.u32 %v6304, 7
        %v6306 = vsub.s32 %v6303, %v6305
        %v6307 = vrot.slane %v6299, %v6306
        %v6309 = vunpack.c.l.s4 1983009808
        %v6310 = vunpack.c.0.s8 %v6309
        %v6311 = vlaneseq
        %v6312 = vshrl.u32 %v6311, 7
        %v6313 = vsub.s32 %v6310, %v6312
        %v6314 = vrot.slane %v6300, %v6313
        %v6315 = vcombine.low %v6307, %v6314
        %v6316 = vcombine.low %v5795, %v5807
        %v6317 = vcombine.low %v5819, %v5831
        %v6319 = vunpack.c.l.s4 1983009808
        %v6320 = vunpack.c.0.s8 %v6319
        %v6321 = vlaneseq
        %v6322 = vshrl.u32 %v6321, 7
        %v6323 = vsub.s32 %v6320, %v6322
        %v6324 = vrot.slane %v6316, %v6323
        %v6326 = vunpack.c.l.s4 1983009808
        %v6327 = vunpack.c.0.s8 %v6326
        %v6328 = vlaneseq
        %v6329 = vshrl.u32 %v6328, 7
        %v6330 = vsub.s32 %v6327, %v6329
        %v6331 = vrot.slane %v6317, %v6330
        %v6332 = vcombine.low %v6324, %v6331
        %v6333 = vcombine.low %v5843, %v5855
        %v6334 = vcombine.low %v5867, %v5879
        %v6336 = vunpack.c.l.s4 1983009808
        %v6337 = vunpack.c.0.s8 %v6336
        %v6338 = vlaneseq
        %v6339 = vshrl.u32 %v6338, 7
        %v6340 = vsub.s32 %v6337, %v6339
        %v6341 = vrot.slane %v6333, %v6340
        %v6343 = vunpack.c.l.s4 1983009808
        %v6344 = vunpack.c.0.s8 %v6343
        %v6345 = vlaneseq
        %v6346 = vshrl.u32 %v6345, 7
        %v6347 = vsub.s32 %v6344, %v6346
        %v6348 = vrot.slane %v6334, %v6347
        %v6349 = vcombine.low %v6341, %v6348
        %v6350 = vcombine.low %v5891, %v5903
        %v6351 = vcombine.low %v5915, %v5927
        %v6353 = vunpack.c.l.s4 1983009808
        %v6354 = vunpack.c.0.s8 %v6353
        %v6355 = vlaneseq
        %v6356 = vshrl.u32 %v6355, 7
        %v6357 = vsub.s32 %v6354, %v6356
        %v6358 = vrot.slane %v6350, %v6357
        %v6360 = vunpack.c.l.s4 1983009808
        %v6361 = vunpack.c.0.s8 %v6360
        %v6362 = vlaneseq
        %v6363 = vshrl.u32 %v6362, 7
        %v6364 = vsub.s32 %v6361, %v6363
        %v6365 = vrot.slane %v6351, %v6364
        %v6366 = vcombine.low %v6358, %v6365
        %v6367 = vcombine.low %v5939, %v5951
        %v6368 = vcombine.low %v5963, %v5975
        %v6370 = vunpack.c.l.s4 1983009808
        %v6371 = vunpack.c.0.s8 %v6370
        %v6372 = vlaneseq
        %v6373 = vshrl.u32 %v6372, 7
        %v6374 = vsub.s32 %v6371, %v6373
        %v6375 = vrot.slane %v6367, %v6374
        %v6377 = vunpack.c.l.s4 1983009808
        %v6378 = vunpack.c.0.s8 %v6377
        %v6379 = vlaneseq
        %v6380 = vshrl.u32 %v6379, 7
        %v6381 = vsub.s32 %v6378, %v6380
        %v6382 = vrot.slane %v6368, %v6381
        %v6383 = vcombine.low %v6375, %v6382
        %v6384 = vcombine.low %v5987, %v5999
        %v6385 = vcombine.low %v6011, %v6023
        %v6387 = vunpack.c.l.s4 1983009808
        %v6388 = vunpack.c.0.s8 %v6387
        %v6389 = vlaneseq
        %v6390 = vshrl.u32 %v6389, 7
        %v6391 = vsub.s32 %v6388, %v6390
        %v6392 = vrot.slane %v6384, %v6391
        %v6394 = vunpack.c.l.s4 1983009808
        %v6395 = vunpack.c.0.s8 %v6394
        %v6396 = vlaneseq
        %v6397 = vshrl.u32 %v6396, 7
        %v6398 = vsub.s32 %v6395, %v6397
        %v6399 = vrot.slane %v6385, %v6398
        %v6400 = vcombine.low %v6392, %v6399
        %v6401 = vcombine.low %v6035, %v6047
        %v6402 = vcombine.low %v6059, %v6071
        %v6404 = vunpack.c.l.s4 1983009808
        %v6405 = vunpack.c.0.s8 %v6404
        %v6406 = vlaneseq
        %v6407 = vshrl.u32 %v6406, 7
        %v6408 = vsub.s32 %v6405, %v6407
        %v6409 = vrot.slane %v6401, %v6408
        %v6411 = vunpack.c.l.s4 1983009808
        %v6412 = vunpack.c.0.s8 %v6411
        %v6413 = vlaneseq
        %v6414 = vshrl.u32 %v6413, 7
        %v6415 = vsub.s32 %v6412, %v6414
        %v6416 = vrot.slane %v6402, %v6415
        %v6417 = vcombine.low %v6409, %v6416
        %v6418 = vcombine.low %v6083, %v6095
        %v6419 = vcombine.low %v6107, %v6119
        %v6421 = vunpack.c.l.s4 1983009808
        %v6422 = vunpack.c.0.s8 %v6421
        %v6423 = vlaneseq
        %v6424 = vshrl.u32 %v6423, 7
        %v6425 = vsub.s32 %v6422, %v6424
        %v6426 = vrot.slane %v6418, %v6425
        %v6428 = vunpack.c.l.s4 1983009808
        %v6429 = vunpack.c.0.s8 %v6428
        %v6430 = vlaneseq
        %v6431 = vshrl.u32 %v6430, 7
        %v6432 = vsub.s32 %v6429, %v6431
        %v6433 = vrot.slane %v6419, %v6432
        %v6434 = vcombine.low %v6426, %v6433
        %v6435 = vcombine.low %v5270, %v5282
        %v6436 = vcombine.low %v5294, %v5306
        %v6438 = vunpack.c.l.s4 1983009808
        %v6439 = vunpack.c.0.s8 %v6438
        %v6440 = vlaneseq
        %v6441 = vshrl.u32 %v6440, 7
        %v6442 = vsub.s32 %v6439, %v6441
        %v6443 = vrot.slane %v6435, %v6442
        %v6445 = vunpack.c.l.s4 1983009808
        %v6446 = vunpack.c.0.s8 %v6445
        %v6447 = vlaneseq
        %v6448 = vshrl.u32 %v6447, 7
        %v6449 = vsub.s32 %v6446, %v6448
        %v6450 = vrot.slane %v6436, %v6449
        %v6451 = vcombine.low %v6443, %v6450
        %v6452 = vcombine.low %v5318, %v5330
        %v6453 = vcombine.low %v5342, %v5354
        %v6455 = vunpack.c.l.s4 1983009808
        %v6456 = vunpack.c.0.s8 %v6455
        %v6457 = vlaneseq
        %v6458 = vshrl.u32 %v6457, 7
        %v6459 = vsub.s32 %v6456, %v6458
        %v6460 = vrot.slane %v6452, %v6459
        %v6462 = vunpack.c.l.s4 1983009808
        %v6463 = vunpack.c.0.s8 %v6462
        %v6464 = vlaneseq
        %v6465 = vshrl.u32 %v6464, 7
        %v6466 = vsub.s32 %v6463, %v6465
        %v6467 = vrot.slane %v6453, %v6466
        %v6468 = vcombine.low %v6460, %v6467
        %v6469 = vcombine.low %v5366, %v5378
        %v6470 = vcombine.low %v5390, %v5402
        %v6472 = vunpack.c.l.s4 1983009808
        %v6473 = vunpack.c.0.s8 %v6472
        %v6474 = vlaneseq
        %v6475 = vshrl.u32 %v6474, 7
        %v6476 = vsub.s32 %v6473, %v6475
        %v6477 = vrot.slane %v6469, %v6476
        %v6479 = vunpack.c.l.s4 1983009808
        %v6480 = vunpack.c.0.s8 %v6479
        %v6481 = vlaneseq
        %v6482 = vshrl.u32 %v6481, 7
        %v6483 = vsub.s32 %v6480, %v6482
        %v6484 = vrot.slane %v6470, %v6483
        %v6485 = vcombine.low %v6477, %v6484
        %v6486 = vcombine.low %v5414, %v5426
        %v6487 = vcombine.low %v5438, %v5450
        %v6489 = vunpack.c.l.s4 1983009808
        %v6490 = vunpack.c.0.s8 %v6489
        %v6491 = vlaneseq
        %v6492 = vshrl.u32 %v6491, 7
        %v6493 = vsub.s32 %v6490, %v6492
        %v6494 = vrot.slane %v6486, %v6493
        %v6496 = vunpack.c.l.s4 1983009808
        %v6497 = vunpack.c.0.s8 %v6496
        %v6498 = vlaneseq
        %v6499 = vshrl.u32 %v6498, 7
        %v6500 = vsub.s32 %v6497, %v6499
        %v6501 = vrot.slane %v6487, %v6500
        %v6502 = vcombine.low %v6494, %v6501
        %v6503 = vcombine.low %v5462, %v5474
        %v6504 = vcombine.low %v5486, %v5498
        %v6506 = vunpack.c.l.s4 1983009808
        %v6507 = vunpack.c.0.s8 %v6506
        %v6508 = vlaneseq
        %v6509 = vshrl.u32 %v6508, 7
        %v6510 = vsub.s32 %v6507, %v6509
        %v6511 = vrot.slane %v6503, %v6510
        %v6513 = vunpack.c.l.s4 1983009808
        %v6514 = vunpack.c.0.s8 %v6513
        %v6515 = vlaneseq
        %v6516 = vshrl.u32 %v6515, 7
        %v6517 = vsub.s32 %v6514, %v6516
        %v6518 = vrot.slane %v6504, %v6517
        %v6519 = vcombine.low %v6511, %v6518
        %v6520 = vcombine.low %v5510, %v5522
        %v6521 = vcombine.low %v5534, %v5546
        %v6523 = vunpack.c.l.s4 1983009808
        %v6524 = vunpack.c.0.s8 %v6523
        %v6525 = vlaneseq
        %v6526 = vshrl.u32 %v6525, 7
        %v6527 = vsub.s32 %v6524, %v6526
        %v6528 = vrot.slane %v6520, %v6527
        %v6530 = vunpack.c.l.s4 1983009808
        %v6531 = vunpack.c.0.s8 %v6530
        %v6532 = vlaneseq
        %v6533 = vshrl.u32 %v6532, 7
        %v6534 = vsub.s32 %v6531, %v6533
        %v6535 = vrot.slane %v6521, %v6534
        %v6536 = vcombine.low %v6528, %v6535
        %v6537 = vcombine.low %v5558, %v5570
        %v6538 = vcombine.low %v5582, %v5594
        %v6540 = vunpack.c.l.s4 1983009808
        %v6541 = vunpack.c.0.s8 %v6540
        %v6542 = vlaneseq
        %v6543 = vshrl.u32 %v6542, 7
        %v6544 = vsub.s32 %v6541, %v6543
        %v6545 = vrot.slane %v6537, %v6544
        %v6547 = vunpack.c.l.s4 1983009808
        %v6548 = vunpack.c.0.s8 %v6547
        %v6549 = vlaneseq
        %v6550 = vshrl.u32 %v6549, 7
        %v6551 = vsub.s32 %v6548, %v6550
        %v6552 = vrot.slane %v6538, %v6551
        %v6553 = vcombine.low %v6545, %v6552
        %v6554 = vcombine.low %v5606, %v5618
        %v6555 = vcombine.low %v5630, %v5642
        %v6557 = vunpack.c.l.s4 1983009808
        %v6558 = vunpack.c.0.s8 %v6557
        %v6559 = vlaneseq
        %v6560 = vshrl.u32 %v6559, 7
        %v6561 = vsub.s32 %v6558, %v6560
        %v6562 = vrot.slane %v6554, %v6561
        %v6564 = vunpack.c.l.s4 1983009808
        %v6565 = vunpack.c.0.s8 %v6564
        %v6566 = vlaneseq
        %v6567 = vshrl.u32 %v6566, 7
        %v6568 = vsub.s32 %v6565, %v6567
        %v6569 = vrot.slane %v6555, %v6568
        %v6570 = vcombine.low %v6562, %v6569
        %v6571 = vcombine.low %v5654, %v5666
        %v6572 = vcombine.low %v5678, %v5690
        %v6574 = vunpack.c.l.s4 1983009808
        %v6575 = vunpack.c.0.s8 %v6574
        %v6576 = vlaneseq
        %v6577 = vshrl.u32 %v6576, 7
        %v6578 = vsub.s32 %v6575, %v6577
        %v6579 = vrot.slane %v6571, %v6578
        %v6581 = vunpack.c.l.s4 1983009808
        %v6582 = vunpack.c.0.s8 %v6581
        %v6583 = vlaneseq
        %v6584 = vshrl.u32 %v6583, 7
        %v6585 = vsub.s32 %v6582, %v6584
        %v6586 = vrot.slane %v6572, %v6585
        %v6587 = vcombine.low %v6579, %v6586
        %v6588 = vcombine.low %v5702, %v5714
        %v6589 = vcombine.low %v5726, %v5738
        %v6591 = vunpack.c.l.s4 1983009808
        %v6592 = vunpack.c.0.s8 %v6591
        %v6593 = vlaneseq
        %v6594 = vshrl.u32 %v6593, 7
        %v6595 = vsub.s32 %v6592, %v6594
        %v6596 = vrot.slane %v6588, %v6595
        %v6598 = vunpack.c.l.s4 1983009808
        %v6599 = vunpack.c.0.s8 %v6598
        %v6600 = vlaneseq
        %v6601 = vshrl.u32 %v6600, 7
        %v6602 = vsub.s32 %v6599, %v6601
        %v6603 = vrot.slane %v6589, %v6602
        %v6604 = vcombine.low %v6596, %v6603
        %v6605 = vcombine.low %v5750, %v5762
        %v6606 = vcombine.low %v5774, %v5786
        %v6608 = vunpack.c.l.s4 1983009808
        %v6609 = vunpack.c.0.s8 %v6608
        %v6610 = vlaneseq
        %v6611 = vshrl.u32 %v6610, 7
        %v6612 = vsub.s32 %v6609, %v6611
        %v6613 = vrot.slane %v6605, %v6612
        %v6615 = vunpack.c.l.s4 1983009808
        %v6616 = vunpack.c.0.s8 %v6615
        %v6617 = vlaneseq
        %v6618 = vshrl.u32 %v6617, 7
        %v6619 = vsub.s32 %v6616, %v6618
        %v6620 = vrot.slane %v6606, %v6619
        %v6621 = vcombine.low %v6613, %v6620
        %v6622 = vcombine.low %v5798, %v5810
        %v6623 = vcombine.low %v5822, %v5834
        %v6625 = vunpack.c.l.s4 1983009808
        %v6626 = vunpack.c.0.s8 %v6625
        %v6627 = vlaneseq
        %v6628 = vshrl.u32 %v6627, 7
        %v6629 = vsub.s32 %v6626, %v6628
        %v6630 = vrot.slane %v6622, %v6629
        %v6632 = vunpack.c.l.s4 1983009808
        %v6633 = vunpack.c.0.s8 %v6632
        %v6634 = vlaneseq
        %v6635 = vshrl.u32 %v6634, 7
        %v6636 = vsub.s32 %v6633, %v6635
        %v6637 = vrot.slane %v6623, %v6636
        %v6638 = vcombine.low %v6630, %v6637
        %v6639 = vcombine.low %v5846, %v5858
        %v6640 = vcombine.low %v5870, %v5882
        %v6642 = vunpack.c.l.s4 1983009808
        %v6643 = vunpack.c.0.s8 %v6642
        %v6644 = vlaneseq
        %v6645 = vshrl.u32 %v6644, 7
        %v6646 = vsub.s32 %v6643, %v6645
        %v6647 = vrot.slane %v6639, %v6646
        %v6649 = vunpack.c.l.s4 1983009808
        %v6650 = vunpack.c.0.s8 %v6649
        %v6651 = vlaneseq
        %v6652 = vshrl.u32 %v6651, 7
        %v6653 = vsub.s32 %v6650, %v6652
        %v6654 = vrot.slane %v6640, %v6653
        %v6655 = vcombine.low %v6647, %v6654
        %v6656 = vcombine.low %v5894, %v5906
        %v6657 = vcombine.low %v5918, %v5930
        %v6659 = vunpack.c.l.s4 1983009808
        %v6660 = vunpack.c.0.s8 %v6659
        %v6661 = vlaneseq
        %v6662 = vshrl.u32 %v6661, 7
        %v6663 = vsub.s32 %v6660, %v6662
        %v6664 = vrot.slane %v6656, %v6663
        %v6666 = vunpack.c.l.s4 1983009808
        %v6667 = vunpack.c.0.s8 %v6666
        %v6668 = vlaneseq
        %v6669 = vshrl.u32 %v6668, 7
        %v6670 = vsub.s32 %v6667, %v6669
        %v6671 = vrot.slane %v6657, %v6670
        %v6672 = vcombine.low %v6664, %v6671
        %v6673 = vcombine.low %v5942, %v5954
        %v6674 = vcombine.low %v5966, %v5978
        %v6676 = vunpack.c.l.s4 1983009808
        %v6677 = vunpack.c.0.s8 %v6676
        %v6678 = vlaneseq
        %v6679 = vshrl.u32 %v6678, 7
        %v6680 = vsub.s32 %v6677, %v6679
        %v6681 = vrot.slane %v6673, %v6680
        %v6683 = vunpack.c.l.s4 1983009808
        %v6684 = vunpack.c.0.s8 %v6683
        %v6685 = vlaneseq
        %v6686 = vshrl.u32 %v6685, 7
        %v6687 = vsub.s32 %v6684, %v6686
        %v6688 = vrot.slane %v6674, %v6687
        %v6689 = vcombine.low %v6681, %v6688
        %v6690 = vcombine.low %v5990, %v6002
        %v6691 = vcombine.low %v6014, %v6026
        %v6693 = vunpack.c.l.s4 1983009808
        %v6694 = vunpack.c.0.s8 %v6693
        %v6695 = vlaneseq
        %v6696 = vshrl.u32 %v6695, 7
        %v6697 = vsub.s32 %v6694, %v6696
        %v6698 = vrot.slane %v6690, %v6697
        %v6700 = vunpack.c.l.s4 1983009808
        %v6701 = vunpack.c.0.s8 %v6700
        %v6702 = vlaneseq
        %v6703 = vshrl.u32 %v6702, 7
        %v6704 = vsub.s32 %v6701, %v6703
        %v6705 = vrot.slane %v6691, %v6704
        %v6706 = vcombine.low %v6698, %v6705
        %v6707 = vcombine.low %v6038, %v6050
        %v6708 = vcombine.low %v6062, %v6074
        %v6710 = vunpack.c.l.s4 1983009808
        %v6711 = vunpack.c.0.s8 %v6710
        %v6712 = vlaneseq
        %v6713 = vshrl.u32 %v6712, 7
        %v6714 = vsub.s32 %v6711, %v6713
        %v6715 = vrot.slane %v6707, %v6714
        %v6717 = vunpack.c.l.s4 1983009808
        %v6718 = vunpack.c.0.s8 %v6717
        %v6719 = vlaneseq
        %v6720 = vshrl.u32 %v6719, 7
        %v6721 = vsub.s32 %v6718, %v6720
        %v6722 = vrot.slane %v6708, %v6721
        %v6723 = vcombine.low %v6715, %v6722
        %v6724 = vcombine.low %v6086, %v6098
        %v6725 = vcombine.low %v6110, %v6122
        %v6727 = vunpack.c.l.s4 1983009808
        %v6728 = vunpack.c.0.s8 %v6727
        %v6729 = vlaneseq
        %v6730 = vshrl.u32 %v6729, 7
        %v6731 = vsub.s32 %v6728, %v6730
        %v6732 = vrot.slane %v6724, %v6731
        %v6734 = vunpack.c.l.s4 1983009808
        %v6735 = vunpack.c.0.s8 %v6734
        %v6736 = vlaneseq
        %v6737 = vshrl.u32 %v6736, 7
        %v6738 = vsub.s32 %v6735, %v6737
        %v6739 = vrot.slane %v6725, %v6738
        %v6740 = vcombine.low %v6732, %v6739
        %6741 = vrot.lane.b32.xlu0 %v6451, 16
        %v6742 = vpop.permute.xlu0 %6741
        %6743 = vrot.lane.b32.xlu0 %v6468, 16
        %v6744 = vpop.permute.xlu0 %6743
        %6745 = vrot.lane.b32.xlu0 %v6485, 16
        %v6746 = vpop.permute.xlu0 %6745
        %6747 = vrot.lane.b32.xlu0 %v6502, 16
        %v6748 = vpop.permute.xlu0 %6747
        %6749 = vrot.lane.b32.xlu0 %v6519, 16
        %v6750 = vpop.permute.xlu0 %6749
        %6751 = vrot.lane.b32.xlu0 %v6536, 16
        %v6752 = vpop.permute.xlu0 %6751
        %6753 = vrot.lane.b32.xlu0 %v6553, 16
        %v6754 = vpop.permute.xlu0 %6753
        %6755 = vrot.lane.b32.xlu0 %v6570, 16
        %v6756 = vpop.permute.xlu0 %6755
        %6757 = vrot.lane.b32.xlu0 %v6587, 16
        %v6758 = vpop.permute.xlu0 %6757
        %6759 = vrot.lane.b32.xlu0 %v6604, 16
        %v6760 = vpop.permute.xlu0 %6759
        %6761 = vrot.lane.b32.xlu0 %v6621, 16
        %v6762 = vpop.permute.xlu0 %6761
        %6763 = vrot.lane.b32.xlu0 %v6638, 16
        %v6764 = vpop.permute.xlu0 %6763
        %6765 = vrot.lane.b32.xlu0 %v6655, 16
        %v6766 = vpop.permute.xlu0 %6765
        %6767 = vrot.lane.b32.xlu0 %v6672, 16
        %v6768 = vpop.permute.xlu0 %6767
        %6769 = vrot.lane.b32.xlu0 %v6689, 16
        %v6770 = vpop.permute.xlu0 %6769
        %6771 = vrot.lane.b32.xlu0 %v6706, 16
        %v6772 = vpop.permute.xlu0 %6771
        %6773 = vrot.lane.b32.xlu0 %v6723, 16
        %v6774 = vpop.permute.xlu0 %6773
        %6775 = vrot.lane.b32.xlu0 %v6740, 16
        %v6776 = vpop.permute.xlu0 %6775
        %v6777 = vcombine.low %v5273, %v5285
        %v6778 = vcombine.low %v5297, %v5309
        %v6780 = vunpack.c.l.s4 1983009808
        %v6781 = vunpack.c.0.s8 %v6780
        %v6782 = vlaneseq
        %v6783 = vshrl.u32 %v6782, 7
        %v6784 = vsub.s32 %v6781, %v6783
        %v6785 = vrot.slane %v6777, %v6784
        %v6787 = vunpack.c.l.s4 1983009808
        %v6788 = vunpack.c.0.s8 %v6787
        %v6789 = vlaneseq
        %v6790 = vshrl.u32 %v6789, 7
        %v6791 = vsub.s32 %v6788, %v6790
        %v6792 = vrot.slane %v6778, %v6791
        %v6793 = vcombine.low %v6785, %v6792
        %v6794 = vcombine.low %v5321, %v5333
        %v6795 = vcombine.low %v5345, %v5357
        %v6797 = vunpack.c.l.s4 1983009808
        %v6798 = vunpack.c.0.s8 %v6797
        %v6799 = vlaneseq
        %v6800 = vshrl.u32 %v6799, 7
        %v6801 = vsub.s32 %v6798, %v6800
        %v6802 = vrot.slane %v6794, %v6801
        %v6804 = vunpack.c.l.s4 1983009808
        %v6805 = vunpack.c.0.s8 %v6804
        %v6806 = vlaneseq
        %v6807 = vshrl.u32 %v6806, 7
        %v6808 = vsub.s32 %v6805, %v6807
        %v6809 = vrot.slane %v6795, %v6808
        %v6810 = vcombine.low %v6802, %v6809
        %v6811 = vcombine.low %v5369, %v5381
        %v6812 = vcombine.low %v5393, %v5405
        %v6814 = vunpack.c.l.s4 1983009808
        %v6815 = vunpack.c.0.s8 %v6814
        %v6816 = vlaneseq
        %v6817 = vshrl.u32 %v6816, 7
        %v6818 = vsub.s32 %v6815, %v6817
        %v6819 = vrot.slane %v6811, %v6818
        %v6821 = vunpack.c.l.s4 1983009808
        %v6822 = vunpack.c.0.s8 %v6821
        %v6823 = vlaneseq
        %v6824 = vshrl.u32 %v6823, 7
        %v6825 = vsub.s32 %v6822, %v6824
        %v6826 = vrot.slane %v6812, %v6825
        %v6827 = vcombine.low %v6819, %v6826
        %v6828 = vcombine.low %v5417, %v5429
        %v6829 = vcombine.low %v5441, %v5453
        %v6831 = vunpack.c.l.s4 1983009808
        %v6832 = vunpack.c.0.s8 %v6831
        %v6833 = vlaneseq
        %v6834 = vshrl.u32 %v6833, 7
        %v6835 = vsub.s32 %v6832, %v6834
        %v6836 = vrot.slane %v6828, %v6835
        %v6838 = vunpack.c.l.s4 1983009808
        %v6839 = vunpack.c.0.s8 %v6838
        %v6840 = vlaneseq
        %v6841 = vshrl.u32 %v6840, 7
        %v6842 = vsub.s32 %v6839, %v6841
        %v6843 = vrot.slane %v6829, %v6842
        %v6844 = vcombine.low %v6836, %v6843
        %v6845 = vcombine.low %v5465, %v5477
        %v6846 = vcombine.low %v5489, %v5501
        %v6848 = vunpack.c.l.s4 1983009808
        %v6849 = vunpack.c.0.s8 %v6848
        %v6850 = vlaneseq
        %v6851 = vshrl.u32 %v6850, 7
        %v6852 = vsub.s32 %v6849, %v6851
        %v6853 = vrot.slane %v6845, %v6852
        %v6855 = vunpack.c.l.s4 1983009808
        %v6856 = vunpack.c.0.s8 %v6855
        %v6857 = vlaneseq
        %v6858 = vshrl.u32 %v6857, 7
        %v6859 = vsub.s32 %v6856, %v6858
        %v6860 = vrot.slane %v6846, %v6859
        %v6861 = vcombine.low %v6853, %v6860
        %v6862 = vcombine.low %v5513, %v5525
        %v6863 = vcombine.low %v5537, %v5549
        %v6865 = vunpack.c.l.s4 1983009808
        %v6866 = vunpack.c.0.s8 %v6865
        %v6867 = vlaneseq
        %v6868 = vshrl.u32 %v6867, 7
        %v6869 = vsub.s32 %v6866, %v6868
        %v6870 = vrot.slane %v6862, %v6869
        %v6872 = vunpack.c.l.s4 1983009808
        %v6873 = vunpack.c.0.s8 %v6872
        %v6874 = vlaneseq
        %v6875 = vshrl.u32 %v6874, 7
        %v6876 = vsub.s32 %v6873, %v6875
        %v6877 = vrot.slane %v6863, %v6876
        %v6878 = vcombine.low %v6870, %v6877
        %v6879 = vcombine.low %v5561, %v5573
        %v6880 = vcombine.low %v5585, %v5597
        %v6882 = vunpack.c.l.s4 1983009808
        %v6883 = vunpack.c.0.s8 %v6882
        %v6884 = vlaneseq
        %v6885 = vshrl.u32 %v6884, 7
        %v6886 = vsub.s32 %v6883, %v6885
        %v6887 = vrot.slane %v6879, %v6886
        %v6889 = vunpack.c.l.s4 1983009808
        %v6890 = vunpack.c.0.s8 %v6889
        %v6891 = vlaneseq
        %v6892 = vshrl.u32 %v6891, 7
        %v6893 = vsub.s32 %v6890, %v6892
        %v6894 = vrot.slane %v6880, %v6893
        %v6895 = vcombine.low %v6887, %v6894
        %v6896 = vcombine.low %v5609, %v5621
        %v6897 = vcombine.low %v5633, %v5645
        %v6899 = vunpack.c.l.s4 1983009808
        %v6900 = vunpack.c.0.s8 %v6899
        %v6901 = vlaneseq
        %v6902 = vshrl.u32 %v6901, 7
        %v6903 = vsub.s32 %v6900, %v6902
        %v6904 = vrot.slane %v6896, %v6903
        %v6906 = vunpack.c.l.s4 1983009808
        %v6907 = vunpack.c.0.s8 %v6906
        %v6908 = vlaneseq
        %v6909 = vshrl.u32 %v6908, 7
        %v6910 = vsub.s32 %v6907, %v6909
        %v6911 = vrot.slane %v6897, %v6910
        %v6912 = vcombine.low %v6904, %v6911
        %v6913 = vcombine.low %v5657, %v5669
        %v6914 = vcombine.low %v5681, %v5693
        %v6916 = vunpack.c.l.s4 1983009808
        %v6917 = vunpack.c.0.s8 %v6916
        %v6918 = vlaneseq
        %v6919 = vshrl.u32 %v6918, 7
        %v6920 = vsub.s32 %v6917, %v6919
        %v6921 = vrot.slane %v6913, %v6920
        %v6923 = vunpack.c.l.s4 1983009808
        %v6924 = vunpack.c.0.s8 %v6923
        %v6925 = vlaneseq
        %v6926 = vshrl.u32 %v6925, 7
        %v6927 = vsub.s32 %v6924, %v6926
        %v6928 = vrot.slane %v6914, %v6927
        %v6929 = vcombine.low %v6921, %v6928
        %v6930 = vcombine.low %v5705, %v5717
        %v6931 = vcombine.low %v5729, %v5741
        %v6933 = vunpack.c.l.s4 1983009808
        %v6934 = vunpack.c.0.s8 %v6933
        %v6935 = vlaneseq
        %v6936 = vshrl.u32 %v6935, 7
        %v6937 = vsub.s32 %v6934, %v6936
        %v6938 = vrot.slane %v6930, %v6937
        %v6940 = vunpack.c.l.s4 1983009808
        %v6941 = vunpack.c.0.s8 %v6940
        %v6942 = vlaneseq
        %v6943 = vshrl.u32 %v6942, 7
        %v6944 = vsub.s32 %v6941, %v6943
        %v6945 = vrot.slane %v6931, %v6944
        %v6946 = vcombine.low %v6938, %v6945
        %v6947 = vcombine.low %v5753, %v5765
        %v6948 = vcombine.low %v5777, %v5789
        %v6950 = vunpack.c.l.s4 1983009808
        %v6951 = vunpack.c.0.s8 %v6950
        %v6952 = vlaneseq
        %v6953 = vshrl.u32 %v6952, 7
        %v6954 = vsub.s32 %v6951, %v6953
        %v6955 = vrot.slane %v6947, %v6954
        %v6957 = vunpack.c.l.s4 1983009808
        %v6958 = vunpack.c.0.s8 %v6957
        %v6959 = vlaneseq
        %v6960 = vshrl.u32 %v6959, 7
        %v6961 = vsub.s32 %v6958, %v6960
        %v6962 = vrot.slane %v6948, %v6961
        %v6963 = vcombine.low %v6955, %v6962
        %v6964 = vcombine.low %v5801, %v5813
        %v6965 = vcombine.low %v5825, %v5837
        %v6967 = vunpack.c.l.s4 1983009808
        %v6968 = vunpack.c.0.s8 %v6967
        %v6969 = vlaneseq
        %v6970 = vshrl.u32 %v6969, 7
        %v6971 = vsub.s32 %v6968, %v6970
        %v6972 = vrot.slane %v6964, %v6971
        %v6974 = vunpack.c.l.s4 1983009808
        %v6975 = vunpack.c.0.s8 %v6974
        %v6976 = vlaneseq
        %v6977 = vshrl.u32 %v6976, 7
        %v6978 = vsub.s32 %v6975, %v6977
        %v6979 = vrot.slane %v6965, %v6978
        %v6980 = vcombine.low %v6972, %v6979
        %v6981 = vcombine.low %v5849, %v5861
        %v6982 = vcombine.low %v5873, %v5885
        %v6984 = vunpack.c.l.s4 1983009808
        %v6985 = vunpack.c.0.s8 %v6984
        %v6986 = vlaneseq
        %v6987 = vshrl.u32 %v6986, 7
        %v6988 = vsub.s32 %v6985, %v6987
        %v6989 = vrot.slane %v6981, %v6988
        %v6991 = vunpack.c.l.s4 1983009808
        %v6992 = vunpack.c.0.s8 %v6991
        %v6993 = vlaneseq
        %v6994 = vshrl.u32 %v6993, 7
        %v6995 = vsub.s32 %v6992, %v6994
        %v6996 = vrot.slane %v6982, %v6995
        %v6997 = vcombine.low %v6989, %v6996
        %v6998 = vcombine.low %v5897, %v5909
        %v6999 = vcombine.low %v5921, %v5933
        %v7001 = vunpack.c.l.s4 1983009808
        %v7002 = vunpack.c.0.s8 %v7001
        %v7003 = vlaneseq
        %v7004 = vshrl.u32 %v7003, 7
        %v7005 = vsub.s32 %v7002, %v7004
        %v7006 = vrot.slane %v6998, %v7005
        %v7008 = vunpack.c.l.s4 1983009808
        %v7009 = vunpack.c.0.s8 %v7008
        %v7010 = vlaneseq
        %v7011 = vshrl.u32 %v7010, 7
        %v7012 = vsub.s32 %v7009, %v7011
        %v7013 = vrot.slane %v6999, %v7012
        %v7014 = vcombine.low %v7006, %v7013
        %v7015 = vcombine.low %v5945, %v5957
        %v7016 = vcombine.low %v5969, %v5981
        %v7018 = vunpack.c.l.s4 1983009808
        %v7019 = vunpack.c.0.s8 %v7018
        %v7020 = vlaneseq
        %v7021 = vshrl.u32 %v7020, 7
        %v7022 = vsub.s32 %v7019, %v7021
        %v7023 = vrot.slane %v7015, %v7022
        %v7025 = vunpack.c.l.s4 1983009808
        %v7026 = vunpack.c.0.s8 %v7025
        %v7027 = vlaneseq
        %v7028 = vshrl.u32 %v7027, 7
        %v7029 = vsub.s32 %v7026, %v7028
        %v7030 = vrot.slane %v7016, %v7029
        %v7031 = vcombine.low %v7023, %v7030
        %v7032 = vcombine.low %v5993, %v6005
        %v7033 = vcombine.low %v6017, %v6029
        %v7035 = vunpack.c.l.s4 1983009808
        %v7036 = vunpack.c.0.s8 %v7035
        %v7037 = vlaneseq
        %v7038 = vshrl.u32 %v7037, 7
        %v7039 = vsub.s32 %v7036, %v7038
        %v7040 = vrot.slane %v7032, %v7039
        %v7042 = vunpack.c.l.s4 1983009808
        %v7043 = vunpack.c.0.s8 %v7042
        %v7044 = vlaneseq
        %v7045 = vshrl.u32 %v7044, 7
        %v7046 = vsub.s32 %v7043, %v7045
        %v7047 = vrot.slane %v7033, %v7046
        %v7048 = vcombine.low %v7040, %v7047
        %v7049 = vcombine.low %v6041, %v6053
        %v7050 = vcombine.low %v6065, %v6077
        %v7052 = vunpack.c.l.s4 1983009808
        %v7053 = vunpack.c.0.s8 %v7052
        %v7054 = vlaneseq
        %v7055 = vshrl.u32 %v7054, 7
        %v7056 = vsub.s32 %v7053, %v7055
        %v7057 = vrot.slane %v7049, %v7056
        %v7059 = vunpack.c.l.s4 1983009808
        %v7060 = vunpack.c.0.s8 %v7059
        %v7061 = vlaneseq
        %v7062 = vshrl.u32 %v7061, 7
        %v7063 = vsub.s32 %v7060, %v7062
        %v7064 = vrot.slane %v7050, %v7063
        %v7065 = vcombine.low %v7057, %v7064
        %v7066 = vcombine.low %v6089, %v6101
        %v7067 = vcombine.low %v6113, %v6125
        %v7069 = vunpack.c.l.s4 1983009808
        %v7070 = vunpack.c.0.s8 %v7069
        %v7071 = vlaneseq
        %v7072 = vshrl.u32 %v7071, 7
        %v7073 = vsub.s32 %v7070, %v7072
        %v7074 = vrot.slane %v7066, %v7073
        %v7076 = vunpack.c.l.s4 1983009808
        %v7077 = vunpack.c.0.s8 %v7076
        %v7078 = vlaneseq
        %v7079 = vshrl.u32 %v7078, 7
        %v7080 = vsub.s32 %v7077, %v7079
        %v7081 = vrot.slane %v7067, %v7080
        %v7082 = vcombine.low %v7074, %v7081
        %7083 = vrot.lane.b32.xlu0 %v6793, 32
        %v7084 = vpop.permute.xlu0 %7083
        %7085 = vrot.lane.b32.xlu0 %v6810, 32
        %v7086 = vpop.permute.xlu0 %7085
        %7087 = vrot.lane.b32.xlu0 %v6827, 32
        %v7088 = vpop.permute.xlu0 %7087
        %7089 = vrot.lane.b32.xlu0 %v6844, 32
        %v7090 = vpop.permute.xlu0 %7089
        %7091 = vrot.lane.b32.xlu0 %v6861, 32
        %v7092 = vpop.permute.xlu0 %7091
        %7093 = vrot.lane.b32.xlu0 %v6878, 32
        %v7094 = vpop.permute.xlu0 %7093
        %7095 = vrot.lane.b32.xlu0 %v6895, 32
        %v7096 = vpop.permute.xlu0 %7095
        %7097 = vrot.lane.b32.xlu0 %v6912, 32
        %v7098 = vpop.permute.xlu0 %7097
        %7099 = vrot.lane.b32.xlu0 %v6929, 32
        %v7100 = vpop.permute.xlu0 %7099
        %7101 = vrot.lane.b32.xlu0 %v6946, 32
        %v7102 = vpop.permute.xlu0 %7101
        %7103 = vrot.lane.b32.xlu0 %v6963, 32
        %v7104 = vpop.permute.xlu0 %7103
        %7105 = vrot.lane.b32.xlu0 %v6980, 32
        %v7106 = vpop.permute.xlu0 %7105
        %7107 = vrot.lane.b32.xlu0 %v6997, 32
        %v7108 = vpop.permute.xlu0 %7107
        %7109 = vrot.lane.b32.xlu0 %v7014, 32
        %v7110 = vpop.permute.xlu0 %7109
        %7111 = vrot.lane.b32.xlu0 %v7031, 32
        %v7112 = vpop.permute.xlu0 %7111
        %7113 = vrot.lane.b32.xlu0 %v7048, 32
        %v7114 = vpop.permute.xlu0 %7113
        %7115 = vrot.lane.b32.xlu0 %v7065, 32
        %v7116 = vpop.permute.xlu0 %7115
        %7117 = vrot.lane.b32.xlu0 %v7082, 32
        %v7118 = vpop.permute.xlu0 %7117
        %v7119 = vcombine.low %v5276, %v5288
        %v7120 = vcombine.low %v5300, %v5312
        %v7122 = vunpack.c.l.s4 1983009808
        %v7123 = vunpack.c.0.s8 %v7122
        %v7124 = vlaneseq
        %v7125 = vshrl.u32 %v7124, 7
        %v7126 = vsub.s32 %v7123, %v7125
        %v7127 = vrot.slane %v7119, %v7126
        %v7129 = vunpack.c.l.s4 1983009808
        %v7130 = vunpack.c.0.s8 %v7129
        %v7131 = vlaneseq
        %v7132 = vshrl.u32 %v7131, 7
        %v7133 = vsub.s32 %v7130, %v7132
        %v7134 = vrot.slane %v7120, %v7133
        %v7135 = vcombine.low %v7127, %v7134
        %v7136 = vcombine.low %v5324, %v5336
        %v7137 = vcombine.low %v5348, %v5360
        %v7139 = vunpack.c.l.s4 1983009808
        %v7140 = vunpack.c.0.s8 %v7139
        %v7141 = vlaneseq
        %v7142 = vshrl.u32 %v7141, 7
        %v7143 = vsub.s32 %v7140, %v7142
        %v7144 = vrot.slane %v7136, %v7143
        %v7146 = vunpack.c.l.s4 1983009808
        %v7147 = vunpack.c.0.s8 %v7146
        %v7148 = vlaneseq
        %v7149 = vshrl.u32 %v7148, 7
        %v7150 = vsub.s32 %v7147, %v7149
        %v7151 = vrot.slane %v7137, %v7150
        %v7152 = vcombine.low %v7144, %v7151
        %v7153 = vcombine.low %v5372, %v5384
        %v7154 = vcombine.low %v5396, %v5408
        %v7156 = vunpack.c.l.s4 1983009808
        %v7157 = vunpack.c.0.s8 %v7156
        %v7158 = vlaneseq
        %v7159 = vshrl.u32 %v7158, 7
        %v7160 = vsub.s32 %v7157, %v7159
        %v7161 = vrot.slane %v7153, %v7160
        %v7163 = vunpack.c.l.s4 1983009808
        %v7164 = vunpack.c.0.s8 %v7163
        %v7165 = vlaneseq
        %v7166 = vshrl.u32 %v7165, 7
        %v7167 = vsub.s32 %v7164, %v7166
        %v7168 = vrot.slane %v7154, %v7167
        %v7169 = vcombine.low %v7161, %v7168
        %v7170 = vcombine.low %v5420, %v5432
        %v7171 = vcombine.low %v5444, %v5456
        %v7173 = vunpack.c.l.s4 1983009808
        %v7174 = vunpack.c.0.s8 %v7173
        %v7175 = vlaneseq
        %v7176 = vshrl.u32 %v7175, 7
        %v7177 = vsub.s32 %v7174, %v7176
        %v7178 = vrot.slane %v7170, %v7177
        %v7180 = vunpack.c.l.s4 1983009808
        %v7181 = vunpack.c.0.s8 %v7180
        %v7182 = vlaneseq
        %v7183 = vshrl.u32 %v7182, 7
        %v7184 = vsub.s32 %v7181, %v7183
        %v7185 = vrot.slane %v7171, %v7184
        %v7186 = vcombine.low %v7178, %v7185
        %v7187 = vcombine.low %v5468, %v5480
        %v7188 = vcombine.low %v5492, %v5504
        %v7190 = vunpack.c.l.s4 1983009808
        %v7191 = vunpack.c.0.s8 %v7190
        %v7192 = vlaneseq
        %v7193 = vshrl.u32 %v7192, 7
        %v7194 = vsub.s32 %v7191, %v7193
        %v7195 = vrot.slane %v7187, %v7194
        %v7197 = vunpack.c.l.s4 1983009808
        %v7198 = vunpack.c.0.s8 %v7197
        %v7199 = vlaneseq
        %v7200 = vshrl.u32 %v7199, 7
        %v7201 = vsub.s32 %v7198, %v7200
        %v7202 = vrot.slane %v7188, %v7201
        %v7203 = vcombine.low %v7195, %v7202
        %v7204 = vcombine.low %v5516, %v5528
        %v7205 = vcombine.low %v5540, %v5552
        %v7207 = vunpack.c.l.s4 1983009808
        %v7208 = vunpack.c.0.s8 %v7207
        %v7209 = vlaneseq
        %v7210 = vshrl.u32 %v7209, 7
        %v7211 = vsub.s32 %v7208, %v7210
        %v7212 = vrot.slane %v7204, %v7211
        %v7214 = vunpack.c.l.s4 1983009808
        %v7215 = vunpack.c.0.s8 %v7214
        %v7216 = vlaneseq
        %v7217 = vshrl.u32 %v7216, 7
        %v7218 = vsub.s32 %v7215, %v7217
        %v7219 = vrot.slane %v7205, %v7218
        %v7220 = vcombine.low %v7212, %v7219
        %v7221 = vcombine.low %v5564, %v5576
        %v7222 = vcombine.low %v5588, %v5600
        %v7224 = vunpack.c.l.s4 1983009808
        %v7225 = vunpack.c.0.s8 %v7224
        %v7226 = vlaneseq
        %v7227 = vshrl.u32 %v7226, 7
        %v7228 = vsub.s32 %v7225, %v7227
        %v7229 = vrot.slane %v7221, %v7228
        %v7231 = vunpack.c.l.s4 1983009808
        %v7232 = vunpack.c.0.s8 %v7231
        %v7233 = vlaneseq
        %v7234 = vshrl.u32 %v7233, 7
        %v7235 = vsub.s32 %v7232, %v7234
        %v7236 = vrot.slane %v7222, %v7235
        %v7237 = vcombine.low %v7229, %v7236
        %v7238 = vcombine.low %v5612, %v5624
        %v7239 = vcombine.low %v5636, %v5648
        %v7241 = vunpack.c.l.s4 1983009808
        %v7242 = vunpack.c.0.s8 %v7241
        %v7243 = vlaneseq
        %v7244 = vshrl.u32 %v7243, 7
        %v7245 = vsub.s32 %v7242, %v7244
        %v7246 = vrot.slane %v7238, %v7245
        %v7248 = vunpack.c.l.s4 1983009808
        %v7249 = vunpack.c.0.s8 %v7248
        %v7250 = vlaneseq
        %v7251 = vshrl.u32 %v7250, 7
        %v7252 = vsub.s32 %v7249, %v7251
        %v7253 = vrot.slane %v7239, %v7252
        %v7254 = vcombine.low %v7246, %v7253
        %v7255 = vcombine.low %v5660, %v5672
        %v7256 = vcombine.low %v5684, %v5696
        %v7258 = vunpack.c.l.s4 1983009808
        %v7259 = vunpack.c.0.s8 %v7258
        %v7260 = vlaneseq
        %v7261 = vshrl.u32 %v7260, 7
        %v7262 = vsub.s32 %v7259, %v7261
        %v7263 = vrot.slane %v7255, %v7262
        %v7265 = vunpack.c.l.s4 1983009808
        %v7266 = vunpack.c.0.s8 %v7265
        %v7267 = vlaneseq
        %v7268 = vshrl.u32 %v7267, 7
        %v7269 = vsub.s32 %v7266, %v7268
        %v7270 = vrot.slane %v7256, %v7269
        %v7271 = vcombine.low %v7263, %v7270
        %v7272 = vcombine.low %v5708, %v5720
        %v7273 = vcombine.low %v5732, %v5744
        %v7275 = vunpack.c.l.s4 1983009808
        %v7276 = vunpack.c.0.s8 %v7275
        %v7277 = vlaneseq
        %v7278 = vshrl.u32 %v7277, 7
        %v7279 = vsub.s32 %v7276, %v7278
        %v7280 = vrot.slane %v7272, %v7279
        %v7282 = vunpack.c.l.s4 1983009808
        %v7283 = vunpack.c.0.s8 %v7282
        %v7284 = vlaneseq
        %v7285 = vshrl.u32 %v7284, 7
        %v7286 = vsub.s32 %v7283, %v7285
        %v7287 = vrot.slane %v7273, %v7286
        %v7288 = vcombine.low %v7280, %v7287
        %v7289 = vcombine.low %v5756, %v5768
        %v7290 = vcombine.low %v5780, %v5792
        %v7292 = vunpack.c.l.s4 1983009808
        %v7293 = vunpack.c.0.s8 %v7292
        %v7294 = vlaneseq
        %v7295 = vshrl.u32 %v7294, 7
        %v7296 = vsub.s32 %v7293, %v7295
        %v7297 = vrot.slane %v7289, %v7296
        %v7299 = vunpack.c.l.s4 1983009808
        %v7300 = vunpack.c.0.s8 %v7299
        %v7301 = vlaneseq
        %v7302 = vshrl.u32 %v7301, 7
        %v7303 = vsub.s32 %v7300, %v7302
        %v7304 = vrot.slane %v7290, %v7303
        %v7305 = vcombine.low %v7297, %v7304
        %v7306 = vcombine.low %v5804, %v5816
        %v7307 = vcombine.low %v5828, %v5840
        %v7309 = vunpack.c.l.s4 1983009808
        %v7310 = vunpack.c.0.s8 %v7309
        %v7311 = vlaneseq
        %v7312 = vshrl.u32 %v7311, 7
        %v7313 = vsub.s32 %v7310, %v7312
        %v7314 = vrot.slane %v7306, %v7313
        %v7316 = vunpack.c.l.s4 1983009808
        %v7317 = vunpack.c.0.s8 %v7316
        %v7318 = vlaneseq
        %v7319 = vshrl.u32 %v7318, 7
        %v7320 = vsub.s32 %v7317, %v7319
        %v7321 = vrot.slane %v7307, %v7320
        %v7322 = vcombine.low %v7314, %v7321
        %v7323 = vcombine.low %v5852, %v5864
        %v7324 = vcombine.low %v5876, %v5888
        %v7326 = vunpack.c.l.s4 1983009808
        %v7327 = vunpack.c.0.s8 %v7326
        %v7328 = vlaneseq
        %v7329 = vshrl.u32 %v7328, 7
        %v7330 = vsub.s32 %v7327, %v7329
        %v7331 = vrot.slane %v7323, %v7330
        %v7333 = vunpack.c.l.s4 1983009808
        %v7334 = vunpack.c.0.s8 %v7333
        %v7335 = vlaneseq
        %v7336 = vshrl.u32 %v7335, 7
        %v7337 = vsub.s32 %v7334, %v7336
        %v7338 = vrot.slane %v7324, %v7337
        %v7339 = vcombine.low %v7331, %v7338
        %v7340 = vcombine.low %v5900, %v5912
        %v7341 = vcombine.low %v5924, %v5936
        %v7343 = vunpack.c.l.s4 1983009808
        %v7344 = vunpack.c.0.s8 %v7343
        %v7345 = vlaneseq
        %v7346 = vshrl.u32 %v7345, 7
        %v7347 = vsub.s32 %v7344, %v7346
        %v7348 = vrot.slane %v7340, %v7347
        %v7350 = vunpack.c.l.s4 1983009808
        %v7351 = vunpack.c.0.s8 %v7350
        %v7352 = vlaneseq
        %v7353 = vshrl.u32 %v7352, 7
        %v7354 = vsub.s32 %v7351, %v7353
        %v7355 = vrot.slane %v7341, %v7354
        %v7356 = vcombine.low %v7348, %v7355
        %v7357 = vcombine.low %v5948, %v5960
        %v7358 = vcombine.low %v5972, %v5984
        %v7360 = vunpack.c.l.s4 1983009808
        %v7361 = vunpack.c.0.s8 %v7360
        %v7362 = vlaneseq
        %v7363 = vshrl.u32 %v7362, 7
        %v7364 = vsub.s32 %v7361, %v7363
        %v7365 = vrot.slane %v7357, %v7364
        %v7367 = vunpack.c.l.s4 1983009808
        %v7368 = vunpack.c.0.s8 %v7367
        %v7369 = vlaneseq
        %v7370 = vshrl.u32 %v7369, 7
        %v7371 = vsub.s32 %v7368, %v7370
        %v7372 = vrot.slane %v7358, %v7371
        %v7373 = vcombine.low %v7365, %v7372
        %v7374 = vcombine.low %v5996, %v6008
        %v7375 = vcombine.low %v6020, %v6032
        %v7377 = vunpack.c.l.s4 1983009808
        %v7378 = vunpack.c.0.s8 %v7377
        %v7379 = vlaneseq
        %v7380 = vshrl.u32 %v7379, 7
        %v7381 = vsub.s32 %v7378, %v7380
        %v7382 = vrot.slane %v7374, %v7381
        %v7384 = vunpack.c.l.s4 1983009808
        %v7385 = vunpack.c.0.s8 %v7384
        %v7386 = vlaneseq
        %v7387 = vshrl.u32 %v7386, 7
        %v7388 = vsub.s32 %v7385, %v7387
        %v7389 = vrot.slane %v7375, %v7388
        %v7390 = vcombine.low %v7382, %v7389
        %v7391 = vcombine.low %v6044, %v6056
        %v7392 = vcombine.low %v6068, %v6080
        %v7394 = vunpack.c.l.s4 1983009808
        %v7395 = vunpack.c.0.s8 %v7394
        %v7396 = vlaneseq
        %v7397 = vshrl.u32 %v7396, 7
        %v7398 = vsub.s32 %v7395, %v7397
        %v7399 = vrot.slane %v7391, %v7398
        %v7401 = vunpack.c.l.s4 1983009808
        %v7402 = vunpack.c.0.s8 %v7401
        %v7403 = vlaneseq
        %v7404 = vshrl.u32 %v7403, 7
        %v7405 = vsub.s32 %v7402, %v7404
        %v7406 = vrot.slane %v7392, %v7405
        %v7407 = vcombine.low %v7399, %v7406
        %v7408 = vcombine.low %v6092, %v6104
        %v7409 = vcombine.low %v6116, %v6128
        %v7411 = vunpack.c.l.s4 1983009808
        %v7412 = vunpack.c.0.s8 %v7411
        %v7413 = vlaneseq
        %v7414 = vshrl.u32 %v7413, 7
        %v7415 = vsub.s32 %v7412, %v7414
        %v7416 = vrot.slane %v7408, %v7415
        %v7418 = vunpack.c.l.s4 1983009808
        %v7419 = vunpack.c.0.s8 %v7418
        %v7420 = vlaneseq
        %v7421 = vshrl.u32 %v7420, 7
        %v7422 = vsub.s32 %v7419, %v7421
        %v7423 = vrot.slane %v7409, %v7422
        %v7424 = vcombine.low %v7416, %v7423
        %7425 = vrot.lane.b32.xlu0 %v7135, 48
        %v7426 = vpop.permute.xlu0 %7425
        %7427 = vrot.lane.b32.xlu0 %v7152, 48
        %v7428 = vpop.permute.xlu0 %7427
        %7429 = vrot.lane.b32.xlu0 %v7169, 48
        %v7430 = vpop.permute.xlu0 %7429
        %7431 = vrot.lane.b32.xlu0 %v7186, 48
        %v7432 = vpop.permute.xlu0 %7431
        %7433 = vrot.lane.b32.xlu0 %v7203, 48
        %v7434 = vpop.permute.xlu0 %7433
        %7435 = vrot.lane.b32.xlu0 %v7220, 48
        %v7436 = vpop.permute.xlu0 %7435
        %7437 = vrot.lane.b32.xlu0 %v7237, 48
        %v7438 = vpop.permute.xlu0 %7437
        %7439 = vrot.lane.b32.xlu0 %v7254, 48
        %v7440 = vpop.permute.xlu0 %7439
        %7441 = vrot.lane.b32.xlu0 %v7271, 48
        %v7442 = vpop.permute.xlu0 %7441
        %7443 = vrot.lane.b32.xlu0 %v7288, 48
        %v7444 = vpop.permute.xlu0 %7443
        %7445 = vrot.lane.b32.xlu0 %v7305, 48
        %v7446 = vpop.permute.xlu0 %7445
        %7447 = vrot.lane.b32.xlu0 %v7322, 48
        %v7448 = vpop.permute.xlu0 %7447
        %7449 = vrot.lane.b32.xlu0 %v7339, 48
        %v7450 = vpop.permute.xlu0 %7449
        %7451 = vrot.lane.b32.xlu0 %v7356, 48
        %v7452 = vpop.permute.xlu0 %7451
        %7453 = vrot.lane.b32.xlu0 %v7373, 48
        %v7454 = vpop.permute.xlu0 %7453
        %7455 = vrot.lane.b32.xlu0 %v7390, 48
        %v7456 = vpop.permute.xlu0 %7455
        %7457 = vrot.lane.b32.xlu0 %v7407, 48
        %v7458 = vpop.permute.xlu0 %7457
        %7459 = vrot.lane.b32.xlu0 %v7424, 48
        %v7460 = vpop.permute.xlu0 %7459
        %vm7461 = vcmask 130048
        %v7464 = vsel %vm7461, %v6145, %v6742
        %v7467 = vsel %vm7461, %v6162, %v6744
        %v7470 = vsel %vm7461, %v6179, %v6746
        %v7473 = vsel %vm7461, %v6196, %v6748
        %v7476 = vsel %vm7461, %v6213, %v6750
        %v7479 = vsel %vm7461, %v6230, %v6752
        %v7482 = vsel %vm7461, %v6247, %v6754
        %v7485 = vsel %vm7461, %v6264, %v6756
        %v7488 = vsel %vm7461, %v6281, %v6758
        %v7491 = vsel %vm7461, %v6298, %v6760
        %v7494 = vsel %vm7461, %v6315, %v6762
        %v7497 = vsel %vm7461, %v6332, %v6764
        %v7500 = vsel %vm7461, %v6349, %v6766
        %v7503 = vsel %vm7461, %v6366, %v6768
        %v7506 = vsel %vm7461, %v6383, %v6770
        %v7509 = vsel %vm7461, %v6400, %v6772
        %v7512 = vsel %vm7461, %v6417, %v6774
        %v7515 = vsel %vm7461, %v6434, %v6776
        %vm7516 = vcmask 261120
        %v7518 = vsel %vm7516, %v7464, %v7084
        %v7520 = vsel %vm7516, %v7467, %v7086
        %v7522 = vsel %vm7516, %v7470, %v7088
        %v7524 = vsel %vm7516, %v7473, %v7090
        %v7526 = vsel %vm7516, %v7476, %v7092
        %v7528 = vsel %vm7516, %v7479, %v7094
        %v7530 = vsel %vm7516, %v7482, %v7096
        %v7532 = vsel %vm7516, %v7485, %v7098
        %v7534 = vsel %vm7516, %v7488, %v7100
        %v7536 = vsel %vm7516, %v7491, %v7102
        %v7538 = vsel %vm7516, %v7494, %v7104
        %v7540 = vsel %vm7516, %v7497, %v7106
        %v7542 = vsel %vm7516, %v7500, %v7108
        %v7544 = vsel %vm7516, %v7503, %v7110
        %v7546 = vsel %vm7516, %v7506, %v7112
        %v7548 = vsel %vm7516, %v7509, %v7114
        %v7550 = vsel %vm7516, %v7512, %v7116
        %v7552 = vsel %vm7516, %v7515, %v7118
        %vm7553 = vcmask 392192
        %v7555 = vsel %vm7553, %v7518, %v7426
        %v7558 = vsel %vm7553, %v7520, %v7428
        %v7561 = vsel %vm7553, %v7522, %v7430
        %v7564 = vsel %vm7553, %v7524, %v7432
        %v7567 = vsel %vm7553, %v7526, %v7434
        %v7570 = vsel %vm7553, %v7528, %v7436
        %v7573 = vsel %vm7553, %v7530, %v7438
        %v7576 = vsel %vm7553, %v7532, %v7440
        %v7579 = vsel %vm7553, %v7534, %v7442
        %v7582 = vsel %vm7553, %v7536, %v7444
        %v7585 = vsel %vm7553, %v7538, %v7446
        %v7588 = vsel %vm7553, %v7540, %v7448
        %v7591 = vsel %vm7553, %v7542, %v7450
        %v7594 = vsel %vm7553, %v7544, %v7452
        %v7597 = vsel %vm7553, %v7546, %v7454
        %v7600 = vsel %vm7553, %v7548, %v7456
        %v7603 = vsel %vm7553, %v7550, %v7458
        %v7606 = vsel %vm7553, %v7552, %v7460
        %v7608 = vld [vmem:[%s5] sm:$0xf]
        %7610 = vset.pattern.permute.xlu0 0
        %7611 = vperm.xlu0 %7610, %v7608
        %v7612 = vpop.permute.xlu0 %7611
        %v7615 = vcombine.high %v3680, %v3680
        %v7617 = vunpack.c.l.s4 1983009808
        %v7618 = vunpack.c.0.s8 %v7617
        %v7619 = vlaneseq
        %v7620 = vshrl.u32 %v7619, 7
        %v7621 = vsub.s32 %v7618, %v7620
        %v7622 = vrot.slane %v3680, %v7621
        %v7624 = vunpack.c.l.s4 1983009808
        %v7625 = vunpack.c.0.s8 %v7624
        %v7626 = vlaneseq
        %v7627 = vshrl.u32 %v7626, 7
        %v7628 = vsub.s32 %v7625, %v7627
        %v7629 = vrot.slane %v7615, %v7628
        %v7630 = vcombine.high %v7622, %v7622
        %v7634 = vsel %vm7516, %v7629, 0
        %7636 = vmatprep.subr.bf16.mxu0 0
        %7637 = vmatpush1.bf16.msra.mxu0 %v7555
        %7638 = vmatprep.subr.bf16.mxu0 0
        %7639 = vmatpush1.bf16.msra.mxu0 %v7558
        %7640 = vmatprep.subr.bf16.mxu0 0
        %7641 = vmatpush1.bf16.msra.mxu0 %v7561
        %7642 = vmatprep.subr.bf16.mxu0 0
        %7643 = vmatpush1.bf16.msra.mxu0 %v7564
        %7644 = vmatprep.subr.bf16.mxu0 0
        %7645 = vmatpush1.bf16.msra.mxu0 %v7567
        %7646 = vmatprep.subr.bf16.mxu0 0
        %7647 = vmatpush1.bf16.msra.mxu0 %v7570
        %7648 = vmatprep.subr.bf16.mxu0 0
        %7649 = vmatpush1.bf16.msra.mxu0 %v7573
        %7650 = vmatprep.subr.bf16.mxu0 0
        %7651 = vmatpush1.bf16.msra.mxu0 %v7576
        %7652 = vmatprep.subr.bf16.mxu0 0
        %7653 = vmatpush1.bf16.msra.mxu0 %v7579
        %7654 = vmatprep.subr.bf16.mxu0 0
        %7655 = vmatpush1.bf16.msra.mxu0 %v7582
        %7656 = vmatprep.subr.bf16.mxu0 0
        %7657 = vmatpush1.bf16.msra.mxu0 %v7585
        %7658 = vmatprep.subr.bf16.mxu0 0
        %7659 = vmatpush1.bf16.msra.mxu0 %v7588
        %7660 = vmatprep.subr.bf16.mxu0 0
        %7661 = vmatpush1.bf16.msra.mxu0 %v7591
        %7662 = vmatprep.subr.bf16.mxu0 0
        %7663 = vmatpush1.bf16.msra.mxu0 %v7594
        %7664 = vmatprep.subr.bf16.mxu0 0
        %7665 = vmatpush1.bf16.msra.mxu0 %v7597
        %7666 = vmatprep.subr.bf16.mxu0 0
        %7667 = vmatpush1.bf16.msra.mxu0 %v7600
        %7668 = vmatprep.mubr.bf16.mxu0 %v7630
        %7669 = vmatmul.mubr.bf16.gmra.mrb[0].mxu0 %v7622
        %v7670 = vpop.f32.mrb[0].mxu0
        %v7671 = vadd.f32 %v7612, %v7670
        %v7672 = vpop.f32.mrb[0].mxu0
        %v7673 = vpop.f32.mrb[0].mxu0
        %v7674 = vpop.f32.mrb[0].mxu0
        %7675 = vdwg.mxu0
        %7676 = vmatprep.subr.bf16.mxu0 0
        %7677 = vmatpush1.bf16.msra.mxu0 %v7603
        %7678 = vmatprep.subr.bf16.mxu0 0
        %7679 = vmatpush1.bf16.msra.mxu0 %v7606
        %7680 = vmatprep.subr.bf16.mxu0 0
        %7681 = vmatpush1.bf16.msra.mxu0 0
        %7682 = vmatprep.subr.bf16.mxu0 0
        %7683 = vmatpush1.bf16.msra.mxu0 0
        %7684 = vmatprep.subr.bf16.mxu0 0
        %7685 = vmatpush1.bf16.msra.mxu0 0
        %7686 = vmatprep.subr.bf16.mxu0 0
        %7687 = vmatpush1.bf16.msra.mxu0 0
        %7688 = vmatprep.subr.bf16.mxu0 0
        %7689 = vmatpush1.bf16.msra.mxu0 0
        %7690 = vmatprep.subr.bf16.mxu0 0
        %7691 = vmatpush1.bf16.msra.mxu0 0
        %7692 = vmatprep.subr.bf16.mxu0 0
        %7693 = vmatpush1.bf16.msra.mxu0 0
        %7694 = vmatprep.subr.bf16.mxu0 0
        %7695 = vmatpush1.bf16.msra.mxu0 0
        %7696 = vmatprep.subr.bf16.mxu0 0
        %7697 = vmatpush1.bf16.msra.mxu0 0
        %7698 = vmatprep.subr.bf16.mxu0 0
        %7699 = vmatpush1.bf16.msra.mxu0 0
        %7700 = vmatprep.subr.bf16.mxu0 0
        %7701 = vmatpush1.bf16.msra.mxu0 0
        %7702 = vmatprep.subr.bf16.mxu0 0
        %7703 = vmatpush1.bf16.msra.mxu0 0
        %7704 = vmatprep.subr.bf16.mxu0 0
        %7705 = vmatpush1.bf16.msra.mxu0 0
        %7706 = vmatprep.subr.bf16.mxu0 0
        %7707 = vmatpush1.bf16.msra.mxu0 0
        %7708 = vmatprep.mubr.bf16.mxu0 0
        %7709 = vmatmul.mubr.bf16.gmra.mrb[0].mxu0 %v7634
        %v7710 = vpop.f32.mrb[0].mxu0
        %v7711 = vadd.f32 %v7671, %v7710
        %v7712 = vpop.f32.mrb[0].mxu0
        %v7713 = vpop.f32.mrb[0].mxu0
        %v7714 = vpop.f32.mrb[0].mxu0
        %7715 = vdwg.mxu0
        %vm7716 = vcmask 519168
        %7717 = vst.msk [vmem:[%s293] sm:$0xf] %vm7716, %v7711
        %s7718 = sand.u32 %s182, 1
        %s7719 = scalar_lea.sflag [#allocation5], %s7718
        %s7720 = sand.u32 %s182, 1
        %s7721 = smul.addr %s7720, 4
        %s7722 = scalar_lea.vmem [#allocation4], %s7721
        // Predicated region
        $region45: #{tpu_custom_call.1} parent=43 // pred_check
          %p7723 = pneg %p192
        $region46: #{tpu_custom_call.1} parent=43 // pred_check_branch
          %7725 = sbr.rel (%p7723) target = $region48
        $region47: #{tpu_custom_call.1} parent=43 // pred_region
          %s7727 = ssub.s32 64, 64
          %7728 = vsyncadd %s7719, %s7727
          %s7729 = sadd.s32 %s25, %s24
          %s7730 = smul.addr %s7729, 64
          %s7731 = scalar_lea.hbm %s6, %s7730
          %s7733 = sshll.u32 %s7722, 4
          %s7734 = int_to_ptr.vmem [resolvable:$true] %s7733
          %7736 = dma.vmem_to_hbm [thread:$0]  %s7734, 64, %s7731, %s7719
        $region48: #{tpu_custom_call.1} parent=43 // pred_fallthru
          _
      $region44: #{tpu_custom_call.1} parent=5 // pred_fallthru
        _
      %p7737 = scmp.le.s32.totalorder 2, %s15
      // Predicated region
      $region49: #{tpu_custom_call.1} parent=5 // pred_check
        %p7738 = pneg %p7737
      $region50: #{tpu_custom_call.1} parent=5 // pred_check_branch
        %7740 = sbr.rel (%p7738) target = $region52
      $region51: #{tpu_custom_call.1} parent=5 // pred_region
        %s7741 = ssub.s32 %s15, 2
        // Predicated region
        $region53: #{tpu_custom_call.1} parent=51 // pred_check
          %p7742 = pneg %p198
        $region54: #{tpu_custom_call.1} parent=51 // pred_check_branch
          %7744 = sbr.rel (%p7742) target = $region56
        $region55: #{tpu_custom_call.1} parent=51 // pred_region
          %s7745 = sand.u32 %s183, 1
          %s7746 = scalar_lea.sflag [#allocation5], %s7745
          %s7747 = sand.u32 %s183, 1
          %s7748 = smul.addr %s7747, 4
          %s7749 = scalar_lea.vmem [#allocation4], %s7748
          %7750 = dma.done %s7746, 64
        $region56: #{tpu_custom_call.1} parent=51 // pred_fallthru
          _
      $region52: #{tpu_custom_call.1} parent=5 // pred_fallthru
        _
    $region6: #{tpu_custom_call.1} parent=1 // loop_footer
      %s19 = sadd.s32 1, %s15
    $region7: #{tpu_custom_call.1} parent=1 // loop_footer_branch
      %14 = sbr.rel target = $region3
    $region8: #{tpu_custom_call.1} parent=1 // loop_exit
      _
    %7751 = vsyncpa [#allocation5], 1
    %s7752 = scalar_lea.sflag [#allocation5], 1
    %7753 = vsyncpa %s7752, 1

</llo_original>
